<compile_context>
chip_gen: v5e
topology: v5e:2x2
jax: 0.10.0
libtpu: 0.0.40
codegen_flags: <defaults>
</compile_context>

<pallas_src>
import functools

import jax
import jax.numpy as jnp
import numpy as np
from jax import lax
from jax.experimental import pallas as pl
from jax.experimental.pallas import tpu as pltpu

# ---- model hyper-parameters (small, consistent with the module signature) ----
WORD_EMBEDDING_SIZE = 32      # E
NUM_HEADS = 4                 # H
HEAD_SIZE = 8                 # D
MHS_OUTPUT_SIZE = NUM_HEADS * HEAD_SIZE   # H*D = 32
TITLE_LEN = 8                 # T  (words per title, from title_embedding table)
VOCAB_SIZE = 50
NUM_TITLES = 20

PACK = 128 // MHS_OUTPUT_SIZE  # titles packed per 128-lane output row (= 4)


def _round_up(n, m):
    return (n + m - 1) // m * m


def _choose_tb(n_titles):
    """Titles per grid step.

    Multiple of 8*PACK (=32) so the packed output block (TB//PACK, 128) keeps an
    (8,128)-aligned second-minor dim; capped at 256 so lane-padded temporaries stay
    well under the default scoped VMEM; and split so the 'parallel' grid axis has
    >= 2 steps when there is enough work (v7x has 2 TensorCores).
    """
    unit = 8 * PACK
    tb = min(256, _round_up(n_titles, unit))
    if _round_up(n_titles, tb) == tb and n_titles > unit:
        tb = _round_up((n_titles + 1) // 2, unit)
    return tb


def title_encoder_kernel(tid_ref, qkvtbl_ref, bqkv_ref, wp_ref, bp_ref, qv_ref,
                         o_ref, *, tb):
    """One block of `tb` titles per grid step.

    tid_ref   : (tb*T, 1) int32   word ids for the tb titles of this block
    qkvtbl_ref: (V, 3*HD)         word_embedding @ [Wq|Wk|Wv]  (resident, constant block)
    o_ref     : (tb//PACK, 128)   pooled title vectors, PACK titles packed per row
    """
    T, HD = TITLE_LEN, MHS_OUTPUT_SIZE
    H, D = NUM_HEADS, HEAD_SIZE
    V = qkvtbl_ref.shape[0]
    n_words = tb * T

    # ---- fused word-embedding gather + Q/K/V projection: one MXU pass ----
    tid = tid_ref[...]                                                    # (tb*T, 1) int32
    vocab_iota = lax.broadcasted_iota(jnp.int32, (n_words, V), 1)
    onehot = jnp.where(vocab_iota == tid, jnp.float32(1.0), jnp.float32(0.0))
    qkv = jnp.dot(onehot, qkvtbl_ref[...],
                  preferred_element_type=jnp.float32) + bqkv_ref[...]     # (tb*T, 3*HD)
    # dropout = identity (inference mode)
    q = qkv[:, 0 * HD:1 * HD].reshape(tb, T, HD)
    k = qkv[:, 1 * HD:2 * HD].reshape(tb, T, HD)
    v = qkv[:, 2 * HD:3 * HD].reshape(tb, T, HD)

    # ---- multi-head scaled dot-product attention, batched over the tb titles ----
    # Heads are isolated with full-width lane masks instead of width-8 lane slices and a
    # head concat (masked lanes contribute exact zeros), removing the XLU relayouts the
    # per-head slicing caused.  MXU work is unchanged (everything pads to >=128 lanes).
    scale = jnp.float32(1.0 / np.sqrt(D))
    lane = lax.broadcasted_iota(jnp.int32, (1, 1, HD), 2)                 # hoisted
    hcat = jnp.zeros((tb, T, HD), jnp.float32)
    for h in range(H):                                                    # static 4-iter loop
        mask = jnp.where((lane >= h * D) & (lane < (h + 1) * D),
                         jnp.float32(1.0), jnp.float32(0.0))              # (1, 1, HD)
        s = jnp.einsum("btf,bsf->bts", q * mask, k,
                       preferred_element_type=jnp.float32) * scale        # (tb, T, T)
        s = s - jnp.max(s, axis=-1, keepdims=True)
        p = jnp.exp(s)
        # Exact reciprocal on purpose (review item 8): protects the tolerance, and the
        # kernel is layout/overhead-bound, not EUP-bound.
        p = p * pl.reciprocal(jnp.sum(p, axis=-1, keepdims=True), approx=False)
        o_h = jnp.einsum("bts,bsf->btf", p, v,
                         preferred_element_type=jnp.float32)              # (tb, T, HD)
        hcat = hcat + o_h * mask

    # ---- additive (word-level) self-attention pooling ----
    u = jnp.tanh(jnp.dot(hcat.reshape(n_words, HD), wp_ref[...],
                         preferred_element_type=jnp.float32) + bp_ref[...])
    u = u.reshape(tb, T, HD)
    sc = jnp.sum(u * qv_ref[...], axis=-1, keepdims=True)                 # (tb, T, 1)
    sc = sc - jnp.max(sc, axis=1, keepdims=True)
    a = jnp.exp(sc)
    a = a * pl.reciprocal(jnp.sum(a, axis=1, keepdims=True), approx=False)
    pooled = jnp.sum(a * hcat, axis=1)                                    # (tb, HD)

    # ---- lane-dense output: pack PACK(=4) titles per 128-lane row ----
    # packed[g, HD*j + f] = pooled[PACK*g + j, f].  Done with tiny selection matmuls
    # (row gather on the MXU) + one lane concat, so the store is a full-width vst and
    # the writeback DMA is dense.  The wrapper reshapes (n_pad//4, 128) -> (n_pad, HD).
    gi = lax.broadcasted_iota(jnp.int32, (tb // PACK, tb), 0)
    ri = lax.broadcasted_iota(jnp.int32, (tb // PACK, tb), 1)
    parts = []
    for j in range(PACK):
        sel = jnp.where(ri == PACK * gi + j, jnp.float32(1.0), jnp.float32(0.0))
        parts.append(jnp.dot(sel, pooled, preferred_element_type=jnp.float32))
    o_ref[...] = jnp.concatenate(parts, axis=-1)                          # (tb//PACK, 128)


@jax.jit
def title_encoder_forward(seqs, params):
    """seqs: int32 [...], indices into the title table. Returns [..., H*D] float32."""
    T, HD = TITLE_LEN, MHS_OUTPUT_SIZE
    V = params["word_embedding"].shape[0]

    # Tiny title-id -> word-id lookup stays in plain JAX; the word-embedding gather is
    # fused inside the kernel so no [n, T, E] array ever hits HBM.
    titles = params["title_embedding"][seqs].reshape(-1, T).astype(jnp.int32)   # (n, T)
    n_titles = titles.shape[0]

    TB = _choose_tb(n_titles)
    n_pad = _round_up(n_titles, TB)
    titles = jnp.pad(titles, ((0, n_pad - n_titles), (0, 0)))
    tid = titles.reshape(n_pad * T, 1)

    # Fuse the embedding gather with the Q/K/V projection: one (V, 3*HD) table.
    wqkv = jnp.concatenate([params["wq"], params["wk"], params["wv"]], axis=1)  # (E, 3*HD)
    bqkv = jnp.concatenate([params["bq"], params["bk"], params["bv"]], axis=1)  # (1, 3*HD)
    qkv_table = jnp.dot(params["word_embedding"], wqkv,
                        precision=lax.Precision.HIGHEST)                        # (V, 3*HD)

    kernel = functools.partial(title_encoder_kernel, tb=TB)
    const = lambda shape: pl.BlockSpec(shape, lambda i: (0,) * len(shape))

    out = pl.pallas_call(
        kernel,
        out_shape=jax.ShapeDtypeStruct((n_pad // PACK, PACK * HD), jnp.float32),
        grid=(n_pad // TB,),
        in_specs=[
            pl.BlockSpec((TB * T, 1), lambda i: (i, 0)),    # word ids for TB titles
            const((V, 3 * HD)),                             # fused gather+QKV table
            const((1, 3 * HD)),                             # fused Q/K/V bias
            const((HD, HD)), const((1, HD)),                # SelfAttention W, b
            const((1, HD)),                                 # SelfAttention query vector
        ],
        out_specs=pl.BlockSpec((TB // PACK, PACK * HD), lambda i: (i, 0)),
        compiler_params=pltpu.CompilerParams(
            dimension_semantics=("parallel",)),             # titles are independent
    )(tid, qkv_table, bqkv, params["wp"], params["bp"], params["qv"])

    out = out.reshape(n_pad, HD)[:n_titles]                 # un-pack 4 titles / row
    return out.reshape(seqs.shape + (HD,))


def reference_forward(seqs, params):
    """Pure-JAX reference for correctness checking."""
    titles = params["title_embedding"][seqs]
    x = params["word_embedding"][titles].astype(jnp.float32)          # [..., T, E]
    q = x @ params["wq"] + params["bq"]
    k = x @ params["wk"] + params["bk"]
    v = x @ params["wv"] + params["bv"]

    def split(t):
        return t.reshape(t.shape[:-1] + (NUM_HEADS, HEAD_SIZE))
    qh, kh, vh = split(q), split(k), split(v)                          # [..., T, H, D]
    s = jnp.einsum("...thd,...shd->...hts", qh, kh) / np.sqrt(HEAD_SIZE)
    p = jax.nn.softmax(s, axis=-1)
    oh = jnp.einsum("...hts,...shd->...thd", p, vh)
    hcat = oh.reshape(oh.shape[:-2] + (MHS_OUTPUT_SIZE,))              # [..., T, H*D]

    u = jnp.tanh(hcat @ params["wp"] + params["bp"])
    sc = jnp.einsum("...td,d->...t", u, params["qv"][0])
    a = jax.nn.softmax(sc, axis=-1)
    return jnp.einsum("...t,...td->...d", a, hcat)


def init_params(key):
    ks = jax.random.split(key, 12)
    E, HD = WORD_EMBEDDING_SIZE, MHS_OUTPUT_SIZE
    n = lambda k, shape: (0.02 * jax.random.normal(k, shape)).astype(jnp.float32)
    return {
        # title id -> word ids (synthetic stand-in for np.load(title_embedding_path))
        "title_embedding": jax.random.randint(
            ks[0], (NUM_TITLES, TITLE_LEN), 0, VOCAB_SIZE, dtype=jnp.int32),
        # word id -> embedding (synthetic stand-in for nn.Embedding weights)
        "word_embedding": n(ks[1], (VOCAB_SIZE, E)),
        "wq": n(ks[2], (E, HD)), "bq": n(ks[3], (1, HD)),
        "wk": n(ks[4], (E, HD)), "bk": n(ks[5], (1, HD)),
        "wv": n(ks[6], (E, HD)), "bv": n(ks[7], (1, HD)),
        "wp": n(ks[8], (HD, HD)), "bp": n(ks[9], (1, HD)),
        "qv": n(ks[10], (1, HD)),
    }


if __name__ == "__main__":
    key = jax.random.PRNGKey(0)
    params = init_params(key)

    # seqs: batch of 2 users, each with 3 news indices into the title table.
    seqs = jax.random.randint(jax.random.PRNGKey(1), (2, 3), 0, NUM_TITLES,
                              dtype=jnp.int32)

    out = title_encoder_forward(seqs, params)
    out = jax.block_until_ready(out)
    assert out.shape == (2, 3, MHS_OUTPUT_SIZE), out.shape

    ref = reference_forward(seqs, params)
    np.testing.assert_allclose(np.asarray(out), np.asarray(ref), rtol=5e-5, atol=5e-6)

    print("KERNEL_OK")
</pallas_src>

<mosaic_0001>
module attributes {stable_mosaic.version = 11 : i64} {
  func.func @title_encoder_kernel(%arg0: i32, %arg1: memref<256x1xi32, #tpu.memory_space<vmem>>, %arg2: memref<50x96xf32, #tpu.memory_space<vmem>>, %arg3: memref<1x96xf32, #tpu.memory_space<vmem>>, %arg4: memref<32x32xf32, #tpu.memory_space<vmem>>, %arg5: memref<1x32xf32, #tpu.memory_space<vmem>>, %arg6: memref<1x32xf32, #tpu.memory_space<vmem>>, %arg7: memref<8x128xf32, #tpu.memory_space<vmem>>) attributes {dimension_semantics = [#tpu.dimension_semantics<parallel>], iteration_bounds = array<i64: 1>, scalar_prefetch = 0 : i64, scratch_operands = 0 : i64, tpu.core_type = #tpu.core_type<tc>, window_params = [{transform_indices = @transform_0, window_bounds = array<i64: 256, 1>}, {pipeline_mode = #tpu.pipeline_mode<synchronous>, transform_indices = @transform_1, window_bounds = array<i64: 50, 96>}, {pipeline_mode = #tpu.pipeline_mode<synchronous>, transform_indices = @transform_2, window_bounds = array<i64: 1, 96>}, {pipeline_mode = #tpu.pipeline_mode<synchronous>, transform_indices = @transform_3, window_bounds = array<i64: 32, 32>}, {pipeline_mode = #tpu.pipeline_mode<synchronous>, transform_indices = @transform_4, window_bounds = array<i64: 1, 32>}, {pipeline_mode = #tpu.pipeline_mode<synchronous>, transform_indices = @transform_5, window_bounds = array<i64: 1, 32>}, {transform_indices = @transform_6, window_bounds = array<i64: 8, 128>}]} {
    %c0 = arith.constant 0 : index
    %c0_0 = arith.constant 0 : index
    %0 = vector.load %arg1[%c0, %c0_0] : memref<256x1xi32, #tpu.memory_space<vmem>>, vector<256x1xi32>
    %1 = tpu.iota {dimensions = array<i32: 1>} : vector<256x50xi32>
    %2 = vector.broadcast %0 : vector<256x1xi32> to vector<256x50xi32>
    %3 = arith.cmpi eq, %1, %2 : vector<256x50xi32>
    %cst = arith.constant 1.000000e+00 : f32
    %cst_1 = arith.constant 0.000000e+00 : f32
    %4 = vector.broadcast %cst : f32 to vector<256x50xf32>
    %5 = vector.broadcast %cst_1 : f32 to vector<256x50xf32>
    %6 = arith.select %3, %4, %5 : vector<256x50xi1>, vector<256x50xf32>
    %c0_2 = arith.constant 0 : index
    %c0_3 = arith.constant 0 : index
    %7 = vector.load %arg2[%c0_2, %c0_3] : memref<50x96xf32, #tpu.memory_space<vmem>>, vector<50x96xf32>
    %cst_4 = arith.constant dense<0.000000e+00> : vector<256x96xf32>
    %8 = tpu.matmul %6, %7, %cst_4 {dimension_numbers = #tpu.dot_dimension_numbers<[1], [0], [0], [1], [0, 0, 1, 1], [], []>} : vector<256x50xf32>, vector<50x96xf32>, vector<256x96xf32> -> vector<256x96xf32>
    %c0_5 = arith.constant 0 : index
    %c0_6 = arith.constant 0 : index
    %9 = vector.load %arg3[%c0_5, %c0_6] : memref<1x96xf32, #tpu.memory_space<vmem>>, vector<1x96xf32>
    %10 = vector.broadcast %9 : vector<1x96xf32> to vector<256x96xf32>
    %11 = arith.addf %8, %10 : vector<256x96xf32>
    %12 = vector.extract_strided_slice %11 {offsets = [0, 0], sizes = [256, 32], strides = [1, 1]} : vector<256x96xf32> to vector<256x32xf32>
    %13 = vector.shape_cast %12 : vector<256x32xf32> to vector<32x8x32xf32>
    %14 = vector.extract_strided_slice %11 {offsets = [0, 32], sizes = [256, 32], strides = [1, 1]} : vector<256x96xf32> to vector<256x32xf32>
    %15 = vector.shape_cast %14 : vector<256x32xf32> to vector<32x8x32xf32>
    %16 = vector.extract_strided_slice %11 {offsets = [0, 64], sizes = [256, 32], strides = [1, 1]} : vector<256x96xf32> to vector<256x32xf32>
    %17 = vector.shape_cast %16 : vector<256x32xf32> to vector<32x8x32xf32>
    %18 = tpu.iota {dimensions = array<i32: 2>} : vector<1x1x32xi32>
    %cst_7 = arith.constant 0.000000e+00 : f32
    %19 = vector.broadcast %cst_7 : f32 to vector<32x8x32xf32>
    %c0_i32 = arith.constant 0 : i32
    %20 = vector.broadcast %c0_i32 : i32 to vector<1x1x32xi32>
    %21 = arith.cmpi sge, %18, %20 : vector<1x1x32xi32>
    %c8_i32 = arith.constant 8 : i32
    %22 = vector.broadcast %c8_i32 : i32 to vector<1x1x32xi32>
    %23 = arith.cmpi slt, %18, %22 : vector<1x1x32xi32>
    %24 = arith.andi %21, %23 : vector<1x1x32xi1>
    %cst_8 = arith.constant 1.000000e+00 : f32
    %cst_9 = arith.constant 0.000000e+00 : f32
    %25 = vector.broadcast %cst_8 : f32 to vector<1x1x32xf32>
    %26 = vector.broadcast %cst_9 : f32 to vector<1x1x32xf32>
    %27 = arith.select %24, %25, %26 : vector<1x1x32xi1>, vector<1x1x32xf32>
    %28 = vector.broadcast %27 : vector<1x1x32xf32> to vector<32x8x32xf32>
    %29 = arith.mulf %13, %28 : vector<32x8x32xf32>
    "tpu.trace_start"() <{level = 10 : i32, message = "btf,bsf->bts"}> : () -> ()
    %cst_10 = arith.constant dense<0.000000e+00> : vector<32x8x8xf32>
    %30 = tpu.matmul %29, %15, %cst_10 {dimension_numbers = #tpu.dot_dimension_numbers<[2], [2], [1], [1], [0, 0, 0, 1, 1, 1], [0], [0]>} : vector<32x8x32xf32>, vector<32x8x32xf32>, vector<32x8x8xf32> -> vector<32x8x8xf32>
    "tpu.trace_stop"() : () -> ()
    %cst_11 = arith.constant 0.353553385 : f32
    %31 = vector.broadcast %cst_11 : f32 to vector<32x8x8xf32>
    %32 = arith.mulf %30, %31 : vector<32x8x8xf32>
    %cst_12 = arith.constant dense<0xFF800000> : vector<32x8xf32>
    %33 = vector.multi_reduction <maximumf>, %32, %cst_12 [2] : vector<32x8x8xf32> to vector<32x8xf32>
    %34 = vector.shape_cast %33 : vector<32x8xf32> to vector<32x8x1xf32>
    %35 = vector.broadcast %34 : vector<32x8x1xf32> to vector<32x8x8xf32>
    %36 = arith.subf %32, %35 : vector<32x8x8xf32>
    %37 = math.exp %36 : vector<32x8x8xf32>
    %cst_13 = arith.constant dense<0.000000e+00> : vector<32x8xf32>
    %38 = vector.multi_reduction <add>, %37, %cst_13 [2] : vector<32x8x8xf32> to vector<32x8xf32>
    %39 = vector.shape_cast %38 : vector<32x8xf32> to vector<32x8x1xf32>
    %40 = tpu.reciprocal %39 : vector<32x8x1xf32> -> vector<32x8x1xf32>
    %41 = vector.broadcast %40 : vector<32x8x1xf32> to vector<32x8x8xf32>
    %42 = arith.mulf %37, %41 : vector<32x8x8xf32>
    "tpu.trace_start"() <{level = 10 : i32, message = "bts,bsf->btf"}> : () -> ()
    %cst_14 = arith.constant dense<0.000000e+00> : vector<32x8x32xf32>
    %43 = tpu.matmul %42, %17, %cst_14 {dimension_numbers = #tpu.dot_dimension_numbers<[2], [1], [1], [2], [0, 0, 0, 1, 1, 2], [0], [0]>} : vector<32x8x8xf32>, vector<32x8x32xf32>, vector<32x8x32xf32> -> vector<32x8x32xf32>
    "tpu.trace_stop"() : () -> ()
    %44 = vector.broadcast %27 : vector<1x1x32xf32> to vector<32x8x32xf32>
    %45 = arith.mulf %43, %44 : vector<32x8x32xf32>
    %46 = arith.addf %19, %45 : vector<32x8x32xf32>
    %c8_i32_15 = arith.constant 8 : i32
    %47 = vector.broadcast %c8_i32_15 : i32 to vector<1x1x32xi32>
    %48 = arith.cmpi sge, %18, %47 : vector<1x1x32xi32>
    %c16_i32 = arith.constant 16 : i32
    %49 = vector.broadcast %c16_i32 : i32 to vector<1x1x32xi32>
    %50 = arith.cmpi slt, %18, %49 : vector<1x1x32xi32>
    %51 = arith.andi %48, %50 : vector<1x1x32xi1>
    %cst_16 = arith.constant 1.000000e+00 : f32
    %cst_17 = arith.constant 0.000000e+00 : f32
    %52 = vector.broadcast %cst_16 : f32 to vector<1x1x32xf32>
    %53 = vector.broadcast %cst_17 : f32 to vector<1x1x32xf32>
    %54 = arith.select %51, %52, %53 : vector<1x1x32xi1>, vector<1x1x32xf32>
    %55 = vector.broadcast %54 : vector<1x1x32xf32> to vector<32x8x32xf32>
    %56 = arith.mulf %13, %55 : vector<32x8x32xf32>
    "tpu.trace_start"() <{level = 10 : i32, message = "btf,bsf->bts"}> : () -> ()
    %cst_18 = arith.constant dense<0.000000e+00> : vector<32x8x8xf32>
    %57 = tpu.matmul %56, %15, %cst_18 {dimension_numbers = #tpu.dot_dimension_numbers<[2], [2], [1], [1], [0, 0, 0, 1, 1, 1], [0], [0]>} : vector<32x8x32xf32>, vector<32x8x32xf32>, vector<32x8x8xf32> -> vector<32x8x8xf32>
    "tpu.trace_stop"() : () -> ()
    %cst_19 = arith.constant 0.353553385 : f32
    %58 = vector.broadcast %cst_19 : f32 to vector<32x8x8xf32>
    %59 = arith.mulf %57, %58 : vector<32x8x8xf32>
    %cst_20 = arith.constant dense<0xFF800000> : vector<32x8xf32>
    %60 = vector.multi_reduction <maximumf>, %59, %cst_20 [2] : vector<32x8x8xf32> to vector<32x8xf32>
    %61 = vector.shape_cast %60 : vector<32x8xf32> to vector<32x8x1xf32>
    %62 = vector.broadcast %61 : vector<32x8x1xf32> to vector<32x8x8xf32>
    %63 = arith.subf %59, %62 : vector<32x8x8xf32>
    %64 = math.exp %63 : vector<32x8x8xf32>
    %cst_21 = arith.constant dense<0.000000e+00> : vector<32x8xf32>
    %65 = vector.multi_reduction <add>, %64, %cst_21 [2] : vector<32x8x8xf32> to vector<32x8xf32>
    %66 = vector.shape_cast %65 : vector<32x8xf32> to vector<32x8x1xf32>
    %67 = tpu.reciprocal %66 : vector<32x8x1xf32> -> vector<32x8x1xf32>
    %68 = vector.broadcast %67 : vector<32x8x1xf32> to vector<32x8x8xf32>
    %69 = arith.mulf %64, %68 : vector<32x8x8xf32>
    "tpu.trace_start"() <{level = 10 : i32, message = "bts,bsf->btf"}> : () -> ()
    %cst_22 = arith.constant dense<0.000000e+00> : vector<32x8x32xf32>
    %70 = tpu.matmul %69, %17, %cst_22 {dimension_numbers = #tpu.dot_dimension_numbers<[2], [1], [1], [2], [0, 0, 0, 1, 1, 2], [0], [0]>} : vector<32x8x8xf32>, vector<32x8x32xf32>, vector<32x8x32xf32> -> vector<32x8x32xf32>
    "tpu.trace_stop"() : () -> ()
    %71 = vector.broadcast %54 : vector<1x1x32xf32> to vector<32x8x32xf32>
    %72 = arith.mulf %70, %71 : vector<32x8x32xf32>
    %73 = arith.addf %46, %72 : vector<32x8x32xf32>
    %c16_i32_23 = arith.constant 16 : i32
    %74 = vector.broadcast %c16_i32_23 : i32 to vector<1x1x32xi32>
    %75 = arith.cmpi sge, %18, %74 : vector<1x1x32xi32>
    %c24_i32 = arith.constant 24 : i32
    %76 = vector.broadcast %c24_i32 : i32 to vector<1x1x32xi32>
    %77 = arith.cmpi slt, %18, %76 : vector<1x1x32xi32>
    %78 = arith.andi %75, %77 : vector<1x1x32xi1>
    %cst_24 = arith.constant 1.000000e+00 : f32
    %cst_25 = arith.constant 0.000000e+00 : f32
    %79 = vector.broadcast %cst_24 : f32 to vector<1x1x32xf32>
    %80 = vector.broadcast %cst_25 : f32 to vector<1x1x32xf32>
    %81 = arith.select %78, %79, %80 : vector<1x1x32xi1>, vector<1x1x32xf32>
    %82 = vector.broadcast %81 : vector<1x1x32xf32> to vector<32x8x32xf32>
    %83 = arith.mulf %13, %82 : vector<32x8x32xf32>
    "tpu.trace_start"() <{level = 10 : i32, message = "btf,bsf->bts"}> : () -> ()
    %cst_26 = arith.constant dense<0.000000e+00> : vector<32x8x8xf32>
    %84 = tpu.matmul %83, %15, %cst_26 {dimension_numbers = #tpu.dot_dimension_numbers<[2], [2], [1], [1], [0, 0, 0, 1, 1, 1], [0], [0]>} : vector<32x8x32xf32>, vector<32x8x32xf32>, vector<32x8x8xf32> -> vector<32x8x8xf32>
    "tpu.trace_stop"() : () -> ()
    %cst_27 = arith.constant 0.353553385 : f32
    %85 = vector.broadcast %cst_27 : f32 to vector<32x8x8xf32>
    %86 = arith.mulf %84, %85 : vector<32x8x8xf32>
    %cst_28 = arith.constant dense<0xFF800000> : vector<32x8xf32>
    %87 = vector.multi_reduction <maximumf>, %86, %cst_28 [2] : vector<32x8x8xf32> to vector<32x8xf32>
    %88 = vector.shape_cast %87 : vector<32x8xf32> to vector<32x8x1xf32>
    %89 = vector.broadcast %88 : vector<32x8x1xf32> to vector<32x8x8xf32>
    %90 = arith.subf %86, %89 : vector<32x8x8xf32>
    %91 = math.exp %90 : vector<32x8x8xf32>
    %cst_29 = arith.constant dense<0.000000e+00> : vector<32x8xf32>
    %92 = vector.multi_reduction <add>, %91, %cst_29 [2] : vector<32x8x8xf32> to vector<32x8xf32>
    %93 = vector.shape_cast %92 : vector<32x8xf32> to vector<32x8x1xf32>
    %94 = tpu.reciprocal %93 : vector<32x8x1xf32> -> vector<32x8x1xf32>
    %95 = vector.broadcast %94 : vector<32x8x1xf32> to vector<32x8x8xf32>
    %96 = arith.mulf %91, %95 : vector<32x8x8xf32>
    "tpu.trace_start"() <{level = 10 : i32, message = "bts,bsf->btf"}> : () -> ()
    %cst_30 = arith.constant dense<0.000000e+00> : vector<32x8x32xf32>
    %97 = tpu.matmul %96, %17, %cst_30 {dimension_numbers = #tpu.dot_dimension_numbers<[2], [1], [1], [2], [0, 0, 0, 1, 1, 2], [0], [0]>} : vector<32x8x8xf32>, vector<32x8x32xf32>, vector<32x8x32xf32> -> vector<32x8x32xf32>
    "tpu.trace_stop"() : () -> ()
    %98 = vector.broadcast %81 : vector<1x1x32xf32> to vector<32x8x32xf32>
    %99 = arith.mulf %97, %98 : vector<32x8x32xf32>
    %100 = arith.addf %73, %99 : vector<32x8x32xf32>
    %c24_i32_31 = arith.constant 24 : i32
    %101 = vector.broadcast %c24_i32_31 : i32 to vector<1x1x32xi32>
    %102 = arith.cmpi sge, %18, %101 : vector<1x1x32xi32>
    %c32_i32 = arith.constant 32 : i32
    %103 = vector.broadcast %c32_i32 : i32 to vector<1x1x32xi32>
    %104 = arith.cmpi slt, %18, %103 : vector<1x1x32xi32>
    %105 = arith.andi %102, %104 : vector<1x1x32xi1>
    %cst_32 = arith.constant 1.000000e+00 : f32
    %cst_33 = arith.constant 0.000000e+00 : f32
    %106 = vector.broadcast %cst_32 : f32 to vector<1x1x32xf32>
    %107 = vector.broadcast %cst_33 : f32 to vector<1x1x32xf32>
    %108 = arith.select %105, %106, %107 : vector<1x1x32xi1>, vector<1x1x32xf32>
    %109 = vector.broadcast %108 : vector<1x1x32xf32> to vector<32x8x32xf32>
    %110 = arith.mulf %13, %109 : vector<32x8x32xf32>
    "tpu.trace_start"() <{level = 10 : i32, message = "btf,bsf->bts"}> : () -> ()
    %cst_34 = arith.constant dense<0.000000e+00> : vector<32x8x8xf32>
    %111 = tpu.matmul %110, %15, %cst_34 {dimension_numbers = #tpu.dot_dimension_numbers<[2], [2], [1], [1], [0, 0, 0, 1, 1, 1], [0], [0]>} : vector<32x8x32xf32>, vector<32x8x32xf32>, vector<32x8x8xf32> -> vector<32x8x8xf32>
    "tpu.trace_stop"() : () -> ()
    %cst_35 = arith.constant 0.353553385 : f32
    %112 = vector.broadcast %cst_35 : f32 to vector<32x8x8xf32>
    %113 = arith.mulf %111, %112 : vector<32x8x8xf32>
    %cst_36 = arith.constant dense<0xFF800000> : vector<32x8xf32>
    %114 = vector.multi_reduction <maximumf>, %113, %cst_36 [2] : vector<32x8x8xf32> to vector<32x8xf32>
    %115 = vector.shape_cast %114 : vector<32x8xf32> to vector<32x8x1xf32>
    %116 = vector.broadcast %115 : vector<32x8x1xf32> to vector<32x8x8xf32>
    %117 = arith.subf %113, %116 : vector<32x8x8xf32>
    %118 = math.exp %117 : vector<32x8x8xf32>
    %cst_37 = arith.constant dense<0.000000e+00> : vector<32x8xf32>
    %119 = vector.multi_reduction <add>, %118, %cst_37 [2] : vector<32x8x8xf32> to vector<32x8xf32>
    %120 = vector.shape_cast %119 : vector<32x8xf32> to vector<32x8x1xf32>
    %121 = tpu.reciprocal %120 : vector<32x8x1xf32> -> vector<32x8x1xf32>
    %122 = vector.broadcast %121 : vector<32x8x1xf32> to vector<32x8x8xf32>
    %123 = arith.mulf %118, %122 : vector<32x8x8xf32>
    "tpu.trace_start"() <{level = 10 : i32, message = "bts,bsf->btf"}> : () -> ()
    %cst_38 = arith.constant dense<0.000000e+00> : vector<32x8x32xf32>
    %124 = tpu.matmul %123, %17, %cst_38 {dimension_numbers = #tpu.dot_dimension_numbers<[2], [1], [1], [2], [0, 0, 0, 1, 1, 2], [0], [0]>} : vector<32x8x8xf32>, vector<32x8x32xf32>, vector<32x8x32xf32> -> vector<32x8x32xf32>
    "tpu.trace_stop"() : () -> ()
    %125 = vector.broadcast %108 : vector<1x1x32xf32> to vector<32x8x32xf32>
    %126 = arith.mulf %124, %125 : vector<32x8x32xf32>
    %127 = arith.addf %100, %126 : vector<32x8x32xf32>
    %128 = vector.shape_cast %127 : vector<32x8x32xf32> to vector<256x32xf32>
    %c0_39 = arith.constant 0 : index
    %c0_40 = arith.constant 0 : index
    %129 = vector.load %arg4[%c0_39, %c0_40] : memref<32x32xf32, #tpu.memory_space<vmem>>, vector<32x32xf32>
    %cst_41 = arith.constant dense<0.000000e+00> : vector<256x32xf32>
    %130 = tpu.matmul %128, %129, %cst_41 {dimension_numbers = #tpu.dot_dimension_numbers<[1], [0], [0], [1], [0, 0, 1, 1], [], []>} : vector<256x32xf32>, vector<32x32xf32>, vector<256x32xf32> -> vector<256x32xf32>
    %c0_42 = arith.constant 0 : index
    %c0_43 = arith.constant 0 : index
    %131 = vector.load %arg5[%c0_42, %c0_43] : memref<1x32xf32, #tpu.memory_space<vmem>>, vector<1x32xf32>
    %132 = vector.broadcast %131 : vector<1x32xf32> to vector<256x32xf32>
    %133 = arith.addf %130, %132 : vector<256x32xf32>
    %134 = math.tanh %133 : vector<256x32xf32>
    %135 = vector.shape_cast %134 : vector<256x32xf32> to vector<32x8x32xf32>
    %c0_44 = arith.constant 0 : index
    %c0_45 = arith.constant 0 : index
    %136 = vector.load %arg6[%c0_44, %c0_45] : memref<1x32xf32, #tpu.memory_space<vmem>>, vector<1x32xf32>
    %137 = vector.shape_cast %136 : vector<1x32xf32> to vector<1x1x32xf32>
    %138 = vector.broadcast %137 : vector<1x1x32xf32> to vector<32x8x32xf32>
    %139 = arith.mulf %135, %138 : vector<32x8x32xf32>
    %cst_46 = arith.constant dense<0.000000e+00> : vector<32x8xf32>
    %140 = vector.multi_reduction <add>, %139, %cst_46 [2] : vector<32x8x32xf32> to vector<32x8xf32>
    %141 = vector.shape_cast %140 : vector<32x8xf32> to vector<32x8x1xf32>
    %cst_47 = arith.constant dense<0xFF800000> : vector<32x1xf32>
    %142 = vector.multi_reduction <maximumf>, %141, %cst_47 [1] : vector<32x8x1xf32> to vector<32x1xf32>
    %143 = vector.shape_cast %142 : vector<32x1xf32> to vector<32x1x1xf32>
    %144 = vector.broadcast %143 : vector<32x1x1xf32> to vector<32x8x1xf32>
    %145 = arith.subf %141, %144 : vector<32x8x1xf32>
    %146 = math.exp %145 : vector<32x8x1xf32>
    %cst_48 = arith.constant dense<0.000000e+00> : vector<32x1xf32>
    %147 = vector.multi_reduction <add>, %146, %cst_48 [1] : vector<32x8x1xf32> to vector<32x1xf32>
    %148 = vector.shape_cast %147 : vector<32x1xf32> to vector<32x1x1xf32>
    %149 = tpu.reciprocal %148 : vector<32x1x1xf32> -> vector<32x1x1xf32>
    %150 = vector.broadcast %149 : vector<32x1x1xf32> to vector<32x8x1xf32>
    %151 = arith.mulf %146, %150 : vector<32x8x1xf32>
    %152 = vector.broadcast %151 : vector<32x8x1xf32> to vector<32x8x32xf32>
    %153 = arith.mulf %152, %127 : vector<32x8x32xf32>
    %cst_49 = arith.constant dense<0.000000e+00> : vector<32x32xf32>
    %154 = vector.multi_reduction <add>, %153, %cst_49 [1] : vector<32x8x32xf32> to vector<32x32xf32>
    %155 = tpu.iota {dimensions = array<i32: 0>} : vector<8x32xi32>
    %156 = tpu.iota {dimensions = array<i32: 1>} : vector<8x32xi32>
    %c4_i32 = arith.constant 4 : i32
    %157 = vector.broadcast %c4_i32 : i32 to vector<8x32xi32>
    %158 = arith.muli %157, %155 : vector<8x32xi32>
    %c0_i32_50 = arith.constant 0 : i32
    %159 = vector.broadcast %c0_i32_50 : i32 to vector<8x32xi32>
    %160 = arith.addi %158, %159 : vector<8x32xi32>
    %161 = arith.cmpi eq, %156, %160 : vector<8x32xi32>
    %cst_51 = arith.constant 1.000000e+00 : f32
    %cst_52 = arith.constant 0.000000e+00 : f32
    %162 = vector.broadcast %cst_51 : f32 to vector<8x32xf32>
    %163 = vector.broadcast %cst_52 : f32 to vector<8x32xf32>
    %164 = arith.select %161, %162, %163 : vector<8x32xi1>, vector<8x32xf32>
    %cst_53 = arith.constant dense<0.000000e+00> : vector<8x32xf32>
    %165 = tpu.matmul %164, %154, %cst_53 {dimension_numbers = #tpu.dot_dimension_numbers<[1], [0], [0], [1], [0, 0, 1, 1], [], []>} : vector<8x32xf32>, vector<32x32xf32>, vector<8x32xf32> -> vector<8x32xf32>
    %c4_i32_54 = arith.constant 4 : i32
    %166 = vector.broadcast %c4_i32_54 : i32 to vector<8x32xi32>
    %167 = arith.muli %166, %155 : vector<8x32xi32>
    %c1_i32 = arith.constant 1 : i32
    %168 = vector.broadcast %c1_i32 : i32 to vector<8x32xi32>
    %169 = arith.addi %167, %168 : vector<8x32xi32>
    %170 = arith.cmpi eq, %156, %169 : vector<8x32xi32>
    %cst_55 = arith.constant 1.000000e+00 : f32
    %cst_56 = arith.constant 0.000000e+00 : f32
    %171 = vector.broadcast %cst_55 : f32 to vector<8x32xf32>
    %172 = vector.broadcast %cst_56 : f32 to vector<8x32xf32>
    %173 = arith.select %170, %171, %172 : vector<8x32xi1>, vector<8x32xf32>
    %cst_57 = arith.constant dense<0.000000e+00> : vector<8x32xf32>
    %174 = tpu.matmul %173, %154, %cst_57 {dimension_numbers = #tpu.dot_dimension_numbers<[1], [0], [0], [1], [0, 0, 1, 1], [], []>} : vector<8x32xf32>, vector<32x32xf32>, vector<8x32xf32> -> vector<8x32xf32>
    %c4_i32_58 = arith.constant 4 : i32
    %175 = vector.broadcast %c4_i32_58 : i32 to vector<8x32xi32>
    %176 = arith.muli %175, %155 : vector<8x32xi32>
    %c2_i32 = arith.constant 2 : i32
    %177 = vector.broadcast %c2_i32 : i32 to vector<8x32xi32>
    %178 = arith.addi %176, %177 : vector<8x32xi32>
    %179 = arith.cmpi eq, %156, %178 : vector<8x32xi32>
    %cst_59 = arith.constant 1.000000e+00 : f32
    %cst_60 = arith.constant 0.000000e+00 : f32
    %180 = vector.broadcast %cst_59 : f32 to vector<8x32xf32>
    %181 = vector.broadcast %cst_60 : f32 to vector<8x32xf32>
    %182 = arith.select %179, %180, %181 : vector<8x32xi1>, vector<8x32xf32>
    %cst_61 = arith.constant dense<0.000000e+00> : vector<8x32xf32>
    %183 = tpu.matmul %182, %154, %cst_61 {dimension_numbers = #tpu.dot_dimension_numbers<[1], [0], [0], [1], [0, 0, 1, 1], [], []>} : vector<8x32xf32>, vector<32x32xf32>, vector<8x32xf32> -> vector<8x32xf32>
    %c4_i32_62 = arith.constant 4 : i32
    %184 = vector.broadcast %c4_i32_62 : i32 to vector<8x32xi32>
    %185 = arith.muli %184, %155 : vector<8x32xi32>
    %c3_i32 = arith.constant 3 : i32
    %186 = vector.broadcast %c3_i32 : i32 to vector<8x32xi32>
    %187 = arith.addi %185, %186 : vector<8x32xi32>
    %188 = arith.cmpi eq, %156, %187 : vector<8x32xi32>
    %cst_63 = arith.constant 1.000000e+00 : f32
    %cst_64 = arith.constant 0.000000e+00 : f32
    %189 = vector.broadcast %cst_63 : f32 to vector<8x32xf32>
    %190 = vector.broadcast %cst_64 : f32 to vector<8x32xf32>
    %191 = arith.select %188, %189, %190 : vector<8x32xi1>, vector<8x32xf32>
    %cst_65 = arith.constant dense<0.000000e+00> : vector<8x32xf32>
    %192 = tpu.matmul %191, %154, %cst_65 {dimension_numbers = #tpu.dot_dimension_numbers<[1], [0], [0], [1], [0, 0, 1, 1], [], []>} : vector<8x32xf32>, vector<32x32xf32>, vector<8x32xf32> -> vector<8x32xf32>
    %193 = tpu.concatenate %165, %174, %183, %192 in 1 : vector<8x32xf32>, vector<8x32xf32>, vector<8x32xf32>, vector<8x32xf32> -> vector<8x128xf32>
    %c0_66 = arith.constant 0 : index
    %c0_67 = arith.constant 0 : index
    %194 = vector.load %arg7[%c0_66, %c0_67] : memref<8x128xf32, #tpu.memory_space<vmem>>, vector<8x128xf32>
    tpu.vector_store %arg7[%c0_66, %c0_67], %193 {strides = array<i32>} : memref<8x128xf32, #tpu.memory_space<vmem>>, vector<8x128xf32>,
    return
  }
  func.func @transform_0(%arg0: i32) -> (i32, i32) {
    %c0_i32 = arith.constant 0 : i32
    %c0_i32_0 = arith.constant 0 : i32
    return %arg0, %c0_i32 : i32, i32
  }
  func.func @transform_1(%arg0: i32) -> (i32, i32) {
    %c0_i32 = arith.constant 0 : i32
    %c0_i32_0 = arith.constant 0 : i32
    %c0_i32_1 = arith.constant 0 : i32
    return %c0_i32, %c0_i32_0 : i32, i32
  }
  func.func @transform_2(%arg0: i32) -> (i32, i32) {
    %c0_i32 = arith.constant 0 : i32
    %c0_i32_0 = arith.constant 0 : i32
    %c0_i32_1 = arith.constant 0 : i32
    return %c0_i32, %c0_i32_0 : i32, i32
  }
  func.func @transform_3(%arg0: i32) -> (i32, i32) {
    %c0_i32 = arith.constant 0 : i32
    %c0_i32_0 = arith.constant 0 : i32
    %c0_i32_1 = arith.constant 0 : i32
    return %c0_i32, %c0_i32_0 : i32, i32
  }
  func.func @transform_4(%arg0: i32) -> (i32, i32) {
    %c0_i32 = arith.constant 0 : i32
    %c0_i32_0 = arith.constant 0 : i32
    %c0_i32_1 = arith.constant 0 : i32
    return %c0_i32, %c0_i32_0 : i32, i32
  }
  func.func @transform_5(%arg0: i32) -> (i32, i32) {
    %c0_i32 = arith.constant 0 : i32
    %c0_i32_0 = arith.constant 0 : i32
    %c0_i32_1 = arith.constant 0 : i32
    return %c0_i32, %c0_i32_0 : i32, i32
  }
  func.func @transform_6(%arg0: i32) -> (i32, i32) {
    %c0_i32 = arith.constant 0 : i32
    %c0_i32_0 = arith.constant 0 : i32
    return %arg0, %c0_i32 : i32, i32
  }
}

</mosaic_0001>

<llo_original>
// kernel: title_encoder_forward.1
$region0: #{title_encoder_forward.1}
  #allocation0 [shape = 'u32[]', space=smem, size = 0x4, offset = 0x4, fixed_abs, tag = 'smem constant byte address 0x4 - core index']
  #allocation1 [shape = 'u32[72,128]{1,0:T(1,128)}', space=vmem, size = 0x9000, scoped, tag = 'internal scratch']
  %s0 = inlined_call_operand.vmem [shape: s32[256,1], index: 0, kind: input, shape index: {}]
  %s1 = inlined_call_operand.vmem [shape: f32[50,96], index: 1, kind: input, shape index: {}]
  %s2 = inlined_call_operand.vmem [shape: f32[1,96], index: 2, kind: input, shape index: {}]
  %s3 = inlined_call_operand.vmem [shape: f32[32,32], index: 3, kind: input, shape index: {}]
  %s4 = inlined_call_operand.vmem [shape: f32[1,32], index: 4, kind: input, shape index: {}]
  %s5 = inlined_call_operand.vmem [shape: f32[1,32], index: 5, kind: input, shape index: {}]
  %s6 = inlined_call_operand.vmem [shape: f32[8,128], index: 6, kind: output, shape index: {}]
  %s7 = sld [smem:[#allocation0]]
  $region34: #{title_encoder_forward.1} parent=0
    _
  %s9 = ssub.s32 1, %s7
  %s10 = scalar_select 0, %s9, %s7
  // Predicated region
  $region2: #{title_encoder_forward.1} parent=0 // pred_check
    _
  $region3: #{title_encoder_forward.1} parent=0 // pred_check_branch
    %12 = sbr.rel (0) target = $region5
  $region4: #{title_encoder_forward.1} parent=0 // pred_region
    _
  $region5: #{title_encoder_forward.1} parent=0 // pred_fallthru
    _
  // Predicated region
  $region6: #{title_encoder_forward.1} parent=0 // pred_check
    _
  $region7: #{title_encoder_forward.1} parent=0 // pred_check_branch
    %14 = sbr.rel (0) target = $region9
  $region8: #{title_encoder_forward.1} parent=0 // pred_region
    _
  $region9: #{title_encoder_forward.1} parent=0 // pred_fallthru
    _
  // Predicated region
  $region10: #{title_encoder_forward.1} parent=0 // pred_check
    _
  $region11: #{title_encoder_forward.1} parent=0 // pred_check_branch
    %16 = sbr.rel (0) target = $region13
  $region12: #{title_encoder_forward.1} parent=0 // pred_region
    _
  $region13: #{title_encoder_forward.1} parent=0 // pred_fallthru
    _
  // Predicated region
  $region14: #{title_encoder_forward.1} parent=0 // pred_check
    _
  $region15: #{title_encoder_forward.1} parent=0 // pred_check_branch
    %18 = sbr.rel (0) target = $region17
  $region16: #{title_encoder_forward.1} parent=0 // pred_region
    _
  $region17: #{title_encoder_forward.1} parent=0 // pred_fallthru
    _
  // Predicated region
  $region18: #{title_encoder_forward.1} parent=0 // pred_check
    _
  $region19: #{title_encoder_forward.1} parent=0 // pred_check_branch
    %20 = sbr.rel (0) target = $region21
  $region20: #{title_encoder_forward.1} parent=0 // pred_region
    _
  $region21: #{title_encoder_forward.1} parent=0 // pred_fallthru
    _
  // Predicated region
  $region22: #{title_encoder_forward.1} parent=0 // pred_check
    _
  $region23: #{title_encoder_forward.1} parent=0 // pred_check_branch
    %22 = sbr.rel (0) target = $region25
  $region24: #{title_encoder_forward.1} parent=0 // pred_region
    _
  $region25: #{title_encoder_forward.1} parent=0 // pred_fallthru
    _
  %v23 = vld [vmem:[%s0] sm:$0xff]
  %v24 = vld [vmem:[%s0 + $0x8] sm:$0xff]
  %v25 = vld [vmem:[%s0 + $0x10] sm:$0xff]
  %v26 = vld [vmem:[%s0 + $0x18] sm:$0xff]
  %v27 = vld [vmem:[%s0 + $0x20] sm:$0xff]
  %v28 = vld [vmem:[%s0 + $0x28] sm:$0xff]
  %v29 = vld [vmem:[%s0 + $0x30] sm:$0xff]
  %v30 = vld [vmem:[%s0 + $0x38] sm:$0xff]
  %v31 = vld [vmem:[%s0 + $0x40] sm:$0xff]
  %v32 = vld [vmem:[%s0 + $0x48] sm:$0xff]
  %v33 = vld [vmem:[%s0 + $0x50] sm:$0xff]
  %v34 = vld [vmem:[%s0 + $0x58] sm:$0xff]
  %v35 = vld [vmem:[%s0 + $0x60] sm:$0xff]
  %v36 = vld [vmem:[%s0 + $0x68] sm:$0xff]
  %v37 = vld [vmem:[%s0 + $0x70] sm:$0xff]
  %v38 = vld [vmem:[%s0 + $0x78] sm:$0xff]
  %v39 = vld [vmem:[%s0 + $0x80] sm:$0xff]
  %v40 = vld [vmem:[%s0 + $0x88] sm:$0xff]
  %v41 = vld [vmem:[%s0 + $0x90] sm:$0xff]
  %v42 = vld [vmem:[%s0 + $0x98] sm:$0xff]
  %v43 = vld [vmem:[%s0 + $0xa0] sm:$0xff]
  %v44 = vld [vmem:[%s0 + $0xa8] sm:$0xff]
  %v45 = vld [vmem:[%s0 + $0xb0] sm:$0xff]
  %v46 = vld [vmem:[%s0 + $0xb8] sm:$0xff]
  %v47 = vld [vmem:[%s0 + $0xc0] sm:$0xff]
  %v48 = vld [vmem:[%s0 + $0xc8] sm:$0xff]
  %v49 = vld [vmem:[%s0 + $0xd0] sm:$0xff]
  %v50 = vld [vmem:[%s0 + $0xd8] sm:$0xff]
  %v51 = vld [vmem:[%s0 + $0xe0] sm:$0xff]
  %v52 = vld [vmem:[%s0 + $0xe8] sm:$0xff]
  %v53 = vld [vmem:[%s0 + $0xf0] sm:$0xff]
  %v54 = vld [vmem:[%s0 + $0xf8] sm:$0xff]
  %v55 = vlaneseq
  %v56 = vand.u32 %v55, 127
  %57 = vset.pattern.permute.xlu0 0
  %58 = vperm.xlu0 %57, %v23
  %v59 = vpop.permute.xlu0 %58
  %60 = vset.pattern.permute.xlu0 0
  %61 = vperm.xlu0 %60, %v24
  %v62 = vpop.permute.xlu0 %61
  %63 = vset.pattern.permute.xlu0 0
  %64 = vperm.xlu0 %63, %v25
  %v65 = vpop.permute.xlu0 %64
  %66 = vset.pattern.permute.xlu0 0
  %67 = vperm.xlu0 %66, %v26
  %v68 = vpop.permute.xlu0 %67
  %69 = vset.pattern.permute.xlu0 0
  %70 = vperm.xlu0 %69, %v27
  %v71 = vpop.permute.xlu0 %70
  %72 = vset.pattern.permute.xlu0 0
  %73 = vperm.xlu0 %72, %v28
  %v74 = vpop.permute.xlu0 %73
  %75 = vset.pattern.permute.xlu0 0
  %76 = vperm.xlu0 %75, %v29
  %v77 = vpop.permute.xlu0 %76
  %78 = vset.pattern.permute.xlu0 0
  %79 = vperm.xlu0 %78, %v30
  %v80 = vpop.permute.xlu0 %79
  %81 = vset.pattern.permute.xlu0 0
  %82 = vperm.xlu0 %81, %v31
  %v83 = vpop.permute.xlu0 %82
  %84 = vset.pattern.permute.xlu0 0
  %85 = vperm.xlu0 %84, %v32
  %v86 = vpop.permute.xlu0 %85
  %87 = vset.pattern.permute.xlu0 0
  %88 = vperm.xlu0 %87, %v33
  %v89 = vpop.permute.xlu0 %88
  %90 = vset.pattern.permute.xlu0 0
  %91 = vperm.xlu0 %90, %v34
  %v92 = vpop.permute.xlu0 %91
  %93 = vset.pattern.permute.xlu0 0
  %94 = vperm.xlu0 %93, %v35
  %v95 = vpop.permute.xlu0 %94
  %96 = vset.pattern.permute.xlu0 0
  %97 = vperm.xlu0 %96, %v36
  %v98 = vpop.permute.xlu0 %97
  %99 = vset.pattern.permute.xlu0 0
  %100 = vperm.xlu0 %99, %v37
  %v101 = vpop.permute.xlu0 %100
  %102 = vset.pattern.permute.xlu0 0
  %103 = vperm.xlu0 %102, %v38
  %v104 = vpop.permute.xlu0 %103
  %105 = vset.pattern.permute.xlu0 0
  %106 = vperm.xlu0 %105, %v39
  %v107 = vpop.permute.xlu0 %106
  %108 = vset.pattern.permute.xlu0 0
  %109 = vperm.xlu0 %108, %v40
  %v110 = vpop.permute.xlu0 %109
  %111 = vset.pattern.permute.xlu0 0
  %112 = vperm.xlu0 %111, %v41
  %v113 = vpop.permute.xlu0 %112
  %114 = vset.pattern.permute.xlu0 0
  %115 = vperm.xlu0 %114, %v42
  %v116 = vpop.permute.xlu0 %115
  %117 = vset.pattern.permute.xlu0 0
  %118 = vperm.xlu0 %117, %v43
  %v119 = vpop.permute.xlu0 %118
  %120 = vset.pattern.permute.xlu0 0
  %121 = vperm.xlu0 %120, %v44
  %v122 = vpop.permute.xlu0 %121
  %123 = vset.pattern.permute.xlu0 0
  %124 = vperm.xlu0 %123, %v45
  %v125 = vpop.permute.xlu0 %124
  %126 = vset.pattern.permute.xlu0 0
  %127 = vperm.xlu0 %126, %v46
  %v128 = vpop.permute.xlu0 %127
  %129 = vset.pattern.permute.xlu0 0
  %130 = vperm.xlu0 %129, %v47
  %v131 = vpop.permute.xlu0 %130
  %132 = vset.pattern.permute.xlu0 0
  %133 = vperm.xlu0 %132, %v48
  %v134 = vpop.permute.xlu0 %133
  %135 = vset.pattern.permute.xlu0 0
  %136 = vperm.xlu0 %135, %v49
  %v137 = vpop.permute.xlu0 %136
  %138 = vset.pattern.permute.xlu0 0
  %139 = vperm.xlu0 %138, %v50
  %v140 = vpop.permute.xlu0 %139
  %141 = vset.pattern.permute.xlu0 0
  %142 = vperm.xlu0 %141, %v51
  %v143 = vpop.permute.xlu0 %142
  %144 = vset.pattern.permute.xlu0 0
  %145 = vperm.xlu0 %144, %v52
  %v146 = vpop.permute.xlu0 %145
  %147 = vset.pattern.permute.xlu0 0
  %148 = vperm.xlu0 %147, %v53
  %v149 = vpop.permute.xlu0 %148
  %150 = vset.pattern.permute.xlu0 0
  %151 = vperm.xlu0 %150, %v54
  %v152 = vpop.permute.xlu0 %151
  %vm153 = vcmp.eq.s32.totalorder %v56, %v59
  %vm154 = vcmp.eq.s32.totalorder %v56, %v62
  %vm155 = vcmp.eq.s32.totalorder %v56, %v65
  %vm156 = vcmp.eq.s32.totalorder %v56, %v68
  %vm157 = vcmp.eq.s32.totalorder %v56, %v71
  %vm158 = vcmp.eq.s32.totalorder %v56, %v74
  %vm159 = vcmp.eq.s32.totalorder %v56, %v77
  %vm160 = vcmp.eq.s32.totalorder %v56, %v80
  %vm161 = vcmp.eq.s32.totalorder %v56, %v83
  %vm162 = vcmp.eq.s32.totalorder %v56, %v86
  %vm163 = vcmp.eq.s32.totalorder %v56, %v89
  %vm164 = vcmp.eq.s32.totalorder %v56, %v92
  %vm165 = vcmp.eq.s32.totalorder %v56, %v95
  %vm166 = vcmp.eq.s32.totalorder %v56, %v98
  %vm167 = vcmp.eq.s32.totalorder %v56, %v101
  %vm168 = vcmp.eq.s32.totalorder %v56, %v104
  %vm169 = vcmp.eq.s32.totalorder %v56, %v107
  %vm170 = vcmp.eq.s32.totalorder %v56, %v110
  %vm171 = vcmp.eq.s32.totalorder %v56, %v113
  %vm172 = vcmp.eq.s32.totalorder %v56, %v116
  %vm173 = vcmp.eq.s32.totalorder %v56, %v119
  %vm174 = vcmp.eq.s32.totalorder %v56, %v122
  %vm175 = vcmp.eq.s32.totalorder %v56, %v125
  %vm176 = vcmp.eq.s32.totalorder %v56, %v128
  %vm177 = vcmp.eq.s32.totalorder %v56, %v131
  %vm178 = vcmp.eq.s32.totalorder %v56, %v134
  %vm179 = vcmp.eq.s32.totalorder %v56, %v137
  %vm180 = vcmp.eq.s32.totalorder %v56, %v140
  %vm181 = vcmp.eq.s32.totalorder %v56, %v143
  %vm182 = vcmp.eq.s32.totalorder %v56, %v146
  %vm183 = vcmp.eq.s32.totalorder %v56, %v149
  %vm184 = vcmp.eq.s32.totalorder %v56, %v152
  %v185 = vsel %vm153, 1.0, 0.0
  %v186 = vsel %vm154, 1.0, 0.0
  %v187 = vsel %vm155, 1.0, 0.0
  %v188 = vsel %vm156, 1.0, 0.0
  %v189 = vsel %vm157, 1.0, 0.0
  %v190 = vsel %vm158, 1.0, 0.0
  %v191 = vsel %vm159, 1.0, 0.0
  %v192 = vsel %vm160, 1.0, 0.0
  %v193 = vsel %vm161, 1.0, 0.0
  %v194 = vsel %vm162, 1.0, 0.0
  %v195 = vsel %vm163, 1.0, 0.0
  %v196 = vsel %vm164, 1.0, 0.0
  %v197 = vsel %vm165, 1.0, 0.0
  %v198 = vsel %vm166, 1.0, 0.0
  %v199 = vsel %vm167, 1.0, 0.0
  %v200 = vsel %vm168, 1.0, 0.0
  %v201 = vsel %vm169, 1.0, 0.0
  %v202 = vsel %vm170, 1.0, 0.0
  %v203 = vsel %vm171, 1.0, 0.0
  %v204 = vsel %vm172, 1.0, 0.0
  %v205 = vsel %vm173, 1.0, 0.0
  %v206 = vsel %vm174, 1.0, 0.0
  %v207 = vsel %vm175, 1.0, 0.0
  %v208 = vsel %vm176, 1.0, 0.0
  %v209 = vsel %vm177, 1.0, 0.0
  %v210 = vsel %vm178, 1.0, 0.0
  %v211 = vsel %vm179, 1.0, 0.0
  %v212 = vsel %vm180, 1.0, 0.0
  %v213 = vsel %vm181, 1.0, 0.0
  %v214 = vsel %vm182, 1.0, 0.0
  %v215 = vsel %vm183, 1.0, 0.0
  %v216 = vsel %vm184, 1.0, 0.0
  %v217 = vld [vmem:[%s1] sm:$0xff]
  %v218 = vld [vmem:[%s1 + $0x8] sm:$0xff]
  %v219 = vld [vmem:[%s1 + $0x10] sm:$0xff]
  %v220 = vld [vmem:[%s1 + $0x18] sm:$0xff]
  %v221 = vld [vmem:[%s1 + $0x20] sm:$0xff]
  %v222 = vld [vmem:[%s1 + $0x28] sm:$0xff]
  %v223 = vld [vmem:[%s1 + $0x30] sm:$0x3]
  %v224 = vld [vmem:[%s2] sm:$0x1]
  %v226 = vperm.slane %v224, 0
  %vm228 = vcmask 408576
  %v230 = vsel %vm228, %v185, 0
  %v233 = vsel %vm228, %v186, 0
  %v236 = vsel %vm228, %v187, 0
  %v239 = vsel %vm228, %v188, 0
  %v242 = vsel %vm228, %v189, 0
  %v245 = vsel %vm228, %v190, 0
  %v248 = vsel %vm228, %v191, 0
  %v251 = vsel %vm228, %v192, 0
  %v254 = vsel %vm228, %v193, 0
  %v257 = vsel %vm228, %v194, 0
  %v260 = vsel %vm228, %v195, 0
  %v263 = vsel %vm228, %v196, 0
  %v266 = vsel %vm228, %v197, 0
  %v269 = vsel %vm228, %v198, 0
  %v272 = vsel %vm228, %v199, 0
  %v275 = vsel %vm228, %v200, 0
  %v278 = vsel %vm228, %v201, 0
  %v281 = vsel %vm228, %v202, 0
  %v284 = vsel %vm228, %v203, 0
  %v287 = vsel %vm228, %v204, 0
  %v290 = vsel %vm228, %v205, 0
  %v293 = vsel %vm228, %v206, 0
  %v296 = vsel %vm228, %v207, 0
  %v299 = vsel %vm228, %v208, 0
  %v302 = vsel %vm228, %v209, 0
  %v305 = vsel %vm228, %v210, 0
  %v308 = vsel %vm228, %v211, 0
  %v311 = vsel %vm228, %v212, 0
  %v314 = vsel %vm228, %v213, 0
  %v317 = vsel %vm228, %v214, 0
  %v320 = vsel %vm228, %v215, 0
  %v323 = vsel %vm228, %v216, 0
  %vm325 = vcmask 1041408
  %v327 = vsel %vm325, %v223, 0
  %329 = vmatpush.msra.mxu0 0.0
  %330 = vmatpush.msra.mxu0 0.0
  %331 = vmatpush.msra.mxu0 0.0
  %332 = vmatpush.msra.mxu0 0.0
  %333 = vmatpush.msra.mxu0 0.0
  %334 = vmatpush.msra.mxu0 0.0
  %335 = vmatpush.msra.mxu0 0.0
  %336 = vmatpush.msra.mxu0 0.0
  %337 = vmatpush.msra.mxu0 0.0
  %338 = vmatpush.msra.mxu0 %v327
  %339 = vmatpush.msra.mxu0 %v222
  %340 = vmatpush.msra.mxu0 %v221
  %341 = vmatpush.msra.mxu0 %v220
  %342 = vmatpush.msra.mxu0 %v219
  %343 = vmatpush.msra.mxu0 %v218
  %344 = vmatpush.msra.mxu0 %v217
  %345 = vmatmul.f32.gmra.mxu0 %v230
  %v346 = vpop.f32.mrf.mxu0
  %v347 = vadd.f32 %v226, %v346
  %348 = vmatmul.f32.gmra.mxu0 %v233
  %v349 = vpop.f32.mrf.mxu0
  %v350 = vadd.f32 %v226, %v349
  %351 = vmatmul.f32.gmra.mxu0 %v236
  %v352 = vpop.f32.mrf.mxu0
  %v353 = vadd.f32 %v226, %v352
  %354 = vmatmul.f32.gmra.mxu0 %v239
  %v355 = vpop.f32.mrf.mxu0
  %v356 = vadd.f32 %v226, %v355
  %357 = vmatmul.f32.gmra.mxu0 %v242
  %v358 = vpop.f32.mrf.mxu0
  %v359 = vadd.f32 %v226, %v358
  %360 = vmatmul.f32.gmra.mxu0 %v245
  %v361 = vpop.f32.mrf.mxu0
  %v362 = vadd.f32 %v226, %v361
  %363 = vmatmul.f32.gmra.mxu0 %v248
  %v364 = vpop.f32.mrf.mxu0
  %v365 = vadd.f32 %v226, %v364
  %366 = vmatmul.f32.gmra.mxu0 %v251
  %v367 = vpop.f32.mrf.mxu0
  %v368 = vadd.f32 %v226, %v367
  %369 = vmatmul.f32.gmra.mxu0 %v254
  %v370 = vpop.f32.mrf.mxu0
  %v371 = vadd.f32 %v226, %v370
  %372 = vmatmul.f32.gmra.mxu0 %v257
  %v373 = vpop.f32.mrf.mxu0
  %v374 = vadd.f32 %v226, %v373
  %375 = vmatmul.f32.gmra.mxu0 %v260
  %v376 = vpop.f32.mrf.mxu0
  %v377 = vadd.f32 %v226, %v376
  %378 = vmatmul.f32.gmra.mxu0 %v263
  %v379 = vpop.f32.mrf.mxu0
  %v380 = vadd.f32 %v226, %v379
  %381 = vmatmul.f32.gmra.mxu0 %v266
  %v382 = vpop.f32.mrf.mxu0
  %v383 = vadd.f32 %v226, %v382
  %384 = vmatmul.f32.gmra.mxu0 %v269
  %v385 = vpop.f32.mrf.mxu0
  %v386 = vadd.f32 %v226, %v385
  %387 = vmatmul.f32.gmra.mxu0 %v272
  %v388 = vpop.f32.mrf.mxu0
  %v389 = vadd.f32 %v226, %v388
  %390 = vmatmul.f32.gmra.mxu0 %v275
  %v391 = vpop.f32.mrf.mxu0
  %v392 = vadd.f32 %v226, %v391
  %393 = vmatmul.f32.gmra.mxu0 %v278
  %v394 = vpop.f32.mrf.mxu0
  %v395 = vadd.f32 %v226, %v394
  %396 = vmatmul.f32.gmra.mxu0 %v281
  %v397 = vpop.f32.mrf.mxu0
  %v398 = vadd.f32 %v226, %v397
  %399 = vmatmul.f32.gmra.mxu0 %v284
  %v400 = vpop.f32.mrf.mxu0
  %v401 = vadd.f32 %v226, %v400
  %402 = vmatmul.f32.gmra.mxu0 %v287
  %v403 = vpop.f32.mrf.mxu0
  %v404 = vadd.f32 %v226, %v403
  %405 = vmatmul.f32.gmra.mxu0 %v290
  %v406 = vpop.f32.mrf.mxu0
  %v407 = vadd.f32 %v226, %v406
  %408 = vmatmul.f32.gmra.mxu0 %v293
  %v409 = vpop.f32.mrf.mxu0
  %v410 = vadd.f32 %v226, %v409
  %411 = vmatmul.f32.gmra.mxu0 %v296
  %v412 = vpop.f32.mrf.mxu0
  %v413 = vadd.f32 %v226, %v412
  %414 = vmatmul.f32.gmra.mxu0 %v299
  %v415 = vpop.f32.mrf.mxu0
  %v416 = vadd.f32 %v226, %v415
  %417 = vmatmul.f32.gmra.mxu0 %v302
  %v418 = vpop.f32.mrf.mxu0
  %v419 = vadd.f32 %v226, %v418
  %420 = vmatmul.f32.gmra.mxu0 %v305
  %v421 = vpop.f32.mrf.mxu0
  %v422 = vadd.f32 %v226, %v421
  %423 = vmatmul.f32.gmra.mxu0 %v308
  %v424 = vpop.f32.mrf.mxu0
  %v425 = vadd.f32 %v226, %v424
  %426 = vmatmul.f32.gmra.mxu0 %v311
  %v427 = vpop.f32.mrf.mxu0
  %v428 = vadd.f32 %v226, %v427
  %429 = vmatmul.f32.gmra.mxu0 %v314
  %v430 = vpop.f32.mrf.mxu0
  %v431 = vadd.f32 %v226, %v430
  %432 = vmatmul.f32.gmra.mxu0 %v317
  %v433 = vpop.f32.mrf.mxu0
  %v434 = vadd.f32 %v226, %v433
  %435 = vmatmul.f32.gmra.mxu0 %v320
  %v436 = vpop.f32.mrf.mxu0
  %v437 = vadd.f32 %v226, %v436
  %438 = vmatmul.f32.gmra.mxu0 %v323
  %v439 = vpop.f32.mrf.mxu0
  %v440 = vadd.f32 %v226, %v439
  %441 = vdwg.mxu0
  %vm442 = vcmp.ge.s32.totalorder %v56, 0
  %vm443 = vcmp.lt.s32.totalorder %v56, 8
  %vm444 = vmand %vm442, %vm443
  %v445 = vsel %vm444, 1.0, 0.0
  %v446 = vmul.f32 %v347, %v445
  %v447 = vmul.f32 %v350, %v445
  %v448 = vmul.f32 %v353, %v445
  %v449 = vmul.f32 %v356, %v445
  %v450 = vmul.f32 %v359, %v445
  %v451 = vmul.f32 %v362, %v445
  %v452 = vmul.f32 %v365, %v445
  %v453 = vmul.f32 %v368, %v445
  %v454 = vmul.f32 %v371, %v445
  %v455 = vmul.f32 %v374, %v445
  %v456 = vmul.f32 %v377, %v445
  %v457 = vmul.f32 %v380, %v445
  %v458 = vmul.f32 %v383, %v445
  %v459 = vmul.f32 %v386, %v445
  %v460 = vmul.f32 %v389, %v445
  %v461 = vmul.f32 %v392, %v445
  %v462 = vmul.f32 %v395, %v445
  %v463 = vmul.f32 %v398, %v445
  %v464 = vmul.f32 %v401, %v445
  %v465 = vmul.f32 %v404, %v445
  %v466 = vmul.f32 %v407, %v445
  %v467 = vmul.f32 %v410, %v445
  %v468 = vmul.f32 %v413, %v445
  %v469 = vmul.f32 %v416, %v445
  %v470 = vmul.f32 %v419, %v445
  %v471 = vmul.f32 %v422, %v445
  %v472 = vmul.f32 %v425, %v445
  %v473 = vmul.f32 %v428, %v445
  %v474 = vmul.f32 %v431, %v445
  %v475 = vmul.f32 %v434, %v445
  %v476 = vmul.f32 %v437, %v445
  %v477 = vmul.f32 %v440, %v445
  %479 = vrot.lane.b32.xlu0 %v347, 96
  %v480 = vpop.permute.xlu0 %479
  %vm481 = vcmask 261120
  %v483 = vsel %vm481, %v446, 0
  %v485 = vsel %vm481, %v480, 0
  %487 = vmatpush.xpose.msra.mxu0 0.0
  %488 = vmatpush.xpose.msra.mxu0 0.0
  %489 = vmatpush.xpose.msra.mxu0 0.0
  %490 = vmatpush.xpose.msra.mxu0 0.0
  %491 = vmatpush.xpose.msra.mxu0 0.0
  %492 = vmatpush.xpose.msra.mxu0 0.0
  %493 = vmatpush.xpose.msra.mxu0 0.0
  %494 = vmatpush.xpose.msra.mxu0 0.0
  %495 = vmatpush.xpose.msra.mxu0 0.0
  %496 = vmatpush.xpose.msra.mxu0 0.0
  %497 = vmatpush.xpose.msra.mxu0 0.0
  %498 = vmatpush.xpose.msra.mxu0 0.0
  %499 = vmatpush.xpose.msra.mxu0 0.0
  %500 = vmatpush.xpose.msra.mxu0 0.0
  %501 = vmatpush.xpose.msra.mxu0 0.0
  %502 = vmatpush.xpose.msra.mxu0 %v485
  %503 = vmatmul.f32.gmra.mxu0 %v483
  %v504 = vpop.f32.mrf.mxu0
  %v505 = vadd.f32 0.0, %v504
  %506 = vdwg.mxu0
  %508 = vrot.lane.b32.xlu0 %v350, 96
  %v509 = vpop.permute.xlu0 %508
  %v511 = vsel %vm481, %v447, 0
  %v513 = vsel %vm481, %v509, 0
  %515 = vmatpush.xpose.msra.mxu0 0.0
  %516 = vmatpush.xpose.msra.mxu0 0.0
  %517 = vmatpush.xpose.msra.mxu0 0.0
  %518 = vmatpush.xpose.msra.mxu0 0.0
  %519 = vmatpush.xpose.msra.mxu0 0.0
  %520 = vmatpush.xpose.msra.mxu0 0.0
  %521 = vmatpush.xpose.msra.mxu0 0.0
  %522 = vmatpush.xpose.msra.mxu0 0.0
  %523 = vmatpush.xpose.msra.mxu0 0.0
  %524 = vmatpush.xpose.msra.mxu0 0.0
  %525 = vmatpush.xpose.msra.mxu0 0.0
  %526 = vmatpush.xpose.msra.mxu0 0.0
  %527 = vmatpush.xpose.msra.mxu0 0.0
  %528 = vmatpush.xpose.msra.mxu0 0.0
  %529 = vmatpush.xpose.msra.mxu0 0.0
  %530 = vmatpush.xpose.msra.mxu0 %v513
  %531 = vmatmul.f32.gmra.mxu0 %v511
  %v532 = vpop.f32.mrf.mxu0
  %v533 = vadd.f32 0.0, %v532
  %534 = vdwg.mxu0
  %536 = vrot.lane.b32.xlu0 %v353, 96
  %v537 = vpop.permute.xlu0 %536
  %v539 = vsel %vm481, %v448, 0
  %v541 = vsel %vm481, %v537, 0
  %543 = vmatpush.xpose.msra.mxu0 0.0
  %544 = vmatpush.xpose.msra.mxu0 0.0
  %545 = vmatpush.xpose.msra.mxu0 0.0
  %546 = vmatpush.xpose.msra.mxu0 0.0
  %547 = vmatpush.xpose.msra.mxu0 0.0
  %548 = vmatpush.xpose.msra.mxu0 0.0
  %549 = vmatpush.xpose.msra.mxu0 0.0
  %550 = vmatpush.xpose.msra.mxu0 0.0
  %551 = vmatpush.xpose.msra.mxu0 0.0
  %552 = vmatpush.xpose.msra.mxu0 0.0
  %553 = vmatpush.xpose.msra.mxu0 0.0
  %554 = vmatpush.xpose.msra.mxu0 0.0
  %555 = vmatpush.xpose.msra.mxu0 0.0
  %556 = vmatpush.xpose.msra.mxu0 0.0
  %557 = vmatpush.xpose.msra.mxu0 0.0
  %558 = vmatpush.xpose.msra.mxu0 %v541
  %559 = vmatmul.f32.gmra.mxu0 %v539
  %v560 = vpop.f32.mrf.mxu0
  %v561 = vadd.f32 0.0, %v560
  %562 = vdwg.mxu0
  %564 = vrot.lane.b32.xlu0 %v356, 96
  %v565 = vpop.permute.xlu0 %564
  %v567 = vsel %vm481, %v449, 0
  %v569 = vsel %vm481, %v565, 0
  %571 = vmatpush.xpose.msra.mxu0 0.0
  %572 = vmatpush.xpose.msra.mxu0 0.0
  %573 = vmatpush.xpose.msra.mxu0 0.0
  %574 = vmatpush.xpose.msra.mxu0 0.0
  %575 = vmatpush.xpose.msra.mxu0 0.0
  %576 = vmatpush.xpose.msra.mxu0 0.0
  %577 = vmatpush.xpose.msra.mxu0 0.0
  %578 = vmatpush.xpose.msra.mxu0 0.0
  %579 = vmatpush.xpose.msra.mxu0 0.0
  %580 = vmatpush.xpose.msra.mxu0 0.0
  %581 = vmatpush.xpose.msra.mxu0 0.0
  %582 = vmatpush.xpose.msra.mxu0 0.0
  %583 = vmatpush.xpose.msra.mxu0 0.0
  %584 = vmatpush.xpose.msra.mxu0 0.0
  %585 = vmatpush.xpose.msra.mxu0 0.0
  %586 = vmatpush.xpose.msra.mxu0 %v569
  %587 = vmatmul.f32.gmra.mxu0 %v567
  %v588 = vpop.f32.mrf.mxu0
  %v589 = vadd.f32 0.0, %v588
  %590 = vdwg.mxu0
  %592 = vrot.lane.b32.xlu0 %v359, 96
  %v593 = vpop.permute.xlu0 %592
  %v595 = vsel %vm481, %v450, 0
  %v597 = vsel %vm481, %v593, 0
  %599 = vmatpush.xpose.msra.mxu0 0.0
  %600 = vmatpush.xpose.msra.mxu0 0.0
  %601 = vmatpush.xpose.msra.mxu0 0.0
  %602 = vmatpush.xpose.msra.mxu0 0.0
  %603 = vmatpush.xpose.msra.mxu0 0.0
  %604 = vmatpush.xpose.msra.mxu0 0.0
  %605 = vmatpush.xpose.msra.mxu0 0.0
  %606 = vmatpush.xpose.msra.mxu0 0.0
  %607 = vmatpush.xpose.msra.mxu0 0.0
  %608 = vmatpush.xpose.msra.mxu0 0.0
  %609 = vmatpush.xpose.msra.mxu0 0.0
  %610 = vmatpush.xpose.msra.mxu0 0.0
  %611 = vmatpush.xpose.msra.mxu0 0.0
  %612 = vmatpush.xpose.msra.mxu0 0.0
  %613 = vmatpush.xpose.msra.mxu0 0.0
  %614 = vmatpush.xpose.msra.mxu0 %v597
  %615 = vmatmul.f32.gmra.mxu0 %v595
  %v616 = vpop.f32.mrf.mxu0
  %v617 = vadd.f32 0.0, %v616
  %618 = vdwg.mxu0
  %620 = vrot.lane.b32.xlu0 %v362, 96
  %v621 = vpop.permute.xlu0 %620
  %v623 = vsel %vm481, %v451, 0
  %v625 = vsel %vm481, %v621, 0
  %627 = vmatpush.xpose.msra.mxu0 0.0
  %628 = vmatpush.xpose.msra.mxu0 0.0
  %629 = vmatpush.xpose.msra.mxu0 0.0
  %630 = vmatpush.xpose.msra.mxu0 0.0
  %631 = vmatpush.xpose.msra.mxu0 0.0
  %632 = vmatpush.xpose.msra.mxu0 0.0
  %633 = vmatpush.xpose.msra.mxu0 0.0
  %634 = vmatpush.xpose.msra.mxu0 0.0
  %635 = vmatpush.xpose.msra.mxu0 0.0
  %636 = vmatpush.xpose.msra.mxu0 0.0
  %637 = vmatpush.xpose.msra.mxu0 0.0
  %638 = vmatpush.xpose.msra.mxu0 0.0
  %639 = vmatpush.xpose.msra.mxu0 0.0
  %640 = vmatpush.xpose.msra.mxu0 0.0
  %641 = vmatpush.xpose.msra.mxu0 0.0
  %642 = vmatpush.xpose.msra.mxu0 %v625
  %643 = vmatmul.f32.gmra.mxu0 %v623
  %v644 = vpop.f32.mrf.mxu0
  %v645 = vadd.f32 0.0, %v644
  %646 = vdwg.mxu0
  %648 = vrot.lane.b32.xlu0 %v365, 96
  %v649 = vpop.permute.xlu0 %648
  %v651 = vsel %vm481, %v452, 0
  %v653 = vsel %vm481, %v649, 0
  %655 = vmatpush.xpose.msra.mxu0 0.0
  %656 = vmatpush.xpose.msra.mxu0 0.0
  %657 = vmatpush.xpose.msra.mxu0 0.0
  %658 = vmatpush.xpose.msra.mxu0 0.0
  %659 = vmatpush.xpose.msra.mxu0 0.0
  %660 = vmatpush.xpose.msra.mxu0 0.0
  %661 = vmatpush.xpose.msra.mxu0 0.0
  %662 = vmatpush.xpose.msra.mxu0 0.0
  %663 = vmatpush.xpose.msra.mxu0 0.0
  %664 = vmatpush.xpose.msra.mxu0 0.0
  %665 = vmatpush.xpose.msra.mxu0 0.0
  %666 = vmatpush.xpose.msra.mxu0 0.0
  %667 = vmatpush.xpose.msra.mxu0 0.0
  %668 = vmatpush.xpose.msra.mxu0 0.0
  %669 = vmatpush.xpose.msra.mxu0 0.0
  %670 = vmatpush.xpose.msra.mxu0 %v653
  %671 = vmatmul.f32.gmra.mxu0 %v651
  %v672 = vpop.f32.mrf.mxu0
  %v673 = vadd.f32 0.0, %v672
  %674 = vdwg.mxu0
  %676 = vrot.lane.b32.xlu0 %v368, 96
  %v677 = vpop.permute.xlu0 %676
  %v679 = vsel %vm481, %v453, 0
  %v681 = vsel %vm481, %v677, 0
  %683 = vmatpush.xpose.msra.mxu0 0.0
  %684 = vmatpush.xpose.msra.mxu0 0.0
  %685 = vmatpush.xpose.msra.mxu0 0.0
  %686 = vmatpush.xpose.msra.mxu0 0.0
  %687 = vmatpush.xpose.msra.mxu0 0.0
  %688 = vmatpush.xpose.msra.mxu0 0.0
  %689 = vmatpush.xpose.msra.mxu0 0.0
  %690 = vmatpush.xpose.msra.mxu0 0.0
  %691 = vmatpush.xpose.msra.mxu0 0.0
  %692 = vmatpush.xpose.msra.mxu0 0.0
  %693 = vmatpush.xpose.msra.mxu0 0.0
  %694 = vmatpush.xpose.msra.mxu0 0.0
  %695 = vmatpush.xpose.msra.mxu0 0.0
  %696 = vmatpush.xpose.msra.mxu0 0.0
  %697 = vmatpush.xpose.msra.mxu0 0.0
  %698 = vmatpush.xpose.msra.mxu0 %v681
  %699 = vmatmul.f32.gmra.mxu0 %v679
  %v700 = vpop.f32.mrf.mxu0
  %v701 = vadd.f32 0.0, %v700
  %702 = vdwg.mxu0
  %704 = vrot.lane.b32.xlu0 %v371, 96
  %v705 = vpop.permute.xlu0 %704
  %v707 = vsel %vm481, %v454, 0
  %v709 = vsel %vm481, %v705, 0
  %711 = vmatpush.xpose.msra.mxu0 0.0
  %712 = vmatpush.xpose.msra.mxu0 0.0
  %713 = vmatpush.xpose.msra.mxu0 0.0
  %714 = vmatpush.xpose.msra.mxu0 0.0
  %715 = vmatpush.xpose.msra.mxu0 0.0
  %716 = vmatpush.xpose.msra.mxu0 0.0
  %717 = vmatpush.xpose.msra.mxu0 0.0
  %718 = vmatpush.xpose.msra.mxu0 0.0
  %719 = vmatpush.xpose.msra.mxu0 0.0
  %720 = vmatpush.xpose.msra.mxu0 0.0
  %721 = vmatpush.xpose.msra.mxu0 0.0
  %722 = vmatpush.xpose.msra.mxu0 0.0
  %723 = vmatpush.xpose.msra.mxu0 0.0
  %724 = vmatpush.xpose.msra.mxu0 0.0
  %725 = vmatpush.xpose.msra.mxu0 0.0
  %726 = vmatpush.xpose.msra.mxu0 %v709
  %727 = vmatmul.f32.gmra.mxu0 %v707
  %v728 = vpop.f32.mrf.mxu0
  %v729 = vadd.f32 0.0, %v728
  %730 = vdwg.mxu0
  %732 = vrot.lane.b32.xlu0 %v374, 96
  %v733 = vpop.permute.xlu0 %732
  %v735 = vsel %vm481, %v455, 0
  %v737 = vsel %vm481, %v733, 0
  %739 = vmatpush.xpose.msra.mxu0 0.0
  %740 = vmatpush.xpose.msra.mxu0 0.0
  %741 = vmatpush.xpose.msra.mxu0 0.0
  %742 = vmatpush.xpose.msra.mxu0 0.0
  %743 = vmatpush.xpose.msra.mxu0 0.0
  %744 = vmatpush.xpose.msra.mxu0 0.0
  %745 = vmatpush.xpose.msra.mxu0 0.0
  %746 = vmatpush.xpose.msra.mxu0 0.0
  %747 = vmatpush.xpose.msra.mxu0 0.0
  %748 = vmatpush.xpose.msra.mxu0 0.0
  %749 = vmatpush.xpose.msra.mxu0 0.0
  %750 = vmatpush.xpose.msra.mxu0 0.0
  %751 = vmatpush.xpose.msra.mxu0 0.0
  %752 = vmatpush.xpose.msra.mxu0 0.0
  %753 = vmatpush.xpose.msra.mxu0 0.0
  %754 = vmatpush.xpose.msra.mxu0 %v737
  %755 = vmatmul.f32.gmra.mxu0 %v735
  %v756 = vpop.f32.mrf.mxu0
  %v757 = vadd.f32 0.0, %v756
  %758 = vdwg.mxu0
  %760 = vrot.lane.b32.xlu0 %v377, 96
  %v761 = vpop.permute.xlu0 %760
  %v763 = vsel %vm481, %v456, 0
  %v765 = vsel %vm481, %v761, 0
  %767 = vmatpush.xpose.msra.mxu0 0.0
  %768 = vmatpush.xpose.msra.mxu0 0.0
  %769 = vmatpush.xpose.msra.mxu0 0.0
  %770 = vmatpush.xpose.msra.mxu0 0.0
  %771 = vmatpush.xpose.msra.mxu0 0.0
  %772 = vmatpush.xpose.msra.mxu0 0.0
  %773 = vmatpush.xpose.msra.mxu0 0.0
  %774 = vmatpush.xpose.msra.mxu0 0.0
  %775 = vmatpush.xpose.msra.mxu0 0.0
  %776 = vmatpush.xpose.msra.mxu0 0.0
  %777 = vmatpush.xpose.msra.mxu0 0.0
  %778 = vmatpush.xpose.msra.mxu0 0.0
  %779 = vmatpush.xpose.msra.mxu0 0.0
  %780 = vmatpush.xpose.msra.mxu0 0.0
  %781 = vmatpush.xpose.msra.mxu0 0.0
  %782 = vmatpush.xpose.msra.mxu0 %v765
  %783 = vmatmul.f32.gmra.mxu0 %v763
  %v784 = vpop.f32.mrf.mxu0
  %v785 = vadd.f32 0.0, %v784
  %786 = vdwg.mxu0
  %788 = vrot.lane.b32.xlu0 %v380, 96
  %v789 = vpop.permute.xlu0 %788
  %v791 = vsel %vm481, %v457, 0
  %v793 = vsel %vm481, %v789, 0
  %795 = vmatpush.xpose.msra.mxu0 0.0
  %796 = vmatpush.xpose.msra.mxu0 0.0
  %797 = vmatpush.xpose.msra.mxu0 0.0
  %798 = vmatpush.xpose.msra.mxu0 0.0
  %799 = vmatpush.xpose.msra.mxu0 0.0
  %800 = vmatpush.xpose.msra.mxu0 0.0
  %801 = vmatpush.xpose.msra.mxu0 0.0
  %802 = vmatpush.xpose.msra.mxu0 0.0
  %803 = vmatpush.xpose.msra.mxu0 0.0
  %804 = vmatpush.xpose.msra.mxu0 0.0
  %805 = vmatpush.xpose.msra.mxu0 0.0
  %806 = vmatpush.xpose.msra.mxu0 0.0
  %807 = vmatpush.xpose.msra.mxu0 0.0
  %808 = vmatpush.xpose.msra.mxu0 0.0
  %809 = vmatpush.xpose.msra.mxu0 0.0
  %810 = vmatpush.xpose.msra.mxu0 %v793
  %811 = vmatmul.f32.gmra.mxu0 %v791
  %v812 = vpop.f32.mrf.mxu0
  %v813 = vadd.f32 0.0, %v812
  %814 = vdwg.mxu0
  %816 = vrot.lane.b32.xlu0 %v383, 96
  %v817 = vpop.permute.xlu0 %816
  %v819 = vsel %vm481, %v458, 0
  %v821 = vsel %vm481, %v817, 0
  %823 = vmatpush.xpose.msra.mxu0 0.0
  %824 = vmatpush.xpose.msra.mxu0 0.0
  %825 = vmatpush.xpose.msra.mxu0 0.0
  %826 = vmatpush.xpose.msra.mxu0 0.0
  %827 = vmatpush.xpose.msra.mxu0 0.0
  %828 = vmatpush.xpose.msra.mxu0 0.0
  %829 = vmatpush.xpose.msra.mxu0 0.0
  %830 = vmatpush.xpose.msra.mxu0 0.0
  %831 = vmatpush.xpose.msra.mxu0 0.0
  %832 = vmatpush.xpose.msra.mxu0 0.0
  %833 = vmatpush.xpose.msra.mxu0 0.0
  %834 = vmatpush.xpose.msra.mxu0 0.0
  %835 = vmatpush.xpose.msra.mxu0 0.0
  %836 = vmatpush.xpose.msra.mxu0 0.0
  %837 = vmatpush.xpose.msra.mxu0 0.0
  %838 = vmatpush.xpose.msra.mxu0 %v821
  %839 = vmatmul.f32.gmra.mxu0 %v819
  %v840 = vpop.f32.mrf.mxu0
  %v841 = vadd.f32 0.0, %v840
  %842 = vdwg.mxu0
  %844 = vrot.lane.b32.xlu0 %v386, 96
  %v845 = vpop.permute.xlu0 %844
  %v847 = vsel %vm481, %v459, 0
  %v849 = vsel %vm481, %v845, 0
  %851 = vmatpush.xpose.msra.mxu0 0.0
  %852 = vmatpush.xpose.msra.mxu0 0.0
  %853 = vmatpush.xpose.msra.mxu0 0.0
  %854 = vmatpush.xpose.msra.mxu0 0.0
  %855 = vmatpush.xpose.msra.mxu0 0.0
  %856 = vmatpush.xpose.msra.mxu0 0.0
  %857 = vmatpush.xpose.msra.mxu0 0.0
  %858 = vmatpush.xpose.msra.mxu0 0.0
  %859 = vmatpush.xpose.msra.mxu0 0.0
  %860 = vmatpush.xpose.msra.mxu0 0.0
  %861 = vmatpush.xpose.msra.mxu0 0.0
  %862 = vmatpush.xpose.msra.mxu0 0.0
  %863 = vmatpush.xpose.msra.mxu0 0.0
  %864 = vmatpush.xpose.msra.mxu0 0.0
  %865 = vmatpush.xpose.msra.mxu0 0.0
  %866 = vmatpush.xpose.msra.mxu0 %v849
  %867 = vmatmul.f32.gmra.mxu0 %v847
  %v868 = vpop.f32.mrf.mxu0
  %v869 = vadd.f32 0.0, %v868
  %870 = vdwg.mxu0
  %872 = vrot.lane.b32.xlu0 %v389, 96
  %v873 = vpop.permute.xlu0 %872
  %v875 = vsel %vm481, %v460, 0
  %v877 = vsel %vm481, %v873, 0
  %879 = vmatpush.xpose.msra.mxu0 0.0
  %880 = vmatpush.xpose.msra.mxu0 0.0
  %881 = vmatpush.xpose.msra.mxu0 0.0
  %882 = vmatpush.xpose.msra.mxu0 0.0
  %883 = vmatpush.xpose.msra.mxu0 0.0
  %884 = vmatpush.xpose.msra.mxu0 0.0
  %885 = vmatpush.xpose.msra.mxu0 0.0
  %886 = vmatpush.xpose.msra.mxu0 0.0
  %887 = vmatpush.xpose.msra.mxu0 0.0
  %888 = vmatpush.xpose.msra.mxu0 0.0
  %889 = vmatpush.xpose.msra.mxu0 0.0
  %890 = vmatpush.xpose.msra.mxu0 0.0
  %891 = vmatpush.xpose.msra.mxu0 0.0
  %892 = vmatpush.xpose.msra.mxu0 0.0
  %893 = vmatpush.xpose.msra.mxu0 0.0
  %894 = vmatpush.xpose.msra.mxu0 %v877
  %895 = vmatmul.f32.gmra.mxu0 %v875
  %v896 = vpop.f32.mrf.mxu0
  %v897 = vadd.f32 0.0, %v896
  %898 = vdwg.mxu0
  %900 = vrot.lane.b32.xlu0 %v392, 96
  %v901 = vpop.permute.xlu0 %900
  %v903 = vsel %vm481, %v461, 0
  %v905 = vsel %vm481, %v901, 0
  %907 = vmatpush.xpose.msra.mxu0 0.0
  %908 = vmatpush.xpose.msra.mxu0 0.0
  %909 = vmatpush.xpose.msra.mxu0 0.0
  %910 = vmatpush.xpose.msra.mxu0 0.0
  %911 = vmatpush.xpose.msra.mxu0 0.0
  %912 = vmatpush.xpose.msra.mxu0 0.0
  %913 = vmatpush.xpose.msra.mxu0 0.0
  %914 = vmatpush.xpose.msra.mxu0 0.0
  %915 = vmatpush.xpose.msra.mxu0 0.0
  %916 = vmatpush.xpose.msra.mxu0 0.0
  %917 = vmatpush.xpose.msra.mxu0 0.0
  %918 = vmatpush.xpose.msra.mxu0 0.0
  %919 = vmatpush.xpose.msra.mxu0 0.0
  %920 = vmatpush.xpose.msra.mxu0 0.0
  %921 = vmatpush.xpose.msra.mxu0 0.0
  %922 = vmatpush.xpose.msra.mxu0 %v905
  %923 = vmatmul.f32.gmra.mxu0 %v903
  %v924 = vpop.f32.mrf.mxu0
  %v925 = vadd.f32 0.0, %v924
  %926 = vdwg.mxu0
  %928 = vrot.lane.b32.xlu0 %v395, 96
  %v929 = vpop.permute.xlu0 %928
  %v931 = vsel %vm481, %v462, 0
  %v933 = vsel %vm481, %v929, 0
  %935 = vmatpush.xpose.msra.mxu0 0.0
  %936 = vmatpush.xpose.msra.mxu0 0.0
  %937 = vmatpush.xpose.msra.mxu0 0.0
  %938 = vmatpush.xpose.msra.mxu0 0.0
  %939 = vmatpush.xpose.msra.mxu0 0.0
  %940 = vmatpush.xpose.msra.mxu0 0.0
  %941 = vmatpush.xpose.msra.mxu0 0.0
  %942 = vmatpush.xpose.msra.mxu0 0.0
  %943 = vmatpush.xpose.msra.mxu0 0.0
  %944 = vmatpush.xpose.msra.mxu0 0.0
  %945 = vmatpush.xpose.msra.mxu0 0.0
  %946 = vmatpush.xpose.msra.mxu0 0.0
  %947 = vmatpush.xpose.msra.mxu0 0.0
  %948 = vmatpush.xpose.msra.mxu0 0.0
  %949 = vmatpush.xpose.msra.mxu0 0.0
  %950 = vmatpush.xpose.msra.mxu0 %v933
  %951 = vmatmul.f32.gmra.mxu0 %v931
  %v952 = vpop.f32.mrf.mxu0
  %v953 = vadd.f32 0.0, %v952
  %954 = vdwg.mxu0
  %956 = vrot.lane.b32.xlu0 %v398, 96
  %v957 = vpop.permute.xlu0 %956
  %v959 = vsel %vm481, %v463, 0
  %v961 = vsel %vm481, %v957, 0
  %963 = vmatpush.xpose.msra.mxu0 0.0
  %964 = vmatpush.xpose.msra.mxu0 0.0
  %965 = vmatpush.xpose.msra.mxu0 0.0
  %966 = vmatpush.xpose.msra.mxu0 0.0
  %967 = vmatpush.xpose.msra.mxu0 0.0
  %968 = vmatpush.xpose.msra.mxu0 0.0
  %969 = vmatpush.xpose.msra.mxu0 0.0
  %970 = vmatpush.xpose.msra.mxu0 0.0
  %971 = vmatpush.xpose.msra.mxu0 0.0
  %972 = vmatpush.xpose.msra.mxu0 0.0
  %973 = vmatpush.xpose.msra.mxu0 0.0
  %974 = vmatpush.xpose.msra.mxu0 0.0
  %975 = vmatpush.xpose.msra.mxu0 0.0
  %976 = vmatpush.xpose.msra.mxu0 0.0
  %977 = vmatpush.xpose.msra.mxu0 0.0
  %978 = vmatpush.xpose.msra.mxu0 %v961
  %979 = vmatmul.f32.gmra.mxu0 %v959
  %v980 = vpop.f32.mrf.mxu0
  %v981 = vadd.f32 0.0, %v980
  %982 = vdwg.mxu0
  %984 = vrot.lane.b32.xlu0 %v401, 96
  %v985 = vpop.permute.xlu0 %984
  %v987 = vsel %vm481, %v464, 0
  %v989 = vsel %vm481, %v985, 0
  %991 = vmatpush.xpose.msra.mxu0 0.0
  %992 = vmatpush.xpose.msra.mxu0 0.0
  %993 = vmatpush.xpose.msra.mxu0 0.0
  %994 = vmatpush.xpose.msra.mxu0 0.0
  %995 = vmatpush.xpose.msra.mxu0 0.0
  %996 = vmatpush.xpose.msra.mxu0 0.0
  %997 = vmatpush.xpose.msra.mxu0 0.0
  %998 = vmatpush.xpose.msra.mxu0 0.0
  %999 = vmatpush.xpose.msra.mxu0 0.0
  %1000 = vmatpush.xpose.msra.mxu0 0.0
  %1001 = vmatpush.xpose.msra.mxu0 0.0
  %1002 = vmatpush.xpose.msra.mxu0 0.0
  %1003 = vmatpush.xpose.msra.mxu0 0.0
  %1004 = vmatpush.xpose.msra.mxu0 0.0
  %1005 = vmatpush.xpose.msra.mxu0 0.0
  %1006 = vmatpush.xpose.msra.mxu0 %v989
  %1007 = vmatmul.f32.gmra.mxu0 %v987
  %v1008 = vpop.f32.mrf.mxu0
  %v1009 = vadd.f32 0.0, %v1008
  %1010 = vdwg.mxu0
  %1012 = vrot.lane.b32.xlu0 %v404, 96
  %v1013 = vpop.permute.xlu0 %1012
  %v1015 = vsel %vm481, %v465, 0
  %v1017 = vsel %vm481, %v1013, 0
  %1019 = vmatpush.xpose.msra.mxu0 0.0
  %1020 = vmatpush.xpose.msra.mxu0 0.0
  %1021 = vmatpush.xpose.msra.mxu0 0.0
  %1022 = vmatpush.xpose.msra.mxu0 0.0
  %1023 = vmatpush.xpose.msra.mxu0 0.0
  %1024 = vmatpush.xpose.msra.mxu0 0.0
  %1025 = vmatpush.xpose.msra.mxu0 0.0
  %1026 = vmatpush.xpose.msra.mxu0 0.0
  %1027 = vmatpush.xpose.msra.mxu0 0.0
  %1028 = vmatpush.xpose.msra.mxu0 0.0
  %1029 = vmatpush.xpose.msra.mxu0 0.0
  %1030 = vmatpush.xpose.msra.mxu0 0.0
  %1031 = vmatpush.xpose.msra.mxu0 0.0
  %1032 = vmatpush.xpose.msra.mxu0 0.0
  %1033 = vmatpush.xpose.msra.mxu0 0.0
  %1034 = vmatpush.xpose.msra.mxu0 %v1017
  %1035 = vmatmul.f32.gmra.mxu0 %v1015
  %v1036 = vpop.f32.mrf.mxu0
  %v1037 = vadd.f32 0.0, %v1036
  %1038 = vdwg.mxu0
  %1040 = vrot.lane.b32.xlu0 %v407, 96
  %v1041 = vpop.permute.xlu0 %1040
  %v1043 = vsel %vm481, %v466, 0
  %v1045 = vsel %vm481, %v1041, 0
  %1047 = vmatpush.xpose.msra.mxu0 0.0
  %1048 = vmatpush.xpose.msra.mxu0 0.0
  %1049 = vmatpush.xpose.msra.mxu0 0.0
  %1050 = vmatpush.xpose.msra.mxu0 0.0
  %1051 = vmatpush.xpose.msra.mxu0 0.0
  %1052 = vmatpush.xpose.msra.mxu0 0.0
  %1053 = vmatpush.xpose.msra.mxu0 0.0
  %1054 = vmatpush.xpose.msra.mxu0 0.0
  %1055 = vmatpush.xpose.msra.mxu0 0.0
  %1056 = vmatpush.xpose.msra.mxu0 0.0
  %1057 = vmatpush.xpose.msra.mxu0 0.0
  %1058 = vmatpush.xpose.msra.mxu0 0.0
  %1059 = vmatpush.xpose.msra.mxu0 0.0
  %1060 = vmatpush.xpose.msra.mxu0 0.0
  %1061 = vmatpush.xpose.msra.mxu0 0.0
  %1062 = vmatpush.xpose.msra.mxu0 %v1045
  %1063 = vmatmul.f32.gmra.mxu0 %v1043
  %v1064 = vpop.f32.mrf.mxu0
  %v1065 = vadd.f32 0.0, %v1064
  %1066 = vdwg.mxu0
  %1068 = vrot.lane.b32.xlu0 %v410, 96
  %v1069 = vpop.permute.xlu0 %1068
  %v1071 = vsel %vm481, %v467, 0
  %v1073 = vsel %vm481, %v1069, 0
  %1075 = vmatpush.xpose.msra.mxu0 0.0
  %1076 = vmatpush.xpose.msra.mxu0 0.0
  %1077 = vmatpush.xpose.msra.mxu0 0.0
  %1078 = vmatpush.xpose.msra.mxu0 0.0
  %1079 = vmatpush.xpose.msra.mxu0 0.0
  %1080 = vmatpush.xpose.msra.mxu0 0.0
  %1081 = vmatpush.xpose.msra.mxu0 0.0
  %1082 = vmatpush.xpose.msra.mxu0 0.0
  %1083 = vmatpush.xpose.msra.mxu0 0.0
  %1084 = vmatpush.xpose.msra.mxu0 0.0
  %1085 = vmatpush.xpose.msra.mxu0 0.0
  %1086 = vmatpush.xpose.msra.mxu0 0.0
  %1087 = vmatpush.xpose.msra.mxu0 0.0
  %1088 = vmatpush.xpose.msra.mxu0 0.0
  %1089 = vmatpush.xpose.msra.mxu0 0.0
  %1090 = vmatpush.xpose.msra.mxu0 %v1073
  %1091 = vmatmul.f32.gmra.mxu0 %v1071
  %v1092 = vpop.f32.mrf.mxu0
  %v1093 = vadd.f32 0.0, %v1092
  %1094 = vdwg.mxu0
  %1096 = vrot.lane.b32.xlu0 %v413, 96
  %v1097 = vpop.permute.xlu0 %1096
  %v1099 = vsel %vm481, %v468, 0
  %v1101 = vsel %vm481, %v1097, 0
  %1103 = vmatpush.xpose.msra.mxu0 0.0
  %1104 = vmatpush.xpose.msra.mxu0 0.0
  %1105 = vmatpush.xpose.msra.mxu0 0.0
  %1106 = vmatpush.xpose.msra.mxu0 0.0
  %1107 = vmatpush.xpose.msra.mxu0 0.0
  %1108 = vmatpush.xpose.msra.mxu0 0.0
  %1109 = vmatpush.xpose.msra.mxu0 0.0
  %1110 = vmatpush.xpose.msra.mxu0 0.0
  %1111 = vmatpush.xpose.msra.mxu0 0.0
  %1112 = vmatpush.xpose.msra.mxu0 0.0
  %1113 = vmatpush.xpose.msra.mxu0 0.0
  %1114 = vmatpush.xpose.msra.mxu0 0.0
  %1115 = vmatpush.xpose.msra.mxu0 0.0
  %1116 = vmatpush.xpose.msra.mxu0 0.0
  %1117 = vmatpush.xpose.msra.mxu0 0.0
  %1118 = vmatpush.xpose.msra.mxu0 %v1101
  %1119 = vmatmul.f32.gmra.mxu0 %v1099
  %v1120 = vpop.f32.mrf.mxu0
  %v1121 = vadd.f32 0.0, %v1120
  %1122 = vdwg.mxu0
  %1124 = vrot.lane.b32.xlu0 %v416, 96
  %v1125 = vpop.permute.xlu0 %1124
  %v1127 = vsel %vm481, %v469, 0
  %v1129 = vsel %vm481, %v1125, 0
  %1131 = vmatpush.xpose.msra.mxu0 0.0
  %1132 = vmatpush.xpose.msra.mxu0 0.0
  %1133 = vmatpush.xpose.msra.mxu0 0.0
  %1134 = vmatpush.xpose.msra.mxu0 0.0
  %1135 = vmatpush.xpose.msra.mxu0 0.0
  %1136 = vmatpush.xpose.msra.mxu0 0.0
  %1137 = vmatpush.xpose.msra.mxu0 0.0
  %1138 = vmatpush.xpose.msra.mxu0 0.0
  %1139 = vmatpush.xpose.msra.mxu0 0.0
  %1140 = vmatpush.xpose.msra.mxu0 0.0
  %1141 = vmatpush.xpose.msra.mxu0 0.0
  %1142 = vmatpush.xpose.msra.mxu0 0.0
  %1143 = vmatpush.xpose.msra.mxu0 0.0
  %1144 = vmatpush.xpose.msra.mxu0 0.0
  %1145 = vmatpush.xpose.msra.mxu0 0.0
  %1146 = vmatpush.xpose.msra.mxu0 %v1129
  %1147 = vmatmul.f32.gmra.mxu0 %v1127
  %v1148 = vpop.f32.mrf.mxu0
  %v1149 = vadd.f32 0.0, %v1148
  %1150 = vdwg.mxu0
  %1152 = vrot.lane.b32.xlu0 %v419, 96
  %v1153 = vpop.permute.xlu0 %1152
  %v1155 = vsel %vm481, %v470, 0
  %v1157 = vsel %vm481, %v1153, 0
  %1159 = vmatpush.xpose.msra.mxu0 0.0
  %1160 = vmatpush.xpose.msra.mxu0 0.0
  %1161 = vmatpush.xpose.msra.mxu0 0.0
  %1162 = vmatpush.xpose.msra.mxu0 0.0
  %1163 = vmatpush.xpose.msra.mxu0 0.0
  %1164 = vmatpush.xpose.msra.mxu0 0.0
  %1165 = vmatpush.xpose.msra.mxu0 0.0
  %1166 = vmatpush.xpose.msra.mxu0 0.0
  %1167 = vmatpush.xpose.msra.mxu0 0.0
  %1168 = vmatpush.xpose.msra.mxu0 0.0
  %1169 = vmatpush.xpose.msra.mxu0 0.0
  %1170 = vmatpush.xpose.msra.mxu0 0.0
  %1171 = vmatpush.xpose.msra.mxu0 0.0
  %1172 = vmatpush.xpose.msra.mxu0 0.0
  %1173 = vmatpush.xpose.msra.mxu0 0.0
  %1174 = vmatpush.xpose.msra.mxu0 %v1157
  %1175 = vmatmul.f32.gmra.mxu0 %v1155
  %v1176 = vpop.f32.mrf.mxu0
  %v1177 = vadd.f32 0.0, %v1176
  %1178 = vdwg.mxu0
  %1180 = vrot.lane.b32.xlu0 %v422, 96
  %v1181 = vpop.permute.xlu0 %1180
  %v1183 = vsel %vm481, %v471, 0
  %v1185 = vsel %vm481, %v1181, 0
  %1187 = vmatpush.xpose.msra.mxu0 0.0
  %1188 = vmatpush.xpose.msra.mxu0 0.0
  %1189 = vmatpush.xpose.msra.mxu0 0.0
  %1190 = vmatpush.xpose.msra.mxu0 0.0
  %1191 = vmatpush.xpose.msra.mxu0 0.0
  %1192 = vmatpush.xpose.msra.mxu0 0.0
  %1193 = vmatpush.xpose.msra.mxu0 0.0
  %1194 = vmatpush.xpose.msra.mxu0 0.0
  %1195 = vmatpush.xpose.msra.mxu0 0.0
  %1196 = vmatpush.xpose.msra.mxu0 0.0
  %1197 = vmatpush.xpose.msra.mxu0 0.0
  %1198 = vmatpush.xpose.msra.mxu0 0.0
  %1199 = vmatpush.xpose.msra.mxu0 0.0
  %1200 = vmatpush.xpose.msra.mxu0 0.0
  %1201 = vmatpush.xpose.msra.mxu0 0.0
  %1202 = vmatpush.xpose.msra.mxu0 %v1185
  %1203 = vmatmul.f32.gmra.mxu0 %v1183
  %v1204 = vpop.f32.mrf.mxu0
  %v1205 = vadd.f32 0.0, %v1204
  %1206 = vdwg.mxu0
  %1208 = vrot.lane.b32.xlu0 %v425, 96
  %v1209 = vpop.permute.xlu0 %1208
  %v1211 = vsel %vm481, %v472, 0
  %v1213 = vsel %vm481, %v1209, 0
  %1215 = vmatpush.xpose.msra.mxu0 0.0
  %1216 = vmatpush.xpose.msra.mxu0 0.0
  %1217 = vmatpush.xpose.msra.mxu0 0.0
  %1218 = vmatpush.xpose.msra.mxu0 0.0
  %1219 = vmatpush.xpose.msra.mxu0 0.0
  %1220 = vmatpush.xpose.msra.mxu0 0.0
  %1221 = vmatpush.xpose.msra.mxu0 0.0
  %1222 = vmatpush.xpose.msra.mxu0 0.0
  %1223 = vmatpush.xpose.msra.mxu0 0.0
  %1224 = vmatpush.xpose.msra.mxu0 0.0
  %1225 = vmatpush.xpose.msra.mxu0 0.0
  %1226 = vmatpush.xpose.msra.mxu0 0.0
  %1227 = vmatpush.xpose.msra.mxu0 0.0
  %1228 = vmatpush.xpose.msra.mxu0 0.0
  %1229 = vmatpush.xpose.msra.mxu0 0.0
  %1230 = vmatpush.xpose.msra.mxu0 %v1213
  %1231 = vmatmul.f32.gmra.mxu0 %v1211
  %v1232 = vpop.f32.mrf.mxu0
  %v1233 = vadd.f32 0.0, %v1232
  %1234 = vdwg.mxu0
  %1236 = vrot.lane.b32.xlu0 %v428, 96
  %v1237 = vpop.permute.xlu0 %1236
  %v1239 = vsel %vm481, %v473, 0
  %v1241 = vsel %vm481, %v1237, 0
  %1243 = vmatpush.xpose.msra.mxu0 0.0
  %1244 = vmatpush.xpose.msra.mxu0 0.0
  %1245 = vmatpush.xpose.msra.mxu0 0.0
  %1246 = vmatpush.xpose.msra.mxu0 0.0
  %1247 = vmatpush.xpose.msra.mxu0 0.0
  %1248 = vmatpush.xpose.msra.mxu0 0.0
  %1249 = vmatpush.xpose.msra.mxu0 0.0
  %1250 = vmatpush.xpose.msra.mxu0 0.0
  %1251 = vmatpush.xpose.msra.mxu0 0.0
  %1252 = vmatpush.xpose.msra.mxu0 0.0
  %1253 = vmatpush.xpose.msra.mxu0 0.0
  %1254 = vmatpush.xpose.msra.mxu0 0.0
  %1255 = vmatpush.xpose.msra.mxu0 0.0
  %1256 = vmatpush.xpose.msra.mxu0 0.0
  %1257 = vmatpush.xpose.msra.mxu0 0.0
  %1258 = vmatpush.xpose.msra.mxu0 %v1241
  %1259 = vmatmul.f32.gmra.mxu0 %v1239
  %v1260 = vpop.f32.mrf.mxu0
  %v1261 = vadd.f32 0.0, %v1260
  %1262 = vdwg.mxu0
  %1264 = vrot.lane.b32.xlu0 %v431, 96
  %v1265 = vpop.permute.xlu0 %1264
  %v1267 = vsel %vm481, %v474, 0
  %v1269 = vsel %vm481, %v1265, 0
  %1271 = vmatpush.xpose.msra.mxu0 0.0
  %1272 = vmatpush.xpose.msra.mxu0 0.0
  %1273 = vmatpush.xpose.msra.mxu0 0.0
  %1274 = vmatpush.xpose.msra.mxu0 0.0
  %1275 = vmatpush.xpose.msra.mxu0 0.0
  %1276 = vmatpush.xpose.msra.mxu0 0.0
  %1277 = vmatpush.xpose.msra.mxu0 0.0
  %1278 = vmatpush.xpose.msra.mxu0 0.0
  %1279 = vmatpush.xpose.msra.mxu0 0.0
  %1280 = vmatpush.xpose.msra.mxu0 0.0
  %1281 = vmatpush.xpose.msra.mxu0 0.0
  %1282 = vmatpush.xpose.msra.mxu0 0.0
  %1283 = vmatpush.xpose.msra.mxu0 0.0
  %1284 = vmatpush.xpose.msra.mxu0 0.0
  %1285 = vmatpush.xpose.msra.mxu0 0.0
  %1286 = vmatpush.xpose.msra.mxu0 %v1269
  %1287 = vmatmul.f32.gmra.mxu0 %v1267
  %v1288 = vpop.f32.mrf.mxu0
  %v1289 = vadd.f32 0.0, %v1288
  %1290 = vdwg.mxu0
  %1292 = vrot.lane.b32.xlu0 %v434, 96
  %v1293 = vpop.permute.xlu0 %1292
  %v1295 = vsel %vm481, %v475, 0
  %v1297 = vsel %vm481, %v1293, 0
  %1299 = vmatpush.xpose.msra.mxu0 0.0
  %1300 = vmatpush.xpose.msra.mxu0 0.0
  %1301 = vmatpush.xpose.msra.mxu0 0.0
  %1302 = vmatpush.xpose.msra.mxu0 0.0
  %1303 = vmatpush.xpose.msra.mxu0 0.0
  %1304 = vmatpush.xpose.msra.mxu0 0.0
  %1305 = vmatpush.xpose.msra.mxu0 0.0
  %1306 = vmatpush.xpose.msra.mxu0 0.0
  %1307 = vmatpush.xpose.msra.mxu0 0.0
  %1308 = vmatpush.xpose.msra.mxu0 0.0
  %1309 = vmatpush.xpose.msra.mxu0 0.0
  %1310 = vmatpush.xpose.msra.mxu0 0.0
  %1311 = vmatpush.xpose.msra.mxu0 0.0
  %1312 = vmatpush.xpose.msra.mxu0 0.0
  %1313 = vmatpush.xpose.msra.mxu0 0.0
  %1314 = vmatpush.xpose.msra.mxu0 %v1297
  %1315 = vmatmul.f32.gmra.mxu0 %v1295
  %v1316 = vpop.f32.mrf.mxu0
  %v1317 = vadd.f32 0.0, %v1316
  %1318 = vdwg.mxu0
  %1320 = vrot.lane.b32.xlu0 %v437, 96
  %v1321 = vpop.permute.xlu0 %1320
  %v1323 = vsel %vm481, %v476, 0
  %v1325 = vsel %vm481, %v1321, 0
  %1327 = vmatpush.xpose.msra.mxu0 0.0
  %1328 = vmatpush.xpose.msra.mxu0 0.0
  %1329 = vmatpush.xpose.msra.mxu0 0.0
  %1330 = vmatpush.xpose.msra.mxu0 0.0
  %1331 = vmatpush.xpose.msra.mxu0 0.0
  %1332 = vmatpush.xpose.msra.mxu0 0.0
  %1333 = vmatpush.xpose.msra.mxu0 0.0
  %1334 = vmatpush.xpose.msra.mxu0 0.0
  %1335 = vmatpush.xpose.msra.mxu0 0.0
  %1336 = vmatpush.xpose.msra.mxu0 0.0
  %1337 = vmatpush.xpose.msra.mxu0 0.0
  %1338 = vmatpush.xpose.msra.mxu0 0.0
  %1339 = vmatpush.xpose.msra.mxu0 0.0
  %1340 = vmatpush.xpose.msra.mxu0 0.0
  %1341 = vmatpush.xpose.msra.mxu0 0.0
  %1342 = vmatpush.xpose.msra.mxu0 %v1325
  %1343 = vmatmul.f32.gmra.mxu0 %v1323
  %v1344 = vpop.f32.mrf.mxu0
  %v1345 = vadd.f32 0.0, %v1344
  %1346 = vdwg.mxu0
  %1348 = vrot.lane.b32.xlu0 %v440, 96
  %v1349 = vpop.permute.xlu0 %1348
  %v1351 = vsel %vm481, %v477, 0
  %v1353 = vsel %vm481, %v1349, 0
  %1355 = vmatpush.xpose.msra.mxu0 0.0
  %1356 = vmatpush.xpose.msra.mxu0 0.0
  %1357 = vmatpush.xpose.msra.mxu0 0.0
  %1358 = vmatpush.xpose.msra.mxu0 0.0
  %1359 = vmatpush.xpose.msra.mxu0 0.0
  %1360 = vmatpush.xpose.msra.mxu0 0.0
  %1361 = vmatpush.xpose.msra.mxu0 0.0
  %1362 = vmatpush.xpose.msra.mxu0 0.0
  %1363 = vmatpush.xpose.msra.mxu0 0.0
  %1364 = vmatpush.xpose.msra.mxu0 0.0
  %1365 = vmatpush.xpose.msra.mxu0 0.0
  %1366 = vmatpush.xpose.msra.mxu0 0.0
  %1367 = vmatpush.xpose.msra.mxu0 0.0
  %1368 = vmatpush.xpose.msra.mxu0 0.0
  %1369 = vmatpush.xpose.msra.mxu0 0.0
  %1370 = vmatpush.xpose.msra.mxu0 %v1353
  %1371 = vmatmul.f32.gmra.mxu0 %v1351
  %v1372 = vpop.f32.mrf.mxu0
  %v1373 = vadd.f32 0.0, %v1372
  %1374 = vdwg.mxu0
  %v1375 = vmul.f32 %v505, 0.35355338
  %v1376 = vmul.f32 %v533, 0.35355338
  %v1377 = vmul.f32 %v561, 0.35355338
  %v1378 = vmul.f32 %v589, 0.35355338
  %v1379 = vmul.f32 %v617, 0.35355338
  %v1380 = vmul.f32 %v645, 0.35355338
  %v1381 = vmul.f32 %v673, 0.35355338
  %v1382 = vmul.f32 %v701, 0.35355338
  %v1383 = vmul.f32 %v729, 0.35355338
  %v1384 = vmul.f32 %v757, 0.35355338
  %v1385 = vmul.f32 %v785, 0.35355338
  %v1386 = vmul.f32 %v813, 0.35355338
  %v1387 = vmul.f32 %v841, 0.35355338
  %v1388 = vmul.f32 %v869, 0.35355338
  %v1389 = vmul.f32 %v897, 0.35355338
  %v1390 = vmul.f32 %v925, 0.35355338
  %v1391 = vmul.f32 %v953, 0.35355338
  %v1392 = vmul.f32 %v981, 0.35355338
  %v1393 = vmul.f32 %v1009, 0.35355338
  %v1394 = vmul.f32 %v1037, 0.35355338
  %v1395 = vmul.f32 %v1065, 0.35355338
  %v1396 = vmul.f32 %v1093, 0.35355338
  %v1397 = vmul.f32 %v1121, 0.35355338
  %v1398 = vmul.f32 %v1149, 0.35355338
  %v1399 = vmul.f32 %v1177, 0.35355338
  %v1400 = vmul.f32 %v1205, 0.35355338
  %v1401 = vmul.f32 %v1233, 0.35355338
  %v1402 = vmul.f32 %v1261, 0.35355338
  %v1403 = vmul.f32 %v1289, 0.35355338
  %v1404 = vmul.f32 %v1317, 0.35355338
  %v1405 = vmul.f32 %v1345, 0.35355338
  %v1406 = vmul.f32 %v1373, 0.35355338
  %vm1407 = vcmask 64512
  %v1408 = vsel %vm1407, %v1375, -inf
  %1409 = vmax.xlane.f32.xlu0 %v1408
  %v1410 = vpop.xlane.xlu0 %1409
  %v1411 = vsel %vm1407, %v1376, -inf
  %1412 = vmax.xlane.f32.xlu0 %v1411
  %v1413 = vpop.xlane.xlu0 %1412
  %v1414 = vsel %vm1407, %v1377, -inf
  %1415 = vmax.xlane.f32.xlu0 %v1414
  %v1416 = vpop.xlane.xlu0 %1415
  %v1417 = vsel %vm1407, %v1378, -inf
  %1418 = vmax.xlane.f32.xlu0 %v1417
  %v1419 = vpop.xlane.xlu0 %1418
  %v1420 = vsel %vm1407, %v1379, -inf
  %1421 = vmax.xlane.f32.xlu0 %v1420
  %v1422 = vpop.xlane.xlu0 %1421
  %v1423 = vsel %vm1407, %v1380, -inf
  %1424 = vmax.xlane.f32.xlu0 %v1423
  %v1425 = vpop.xlane.xlu0 %1424
  %v1426 = vsel %vm1407, %v1381, -inf
  %1427 = vmax.xlane.f32.xlu0 %v1426
  %v1428 = vpop.xlane.xlu0 %1427
  %v1429 = vsel %vm1407, %v1382, -inf
  %1430 = vmax.xlane.f32.xlu0 %v1429
  %v1431 = vpop.xlane.xlu0 %1430
  %v1432 = vsel %vm1407, %v1383, -inf
  %1433 = vmax.xlane.f32.xlu0 %v1432
  %v1434 = vpop.xlane.xlu0 %1433
  %v1435 = vsel %vm1407, %v1384, -inf
  %1436 = vmax.xlane.f32.xlu0 %v1435
  %v1437 = vpop.xlane.xlu0 %1436
  %v1438 = vsel %vm1407, %v1385, -inf
  %1439 = vmax.xlane.f32.xlu0 %v1438
  %v1440 = vpop.xlane.xlu0 %1439
  %v1441 = vsel %vm1407, %v1386, -inf
  %1442 = vmax.xlane.f32.xlu0 %v1441
  %v1443 = vpop.xlane.xlu0 %1442
  %v1444 = vsel %vm1407, %v1387, -inf
  %1445 = vmax.xlane.f32.xlu0 %v1444
  %v1446 = vpop.xlane.xlu0 %1445
  %v1447 = vsel %vm1407, %v1388, -inf
  %1448 = vmax.xlane.f32.xlu0 %v1447
  %v1449 = vpop.xlane.xlu0 %1448
  %v1450 = vsel %vm1407, %v1389, -inf
  %1451 = vmax.xlane.f32.xlu0 %v1450
  %v1452 = vpop.xlane.xlu0 %1451
  %v1453 = vsel %vm1407, %v1390, -inf
  %1454 = vmax.xlane.f32.xlu0 %v1453
  %v1455 = vpop.xlane.xlu0 %1454
  %v1456 = vsel %vm1407, %v1391, -inf
  %1457 = vmax.xlane.f32.xlu0 %v1456
  %v1458 = vpop.xlane.xlu0 %1457
  %v1459 = vsel %vm1407, %v1392, -inf
  %1460 = vmax.xlane.f32.xlu0 %v1459
  %v1461 = vpop.xlane.xlu0 %1460
  %v1462 = vsel %vm1407, %v1393, -inf
  %1463 = vmax.xlane.f32.xlu0 %v1462
  %v1464 = vpop.xlane.xlu0 %1463
  %v1465 = vsel %vm1407, %v1394, -inf
  %1466 = vmax.xlane.f32.xlu0 %v1465
  %v1467 = vpop.xlane.xlu0 %1466
  %v1468 = vsel %vm1407, %v1395, -inf
  %1469 = vmax.xlane.f32.xlu0 %v1468
  %v1470 = vpop.xlane.xlu0 %1469
  %v1471 = vsel %vm1407, %v1396, -inf
  %1472 = vmax.xlane.f32.xlu0 %v1471
  %v1473 = vpop.xlane.xlu0 %1472
  %v1474 = vsel %vm1407, %v1397, -inf
  %1475 = vmax.xlane.f32.xlu0 %v1474
  %v1476 = vpop.xlane.xlu0 %1475
  %v1477 = vsel %vm1407, %v1398, -inf
  %1478 = vmax.xlane.f32.xlu0 %v1477
  %v1479 = vpop.xlane.xlu0 %1478
  %v1480 = vsel %vm1407, %v1399, -inf
  %1481 = vmax.xlane.f32.xlu0 %v1480
  %v1482 = vpop.xlane.xlu0 %1481
  %v1483 = vsel %vm1407, %v1400, -inf
  %1484 = vmax.xlane.f32.xlu0 %v1483
  %v1485 = vpop.xlane.xlu0 %1484
  %v1486 = vsel %vm1407, %v1401, -inf
  %1487 = vmax.xlane.f32.xlu0 %v1486
  %v1488 = vpop.xlane.xlu0 %1487
  %v1489 = vsel %vm1407, %v1402, -inf
  %1490 = vmax.xlane.f32.xlu0 %v1489
  %v1491 = vpop.xlane.xlu0 %1490
  %v1492 = vsel %vm1407, %v1403, -inf
  %1493 = vmax.xlane.f32.xlu0 %v1492
  %v1494 = vpop.xlane.xlu0 %1493
  %v1495 = vsel %vm1407, %v1404, -inf
  %1496 = vmax.xlane.f32.xlu0 %v1495
  %v1497 = vpop.xlane.xlu0 %1496
  %v1498 = vsel %vm1407, %v1405, -inf
  %1499 = vmax.xlane.f32.xlu0 %v1498
  %v1500 = vpop.xlane.xlu0 %1499
  %v1501 = vsel %vm1407, %v1406, -inf
  %1502 = vmax.xlane.f32.xlu0 %v1501
  %v1503 = vpop.xlane.xlu0 %1502
  %v1504 = vsub.f32 %v1375, %v1410
  %v1505 = vsub.f32 %v1376, %v1413
  %v1506 = vsub.f32 %v1377, %v1416
  %v1507 = vsub.f32 %v1378, %v1419
  %v1508 = vsub.f32 %v1379, %v1422
  %v1509 = vsub.f32 %v1380, %v1425
  %v1510 = vsub.f32 %v1381, %v1428
  %v1511 = vsub.f32 %v1382, %v1431
  %v1512 = vsub.f32 %v1383, %v1434
  %v1513 = vsub.f32 %v1384, %v1437
  %v1514 = vsub.f32 %v1385, %v1440
  %v1515 = vsub.f32 %v1386, %v1443
  %v1516 = vsub.f32 %v1387, %v1446
  %v1517 = vsub.f32 %v1388, %v1449
  %v1518 = vsub.f32 %v1389, %v1452
  %v1519 = vsub.f32 %v1390, %v1455
  %v1520 = vsub.f32 %v1391, %v1458
  %v1521 = vsub.f32 %v1392, %v1461
  %v1522 = vsub.f32 %v1393, %v1464
  %v1523 = vsub.f32 %v1394, %v1467
  %v1524 = vsub.f32 %v1395, %v1470
  %v1525 = vsub.f32 %v1396, %v1473
  %v1526 = vsub.f32 %v1397, %v1476
  %v1527 = vsub.f32 %v1398, %v1479
  %v1528 = vsub.f32 %v1399, %v1482
  %v1529 = vsub.f32 %v1400, %v1485
  %v1530 = vsub.f32 %v1401, %v1488
  %v1531 = vsub.f32 %v1402, %v1491
  %v1532 = vsub.f32 %v1403, %v1494
  %v1533 = vsub.f32 %v1404, %v1497
  %v1534 = vsub.f32 %v1405, %v1500
  %v1535 = vsub.f32 %v1406, %v1503
  %v1536 = vmul.f32 %v1504, 1.442695
  %v1537 = vpow.pop %v1536
  %v1538 = vmul.f32 %v1505, 1.442695
  %v1539 = vpow.pop %v1538
  %v1540 = vmul.f32 %v1506, 1.442695
  %v1541 = vpow.pop %v1540
  %v1542 = vmul.f32 %v1507, 1.442695
  %v1543 = vpow.pop %v1542
  %v1544 = vmul.f32 %v1508, 1.442695
  %v1545 = vpow.pop %v1544
  %v1546 = vmul.f32 %v1509, 1.442695
  %v1547 = vpow.pop %v1546
  %v1548 = vmul.f32 %v1510, 1.442695
  %v1549 = vpow.pop %v1548
  %v1550 = vmul.f32 %v1511, 1.442695
  %v1551 = vpow.pop %v1550
  %v1552 = vmul.f32 %v1512, 1.442695
  %v1553 = vpow.pop %v1552
  %v1554 = vmul.f32 %v1513, 1.442695
  %v1555 = vpow.pop %v1554
  %v1556 = vmul.f32 %v1514, 1.442695
  %v1557 = vpow.pop %v1556
  %v1558 = vmul.f32 %v1515, 1.442695
  %v1559 = vpow.pop %v1558
  %v1560 = vmul.f32 %v1516, 1.442695
  %v1561 = vpow.pop %v1560
  %v1562 = vmul.f32 %v1517, 1.442695
  %v1563 = vpow.pop %v1562
  %v1564 = vmul.f32 %v1518, 1.442695
  %v1565 = vpow.pop %v1564
  %v1566 = vmul.f32 %v1519, 1.442695
  %v1567 = vpow.pop %v1566
  %v1568 = vmul.f32 %v1520, 1.442695
  %v1569 = vpow.pop %v1568
  %v1570 = vmul.f32 %v1521, 1.442695
  %v1571 = vpow.pop %v1570
  %v1572 = vmul.f32 %v1522, 1.442695
  %v1573 = vpow.pop %v1572
  %v1574 = vmul.f32 %v1523, 1.442695
  %v1575 = vpow.pop %v1574
  %v1576 = vmul.f32 %v1524, 1.442695
  %v1577 = vpow.pop %v1576
  %v1578 = vmul.f32 %v1525, 1.442695
  %v1579 = vpow.pop %v1578
  %v1580 = vmul.f32 %v1526, 1.442695
  %v1581 = vpow.pop %v1580
  %v1582 = vmul.f32 %v1527, 1.442695
  %v1583 = vpow.pop %v1582
  %v1584 = vmul.f32 %v1528, 1.442695
  %v1585 = vpow.pop %v1584
  %v1586 = vmul.f32 %v1529, 1.442695
  %v1587 = vpow.pop %v1586
  %v1588 = vmul.f32 %v1530, 1.442695
  %v1589 = vpow.pop %v1588
  %v1590 = vmul.f32 %v1531, 1.442695
  %v1591 = vpow.pop %v1590
  %v1592 = vmul.f32 %v1532, 1.442695
  %v1593 = vpow.pop %v1592
  %v1594 = vmul.f32 %v1533, 1.442695
  %v1595 = vpow.pop %v1594
  %v1596 = vmul.f32 %v1534, 1.442695
  %v1597 = vpow.pop %v1596
  %v1598 = vmul.f32 %v1535, 1.442695
  %v1599 = vpow.pop %v1598
  %v1600 = vsel %vm1407, %v1537, 0.0
  %1601 = vadd.xlane.f32.xlu0 %v1600
  %v1602 = vpop.xlane.xlu0 %1601
  %v1603 = vsel %vm1407, %v1539, 0.0
  %1604 = vadd.xlane.f32.xlu0 %v1603
  %v1605 = vpop.xlane.xlu0 %1604
  %v1606 = vsel %vm1407, %v1541, 0.0
  %1607 = vadd.xlane.f32.xlu0 %v1606
  %v1608 = vpop.xlane.xlu0 %1607
  %v1609 = vsel %vm1407, %v1543, 0.0
  %1610 = vadd.xlane.f32.xlu0 %v1609
  %v1611 = vpop.xlane.xlu0 %1610
  %v1612 = vsel %vm1407, %v1545, 0.0
  %1613 = vadd.xlane.f32.xlu0 %v1612
  %v1614 = vpop.xlane.xlu0 %1613
  %v1615 = vsel %vm1407, %v1547, 0.0
  %1616 = vadd.xlane.f32.xlu0 %v1615
  %v1617 = vpop.xlane.xlu0 %1616
  %v1618 = vsel %vm1407, %v1549, 0.0
  %1619 = vadd.xlane.f32.xlu0 %v1618
  %v1620 = vpop.xlane.xlu0 %1619
  %v1621 = vsel %vm1407, %v1551, 0.0
  %1622 = vadd.xlane.f32.xlu0 %v1621
  %v1623 = vpop.xlane.xlu0 %1622
  %v1624 = vsel %vm1407, %v1553, 0.0
  %1625 = vadd.xlane.f32.xlu0 %v1624
  %v1626 = vpop.xlane.xlu0 %1625
  %v1627 = vsel %vm1407, %v1555, 0.0
  %1628 = vadd.xlane.f32.xlu0 %v1627
  %v1629 = vpop.xlane.xlu0 %1628
  %v1630 = vsel %vm1407, %v1557, 0.0
  %1631 = vadd.xlane.f32.xlu0 %v1630
  %v1632 = vpop.xlane.xlu0 %1631
  %v1633 = vsel %vm1407, %v1559, 0.0
  %1634 = vadd.xlane.f32.xlu0 %v1633
  %v1635 = vpop.xlane.xlu0 %1634
  %v1636 = vsel %vm1407, %v1561, 0.0
  %1637 = vadd.xlane.f32.xlu0 %v1636
  %v1638 = vpop.xlane.xlu0 %1637
  %v1639 = vsel %vm1407, %v1563, 0.0
  %1640 = vadd.xlane.f32.xlu0 %v1639
  %v1641 = vpop.xlane.xlu0 %1640
  %v1642 = vsel %vm1407, %v1565, 0.0
  %1643 = vadd.xlane.f32.xlu0 %v1642
  %v1644 = vpop.xlane.xlu0 %1643
  %v1645 = vsel %vm1407, %v1567, 0.0
  %1646 = vadd.xlane.f32.xlu0 %v1645
  %v1647 = vpop.xlane.xlu0 %1646
  %v1648 = vsel %vm1407, %v1569, 0.0
  %1649 = vadd.xlane.f32.xlu0 %v1648
  %v1650 = vpop.xlane.xlu0 %1649
  %v1651 = vsel %vm1407, %v1571, 0.0
  %1652 = vadd.xlane.f32.xlu0 %v1651
  %v1653 = vpop.xlane.xlu0 %1652
  %v1654 = vsel %vm1407, %v1573, 0.0
  %1655 = vadd.xlane.f32.xlu0 %v1654
  %v1656 = vpop.xlane.xlu0 %1655
  %v1657 = vsel %vm1407, %v1575, 0.0
  %1658 = vadd.xlane.f32.xlu0 %v1657
  %v1659 = vpop.xlane.xlu0 %1658
  %v1660 = vsel %vm1407, %v1577, 0.0
  %1661 = vadd.xlane.f32.xlu0 %v1660
  %v1662 = vpop.xlane.xlu0 %1661
  %v1663 = vsel %vm1407, %v1579, 0.0
  %1664 = vadd.xlane.f32.xlu0 %v1663
  %v1665 = vpop.xlane.xlu0 %1664
  %v1666 = vsel %vm1407, %v1581, 0.0
  %1667 = vadd.xlane.f32.xlu0 %v1666
  %v1668 = vpop.xlane.xlu0 %1667
  %v1669 = vsel %vm1407, %v1583, 0.0
  %1670 = vadd.xlane.f32.xlu0 %v1669
  %v1671 = vpop.xlane.xlu0 %1670
  %v1672 = vsel %vm1407, %v1585, 0.0
  %1673 = vadd.xlane.f32.xlu0 %v1672
  %v1674 = vpop.xlane.xlu0 %1673
  %v1675 = vsel %vm1407, %v1587, 0.0
  %1676 = vadd.xlane.f32.xlu0 %v1675
  %v1677 = vpop.xlane.xlu0 %1676
  %v1678 = vsel %vm1407, %v1589, 0.0
  %1679 = vadd.xlane.f32.xlu0 %v1678
  %v1680 = vpop.xlane.xlu0 %1679
  %v1681 = vsel %vm1407, %v1591, 0.0
  %1682 = vadd.xlane.f32.xlu0 %v1681
  %v1683 = vpop.xlane.xlu0 %1682
  %v1684 = vsel %vm1407, %v1593, 0.0
  %1685 = vadd.xlane.f32.xlu0 %v1684
  %v1686 = vpop.xlane.xlu0 %1685
  %v1687 = vsel %vm1407, %v1595, 0.0
  %1688 = vadd.xlane.f32.xlu0 %v1687
  %v1689 = vpop.xlane.xlu0 %1688
  %v1690 = vsel %vm1407, %v1597, 0.0
  %1691 = vadd.xlane.f32.xlu0 %v1690
  %v1692 = vpop.xlane.xlu0 %1691
  %v1693 = vsel %vm1407, %v1599, 0.0
  %1694 = vadd.xlane.f32.xlu0 %v1693
  %v1695 = vpop.xlane.xlu0 %1694
  %v1696 = vrcp.pop %v1602
  %v1697 = vmul.f32 %v1602, %v1696
  %v1698 = vsub.f32 1.0, %v1697
  %v1699 = vmul.f32 %v1696, %v1698
  %v1700 = vadd.f32 %v1696, %v1699
  %vm1701 = vweird.f32 %v1602
  %vm1702 = vweird.f32 %v1696
  %vm1703 = vmor %vm1701, %vm1702
  %v1704 = vsel %vm1703, %v1696, %v1700
  %v1705 = vand.u32 2147483647, %v1602
  %vm1706 = vcmp.eq.f32.partialorder %v1705, 8.507059e+37
  %v1707 = vand.u32 %v1602, 2147483648
  %v1708 = vor.u32 1.1754944e-38, %v1707
  %v1709 = vsel %vm1706, %v1708, %v1704
  %v1710 = vrcp.pop %v1605
  %v1711 = vmul.f32 %v1605, %v1710
  %v1712 = vsub.f32 1.0, %v1711
  %v1713 = vmul.f32 %v1710, %v1712
  %v1714 = vadd.f32 %v1710, %v1713
  %vm1715 = vweird.f32 %v1605
  %vm1716 = vweird.f32 %v1710
  %vm1717 = vmor %vm1715, %vm1716
  %v1718 = vsel %vm1717, %v1710, %v1714
  %v1719 = vand.u32 2147483647, %v1605
  %vm1720 = vcmp.eq.f32.partialorder %v1719, 8.507059e+37
  %v1721 = vand.u32 %v1605, 2147483648
  %v1722 = vor.u32 1.1754944e-38, %v1721
  %v1723 = vsel %vm1720, %v1722, %v1718
  %v1724 = vrcp.pop %v1608
  %v1725 = vmul.f32 %v1608, %v1724
  %v1726 = vsub.f32 1.0, %v1725
  %v1727 = vmul.f32 %v1724, %v1726
  %v1728 = vadd.f32 %v1724, %v1727
  %vm1729 = vweird.f32 %v1608
  %vm1730 = vweird.f32 %v1724
  %vm1731 = vmor %vm1729, %vm1730
  %v1732 = vsel %vm1731, %v1724, %v1728
  %v1733 = vand.u32 2147483647, %v1608
  %vm1734 = vcmp.eq.f32.partialorder %v1733, 8.507059e+37
  %v1735 = vand.u32 %v1608, 2147483648
  %v1736 = vor.u32 1.1754944e-38, %v1735
  %v1737 = vsel %vm1734, %v1736, %v1732
  %v1738 = vrcp.pop %v1611
  %v1739 = vmul.f32 %v1611, %v1738
  %v1740 = vsub.f32 1.0, %v1739
  %v1741 = vmul.f32 %v1738, %v1740
  %v1742 = vadd.f32 %v1738, %v1741
  %vm1743 = vweird.f32 %v1611
  %vm1744 = vweird.f32 %v1738
  %vm1745 = vmor %vm1743, %vm1744
  %v1746 = vsel %vm1745, %v1738, %v1742
  %v1747 = vand.u32 2147483647, %v1611
  %vm1748 = vcmp.eq.f32.partialorder %v1747, 8.507059e+37
  %v1749 = vand.u32 %v1611, 2147483648
  %v1750 = vor.u32 1.1754944e-38, %v1749
  %v1751 = vsel %vm1748, %v1750, %v1746
  %v1752 = vrcp.pop %v1614
  %v1753 = vmul.f32 %v1614, %v1752
  %v1754 = vsub.f32 1.0, %v1753
  %v1755 = vmul.f32 %v1752, %v1754
  %v1756 = vadd.f32 %v1752, %v1755
  %vm1757 = vweird.f32 %v1614
  %vm1758 = vweird.f32 %v1752
  %vm1759 = vmor %vm1757, %vm1758
  %v1760 = vsel %vm1759, %v1752, %v1756
  %v1761 = vand.u32 2147483647, %v1614
  %vm1762 = vcmp.eq.f32.partialorder %v1761, 8.507059e+37
  %v1763 = vand.u32 %v1614, 2147483648
  %v1764 = vor.u32 1.1754944e-38, %v1763
  %v1765 = vsel %vm1762, %v1764, %v1760
  %v1766 = vrcp.pop %v1617
  %v1767 = vmul.f32 %v1617, %v1766
  %v1768 = vsub.f32 1.0, %v1767
  %v1769 = vmul.f32 %v1766, %v1768
  %v1770 = vadd.f32 %v1766, %v1769
  %vm1771 = vweird.f32 %v1617
  %vm1772 = vweird.f32 %v1766
  %vm1773 = vmor %vm1771, %vm1772
  %v1774 = vsel %vm1773, %v1766, %v1770
  %v1775 = vand.u32 2147483647, %v1617
  %vm1776 = vcmp.eq.f32.partialorder %v1775, 8.507059e+37
  %v1777 = vand.u32 %v1617, 2147483648
  %v1778 = vor.u32 1.1754944e-38, %v1777
  %v1779 = vsel %vm1776, %v1778, %v1774
  %v1780 = vrcp.pop %v1620
  %v1781 = vmul.f32 %v1620, %v1780
  %v1782 = vsub.f32 1.0, %v1781
  %v1783 = vmul.f32 %v1780, %v1782
  %v1784 = vadd.f32 %v1780, %v1783
  %vm1785 = vweird.f32 %v1620
  %vm1786 = vweird.f32 %v1780
  %vm1787 = vmor %vm1785, %vm1786
  %v1788 = vsel %vm1787, %v1780, %v1784
  %v1789 = vand.u32 2147483647, %v1620
  %vm1790 = vcmp.eq.f32.partialorder %v1789, 8.507059e+37
  %v1791 = vand.u32 %v1620, 2147483648
  %v1792 = vor.u32 1.1754944e-38, %v1791
  %v1793 = vsel %vm1790, %v1792, %v1788
  %v1794 = vrcp.pop %v1623
  %v1795 = vmul.f32 %v1623, %v1794
  %v1796 = vsub.f32 1.0, %v1795
  %v1797 = vmul.f32 %v1794, %v1796
  %v1798 = vadd.f32 %v1794, %v1797
  %vm1799 = vweird.f32 %v1623
  %vm1800 = vweird.f32 %v1794
  %vm1801 = vmor %vm1799, %vm1800
  %v1802 = vsel %vm1801, %v1794, %v1798
  %v1803 = vand.u32 2147483647, %v1623
  %vm1804 = vcmp.eq.f32.partialorder %v1803, 8.507059e+37
  %v1805 = vand.u32 %v1623, 2147483648
  %v1806 = vor.u32 1.1754944e-38, %v1805
  %v1807 = vsel %vm1804, %v1806, %v1802
  %v1808 = vrcp.pop %v1626
  %v1809 = vmul.f32 %v1626, %v1808
  %v1810 = vsub.f32 1.0, %v1809
  %v1811 = vmul.f32 %v1808, %v1810
  %v1812 = vadd.f32 %v1808, %v1811
  %vm1813 = vweird.f32 %v1626
  %vm1814 = vweird.f32 %v1808
  %vm1815 = vmor %vm1813, %vm1814
  %v1816 = vsel %vm1815, %v1808, %v1812
  %v1817 = vand.u32 2147483647, %v1626
  %vm1818 = vcmp.eq.f32.partialorder %v1817, 8.507059e+37
  %v1819 = vand.u32 %v1626, 2147483648
  %v1820 = vor.u32 1.1754944e-38, %v1819
  %v1821 = vsel %vm1818, %v1820, %v1816
  %v1822 = vrcp.pop %v1629
  %v1823 = vmul.f32 %v1629, %v1822
  %v1824 = vsub.f32 1.0, %v1823
  %v1825 = vmul.f32 %v1822, %v1824
  %v1826 = vadd.f32 %v1822, %v1825
  %vm1827 = vweird.f32 %v1629
  %vm1828 = vweird.f32 %v1822
  %vm1829 = vmor %vm1827, %vm1828
  %v1830 = vsel %vm1829, %v1822, %v1826
  %v1831 = vand.u32 2147483647, %v1629
  %vm1832 = vcmp.eq.f32.partialorder %v1831, 8.507059e+37
  %v1833 = vand.u32 %v1629, 2147483648
  %v1834 = vor.u32 1.1754944e-38, %v1833
  %v1835 = vsel %vm1832, %v1834, %v1830
  %v1836 = vrcp.pop %v1632
  %v1837 = vmul.f32 %v1632, %v1836
  %v1838 = vsub.f32 1.0, %v1837
  %v1839 = vmul.f32 %v1836, %v1838
  %v1840 = vadd.f32 %v1836, %v1839
  %vm1841 = vweird.f32 %v1632
  %vm1842 = vweird.f32 %v1836
  %vm1843 = vmor %vm1841, %vm1842
  %v1844 = vsel %vm1843, %v1836, %v1840
  %v1845 = vand.u32 2147483647, %v1632
  %vm1846 = vcmp.eq.f32.partialorder %v1845, 8.507059e+37
  %v1847 = vand.u32 %v1632, 2147483648
  %v1848 = vor.u32 1.1754944e-38, %v1847
  %v1849 = vsel %vm1846, %v1848, %v1844
  %v1850 = vrcp.pop %v1635
  %v1851 = vmul.f32 %v1635, %v1850
  %v1852 = vsub.f32 1.0, %v1851
  %v1853 = vmul.f32 %v1850, %v1852
  %v1854 = vadd.f32 %v1850, %v1853
  %vm1855 = vweird.f32 %v1635
  %vm1856 = vweird.f32 %v1850
  %vm1857 = vmor %vm1855, %vm1856
  %v1858 = vsel %vm1857, %v1850, %v1854
  %v1859 = vand.u32 2147483647, %v1635
  %vm1860 = vcmp.eq.f32.partialorder %v1859, 8.507059e+37
  %v1861 = vand.u32 %v1635, 2147483648
  %v1862 = vor.u32 1.1754944e-38, %v1861
  %v1863 = vsel %vm1860, %v1862, %v1858
  %v1864 = vrcp.pop %v1638
  %v1865 = vmul.f32 %v1638, %v1864
  %v1866 = vsub.f32 1.0, %v1865
  %v1867 = vmul.f32 %v1864, %v1866
  %v1868 = vadd.f32 %v1864, %v1867
  %vm1869 = vweird.f32 %v1638
  %vm1870 = vweird.f32 %v1864
  %vm1871 = vmor %vm1869, %vm1870
  %v1872 = vsel %vm1871, %v1864, %v1868
  %v1873 = vand.u32 2147483647, %v1638
  %vm1874 = vcmp.eq.f32.partialorder %v1873, 8.507059e+37
  %v1875 = vand.u32 %v1638, 2147483648
  %v1876 = vor.u32 1.1754944e-38, %v1875
  %v1877 = vsel %vm1874, %v1876, %v1872
  %v1878 = vrcp.pop %v1641
  %v1879 = vmul.f32 %v1641, %v1878
  %v1880 = vsub.f32 1.0, %v1879
  %v1881 = vmul.f32 %v1878, %v1880
  %v1882 = vadd.f32 %v1878, %v1881
  %vm1883 = vweird.f32 %v1641
  %vm1884 = vweird.f32 %v1878
  %vm1885 = vmor %vm1883, %vm1884
  %v1886 = vsel %vm1885, %v1878, %v1882
  %v1887 = vand.u32 2147483647, %v1641
  %vm1888 = vcmp.eq.f32.partialorder %v1887, 8.507059e+37
  %v1889 = vand.u32 %v1641, 2147483648
  %v1890 = vor.u32 1.1754944e-38, %v1889
  %v1891 = vsel %vm1888, %v1890, %v1886
  %v1892 = vrcp.pop %v1644
  %v1893 = vmul.f32 %v1644, %v1892
  %v1894 = vsub.f32 1.0, %v1893
  %v1895 = vmul.f32 %v1892, %v1894
  %v1896 = vadd.f32 %v1892, %v1895
  %vm1897 = vweird.f32 %v1644
  %vm1898 = vweird.f32 %v1892
  %vm1899 = vmor %vm1897, %vm1898
  %v1900 = vsel %vm1899, %v1892, %v1896
  %v1901 = vand.u32 2147483647, %v1644
  %vm1902 = vcmp.eq.f32.partialorder %v1901, 8.507059e+37
  %v1903 = vand.u32 %v1644, 2147483648
  %v1904 = vor.u32 1.1754944e-38, %v1903
  %v1905 = vsel %vm1902, %v1904, %v1900
  %v1906 = vrcp.pop %v1647
  %v1907 = vmul.f32 %v1647, %v1906
  %v1908 = vsub.f32 1.0, %v1907
  %v1909 = vmul.f32 %v1906, %v1908
  %v1910 = vadd.f32 %v1906, %v1909
  %vm1911 = vweird.f32 %v1647
  %vm1912 = vweird.f32 %v1906
  %vm1913 = vmor %vm1911, %vm1912
  %v1914 = vsel %vm1913, %v1906, %v1910
  %v1915 = vand.u32 2147483647, %v1647
  %vm1916 = vcmp.eq.f32.partialorder %v1915, 8.507059e+37
  %v1917 = vand.u32 %v1647, 2147483648
  %v1918 = vor.u32 1.1754944e-38, %v1917
  %v1919 = vsel %vm1916, %v1918, %v1914
  %v1920 = vrcp.pop %v1650
  %v1921 = vmul.f32 %v1650, %v1920
  %v1922 = vsub.f32 1.0, %v1921
  %v1923 = vmul.f32 %v1920, %v1922
  %v1924 = vadd.f32 %v1920, %v1923
  %vm1925 = vweird.f32 %v1650
  %vm1926 = vweird.f32 %v1920
  %vm1927 = vmor %vm1925, %vm1926
  %v1928 = vsel %vm1927, %v1920, %v1924
  %v1929 = vand.u32 2147483647, %v1650
  %vm1930 = vcmp.eq.f32.partialorder %v1929, 8.507059e+37
  %v1931 = vand.u32 %v1650, 2147483648
  %v1932 = vor.u32 1.1754944e-38, %v1931
  %v1933 = vsel %vm1930, %v1932, %v1928
  %v1934 = vrcp.pop %v1653
  %v1935 = vmul.f32 %v1653, %v1934
  %v1936 = vsub.f32 1.0, %v1935
  %v1937 = vmul.f32 %v1934, %v1936
  %v1938 = vadd.f32 %v1934, %v1937
  %vm1939 = vweird.f32 %v1653
  %vm1940 = vweird.f32 %v1934
  %vm1941 = vmor %vm1939, %vm1940
  %v1942 = vsel %vm1941, %v1934, %v1938
  %v1943 = vand.u32 2147483647, %v1653
  %vm1944 = vcmp.eq.f32.partialorder %v1943, 8.507059e+37
  %v1945 = vand.u32 %v1653, 2147483648
  %v1946 = vor.u32 1.1754944e-38, %v1945
  %v1947 = vsel %vm1944, %v1946, %v1942
  %v1948 = vrcp.pop %v1656
  %v1949 = vmul.f32 %v1656, %v1948
  %v1950 = vsub.f32 1.0, %v1949
  %v1951 = vmul.f32 %v1948, %v1950
  %v1952 = vadd.f32 %v1948, %v1951
  %vm1953 = vweird.f32 %v1656
  %vm1954 = vweird.f32 %v1948
  %vm1955 = vmor %vm1953, %vm1954
  %v1956 = vsel %vm1955, %v1948, %v1952
  %v1957 = vand.u32 2147483647, %v1656
  %vm1958 = vcmp.eq.f32.partialorder %v1957, 8.507059e+37
  %v1959 = vand.u32 %v1656, 2147483648
  %v1960 = vor.u32 1.1754944e-38, %v1959
  %v1961 = vsel %vm1958, %v1960, %v1956
  %v1962 = vrcp.pop %v1659
  %v1963 = vmul.f32 %v1659, %v1962
  %v1964 = vsub.f32 1.0, %v1963
  %v1965 = vmul.f32 %v1962, %v1964
  %v1966 = vadd.f32 %v1962, %v1965
  %vm1967 = vweird.f32 %v1659
  %vm1968 = vweird.f32 %v1962
  %vm1969 = vmor %vm1967, %vm1968
  %v1970 = vsel %vm1969, %v1962, %v1966
  %v1971 = vand.u32 2147483647, %v1659
  %vm1972 = vcmp.eq.f32.partialorder %v1971, 8.507059e+37
  %v1973 = vand.u32 %v1659, 2147483648
  %v1974 = vor.u32 1.1754944e-38, %v1973
  %v1975 = vsel %vm1972, %v1974, %v1970
  %v1976 = vrcp.pop %v1662
  %v1977 = vmul.f32 %v1662, %v1976
  %v1978 = vsub.f32 1.0, %v1977
  %v1979 = vmul.f32 %v1976, %v1978
  %v1980 = vadd.f32 %v1976, %v1979
  %vm1981 = vweird.f32 %v1662
  %vm1982 = vweird.f32 %v1976
  %vm1983 = vmor %vm1981, %vm1982
  %v1984 = vsel %vm1983, %v1976, %v1980
  %v1985 = vand.u32 2147483647, %v1662
  %vm1986 = vcmp.eq.f32.partialorder %v1985, 8.507059e+37
  %v1987 = vand.u32 %v1662, 2147483648
  %v1988 = vor.u32 1.1754944e-38, %v1987
  %v1989 = vsel %vm1986, %v1988, %v1984
  %v1990 = vrcp.pop %v1665
  %v1991 = vmul.f32 %v1665, %v1990
  %v1992 = vsub.f32 1.0, %v1991
  %v1993 = vmul.f32 %v1990, %v1992
  %v1994 = vadd.f32 %v1990, %v1993
  %vm1995 = vweird.f32 %v1665
  %vm1996 = vweird.f32 %v1990
  %vm1997 = vmor %vm1995, %vm1996
  %v1998 = vsel %vm1997, %v1990, %v1994
  %v1999 = vand.u32 2147483647, %v1665
  %vm2000 = vcmp.eq.f32.partialorder %v1999, 8.507059e+37
  %v2001 = vand.u32 %v1665, 2147483648
  %v2002 = vor.u32 1.1754944e-38, %v2001
  %v2003 = vsel %vm2000, %v2002, %v1998
  %v2004 = vrcp.pop %v1668
  %v2005 = vmul.f32 %v1668, %v2004
  %v2006 = vsub.f32 1.0, %v2005
  %v2007 = vmul.f32 %v2004, %v2006
  %v2008 = vadd.f32 %v2004, %v2007
  %vm2009 = vweird.f32 %v1668
  %vm2010 = vweird.f32 %v2004
  %vm2011 = vmor %vm2009, %vm2010
  %v2012 = vsel %vm2011, %v2004, %v2008
  %v2013 = vand.u32 2147483647, %v1668
  %vm2014 = vcmp.eq.f32.partialorder %v2013, 8.507059e+37
  %v2015 = vand.u32 %v1668, 2147483648
  %v2016 = vor.u32 1.1754944e-38, %v2015
  %v2017 = vsel %vm2014, %v2016, %v2012
  %v2018 = vrcp.pop %v1671
  %v2019 = vmul.f32 %v1671, %v2018
  %v2020 = vsub.f32 1.0, %v2019
  %v2021 = vmul.f32 %v2018, %v2020
  %v2022 = vadd.f32 %v2018, %v2021
  %vm2023 = vweird.f32 %v1671
  %vm2024 = vweird.f32 %v2018
  %vm2025 = vmor %vm2023, %vm2024
  %v2026 = vsel %vm2025, %v2018, %v2022
  %v2027 = vand.u32 2147483647, %v1671
  %vm2028 = vcmp.eq.f32.partialorder %v2027, 8.507059e+37
  %v2029 = vand.u32 %v1671, 2147483648
  %v2030 = vor.u32 1.1754944e-38, %v2029
  %v2031 = vsel %vm2028, %v2030, %v2026
  %v2032 = vrcp.pop %v1674
  %v2033 = vmul.f32 %v1674, %v2032
  %v2034 = vsub.f32 1.0, %v2033
  %v2035 = vmul.f32 %v2032, %v2034
  %v2036 = vadd.f32 %v2032, %v2035
  %vm2037 = vweird.f32 %v1674
  %vm2038 = vweird.f32 %v2032
  %vm2039 = vmor %vm2037, %vm2038
  %v2040 = vsel %vm2039, %v2032, %v2036
  %v2041 = vand.u32 2147483647, %v1674
  %vm2042 = vcmp.eq.f32.partialorder %v2041, 8.507059e+37
  %v2043 = vand.u32 %v1674, 2147483648
  %v2044 = vor.u32 1.1754944e-38, %v2043
  %v2045 = vsel %vm2042, %v2044, %v2040
  %v2046 = vrcp.pop %v1677
  %v2047 = vmul.f32 %v1677, %v2046
  %v2048 = vsub.f32 1.0, %v2047
  %v2049 = vmul.f32 %v2046, %v2048
  %v2050 = vadd.f32 %v2046, %v2049
  %vm2051 = vweird.f32 %v1677
  %vm2052 = vweird.f32 %v2046
  %vm2053 = vmor %vm2051, %vm2052
  %v2054 = vsel %vm2053, %v2046, %v2050
  %v2055 = vand.u32 2147483647, %v1677
  %vm2056 = vcmp.eq.f32.partialorder %v2055, 8.507059e+37
  %v2057 = vand.u32 %v1677, 2147483648
  %v2058 = vor.u32 1.1754944e-38, %v2057
  %v2059 = vsel %vm2056, %v2058, %v2054
  %v2060 = vrcp.pop %v1680
  %v2061 = vmul.f32 %v1680, %v2060
  %v2062 = vsub.f32 1.0, %v2061
  %v2063 = vmul.f32 %v2060, %v2062
  %v2064 = vadd.f32 %v2060, %v2063
  %vm2065 = vweird.f32 %v1680
  %vm2066 = vweird.f32 %v2060
  %vm2067 = vmor %vm2065, %vm2066
  %v2068 = vsel %vm2067, %v2060, %v2064
  %v2069 = vand.u32 2147483647, %v1680
  %vm2070 = vcmp.eq.f32.partialorder %v2069, 8.507059e+37
  %v2071 = vand.u32 %v1680, 2147483648
  %v2072 = vor.u32 1.1754944e-38, %v2071
  %v2073 = vsel %vm2070, %v2072, %v2068
  %v2074 = vrcp.pop %v1683
  %v2075 = vmul.f32 %v1683, %v2074
  %v2076 = vsub.f32 1.0, %v2075
  %v2077 = vmul.f32 %v2074, %v2076
  %v2078 = vadd.f32 %v2074, %v2077
  %vm2079 = vweird.f32 %v1683
  %vm2080 = vweird.f32 %v2074
  %vm2081 = vmor %vm2079, %vm2080
  %v2082 = vsel %vm2081, %v2074, %v2078
  %v2083 = vand.u32 2147483647, %v1683
  %vm2084 = vcmp.eq.f32.partialorder %v2083, 8.507059e+37
  %v2085 = vand.u32 %v1683, 2147483648
  %v2086 = vor.u32 1.1754944e-38, %v2085
  %v2087 = vsel %vm2084, %v2086, %v2082
  %v2088 = vrcp.pop %v1686
  %v2089 = vmul.f32 %v1686, %v2088
  %v2090 = vsub.f32 1.0, %v2089
  %v2091 = vmul.f32 %v2088, %v2090
  %v2092 = vadd.f32 %v2088, %v2091
  %vm2093 = vweird.f32 %v1686
  %vm2094 = vweird.f32 %v2088
  %vm2095 = vmor %vm2093, %vm2094
  %v2096 = vsel %vm2095, %v2088, %v2092
  %v2097 = vand.u32 2147483647, %v1686
  %vm2098 = vcmp.eq.f32.partialorder %v2097, 8.507059e+37
  %v2099 = vand.u32 %v1686, 2147483648
  %v2100 = vor.u32 1.1754944e-38, %v2099
  %v2101 = vsel %vm2098, %v2100, %v2096
  %v2102 = vrcp.pop %v1689
  %v2103 = vmul.f32 %v1689, %v2102
  %v2104 = vsub.f32 1.0, %v2103
  %v2105 = vmul.f32 %v2102, %v2104
  %v2106 = vadd.f32 %v2102, %v2105
  %vm2107 = vweird.f32 %v1689
  %vm2108 = vweird.f32 %v2102
  %vm2109 = vmor %vm2107, %vm2108
  %v2110 = vsel %vm2109, %v2102, %v2106
  %v2111 = vand.u32 2147483647, %v1689
  %vm2112 = vcmp.eq.f32.partialorder %v2111, 8.507059e+37
  %v2113 = vand.u32 %v1689, 2147483648
  %v2114 = vor.u32 1.1754944e-38, %v2113
  %v2115 = vsel %vm2112, %v2114, %v2110
  %v2116 = vrcp.pop %v1692
  %v2117 = vmul.f32 %v1692, %v2116
  %v2118 = vsub.f32 1.0, %v2117
  %v2119 = vmul.f32 %v2116, %v2118
  %v2120 = vadd.f32 %v2116, %v2119
  %vm2121 = vweird.f32 %v1692
  %vm2122 = vweird.f32 %v2116
  %vm2123 = vmor %vm2121, %vm2122
  %v2124 = vsel %vm2123, %v2116, %v2120
  %v2125 = vand.u32 2147483647, %v1692
  %vm2126 = vcmp.eq.f32.partialorder %v2125, 8.507059e+37
  %v2127 = vand.u32 %v1692, 2147483648
  %v2128 = vor.u32 1.1754944e-38, %v2127
  %v2129 = vsel %vm2126, %v2128, %v2124
  %v2130 = vrcp.pop %v1695
  %v2131 = vmul.f32 %v1695, %v2130
  %v2132 = vsub.f32 1.0, %v2131
  %v2133 = vmul.f32 %v2130, %v2132
  %v2134 = vadd.f32 %v2130, %v2133
  %vm2135 = vweird.f32 %v1695
  %vm2136 = vweird.f32 %v2130
  %vm2137 = vmor %vm2135, %vm2136
  %v2138 = vsel %vm2137, %v2130, %v2134
  %v2139 = vand.u32 2147483647, %v1695
  %vm2140 = vcmp.eq.f32.partialorder %v2139, 8.507059e+37
  %v2141 = vand.u32 %v1695, 2147483648
  %v2142 = vor.u32 1.1754944e-38, %v2141
  %v2143 = vsel %vm2140, %v2142, %v2138
  %v2144 = vmul.f32 %v1537, %v1709
  %v2145 = vmul.f32 %v1539, %v1723
  %v2146 = vmul.f32 %v1541, %v1737
  %v2147 = vmul.f32 %v1543, %v1751
  %v2148 = vmul.f32 %v1545, %v1765
  %v2149 = vmul.f32 %v1547, %v1779
  %v2150 = vmul.f32 %v1549, %v1793
  %v2151 = vmul.f32 %v1551, %v1807
  %v2152 = vmul.f32 %v1553, %v1821
  %v2153 = vmul.f32 %v1555, %v1835
  %v2154 = vmul.f32 %v1557, %v1849
  %v2155 = vmul.f32 %v1559, %v1863
  %v2156 = vmul.f32 %v1561, %v1877
  %v2157 = vmul.f32 %v1563, %v1891
  %v2158 = vmul.f32 %v1565, %v1905
  %v2159 = vmul.f32 %v1567, %v1919
  %v2160 = vmul.f32 %v1569, %v1933
  %v2161 = vmul.f32 %v1571, %v1947
  %v2162 = vmul.f32 %v1573, %v1961
  %v2163 = vmul.f32 %v1575, %v1975
  %v2164 = vmul.f32 %v1577, %v1989
  %v2165 = vmul.f32 %v1579, %v2003
  %v2166 = vmul.f32 %v1581, %v2017
  %v2167 = vmul.f32 %v1583, %v2031
  %v2168 = vmul.f32 %v1585, %v2045
  %v2169 = vmul.f32 %v1587, %v2059
  %v2170 = vmul.f32 %v1589, %v2073
  %v2171 = vmul.f32 %v1591, %v2087
  %v2172 = vmul.f32 %v1593, %v2101
  %v2173 = vmul.f32 %v1595, %v2115
  %v2174 = vmul.f32 %v1597, %v2129
  %v2175 = vmul.f32 %v1599, %v2143
  %2176 = vrot.lane.b32.xlu0 %v347, 64
  %v2177 = vpop.permute.xlu0 %2176
  %v2180 = vsel %vm1407, %v2144, 0
  %2182 = vmatpush.msra.mxu0 0.0
  %2183 = vmatpush.msra.mxu0 0.0
  %2184 = vmatpush.msra.mxu0 0.0
  %2185 = vmatpush.msra.mxu0 0.0
  %2186 = vmatpush.msra.mxu0 0.0
  %2187 = vmatpush.msra.mxu0 0.0
  %2188 = vmatpush.msra.mxu0 0.0
  %2189 = vmatpush.msra.mxu0 0.0
  %2190 = vmatpush.msra.mxu0 0.0
  %2191 = vmatpush.msra.mxu0 0.0
  %2192 = vmatpush.msra.mxu0 0.0
  %2193 = vmatpush.msra.mxu0 0.0
  %2194 = vmatpush.msra.mxu0 0.0
  %2195 = vmatpush.msra.mxu0 0.0
  %2196 = vmatpush.msra.mxu0 0.0
  %2197 = vmatpush.msra.mxu0 %v2177
  %2198 = vmatmul.f32.gmra.mxu0 %v2180
  %v2199 = vpop.f32.mrf.mxu0
  %v2200 = vadd.f32 0.0, %v2199
  %2201 = vdwg.mxu0
  %2202 = vrot.lane.b32.xlu0 %v350, 64
  %v2203 = vpop.permute.xlu0 %2202
  %v2206 = vsel %vm1407, %v2145, 0
  %2208 = vmatpush.msra.mxu0 0.0
  %2209 = vmatpush.msra.mxu0 0.0
  %2210 = vmatpush.msra.mxu0 0.0
  %2211 = vmatpush.msra.mxu0 0.0
  %2212 = vmatpush.msra.mxu0 0.0
  %2213 = vmatpush.msra.mxu0 0.0
  %2214 = vmatpush.msra.mxu0 0.0
  %2215 = vmatpush.msra.mxu0 0.0
  %2216 = vmatpush.msra.mxu0 0.0
  %2217 = vmatpush.msra.mxu0 0.0
  %2218 = vmatpush.msra.mxu0 0.0
  %2219 = vmatpush.msra.mxu0 0.0
  %2220 = vmatpush.msra.mxu0 0.0
  %2221 = vmatpush.msra.mxu0 0.0
  %2222 = vmatpush.msra.mxu0 0.0
  %2223 = vmatpush.msra.mxu0 %v2203
  %2224 = vmatmul.f32.gmra.mxu0 %v2206
  %v2225 = vpop.f32.mrf.mxu0
  %v2226 = vadd.f32 0.0, %v2225
  %2227 = vdwg.mxu0
  %2228 = vrot.lane.b32.xlu0 %v353, 64
  %v2229 = vpop.permute.xlu0 %2228
  %v2232 = vsel %vm1407, %v2146, 0
  %2234 = vmatpush.msra.mxu0 0.0
  %2235 = vmatpush.msra.mxu0 0.0
  %2236 = vmatpush.msra.mxu0 0.0
  %2237 = vmatpush.msra.mxu0 0.0
  %2238 = vmatpush.msra.mxu0 0.0
  %2239 = vmatpush.msra.mxu0 0.0
  %2240 = vmatpush.msra.mxu0 0.0
  %2241 = vmatpush.msra.mxu0 0.0
  %2242 = vmatpush.msra.mxu0 0.0
  %2243 = vmatpush.msra.mxu0 0.0
  %2244 = vmatpush.msra.mxu0 0.0
  %2245 = vmatpush.msra.mxu0 0.0
  %2246 = vmatpush.msra.mxu0 0.0
  %2247 = vmatpush.msra.mxu0 0.0
  %2248 = vmatpush.msra.mxu0 0.0
  %2249 = vmatpush.msra.mxu0 %v2229
  %2250 = vmatmul.f32.gmra.mxu0 %v2232
  %v2251 = vpop.f32.mrf.mxu0
  %v2252 = vadd.f32 0.0, %v2251
  %2253 = vdwg.mxu0
  %2254 = vrot.lane.b32.xlu0 %v356, 64
  %v2255 = vpop.permute.xlu0 %2254
  %v2258 = vsel %vm1407, %v2147, 0
  %2260 = vmatpush.msra.mxu0 0.0
  %2261 = vmatpush.msra.mxu0 0.0
  %2262 = vmatpush.msra.mxu0 0.0
  %2263 = vmatpush.msra.mxu0 0.0
  %2264 = vmatpush.msra.mxu0 0.0
  %2265 = vmatpush.msra.mxu0 0.0
  %2266 = vmatpush.msra.mxu0 0.0
  %2267 = vmatpush.msra.mxu0 0.0
  %2268 = vmatpush.msra.mxu0 0.0
  %2269 = vmatpush.msra.mxu0 0.0
  %2270 = vmatpush.msra.mxu0 0.0
  %2271 = vmatpush.msra.mxu0 0.0
  %2272 = vmatpush.msra.mxu0 0.0
  %2273 = vmatpush.msra.mxu0 0.0
  %2274 = vmatpush.msra.mxu0 0.0
  %2275 = vmatpush.msra.mxu0 %v2255
  %2276 = vmatmul.f32.gmra.mxu0 %v2258
  %v2277 = vpop.f32.mrf.mxu0
  %v2278 = vadd.f32 0.0, %v2277
  %2279 = vdwg.mxu0
  %2280 = vrot.lane.b32.xlu0 %v359, 64
  %v2281 = vpop.permute.xlu0 %2280
  %v2284 = vsel %vm1407, %v2148, 0
  %2286 = vmatpush.msra.mxu0 0.0
  %2287 = vmatpush.msra.mxu0 0.0
  %2288 = vmatpush.msra.mxu0 0.0
  %2289 = vmatpush.msra.mxu0 0.0
  %2290 = vmatpush.msra.mxu0 0.0
  %2291 = vmatpush.msra.mxu0 0.0
  %2292 = vmatpush.msra.mxu0 0.0
  %2293 = vmatpush.msra.mxu0 0.0
  %2294 = vmatpush.msra.mxu0 0.0
  %2295 = vmatpush.msra.mxu0 0.0
  %2296 = vmatpush.msra.mxu0 0.0
  %2297 = vmatpush.msra.mxu0 0.0
  %2298 = vmatpush.msra.mxu0 0.0
  %2299 = vmatpush.msra.mxu0 0.0
  %2300 = vmatpush.msra.mxu0 0.0
  %2301 = vmatpush.msra.mxu0 %v2281
  %2302 = vmatmul.f32.gmra.mxu0 %v2284
  %v2303 = vpop.f32.mrf.mxu0
  %v2304 = vadd.f32 0.0, %v2303
  %2305 = vdwg.mxu0
  %2306 = vrot.lane.b32.xlu0 %v362, 64
  %v2307 = vpop.permute.xlu0 %2306
  %v2310 = vsel %vm1407, %v2149, 0
  %2312 = vmatpush.msra.mxu0 0.0
  %2313 = vmatpush.msra.mxu0 0.0
  %2314 = vmatpush.msra.mxu0 0.0
  %2315 = vmatpush.msra.mxu0 0.0
  %2316 = vmatpush.msra.mxu0 0.0
  %2317 = vmatpush.msra.mxu0 0.0
  %2318 = vmatpush.msra.mxu0 0.0
  %2319 = vmatpush.msra.mxu0 0.0
  %2320 = vmatpush.msra.mxu0 0.0
  %2321 = vmatpush.msra.mxu0 0.0
  %2322 = vmatpush.msra.mxu0 0.0
  %2323 = vmatpush.msra.mxu0 0.0
  %2324 = vmatpush.msra.mxu0 0.0
  %2325 = vmatpush.msra.mxu0 0.0
  %2326 = vmatpush.msra.mxu0 0.0
  %2327 = vmatpush.msra.mxu0 %v2307
  %2328 = vmatmul.f32.gmra.mxu0 %v2310
  %v2329 = vpop.f32.mrf.mxu0
  %v2330 = vadd.f32 0.0, %v2329
  %2331 = vdwg.mxu0
  %2332 = vrot.lane.b32.xlu0 %v365, 64
  %v2333 = vpop.permute.xlu0 %2332
  %v2336 = vsel %vm1407, %v2150, 0
  %2338 = vmatpush.msra.mxu0 0.0
  %2339 = vmatpush.msra.mxu0 0.0
  %2340 = vmatpush.msra.mxu0 0.0
  %2341 = vmatpush.msra.mxu0 0.0
  %2342 = vmatpush.msra.mxu0 0.0
  %2343 = vmatpush.msra.mxu0 0.0
  %2344 = vmatpush.msra.mxu0 0.0
  %2345 = vmatpush.msra.mxu0 0.0
  %2346 = vmatpush.msra.mxu0 0.0
  %2347 = vmatpush.msra.mxu0 0.0
  %2348 = vmatpush.msra.mxu0 0.0
  %2349 = vmatpush.msra.mxu0 0.0
  %2350 = vmatpush.msra.mxu0 0.0
  %2351 = vmatpush.msra.mxu0 0.0
  %2352 = vmatpush.msra.mxu0 0.0
  %2353 = vmatpush.msra.mxu0 %v2333
  %2354 = vmatmul.f32.gmra.mxu0 %v2336
  %v2355 = vpop.f32.mrf.mxu0
  %v2356 = vadd.f32 0.0, %v2355
  %2357 = vdwg.mxu0
  %2358 = vrot.lane.b32.xlu0 %v368, 64
  %v2359 = vpop.permute.xlu0 %2358
  %v2362 = vsel %vm1407, %v2151, 0
  %2364 = vmatpush.msra.mxu0 0.0
  %2365 = vmatpush.msra.mxu0 0.0
  %2366 = vmatpush.msra.mxu0 0.0
  %2367 = vmatpush.msra.mxu0 0.0
  %2368 = vmatpush.msra.mxu0 0.0
  %2369 = vmatpush.msra.mxu0 0.0
  %2370 = vmatpush.msra.mxu0 0.0
  %2371 = vmatpush.msra.mxu0 0.0
  %2372 = vmatpush.msra.mxu0 0.0
  %2373 = vmatpush.msra.mxu0 0.0
  %2374 = vmatpush.msra.mxu0 0.0
  %2375 = vmatpush.msra.mxu0 0.0
  %2376 = vmatpush.msra.mxu0 0.0
  %2377 = vmatpush.msra.mxu0 0.0
  %2378 = vmatpush.msra.mxu0 0.0
  %2379 = vmatpush.msra.mxu0 %v2359
  %2380 = vmatmul.f32.gmra.mxu0 %v2362
  %v2381 = vpop.f32.mrf.mxu0
  %v2382 = vadd.f32 0.0, %v2381
  %2383 = vdwg.mxu0
  %2384 = vrot.lane.b32.xlu0 %v371, 64
  %v2385 = vpop.permute.xlu0 %2384
  %v2388 = vsel %vm1407, %v2152, 0
  %2390 = vmatpush.msra.mxu0 0.0
  %2391 = vmatpush.msra.mxu0 0.0
  %2392 = vmatpush.msra.mxu0 0.0
  %2393 = vmatpush.msra.mxu0 0.0
  %2394 = vmatpush.msra.mxu0 0.0
  %2395 = vmatpush.msra.mxu0 0.0
  %2396 = vmatpush.msra.mxu0 0.0
  %2397 = vmatpush.msra.mxu0 0.0
  %2398 = vmatpush.msra.mxu0 0.0
  %2399 = vmatpush.msra.mxu0 0.0
  %2400 = vmatpush.msra.mxu0 0.0
  %2401 = vmatpush.msra.mxu0 0.0
  %2402 = vmatpush.msra.mxu0 0.0
  %2403 = vmatpush.msra.mxu0 0.0
  %2404 = vmatpush.msra.mxu0 0.0
  %2405 = vmatpush.msra.mxu0 %v2385
  %2406 = vmatmul.f32.gmra.mxu0 %v2388
  %v2407 = vpop.f32.mrf.mxu0
  %v2408 = vadd.f32 0.0, %v2407
  %2409 = vdwg.mxu0
  %2410 = vrot.lane.b32.xlu0 %v374, 64
  %v2411 = vpop.permute.xlu0 %2410
  %v2414 = vsel %vm1407, %v2153, 0
  %2416 = vmatpush.msra.mxu0 0.0
  %2417 = vmatpush.msra.mxu0 0.0
  %2418 = vmatpush.msra.mxu0 0.0
  %2419 = vmatpush.msra.mxu0 0.0
  %2420 = vmatpush.msra.mxu0 0.0
  %2421 = vmatpush.msra.mxu0 0.0
  %2422 = vmatpush.msra.mxu0 0.0
  %2423 = vmatpush.msra.mxu0 0.0
  %2424 = vmatpush.msra.mxu0 0.0
  %2425 = vmatpush.msra.mxu0 0.0
  %2426 = vmatpush.msra.mxu0 0.0
  %2427 = vmatpush.msra.mxu0 0.0
  %2428 = vmatpush.msra.mxu0 0.0
  %2429 = vmatpush.msra.mxu0 0.0
  %2430 = vmatpush.msra.mxu0 0.0
  %2431 = vmatpush.msra.mxu0 %v2411
  %2432 = vmatmul.f32.gmra.mxu0 %v2414
  %v2433 = vpop.f32.mrf.mxu0
  %v2434 = vadd.f32 0.0, %v2433
  %2435 = vdwg.mxu0
  %2436 = vrot.lane.b32.xlu0 %v377, 64
  %v2437 = vpop.permute.xlu0 %2436
  %v2440 = vsel %vm1407, %v2154, 0
  %2442 = vmatpush.msra.mxu0 0.0
  %2443 = vmatpush.msra.mxu0 0.0
  %2444 = vmatpush.msra.mxu0 0.0
  %2445 = vmatpush.msra.mxu0 0.0
  %2446 = vmatpush.msra.mxu0 0.0
  %2447 = vmatpush.msra.mxu0 0.0
  %2448 = vmatpush.msra.mxu0 0.0
  %2449 = vmatpush.msra.mxu0 0.0
  %2450 = vmatpush.msra.mxu0 0.0
  %2451 = vmatpush.msra.mxu0 0.0
  %2452 = vmatpush.msra.mxu0 0.0
  %2453 = vmatpush.msra.mxu0 0.0
  %2454 = vmatpush.msra.mxu0 0.0
  %2455 = vmatpush.msra.mxu0 0.0
  %2456 = vmatpush.msra.mxu0 0.0
  %2457 = vmatpush.msra.mxu0 %v2437
  %2458 = vmatmul.f32.gmra.mxu0 %v2440
  %v2459 = vpop.f32.mrf.mxu0
  %v2460 = vadd.f32 0.0, %v2459
  %2461 = vdwg.mxu0
  %2462 = vrot.lane.b32.xlu0 %v380, 64
  %v2463 = vpop.permute.xlu0 %2462
  %v2466 = vsel %vm1407, %v2155, 0
  %2468 = vmatpush.msra.mxu0 0.0
  %2469 = vmatpush.msra.mxu0 0.0
  %2470 = vmatpush.msra.mxu0 0.0
  %2471 = vmatpush.msra.mxu0 0.0
  %2472 = vmatpush.msra.mxu0 0.0
  %2473 = vmatpush.msra.mxu0 0.0
  %2474 = vmatpush.msra.mxu0 0.0
  %2475 = vmatpush.msra.mxu0 0.0
  %2476 = vmatpush.msra.mxu0 0.0
  %2477 = vmatpush.msra.mxu0 0.0
  %2478 = vmatpush.msra.mxu0 0.0
  %2479 = vmatpush.msra.mxu0 0.0
  %2480 = vmatpush.msra.mxu0 0.0
  %2481 = vmatpush.msra.mxu0 0.0
  %2482 = vmatpush.msra.mxu0 0.0
  %2483 = vmatpush.msra.mxu0 %v2463
  %2484 = vmatmul.f32.gmra.mxu0 %v2466
  %v2485 = vpop.f32.mrf.mxu0
  %v2486 = vadd.f32 0.0, %v2485
  %2487 = vdwg.mxu0
  %2488 = vrot.lane.b32.xlu0 %v383, 64
  %v2489 = vpop.permute.xlu0 %2488
  %v2492 = vsel %vm1407, %v2156, 0
  %2494 = vmatpush.msra.mxu0 0.0
  %2495 = vmatpush.msra.mxu0 0.0
  %2496 = vmatpush.msra.mxu0 0.0
  %2497 = vmatpush.msra.mxu0 0.0
  %2498 = vmatpush.msra.mxu0 0.0
  %2499 = vmatpush.msra.mxu0 0.0
  %2500 = vmatpush.msra.mxu0 0.0
  %2501 = vmatpush.msra.mxu0 0.0
  %2502 = vmatpush.msra.mxu0 0.0
  %2503 = vmatpush.msra.mxu0 0.0
  %2504 = vmatpush.msra.mxu0 0.0
  %2505 = vmatpush.msra.mxu0 0.0
  %2506 = vmatpush.msra.mxu0 0.0
  %2507 = vmatpush.msra.mxu0 0.0
  %2508 = vmatpush.msra.mxu0 0.0
  %2509 = vmatpush.msra.mxu0 %v2489
  %2510 = vmatmul.f32.gmra.mxu0 %v2492
  %v2511 = vpop.f32.mrf.mxu0
  %v2512 = vadd.f32 0.0, %v2511
  %2513 = vdwg.mxu0
  %2514 = vrot.lane.b32.xlu0 %v386, 64
  %v2515 = vpop.permute.xlu0 %2514
  %v2518 = vsel %vm1407, %v2157, 0
  %2520 = vmatpush.msra.mxu0 0.0
  %2521 = vmatpush.msra.mxu0 0.0
  %2522 = vmatpush.msra.mxu0 0.0
  %2523 = vmatpush.msra.mxu0 0.0
  %2524 = vmatpush.msra.mxu0 0.0
  %2525 = vmatpush.msra.mxu0 0.0
  %2526 = vmatpush.msra.mxu0 0.0
  %2527 = vmatpush.msra.mxu0 0.0
  %2528 = vmatpush.msra.mxu0 0.0
  %2529 = vmatpush.msra.mxu0 0.0
  %2530 = vmatpush.msra.mxu0 0.0
  %2531 = vmatpush.msra.mxu0 0.0
  %2532 = vmatpush.msra.mxu0 0.0
  %2533 = vmatpush.msra.mxu0 0.0
  %2534 = vmatpush.msra.mxu0 0.0
  %2535 = vmatpush.msra.mxu0 %v2515
  %2536 = vmatmul.f32.gmra.mxu0 %v2518
  %v2537 = vpop.f32.mrf.mxu0
  %v2538 = vadd.f32 0.0, %v2537
  %2539 = vdwg.mxu0
  %2540 = vrot.lane.b32.xlu0 %v389, 64
  %v2541 = vpop.permute.xlu0 %2540
  %v2544 = vsel %vm1407, %v2158, 0
  %2546 = vmatpush.msra.mxu0 0.0
  %2547 = vmatpush.msra.mxu0 0.0
  %2548 = vmatpush.msra.mxu0 0.0
  %2549 = vmatpush.msra.mxu0 0.0
  %2550 = vmatpush.msra.mxu0 0.0
  %2551 = vmatpush.msra.mxu0 0.0
  %2552 = vmatpush.msra.mxu0 0.0
  %2553 = vmatpush.msra.mxu0 0.0
  %2554 = vmatpush.msra.mxu0 0.0
  %2555 = vmatpush.msra.mxu0 0.0
  %2556 = vmatpush.msra.mxu0 0.0
  %2557 = vmatpush.msra.mxu0 0.0
  %2558 = vmatpush.msra.mxu0 0.0
  %2559 = vmatpush.msra.mxu0 0.0
  %2560 = vmatpush.msra.mxu0 0.0
  %2561 = vmatpush.msra.mxu0 %v2541
  %2562 = vmatmul.f32.gmra.mxu0 %v2544
  %v2563 = vpop.f32.mrf.mxu0
  %v2564 = vadd.f32 0.0, %v2563
  %2565 = vdwg.mxu0
  %2566 = vrot.lane.b32.xlu0 %v392, 64
  %v2567 = vpop.permute.xlu0 %2566
  %v2570 = vsel %vm1407, %v2159, 0
  %2572 = vmatpush.msra.mxu0 0.0
  %2573 = vmatpush.msra.mxu0 0.0
  %2574 = vmatpush.msra.mxu0 0.0
  %2575 = vmatpush.msra.mxu0 0.0
  %2576 = vmatpush.msra.mxu0 0.0
  %2577 = vmatpush.msra.mxu0 0.0
  %2578 = vmatpush.msra.mxu0 0.0
  %2579 = vmatpush.msra.mxu0 0.0
  %2580 = vmatpush.msra.mxu0 0.0
  %2581 = vmatpush.msra.mxu0 0.0
  %2582 = vmatpush.msra.mxu0 0.0
  %2583 = vmatpush.msra.mxu0 0.0
  %2584 = vmatpush.msra.mxu0 0.0
  %2585 = vmatpush.msra.mxu0 0.0
  %2586 = vmatpush.msra.mxu0 0.0
  %2587 = vmatpush.msra.mxu0 %v2567
  %2588 = vmatmul.f32.gmra.mxu0 %v2570
  %v2589 = vpop.f32.mrf.mxu0
  %v2590 = vadd.f32 0.0, %v2589
  %2591 = vdwg.mxu0
  %2592 = vrot.lane.b32.xlu0 %v395, 64
  %v2593 = vpop.permute.xlu0 %2592
  %v2596 = vsel %vm1407, %v2160, 0
  %2598 = vmatpush.msra.mxu0 0.0
  %2599 = vmatpush.msra.mxu0 0.0
  %2600 = vmatpush.msra.mxu0 0.0
  %2601 = vmatpush.msra.mxu0 0.0
  %2602 = vmatpush.msra.mxu0 0.0
  %2603 = vmatpush.msra.mxu0 0.0
  %2604 = vmatpush.msra.mxu0 0.0
  %2605 = vmatpush.msra.mxu0 0.0
  %2606 = vmatpush.msra.mxu0 0.0
  %2607 = vmatpush.msra.mxu0 0.0
  %2608 = vmatpush.msra.mxu0 0.0
  %2609 = vmatpush.msra.mxu0 0.0
  %2610 = vmatpush.msra.mxu0 0.0
  %2611 = vmatpush.msra.mxu0 0.0
  %2612 = vmatpush.msra.mxu0 0.0
  %2613 = vmatpush.msra.mxu0 %v2593
  %2614 = vmatmul.f32.gmra.mxu0 %v2596
  %v2615 = vpop.f32.mrf.mxu0
  %v2616 = vadd.f32 0.0, %v2615
  %2617 = vdwg.mxu0
  %2618 = vrot.lane.b32.xlu0 %v398, 64
  %v2619 = vpop.permute.xlu0 %2618
  %v2622 = vsel %vm1407, %v2161, 0
  %2624 = vmatpush.msra.mxu0 0.0
  %2625 = vmatpush.msra.mxu0 0.0
  %2626 = vmatpush.msra.mxu0 0.0
  %2627 = vmatpush.msra.mxu0 0.0
  %2628 = vmatpush.msra.mxu0 0.0
  %2629 = vmatpush.msra.mxu0 0.0
  %2630 = vmatpush.msra.mxu0 0.0
  %2631 = vmatpush.msra.mxu0 0.0
  %2632 = vmatpush.msra.mxu0 0.0
  %2633 = vmatpush.msra.mxu0 0.0
  %2634 = vmatpush.msra.mxu0 0.0
  %2635 = vmatpush.msra.mxu0 0.0
  %2636 = vmatpush.msra.mxu0 0.0
  %2637 = vmatpush.msra.mxu0 0.0
  %2638 = vmatpush.msra.mxu0 0.0
  %2639 = vmatpush.msra.mxu0 %v2619
  %2640 = vmatmul.f32.gmra.mxu0 %v2622
  %v2641 = vpop.f32.mrf.mxu0
  %v2642 = vadd.f32 0.0, %v2641
  %2643 = vdwg.mxu0
  %2644 = vrot.lane.b32.xlu0 %v401, 64
  %v2645 = vpop.permute.xlu0 %2644
  %v2648 = vsel %vm1407, %v2162, 0
  %2650 = vmatpush.msra.mxu0 0.0
  %2651 = vmatpush.msra.mxu0 0.0
  %2652 = vmatpush.msra.mxu0 0.0
  %2653 = vmatpush.msra.mxu0 0.0
  %2654 = vmatpush.msra.mxu0 0.0
  %2655 = vmatpush.msra.mxu0 0.0
  %2656 = vmatpush.msra.mxu0 0.0
  %2657 = vmatpush.msra.mxu0 0.0
  %2658 = vmatpush.msra.mxu0 0.0
  %2659 = vmatpush.msra.mxu0 0.0
  %2660 = vmatpush.msra.mxu0 0.0
  %2661 = vmatpush.msra.mxu0 0.0
  %2662 = vmatpush.msra.mxu0 0.0
  %2663 = vmatpush.msra.mxu0 0.0
  %2664 = vmatpush.msra.mxu0 0.0
  %2665 = vmatpush.msra.mxu0 %v2645
  %2666 = vmatmul.f32.gmra.mxu0 %v2648
  %v2667 = vpop.f32.mrf.mxu0
  %v2668 = vadd.f32 0.0, %v2667
  %2669 = vdwg.mxu0
  %2670 = vrot.lane.b32.xlu0 %v404, 64
  %v2671 = vpop.permute.xlu0 %2670
  %v2674 = vsel %vm1407, %v2163, 0
  %2676 = vmatpush.msra.mxu0 0.0
  %2677 = vmatpush.msra.mxu0 0.0
  %2678 = vmatpush.msra.mxu0 0.0
  %2679 = vmatpush.msra.mxu0 0.0
  %2680 = vmatpush.msra.mxu0 0.0
  %2681 = vmatpush.msra.mxu0 0.0
  %2682 = vmatpush.msra.mxu0 0.0
  %2683 = vmatpush.msra.mxu0 0.0
  %2684 = vmatpush.msra.mxu0 0.0
  %2685 = vmatpush.msra.mxu0 0.0
  %2686 = vmatpush.msra.mxu0 0.0
  %2687 = vmatpush.msra.mxu0 0.0
  %2688 = vmatpush.msra.mxu0 0.0
  %2689 = vmatpush.msra.mxu0 0.0
  %2690 = vmatpush.msra.mxu0 0.0
  %2691 = vmatpush.msra.mxu0 %v2671
  %2692 = vmatmul.f32.gmra.mxu0 %v2674
  %v2693 = vpop.f32.mrf.mxu0
  %v2694 = vadd.f32 0.0, %v2693
  %2695 = vdwg.mxu0
  %2696 = vrot.lane.b32.xlu0 %v407, 64
  %v2697 = vpop.permute.xlu0 %2696
  %v2700 = vsel %vm1407, %v2164, 0
  %2702 = vmatpush.msra.mxu0 0.0
  %2703 = vmatpush.msra.mxu0 0.0
  %2704 = vmatpush.msra.mxu0 0.0
  %2705 = vmatpush.msra.mxu0 0.0
  %2706 = vmatpush.msra.mxu0 0.0
  %2707 = vmatpush.msra.mxu0 0.0
  %2708 = vmatpush.msra.mxu0 0.0
  %2709 = vmatpush.msra.mxu0 0.0
  %2710 = vmatpush.msra.mxu0 0.0
  %2711 = vmatpush.msra.mxu0 0.0
  %2712 = vmatpush.msra.mxu0 0.0
  %2713 = vmatpush.msra.mxu0 0.0
  %2714 = vmatpush.msra.mxu0 0.0
  %2715 = vmatpush.msra.mxu0 0.0
  %2716 = vmatpush.msra.mxu0 0.0
  %2717 = vmatpush.msra.mxu0 %v2697
  %2718 = vmatmul.f32.gmra.mxu0 %v2700
  %v2719 = vpop.f32.mrf.mxu0
  %v2720 = vadd.f32 0.0, %v2719
  %2721 = vdwg.mxu0
  %2722 = vrot.lane.b32.xlu0 %v410, 64
  %v2723 = vpop.permute.xlu0 %2722
  %v2726 = vsel %vm1407, %v2165, 0
  %2728 = vmatpush.msra.mxu0 0.0
  %2729 = vmatpush.msra.mxu0 0.0
  %2730 = vmatpush.msra.mxu0 0.0
  %2731 = vmatpush.msra.mxu0 0.0
  %2732 = vmatpush.msra.mxu0 0.0
  %2733 = vmatpush.msra.mxu0 0.0
  %2734 = vmatpush.msra.mxu0 0.0
  %2735 = vmatpush.msra.mxu0 0.0
  %2736 = vmatpush.msra.mxu0 0.0
  %2737 = vmatpush.msra.mxu0 0.0
  %2738 = vmatpush.msra.mxu0 0.0
  %2739 = vmatpush.msra.mxu0 0.0
  %2740 = vmatpush.msra.mxu0 0.0
  %2741 = vmatpush.msra.mxu0 0.0
  %2742 = vmatpush.msra.mxu0 0.0
  %2743 = vmatpush.msra.mxu0 %v2723
  %2744 = vmatmul.f32.gmra.mxu0 %v2726
  %v2745 = vpop.f32.mrf.mxu0
  %v2746 = vadd.f32 0.0, %v2745
  %2747 = vdwg.mxu0
  %2748 = vrot.lane.b32.xlu0 %v413, 64
  %v2749 = vpop.permute.xlu0 %2748
  %v2752 = vsel %vm1407, %v2166, 0
  %2754 = vmatpush.msra.mxu0 0.0
  %2755 = vmatpush.msra.mxu0 0.0
  %2756 = vmatpush.msra.mxu0 0.0
  %2757 = vmatpush.msra.mxu0 0.0
  %2758 = vmatpush.msra.mxu0 0.0
  %2759 = vmatpush.msra.mxu0 0.0
  %2760 = vmatpush.msra.mxu0 0.0
  %2761 = vmatpush.msra.mxu0 0.0
  %2762 = vmatpush.msra.mxu0 0.0
  %2763 = vmatpush.msra.mxu0 0.0
  %2764 = vmatpush.msra.mxu0 0.0
  %2765 = vmatpush.msra.mxu0 0.0
  %2766 = vmatpush.msra.mxu0 0.0
  %2767 = vmatpush.msra.mxu0 0.0
  %2768 = vmatpush.msra.mxu0 0.0
  %2769 = vmatpush.msra.mxu0 %v2749
  %2770 = vmatmul.f32.gmra.mxu0 %v2752
  %v2771 = vpop.f32.mrf.mxu0
  %v2772 = vadd.f32 0.0, %v2771
  %2773 = vdwg.mxu0
  %2774 = vrot.lane.b32.xlu0 %v416, 64
  %v2775 = vpop.permute.xlu0 %2774
  %v2778 = vsel %vm1407, %v2167, 0
  %2780 = vmatpush.msra.mxu0 0.0
  %2781 = vmatpush.msra.mxu0 0.0
  %2782 = vmatpush.msra.mxu0 0.0
  %2783 = vmatpush.msra.mxu0 0.0
  %2784 = vmatpush.msra.mxu0 0.0
  %2785 = vmatpush.msra.mxu0 0.0
  %2786 = vmatpush.msra.mxu0 0.0
  %2787 = vmatpush.msra.mxu0 0.0
  %2788 = vmatpush.msra.mxu0 0.0
  %2789 = vmatpush.msra.mxu0 0.0
  %2790 = vmatpush.msra.mxu0 0.0
  %2791 = vmatpush.msra.mxu0 0.0
  %2792 = vmatpush.msra.mxu0 0.0
  %2793 = vmatpush.msra.mxu0 0.0
  %2794 = vmatpush.msra.mxu0 0.0
  %2795 = vmatpush.msra.mxu0 %v2775
  %2796 = vmatmul.f32.gmra.mxu0 %v2778
  %v2797 = vpop.f32.mrf.mxu0
  %v2798 = vadd.f32 0.0, %v2797
  %2799 = vdwg.mxu0
  %2800 = vrot.lane.b32.xlu0 %v419, 64
  %v2801 = vpop.permute.xlu0 %2800
  %v2804 = vsel %vm1407, %v2168, 0
  %2806 = vmatpush.msra.mxu0 0.0
  %2807 = vmatpush.msra.mxu0 0.0
  %2808 = vmatpush.msra.mxu0 0.0
  %2809 = vmatpush.msra.mxu0 0.0
  %2810 = vmatpush.msra.mxu0 0.0
  %2811 = vmatpush.msra.mxu0 0.0
  %2812 = vmatpush.msra.mxu0 0.0
  %2813 = vmatpush.msra.mxu0 0.0
  %2814 = vmatpush.msra.mxu0 0.0
  %2815 = vmatpush.msra.mxu0 0.0
  %2816 = vmatpush.msra.mxu0 0.0
  %2817 = vmatpush.msra.mxu0 0.0
  %2818 = vmatpush.msra.mxu0 0.0
  %2819 = vmatpush.msra.mxu0 0.0
  %2820 = vmatpush.msra.mxu0 0.0
  %2821 = vmatpush.msra.mxu0 %v2801
  %2822 = vmatmul.f32.gmra.mxu0 %v2804
  %v2823 = vpop.f32.mrf.mxu0
  %v2824 = vadd.f32 0.0, %v2823
  %2825 = vdwg.mxu0
  %2826 = vrot.lane.b32.xlu0 %v422, 64
  %v2827 = vpop.permute.xlu0 %2826
  %v2830 = vsel %vm1407, %v2169, 0
  %2832 = vmatpush.msra.mxu0 0.0
  %2833 = vmatpush.msra.mxu0 0.0
  %2834 = vmatpush.msra.mxu0 0.0
  %2835 = vmatpush.msra.mxu0 0.0
  %2836 = vmatpush.msra.mxu0 0.0
  %2837 = vmatpush.msra.mxu0 0.0
  %2838 = vmatpush.msra.mxu0 0.0
  %2839 = vmatpush.msra.mxu0 0.0
  %2840 = vmatpush.msra.mxu0 0.0
  %2841 = vmatpush.msra.mxu0 0.0
  %2842 = vmatpush.msra.mxu0 0.0
  %2843 = vmatpush.msra.mxu0 0.0
  %2844 = vmatpush.msra.mxu0 0.0
  %2845 = vmatpush.msra.mxu0 0.0
  %2846 = vmatpush.msra.mxu0 0.0
  %2847 = vmatpush.msra.mxu0 %v2827
  %2848 = vmatmul.f32.gmra.mxu0 %v2830
  %v2849 = vpop.f32.mrf.mxu0
  %v2850 = vadd.f32 0.0, %v2849
  %2851 = vdwg.mxu0
  %2852 = vrot.lane.b32.xlu0 %v425, 64
  %v2853 = vpop.permute.xlu0 %2852
  %v2856 = vsel %vm1407, %v2170, 0
  %2858 = vmatpush.msra.mxu0 0.0
  %2859 = vmatpush.msra.mxu0 0.0
  %2860 = vmatpush.msra.mxu0 0.0
  %2861 = vmatpush.msra.mxu0 0.0
  %2862 = vmatpush.msra.mxu0 0.0
  %2863 = vmatpush.msra.mxu0 0.0
  %2864 = vmatpush.msra.mxu0 0.0
  %2865 = vmatpush.msra.mxu0 0.0
  %2866 = vmatpush.msra.mxu0 0.0
  %2867 = vmatpush.msra.mxu0 0.0
  %2868 = vmatpush.msra.mxu0 0.0
  %2869 = vmatpush.msra.mxu0 0.0
  %2870 = vmatpush.msra.mxu0 0.0
  %2871 = vmatpush.msra.mxu0 0.0
  %2872 = vmatpush.msra.mxu0 0.0
  %2873 = vmatpush.msra.mxu0 %v2853
  %2874 = vmatmul.f32.gmra.mxu0 %v2856
  %v2875 = vpop.f32.mrf.mxu0
  %v2876 = vadd.f32 0.0, %v2875
  %2877 = vdwg.mxu0
  %2878 = vrot.lane.b32.xlu0 %v428, 64
  %v2879 = vpop.permute.xlu0 %2878
  %v2882 = vsel %vm1407, %v2171, 0
  %2884 = vmatpush.msra.mxu0 0.0
  %2885 = vmatpush.msra.mxu0 0.0
  %2886 = vmatpush.msra.mxu0 0.0
  %2887 = vmatpush.msra.mxu0 0.0
  %2888 = vmatpush.msra.mxu0 0.0
  %2889 = vmatpush.msra.mxu0 0.0
  %2890 = vmatpush.msra.mxu0 0.0
  %2891 = vmatpush.msra.mxu0 0.0
  %2892 = vmatpush.msra.mxu0 0.0
  %2893 = vmatpush.msra.mxu0 0.0
  %2894 = vmatpush.msra.mxu0 0.0
  %2895 = vmatpush.msra.mxu0 0.0
  %2896 = vmatpush.msra.mxu0 0.0
  %2897 = vmatpush.msra.mxu0 0.0
  %2898 = vmatpush.msra.mxu0 0.0
  %2899 = vmatpush.msra.mxu0 %v2879
  %2900 = vmatmul.f32.gmra.mxu0 %v2882
  %v2901 = vpop.f32.mrf.mxu0
  %v2902 = vadd.f32 0.0, %v2901
  %2903 = vdwg.mxu0
  %2904 = vrot.lane.b32.xlu0 %v431, 64
  %v2905 = vpop.permute.xlu0 %2904
  %v2908 = vsel %vm1407, %v2172, 0
  %2910 = vmatpush.msra.mxu0 0.0
  %2911 = vmatpush.msra.mxu0 0.0
  %2912 = vmatpush.msra.mxu0 0.0
  %2913 = vmatpush.msra.mxu0 0.0
  %2914 = vmatpush.msra.mxu0 0.0
  %2915 = vmatpush.msra.mxu0 0.0
  %2916 = vmatpush.msra.mxu0 0.0
  %2917 = vmatpush.msra.mxu0 0.0
  %2918 = vmatpush.msra.mxu0 0.0
  %2919 = vmatpush.msra.mxu0 0.0
  %2920 = vmatpush.msra.mxu0 0.0
  %2921 = vmatpush.msra.mxu0 0.0
  %2922 = vmatpush.msra.mxu0 0.0
  %2923 = vmatpush.msra.mxu0 0.0
  %2924 = vmatpush.msra.mxu0 0.0
  %2925 = vmatpush.msra.mxu0 %v2905
  %2926 = vmatmul.f32.gmra.mxu0 %v2908
  %v2927 = vpop.f32.mrf.mxu0
  %v2928 = vadd.f32 0.0, %v2927
  %2929 = vdwg.mxu0
  %2930 = vrot.lane.b32.xlu0 %v434, 64
  %v2931 = vpop.permute.xlu0 %2930
  %v2934 = vsel %vm1407, %v2173, 0
  %2936 = vmatpush.msra.mxu0 0.0
  %2937 = vmatpush.msra.mxu0 0.0
  %2938 = vmatpush.msra.mxu0 0.0
  %2939 = vmatpush.msra.mxu0 0.0
  %2940 = vmatpush.msra.mxu0 0.0
  %2941 = vmatpush.msra.mxu0 0.0
  %2942 = vmatpush.msra.mxu0 0.0
  %2943 = vmatpush.msra.mxu0 0.0
  %2944 = vmatpush.msra.mxu0 0.0
  %2945 = vmatpush.msra.mxu0 0.0
  %2946 = vmatpush.msra.mxu0 0.0
  %2947 = vmatpush.msra.mxu0 0.0
  %2948 = vmatpush.msra.mxu0 0.0
  %2949 = vmatpush.msra.mxu0 0.0
  %2950 = vmatpush.msra.mxu0 0.0
  %2951 = vmatpush.msra.mxu0 %v2931
  %2952 = vmatmul.f32.gmra.mxu0 %v2934
  %v2953 = vpop.f32.mrf.mxu0
  %v2954 = vadd.f32 0.0, %v2953
  %2955 = vdwg.mxu0
  %2956 = vrot.lane.b32.xlu0 %v437, 64
  %v2957 = vpop.permute.xlu0 %2956
  %v2960 = vsel %vm1407, %v2174, 0
  %2962 = vmatpush.msra.mxu0 0.0
  %2963 = vmatpush.msra.mxu0 0.0
  %2964 = vmatpush.msra.mxu0 0.0
  %2965 = vmatpush.msra.mxu0 0.0
  %2966 = vmatpush.msra.mxu0 0.0
  %2967 = vmatpush.msra.mxu0 0.0
  %2968 = vmatpush.msra.mxu0 0.0
  %2969 = vmatpush.msra.mxu0 0.0
  %2970 = vmatpush.msra.mxu0 0.0
  %2971 = vmatpush.msra.mxu0 0.0
  %2972 = vmatpush.msra.mxu0 0.0
  %2973 = vmatpush.msra.mxu0 0.0
  %2974 = vmatpush.msra.mxu0 0.0
  %2975 = vmatpush.msra.mxu0 0.0
  %2976 = vmatpush.msra.mxu0 0.0
  %2977 = vmatpush.msra.mxu0 %v2957
  %2978 = vmatmul.f32.gmra.mxu0 %v2960
  %v2979 = vpop.f32.mrf.mxu0
  %v2980 = vadd.f32 0.0, %v2979
  %2981 = vdwg.mxu0
  %2982 = vrot.lane.b32.xlu0 %v440, 64
  %v2983 = vpop.permute.xlu0 %2982
  %v2986 = vsel %vm1407, %v2175, 0
  %2988 = vmatpush.msra.mxu0 0.0
  %2989 = vmatpush.msra.mxu0 0.0
  %2990 = vmatpush.msra.mxu0 0.0
  %2991 = vmatpush.msra.mxu0 0.0
  %2992 = vmatpush.msra.mxu0 0.0
  %2993 = vmatpush.msra.mxu0 0.0
  %2994 = vmatpush.msra.mxu0 0.0
  %2995 = vmatpush.msra.mxu0 0.0
  %2996 = vmatpush.msra.mxu0 0.0
  %2997 = vmatpush.msra.mxu0 0.0
  %2998 = vmatpush.msra.mxu0 0.0
  %2999 = vmatpush.msra.mxu0 0.0
  %3000 = vmatpush.msra.mxu0 0.0
  %3001 = vmatpush.msra.mxu0 0.0
  %3002 = vmatpush.msra.mxu0 0.0
  %3003 = vmatpush.msra.mxu0 %v2983
  %3004 = vmatmul.f32.gmra.mxu0 %v2986
  %v3005 = vpop.f32.mrf.mxu0
  %v3006 = vadd.f32 0.0, %v3005
  %3007 = vdwg.mxu0
  %v3008 = vmul.f32 %v2200, %v445
  %v3009 = vmul.f32 %v2226, %v445
  %v3010 = vmul.f32 %v2252, %v445
  %v3011 = vmul.f32 %v2278, %v445
  %v3012 = vmul.f32 %v2304, %v445
  %v3013 = vmul.f32 %v2330, %v445
  %v3014 = vmul.f32 %v2356, %v445
  %v3015 = vmul.f32 %v2382, %v445
  %v3016 = vmul.f32 %v2408, %v445
  %v3017 = vmul.f32 %v2434, %v445
  %v3018 = vmul.f32 %v2460, %v445
  %v3019 = vmul.f32 %v2486, %v445
  %v3020 = vmul.f32 %v2512, %v445
  %v3021 = vmul.f32 %v2538, %v445
  %v3022 = vmul.f32 %v2564, %v445
  %v3023 = vmul.f32 %v2590, %v445
  %v3024 = vmul.f32 %v2616, %v445
  %v3025 = vmul.f32 %v2642, %v445
  %v3026 = vmul.f32 %v2668, %v445
  %v3027 = vmul.f32 %v2694, %v445
  %v3028 = vmul.f32 %v2720, %v445
  %v3029 = vmul.f32 %v2746, %v445
  %v3030 = vmul.f32 %v2772, %v445
  %v3031 = vmul.f32 %v2798, %v445
  %v3032 = vmul.f32 %v2824, %v445
  %v3033 = vmul.f32 %v2850, %v445
  %v3034 = vmul.f32 %v2876, %v445
  %v3035 = vmul.f32 %v2902, %v445
  %v3036 = vmul.f32 %v2928, %v445
  %v3037 = vmul.f32 %v2954, %v445
  %v3038 = vmul.f32 %v2980, %v445
  %v3039 = vmul.f32 %v3006, %v445
  %v3040 = vadd.f32 %v3008, 0.0
  %v3041 = vadd.f32 %v3009, 0.0
  %v3042 = vadd.f32 %v3010, 0.0
  %v3043 = vadd.f32 %v3011, 0.0
  %v3044 = vadd.f32 %v3012, 0.0
  %v3045 = vadd.f32 %v3013, 0.0
  %v3046 = vadd.f32 %v3014, 0.0
  %v3047 = vadd.f32 %v3015, 0.0
  %v3048 = vadd.f32 %v3016, 0.0
  %v3049 = vadd.f32 %v3017, 0.0
  %v3050 = vadd.f32 %v3018, 0.0
  %v3051 = vadd.f32 %v3019, 0.0
  %v3052 = vadd.f32 %v3020, 0.0
  %v3053 = vadd.f32 %v3021, 0.0
  %v3054 = vadd.f32 %v3022, 0.0
  %v3055 = vadd.f32 %v3023, 0.0
  %v3056 = vadd.f32 %v3024, 0.0
  %v3057 = vadd.f32 %v3025, 0.0
  %v3058 = vadd.f32 %v3026, 0.0
  %v3059 = vadd.f32 %v3027, 0.0
  %v3060 = vadd.f32 %v3028, 0.0
  %v3061 = vadd.f32 %v3029, 0.0
  %v3062 = vadd.f32 %v3030, 0.0
  %v3063 = vadd.f32 %v3031, 0.0
  %v3064 = vadd.f32 %v3032, 0.0
  %v3065 = vadd.f32 %v3033, 0.0
  %v3066 = vadd.f32 %v3034, 0.0
  %v3067 = vadd.f32 %v3035, 0.0
  %v3068 = vadd.f32 %v3036, 0.0
  %v3069 = vadd.f32 %v3037, 0.0
  %v3070 = vadd.f32 %v3038, 0.0
  %v3071 = vadd.f32 %v3039, 0.0
  %vm3072 = vcmp.ge.s32.totalorder %v56, 8
  %vm3073 = vcmp.lt.s32.totalorder %v56, 16
  %vm3074 = vmand %vm3072, %vm3073
  %v3075 = vsel %vm3074, 1.0, 0.0
  %v3076 = vmul.f32 %v347, %v3075
  %v3077 = vmul.f32 %v350, %v3075
  %v3078 = vmul.f32 %v353, %v3075
  %v3079 = vmul.f32 %v356, %v3075
  %v3080 = vmul.f32 %v359, %v3075
  %v3081 = vmul.f32 %v362, %v3075
  %v3082 = vmul.f32 %v365, %v3075
  %v3083 = vmul.f32 %v368, %v3075
  %v3084 = vmul.f32 %v371, %v3075
  %v3085 = vmul.f32 %v374, %v3075
  %v3086 = vmul.f32 %v377, %v3075
  %v3087 = vmul.f32 %v380, %v3075
  %v3088 = vmul.f32 %v383, %v3075
  %v3089 = vmul.f32 %v386, %v3075
  %v3090 = vmul.f32 %v389, %v3075
  %v3091 = vmul.f32 %v392, %v3075
  %v3092 = vmul.f32 %v395, %v3075
  %v3093 = vmul.f32 %v398, %v3075
  %v3094 = vmul.f32 %v401, %v3075
  %v3095 = vmul.f32 %v404, %v3075
  %v3096 = vmul.f32 %v407, %v3075
  %v3097 = vmul.f32 %v410, %v3075
  %v3098 = vmul.f32 %v413, %v3075
  %v3099 = vmul.f32 %v416, %v3075
  %v3100 = vmul.f32 %v419, %v3075
  %v3101 = vmul.f32 %v422, %v3075
  %v3102 = vmul.f32 %v425, %v3075
  %v3103 = vmul.f32 %v428, %v3075
  %v3104 = vmul.f32 %v431, %v3075
  %v3105 = vmul.f32 %v434, %v3075
  %v3106 = vmul.f32 %v437, %v3075
  %v3107 = vmul.f32 %v440, %v3075
  %v3109 = vsel %vm481, %v3076, 0
  %3111 = vmatpush.xpose.msra.mxu0 0.0
  %3112 = vmatpush.xpose.msra.mxu0 0.0
  %3113 = vmatpush.xpose.msra.mxu0 0.0
  %3114 = vmatpush.xpose.msra.mxu0 0.0
  %3115 = vmatpush.xpose.msra.mxu0 0.0
  %3116 = vmatpush.xpose.msra.mxu0 0.0
  %3117 = vmatpush.xpose.msra.mxu0 0.0
  %3118 = vmatpush.xpose.msra.mxu0 0.0
  %3119 = vmatpush.xpose.msra.mxu0 0.0
  %3120 = vmatpush.xpose.msra.mxu0 0.0
  %3121 = vmatpush.xpose.msra.mxu0 0.0
  %3122 = vmatpush.xpose.msra.mxu0 0.0
  %3123 = vmatpush.xpose.msra.mxu0 0.0
  %3124 = vmatpush.xpose.msra.mxu0 0.0
  %3125 = vmatpush.xpose.msra.mxu0 0.0
  %3126 = vmatpush.xpose.msra.mxu0 %v485
  %3127 = vmatmul.f32.gmra.mxu0 %v3109
  %v3128 = vpop.f32.mrf.mxu0
  %v3129 = vadd.f32 0.0, %v3128
  %3130 = vdwg.mxu0
  %v3132 = vsel %vm481, %v3077, 0
  %3134 = vmatpush.xpose.msra.mxu0 0.0
  %3135 = vmatpush.xpose.msra.mxu0 0.0
  %3136 = vmatpush.xpose.msra.mxu0 0.0
  %3137 = vmatpush.xpose.msra.mxu0 0.0
  %3138 = vmatpush.xpose.msra.mxu0 0.0
  %3139 = vmatpush.xpose.msra.mxu0 0.0
  %3140 = vmatpush.xpose.msra.mxu0 0.0
  %3141 = vmatpush.xpose.msra.mxu0 0.0
  %3142 = vmatpush.xpose.msra.mxu0 0.0
  %3143 = vmatpush.xpose.msra.mxu0 0.0
  %3144 = vmatpush.xpose.msra.mxu0 0.0
  %3145 = vmatpush.xpose.msra.mxu0 0.0
  %3146 = vmatpush.xpose.msra.mxu0 0.0
  %3147 = vmatpush.xpose.msra.mxu0 0.0
  %3148 = vmatpush.xpose.msra.mxu0 0.0
  %3149 = vmatpush.xpose.msra.mxu0 %v513
  %3150 = vmatmul.f32.gmra.mxu0 %v3132
  %v3151 = vpop.f32.mrf.mxu0
  %v3152 = vadd.f32 0.0, %v3151
  %3153 = vdwg.mxu0
  %v3155 = vsel %vm481, %v3078, 0
  %3157 = vmatpush.xpose.msra.mxu0 0.0
  %3158 = vmatpush.xpose.msra.mxu0 0.0
  %3159 = vmatpush.xpose.msra.mxu0 0.0
  %3160 = vmatpush.xpose.msra.mxu0 0.0
  %3161 = vmatpush.xpose.msra.mxu0 0.0
  %3162 = vmatpush.xpose.msra.mxu0 0.0
  %3163 = vmatpush.xpose.msra.mxu0 0.0
  %3164 = vmatpush.xpose.msra.mxu0 0.0
  %3165 = vmatpush.xpose.msra.mxu0 0.0
  %3166 = vmatpush.xpose.msra.mxu0 0.0
  %3167 = vmatpush.xpose.msra.mxu0 0.0
  %3168 = vmatpush.xpose.msra.mxu0 0.0
  %3169 = vmatpush.xpose.msra.mxu0 0.0
  %3170 = vmatpush.xpose.msra.mxu0 0.0
  %3171 = vmatpush.xpose.msra.mxu0 0.0
  %3172 = vmatpush.xpose.msra.mxu0 %v541
  %3173 = vmatmul.f32.gmra.mxu0 %v3155
  %v3174 = vpop.f32.mrf.mxu0
  %v3175 = vadd.f32 0.0, %v3174
  %3176 = vdwg.mxu0
  %v3178 = vsel %vm481, %v3079, 0
  %3180 = vmatpush.xpose.msra.mxu0 0.0
  %3181 = vmatpush.xpose.msra.mxu0 0.0
  %3182 = vmatpush.xpose.msra.mxu0 0.0
  %3183 = vmatpush.xpose.msra.mxu0 0.0
  %3184 = vmatpush.xpose.msra.mxu0 0.0
  %3185 = vmatpush.xpose.msra.mxu0 0.0
  %3186 = vmatpush.xpose.msra.mxu0 0.0
  %3187 = vmatpush.xpose.msra.mxu0 0.0
  %3188 = vmatpush.xpose.msra.mxu0 0.0
  %3189 = vmatpush.xpose.msra.mxu0 0.0
  %3190 = vmatpush.xpose.msra.mxu0 0.0
  %3191 = vmatpush.xpose.msra.mxu0 0.0
  %3192 = vmatpush.xpose.msra.mxu0 0.0
  %3193 = vmatpush.xpose.msra.mxu0 0.0
  %3194 = vmatpush.xpose.msra.mxu0 0.0
  %3195 = vmatpush.xpose.msra.mxu0 %v569
  %3196 = vmatmul.f32.gmra.mxu0 %v3178
  %v3197 = vpop.f32.mrf.mxu0
  %v3198 = vadd.f32 0.0, %v3197
  %3199 = vdwg.mxu0
  %v3201 = vsel %vm481, %v3080, 0
  %3203 = vmatpush.xpose.msra.mxu0 0.0
  %3204 = vmatpush.xpose.msra.mxu0 0.0
  %3205 = vmatpush.xpose.msra.mxu0 0.0
  %3206 = vmatpush.xpose.msra.mxu0 0.0
  %3207 = vmatpush.xpose.msra.mxu0 0.0
  %3208 = vmatpush.xpose.msra.mxu0 0.0
  %3209 = vmatpush.xpose.msra.mxu0 0.0
  %3210 = vmatpush.xpose.msra.mxu0 0.0
  %3211 = vmatpush.xpose.msra.mxu0 0.0
  %3212 = vmatpush.xpose.msra.mxu0 0.0
  %3213 = vmatpush.xpose.msra.mxu0 0.0
  %3214 = vmatpush.xpose.msra.mxu0 0.0
  %3215 = vmatpush.xpose.msra.mxu0 0.0
  %3216 = vmatpush.xpose.msra.mxu0 0.0
  %3217 = vmatpush.xpose.msra.mxu0 0.0
  %3218 = vmatpush.xpose.msra.mxu0 %v597
  %3219 = vmatmul.f32.gmra.mxu0 %v3201
  %v3220 = vpop.f32.mrf.mxu0
  %v3221 = vadd.f32 0.0, %v3220
  %3222 = vdwg.mxu0
  %v3224 = vsel %vm481, %v3081, 0
  %3226 = vmatpush.xpose.msra.mxu0 0.0
  %3227 = vmatpush.xpose.msra.mxu0 0.0
  %3228 = vmatpush.xpose.msra.mxu0 0.0
  %3229 = vmatpush.xpose.msra.mxu0 0.0
  %3230 = vmatpush.xpose.msra.mxu0 0.0
  %3231 = vmatpush.xpose.msra.mxu0 0.0
  %3232 = vmatpush.xpose.msra.mxu0 0.0
  %3233 = vmatpush.xpose.msra.mxu0 0.0
  %3234 = vmatpush.xpose.msra.mxu0 0.0
  %3235 = vmatpush.xpose.msra.mxu0 0.0
  %3236 = vmatpush.xpose.msra.mxu0 0.0
  %3237 = vmatpush.xpose.msra.mxu0 0.0
  %3238 = vmatpush.xpose.msra.mxu0 0.0
  %3239 = vmatpush.xpose.msra.mxu0 0.0
  %3240 = vmatpush.xpose.msra.mxu0 0.0
  %3241 = vmatpush.xpose.msra.mxu0 %v625
  %3242 = vmatmul.f32.gmra.mxu0 %v3224
  %v3243 = vpop.f32.mrf.mxu0
  %v3244 = vadd.f32 0.0, %v3243
  %3245 = vdwg.mxu0
  %v3247 = vsel %vm481, %v3082, 0
  %3249 = vmatpush.xpose.msra.mxu0 0.0
  %3250 = vmatpush.xpose.msra.mxu0 0.0
  %3251 = vmatpush.xpose.msra.mxu0 0.0
  %3252 = vmatpush.xpose.msra.mxu0 0.0
  %3253 = vmatpush.xpose.msra.mxu0 0.0
  %3254 = vmatpush.xpose.msra.mxu0 0.0
  %3255 = vmatpush.xpose.msra.mxu0 0.0
  %3256 = vmatpush.xpose.msra.mxu0 0.0
  %3257 = vmatpush.xpose.msra.mxu0 0.0
  %3258 = vmatpush.xpose.msra.mxu0 0.0
  %3259 = vmatpush.xpose.msra.mxu0 0.0
  %3260 = vmatpush.xpose.msra.mxu0 0.0
  %3261 = vmatpush.xpose.msra.mxu0 0.0
  %3262 = vmatpush.xpose.msra.mxu0 0.0
  %3263 = vmatpush.xpose.msra.mxu0 0.0
  %3264 = vmatpush.xpose.msra.mxu0 %v653
  %3265 = vmatmul.f32.gmra.mxu0 %v3247
  %v3266 = vpop.f32.mrf.mxu0
  %v3267 = vadd.f32 0.0, %v3266
  %3268 = vdwg.mxu0
  %v3270 = vsel %vm481, %v3083, 0
  %3272 = vmatpush.xpose.msra.mxu0 0.0
  %3273 = vmatpush.xpose.msra.mxu0 0.0
  %3274 = vmatpush.xpose.msra.mxu0 0.0
  %3275 = vmatpush.xpose.msra.mxu0 0.0
  %3276 = vmatpush.xpose.msra.mxu0 0.0
  %3277 = vmatpush.xpose.msra.mxu0 0.0
  %3278 = vmatpush.xpose.msra.mxu0 0.0
  %3279 = vmatpush.xpose.msra.mxu0 0.0
  %3280 = vmatpush.xpose.msra.mxu0 0.0
  %3281 = vmatpush.xpose.msra.mxu0 0.0
  %3282 = vmatpush.xpose.msra.mxu0 0.0
  %3283 = vmatpush.xpose.msra.mxu0 0.0
  %3284 = vmatpush.xpose.msra.mxu0 0.0
  %3285 = vmatpush.xpose.msra.mxu0 0.0
  %3286 = vmatpush.xpose.msra.mxu0 0.0
  %3287 = vmatpush.xpose.msra.mxu0 %v681
  %3288 = vmatmul.f32.gmra.mxu0 %v3270
  %v3289 = vpop.f32.mrf.mxu0
  %v3290 = vadd.f32 0.0, %v3289
  %3291 = vdwg.mxu0
  %v3293 = vsel %vm481, %v3084, 0
  %3295 = vmatpush.xpose.msra.mxu0 0.0
  %3296 = vmatpush.xpose.msra.mxu0 0.0
  %3297 = vmatpush.xpose.msra.mxu0 0.0
  %3298 = vmatpush.xpose.msra.mxu0 0.0
  %3299 = vmatpush.xpose.msra.mxu0 0.0
  %3300 = vmatpush.xpose.msra.mxu0 0.0
  %3301 = vmatpush.xpose.msra.mxu0 0.0
  %3302 = vmatpush.xpose.msra.mxu0 0.0
  %3303 = vmatpush.xpose.msra.mxu0 0.0
  %3304 = vmatpush.xpose.msra.mxu0 0.0
  %3305 = vmatpush.xpose.msra.mxu0 0.0
  %3306 = vmatpush.xpose.msra.mxu0 0.0
  %3307 = vmatpush.xpose.msra.mxu0 0.0
  %3308 = vmatpush.xpose.msra.mxu0 0.0
  %3309 = vmatpush.xpose.msra.mxu0 0.0
  %3310 = vmatpush.xpose.msra.mxu0 %v709
  %3311 = vmatmul.f32.gmra.mxu0 %v3293
  %v3312 = vpop.f32.mrf.mxu0
  %v3313 = vadd.f32 0.0, %v3312
  %3314 = vdwg.mxu0
  %v3316 = vsel %vm481, %v3085, 0
  %3318 = vmatpush.xpose.msra.mxu0 0.0
  %3319 = vmatpush.xpose.msra.mxu0 0.0
  %3320 = vmatpush.xpose.msra.mxu0 0.0
  %3321 = vmatpush.xpose.msra.mxu0 0.0
  %3322 = vmatpush.xpose.msra.mxu0 0.0
  %3323 = vmatpush.xpose.msra.mxu0 0.0
  %3324 = vmatpush.xpose.msra.mxu0 0.0
  %3325 = vmatpush.xpose.msra.mxu0 0.0
  %3326 = vmatpush.xpose.msra.mxu0 0.0
  %3327 = vmatpush.xpose.msra.mxu0 0.0
  %3328 = vmatpush.xpose.msra.mxu0 0.0
  %3329 = vmatpush.xpose.msra.mxu0 0.0
  %3330 = vmatpush.xpose.msra.mxu0 0.0
  %3331 = vmatpush.xpose.msra.mxu0 0.0
  %3332 = vmatpush.xpose.msra.mxu0 0.0
  %3333 = vmatpush.xpose.msra.mxu0 %v737
  %3334 = vmatmul.f32.gmra.mxu0 %v3316
  %v3335 = vpop.f32.mrf.mxu0
  %v3336 = vadd.f32 0.0, %v3335
  %3337 = vdwg.mxu0
  %v3339 = vsel %vm481, %v3086, 0
  %3341 = vmatpush.xpose.msra.mxu0 0.0
  %3342 = vmatpush.xpose.msra.mxu0 0.0
  %3343 = vmatpush.xpose.msra.mxu0 0.0
  %3344 = vmatpush.xpose.msra.mxu0 0.0
  %3345 = vmatpush.xpose.msra.mxu0 0.0
  %3346 = vmatpush.xpose.msra.mxu0 0.0
  %3347 = vmatpush.xpose.msra.mxu0 0.0
  %3348 = vmatpush.xpose.msra.mxu0 0.0
  %3349 = vmatpush.xpose.msra.mxu0 0.0
  %3350 = vmatpush.xpose.msra.mxu0 0.0
  %3351 = vmatpush.xpose.msra.mxu0 0.0
  %3352 = vmatpush.xpose.msra.mxu0 0.0
  %3353 = vmatpush.xpose.msra.mxu0 0.0
  %3354 = vmatpush.xpose.msra.mxu0 0.0
  %3355 = vmatpush.xpose.msra.mxu0 0.0
  %3356 = vmatpush.xpose.msra.mxu0 %v765
  %3357 = vmatmul.f32.gmra.mxu0 %v3339
  %v3358 = vpop.f32.mrf.mxu0
  %v3359 = vadd.f32 0.0, %v3358
  %3360 = vdwg.mxu0
  %v3362 = vsel %vm481, %v3087, 0
  %3364 = vmatpush.xpose.msra.mxu0 0.0
  %3365 = vmatpush.xpose.msra.mxu0 0.0
  %3366 = vmatpush.xpose.msra.mxu0 0.0
  %3367 = vmatpush.xpose.msra.mxu0 0.0
  %3368 = vmatpush.xpose.msra.mxu0 0.0
  %3369 = vmatpush.xpose.msra.mxu0 0.0
  %3370 = vmatpush.xpose.msra.mxu0 0.0
  %3371 = vmatpush.xpose.msra.mxu0 0.0
  %3372 = vmatpush.xpose.msra.mxu0 0.0
  %3373 = vmatpush.xpose.msra.mxu0 0.0
  %3374 = vmatpush.xpose.msra.mxu0 0.0
  %3375 = vmatpush.xpose.msra.mxu0 0.0
  %3376 = vmatpush.xpose.msra.mxu0 0.0
  %3377 = vmatpush.xpose.msra.mxu0 0.0
  %3378 = vmatpush.xpose.msra.mxu0 0.0
  %3379 = vmatpush.xpose.msra.mxu0 %v793
  %3380 = vmatmul.f32.gmra.mxu0 %v3362
  %v3381 = vpop.f32.mrf.mxu0
  %v3382 = vadd.f32 0.0, %v3381
  %3383 = vdwg.mxu0
  %v3385 = vsel %vm481, %v3088, 0
  %3387 = vmatpush.xpose.msra.mxu0 0.0
  %3388 = vmatpush.xpose.msra.mxu0 0.0
  %3389 = vmatpush.xpose.msra.mxu0 0.0
  %3390 = vmatpush.xpose.msra.mxu0 0.0
  %3391 = vmatpush.xpose.msra.mxu0 0.0
  %3392 = vmatpush.xpose.msra.mxu0 0.0
  %3393 = vmatpush.xpose.msra.mxu0 0.0
  %3394 = vmatpush.xpose.msra.mxu0 0.0
  %3395 = vmatpush.xpose.msra.mxu0 0.0
  %3396 = vmatpush.xpose.msra.mxu0 0.0
  %3397 = vmatpush.xpose.msra.mxu0 0.0
  %3398 = vmatpush.xpose.msra.mxu0 0.0
  %3399 = vmatpush.xpose.msra.mxu0 0.0
  %3400 = vmatpush.xpose.msra.mxu0 0.0
  %3401 = vmatpush.xpose.msra.mxu0 0.0
  %3402 = vmatpush.xpose.msra.mxu0 %v821
  %3403 = vmatmul.f32.gmra.mxu0 %v3385
  %v3404 = vpop.f32.mrf.mxu0
  %v3405 = vadd.f32 0.0, %v3404
  %3406 = vdwg.mxu0
  %v3408 = vsel %vm481, %v3089, 0
  %3410 = vmatpush.xpose.msra.mxu0 0.0
  %3411 = vmatpush.xpose.msra.mxu0 0.0
  %3412 = vmatpush.xpose.msra.mxu0 0.0
  %3413 = vmatpush.xpose.msra.mxu0 0.0
  %3414 = vmatpush.xpose.msra.mxu0 0.0
  %3415 = vmatpush.xpose.msra.mxu0 0.0
  %3416 = vmatpush.xpose.msra.mxu0 0.0
  %3417 = vmatpush.xpose.msra.mxu0 0.0
  %3418 = vmatpush.xpose.msra.mxu0 0.0
  %3419 = vmatpush.xpose.msra.mxu0 0.0
  %3420 = vmatpush.xpose.msra.mxu0 0.0
  %3421 = vmatpush.xpose.msra.mxu0 0.0
  %3422 = vmatpush.xpose.msra.mxu0 0.0
  %3423 = vmatpush.xpose.msra.mxu0 0.0
  %3424 = vmatpush.xpose.msra.mxu0 0.0
  %3425 = vmatpush.xpose.msra.mxu0 %v849
  %3426 = vmatmul.f32.gmra.mxu0 %v3408
  %v3427 = vpop.f32.mrf.mxu0
  %v3428 = vadd.f32 0.0, %v3427
  %3429 = vdwg.mxu0
  %v3431 = vsel %vm481, %v3090, 0
  %3433 = vmatpush.xpose.msra.mxu0 0.0
  %3434 = vmatpush.xpose.msra.mxu0 0.0
  %3435 = vmatpush.xpose.msra.mxu0 0.0
  %3436 = vmatpush.xpose.msra.mxu0 0.0
  %3437 = vmatpush.xpose.msra.mxu0 0.0
  %3438 = vmatpush.xpose.msra.mxu0 0.0
  %3439 = vmatpush.xpose.msra.mxu0 0.0
  %3440 = vmatpush.xpose.msra.mxu0 0.0
  %3441 = vmatpush.xpose.msra.mxu0 0.0
  %3442 = vmatpush.xpose.msra.mxu0 0.0
  %3443 = vmatpush.xpose.msra.mxu0 0.0
  %3444 = vmatpush.xpose.msra.mxu0 0.0
  %3445 = vmatpush.xpose.msra.mxu0 0.0
  %3446 = vmatpush.xpose.msra.mxu0 0.0
  %3447 = vmatpush.xpose.msra.mxu0 0.0
  %3448 = vmatpush.xpose.msra.mxu0 %v877
  %3449 = vmatmul.f32.gmra.mxu0 %v3431
  %v3450 = vpop.f32.mrf.mxu0
  %v3451 = vadd.f32 0.0, %v3450
  %3452 = vdwg.mxu0
  %v3454 = vsel %vm481, %v3091, 0
  %3456 = vmatpush.xpose.msra.mxu0 0.0
  %3457 = vmatpush.xpose.msra.mxu0 0.0
  %3458 = vmatpush.xpose.msra.mxu0 0.0
  %3459 = vmatpush.xpose.msra.mxu0 0.0
  %3460 = vmatpush.xpose.msra.mxu0 0.0
  %3461 = vmatpush.xpose.msra.mxu0 0.0
  %3462 = vmatpush.xpose.msra.mxu0 0.0
  %3463 = vmatpush.xpose.msra.mxu0 0.0
  %3464 = vmatpush.xpose.msra.mxu0 0.0
  %3465 = vmatpush.xpose.msra.mxu0 0.0
  %3466 = vmatpush.xpose.msra.mxu0 0.0
  %3467 = vmatpush.xpose.msra.mxu0 0.0
  %3468 = vmatpush.xpose.msra.mxu0 0.0
  %3469 = vmatpush.xpose.msra.mxu0 0.0
  %3470 = vmatpush.xpose.msra.mxu0 0.0
  %3471 = vmatpush.xpose.msra.mxu0 %v905
  %3472 = vmatmul.f32.gmra.mxu0 %v3454
  %v3473 = vpop.f32.mrf.mxu0
  %v3474 = vadd.f32 0.0, %v3473
  %3475 = vdwg.mxu0
  %v3477 = vsel %vm481, %v3092, 0
  %3479 = vmatpush.xpose.msra.mxu0 0.0
  %3480 = vmatpush.xpose.msra.mxu0 0.0
  %3481 = vmatpush.xpose.msra.mxu0 0.0
  %3482 = vmatpush.xpose.msra.mxu0 0.0
  %3483 = vmatpush.xpose.msra.mxu0 0.0
  %3484 = vmatpush.xpose.msra.mxu0 0.0
  %3485 = vmatpush.xpose.msra.mxu0 0.0
  %3486 = vmatpush.xpose.msra.mxu0 0.0
  %3487 = vmatpush.xpose.msra.mxu0 0.0
  %3488 = vmatpush.xpose.msra.mxu0 0.0
  %3489 = vmatpush.xpose.msra.mxu0 0.0
  %3490 = vmatpush.xpose.msra.mxu0 0.0
  %3491 = vmatpush.xpose.msra.mxu0 0.0
  %3492 = vmatpush.xpose.msra.mxu0 0.0
  %3493 = vmatpush.xpose.msra.mxu0 0.0
  %3494 = vmatpush.xpose.msra.mxu0 %v933
  %3495 = vmatmul.f32.gmra.mxu0 %v3477
  %v3496 = vpop.f32.mrf.mxu0
  %v3497 = vadd.f32 0.0, %v3496
  %3498 = vdwg.mxu0
  %v3500 = vsel %vm481, %v3093, 0
  %3502 = vmatpush.xpose.msra.mxu0 0.0
  %3503 = vmatpush.xpose.msra.mxu0 0.0
  %3504 = vmatpush.xpose.msra.mxu0 0.0
  %3505 = vmatpush.xpose.msra.mxu0 0.0
  %3506 = vmatpush.xpose.msra.mxu0 0.0
  %3507 = vmatpush.xpose.msra.mxu0 0.0
  %3508 = vmatpush.xpose.msra.mxu0 0.0
  %3509 = vmatpush.xpose.msra.mxu0 0.0
  %3510 = vmatpush.xpose.msra.mxu0 0.0
  %3511 = vmatpush.xpose.msra.mxu0 0.0
  %3512 = vmatpush.xpose.msra.mxu0 0.0
  %3513 = vmatpush.xpose.msra.mxu0 0.0
  %3514 = vmatpush.xpose.msra.mxu0 0.0
  %3515 = vmatpush.xpose.msra.mxu0 0.0
  %3516 = vmatpush.xpose.msra.mxu0 0.0
  %3517 = vmatpush.xpose.msra.mxu0 %v961
  %3518 = vmatmul.f32.gmra.mxu0 %v3500
  %v3519 = vpop.f32.mrf.mxu0
  %v3520 = vadd.f32 0.0, %v3519
  %3521 = vdwg.mxu0
  %v3523 = vsel %vm481, %v3094, 0
  %3525 = vmatpush.xpose.msra.mxu0 0.0
  %3526 = vmatpush.xpose.msra.mxu0 0.0
  %3527 = vmatpush.xpose.msra.mxu0 0.0
  %3528 = vmatpush.xpose.msra.mxu0 0.0
  %3529 = vmatpush.xpose.msra.mxu0 0.0
  %3530 = vmatpush.xpose.msra.mxu0 0.0
  %3531 = vmatpush.xpose.msra.mxu0 0.0
  %3532 = vmatpush.xpose.msra.mxu0 0.0
  %3533 = vmatpush.xpose.msra.mxu0 0.0
  %3534 = vmatpush.xpose.msra.mxu0 0.0
  %3535 = vmatpush.xpose.msra.mxu0 0.0
  %3536 = vmatpush.xpose.msra.mxu0 0.0
  %3537 = vmatpush.xpose.msra.mxu0 0.0
  %3538 = vmatpush.xpose.msra.mxu0 0.0
  %3539 = vmatpush.xpose.msra.mxu0 0.0
  %3540 = vmatpush.xpose.msra.mxu0 %v989
  %3541 = vmatmul.f32.gmra.mxu0 %v3523
  %v3542 = vpop.f32.mrf.mxu0
  %v3543 = vadd.f32 0.0, %v3542
  %3544 = vdwg.mxu0
  %v3546 = vsel %vm481, %v3095, 0
  %3548 = vmatpush.xpose.msra.mxu0 0.0
  %3549 = vmatpush.xpose.msra.mxu0 0.0
  %3550 = vmatpush.xpose.msra.mxu0 0.0
  %3551 = vmatpush.xpose.msra.mxu0 0.0
  %3552 = vmatpush.xpose.msra.mxu0 0.0
  %3553 = vmatpush.xpose.msra.mxu0 0.0
  %3554 = vmatpush.xpose.msra.mxu0 0.0
  %3555 = vmatpush.xpose.msra.mxu0 0.0
  %3556 = vmatpush.xpose.msra.mxu0 0.0
  %3557 = vmatpush.xpose.msra.mxu0 0.0
  %3558 = vmatpush.xpose.msra.mxu0 0.0
  %3559 = vmatpush.xpose.msra.mxu0 0.0
  %3560 = vmatpush.xpose.msra.mxu0 0.0
  %3561 = vmatpush.xpose.msra.mxu0 0.0
  %3562 = vmatpush.xpose.msra.mxu0 0.0
  %3563 = vmatpush.xpose.msra.mxu0 %v1017
  %3564 = vmatmul.f32.gmra.mxu0 %v3546
  %v3565 = vpop.f32.mrf.mxu0
  %v3566 = vadd.f32 0.0, %v3565
  %3567 = vdwg.mxu0
  %v3569 = vsel %vm481, %v3096, 0
  %3571 = vmatpush.xpose.msra.mxu0 0.0
  %3572 = vmatpush.xpose.msra.mxu0 0.0
  %3573 = vmatpush.xpose.msra.mxu0 0.0
  %3574 = vmatpush.xpose.msra.mxu0 0.0
  %3575 = vmatpush.xpose.msra.mxu0 0.0
  %3576 = vmatpush.xpose.msra.mxu0 0.0
  %3577 = vmatpush.xpose.msra.mxu0 0.0
  %3578 = vmatpush.xpose.msra.mxu0 0.0
  %3579 = vmatpush.xpose.msra.mxu0 0.0
  %3580 = vmatpush.xpose.msra.mxu0 0.0
  %3581 = vmatpush.xpose.msra.mxu0 0.0
  %3582 = vmatpush.xpose.msra.mxu0 0.0
  %3583 = vmatpush.xpose.msra.mxu0 0.0
  %3584 = vmatpush.xpose.msra.mxu0 0.0
  %3585 = vmatpush.xpose.msra.mxu0 0.0
  %3586 = vmatpush.xpose.msra.mxu0 %v1045
  %3587 = vmatmul.f32.gmra.mxu0 %v3569
  %v3588 = vpop.f32.mrf.mxu0
  %v3589 = vadd.f32 0.0, %v3588
  %3590 = vdwg.mxu0
  %v3592 = vsel %vm481, %v3097, 0
  %3594 = vmatpush.xpose.msra.mxu0 0.0
  %3595 = vmatpush.xpose.msra.mxu0 0.0
  %3596 = vmatpush.xpose.msra.mxu0 0.0
  %3597 = vmatpush.xpose.msra.mxu0 0.0
  %3598 = vmatpush.xpose.msra.mxu0 0.0
  %3599 = vmatpush.xpose.msra.mxu0 0.0
  %3600 = vmatpush.xpose.msra.mxu0 0.0
  %3601 = vmatpush.xpose.msra.mxu0 0.0
  %3602 = vmatpush.xpose.msra.mxu0 0.0
  %3603 = vmatpush.xpose.msra.mxu0 0.0
  %3604 = vmatpush.xpose.msra.mxu0 0.0
  %3605 = vmatpush.xpose.msra.mxu0 0.0
  %3606 = vmatpush.xpose.msra.mxu0 0.0
  %3607 = vmatpush.xpose.msra.mxu0 0.0
  %3608 = vmatpush.xpose.msra.mxu0 0.0
  %3609 = vmatpush.xpose.msra.mxu0 %v1073
  %3610 = vmatmul.f32.gmra.mxu0 %v3592
  %v3611 = vpop.f32.mrf.mxu0
  %v3612 = vadd.f32 0.0, %v3611
  %3613 = vdwg.mxu0
  %v3615 = vsel %vm481, %v3098, 0
  %3617 = vmatpush.xpose.msra.mxu0 0.0
  %3618 = vmatpush.xpose.msra.mxu0 0.0
  %3619 = vmatpush.xpose.msra.mxu0 0.0
  %3620 = vmatpush.xpose.msra.mxu0 0.0
  %3621 = vmatpush.xpose.msra.mxu0 0.0
  %3622 = vmatpush.xpose.msra.mxu0 0.0
  %3623 = vmatpush.xpose.msra.mxu0 0.0
  %3624 = vmatpush.xpose.msra.mxu0 0.0
  %3625 = vmatpush.xpose.msra.mxu0 0.0
  %3626 = vmatpush.xpose.msra.mxu0 0.0
  %3627 = vmatpush.xpose.msra.mxu0 0.0
  %3628 = vmatpush.xpose.msra.mxu0 0.0
  %3629 = vmatpush.xpose.msra.mxu0 0.0
  %3630 = vmatpush.xpose.msra.mxu0 0.0
  %3631 = vmatpush.xpose.msra.mxu0 0.0
  %3632 = vmatpush.xpose.msra.mxu0 %v1101
  %3633 = vmatmul.f32.gmra.mxu0 %v3615
  %v3634 = vpop.f32.mrf.mxu0
  %v3635 = vadd.f32 0.0, %v3634
  %3636 = vdwg.mxu0
  %v3638 = vsel %vm481, %v3099, 0
  %3640 = vmatpush.xpose.msra.mxu0 0.0
  %3641 = vmatpush.xpose.msra.mxu0 0.0
  %3642 = vmatpush.xpose.msra.mxu0 0.0
  %3643 = vmatpush.xpose.msra.mxu0 0.0
  %3644 = vmatpush.xpose.msra.mxu0 0.0
  %3645 = vmatpush.xpose.msra.mxu0 0.0
  %3646 = vmatpush.xpose.msra.mxu0 0.0
  %3647 = vmatpush.xpose.msra.mxu0 0.0
  %3648 = vmatpush.xpose.msra.mxu0 0.0
  %3649 = vmatpush.xpose.msra.mxu0 0.0
  %3650 = vmatpush.xpose.msra.mxu0 0.0
  %3651 = vmatpush.xpose.msra.mxu0 0.0
  %3652 = vmatpush.xpose.msra.mxu0 0.0
  %3653 = vmatpush.xpose.msra.mxu0 0.0
  %3654 = vmatpush.xpose.msra.mxu0 0.0
  %3655 = vmatpush.xpose.msra.mxu0 %v1129
  %3656 = vmatmul.f32.gmra.mxu0 %v3638
  %v3657 = vpop.f32.mrf.mxu0
  %v3658 = vadd.f32 0.0, %v3657
  %3659 = vdwg.mxu0
  %v3661 = vsel %vm481, %v3100, 0
  %3663 = vmatpush.xpose.msra.mxu0 0.0
  %3664 = vmatpush.xpose.msra.mxu0 0.0
  %3665 = vmatpush.xpose.msra.mxu0 0.0
  %3666 = vmatpush.xpose.msra.mxu0 0.0
  %3667 = vmatpush.xpose.msra.mxu0 0.0
  %3668 = vmatpush.xpose.msra.mxu0 0.0
  %3669 = vmatpush.xpose.msra.mxu0 0.0
  %3670 = vmatpush.xpose.msra.mxu0 0.0
  %3671 = vmatpush.xpose.msra.mxu0 0.0
  %3672 = vmatpush.xpose.msra.mxu0 0.0
  %3673 = vmatpush.xpose.msra.mxu0 0.0
  %3674 = vmatpush.xpose.msra.mxu0 0.0
  %3675 = vmatpush.xpose.msra.mxu0 0.0
  %3676 = vmatpush.xpose.msra.mxu0 0.0
  %3677 = vmatpush.xpose.msra.mxu0 0.0
  %3678 = vmatpush.xpose.msra.mxu0 %v1157
  %3679 = vmatmul.f32.gmra.mxu0 %v3661
  %v3680 = vpop.f32.mrf.mxu0
  %v3681 = vadd.f32 0.0, %v3680
  %3682 = vdwg.mxu0
  %v3684 = vsel %vm481, %v3101, 0
  %3686 = vmatpush.xpose.msra.mxu0 0.0
  %3687 = vmatpush.xpose.msra.mxu0 0.0
  %3688 = vmatpush.xpose.msra.mxu0 0.0
  %3689 = vmatpush.xpose.msra.mxu0 0.0
  %3690 = vmatpush.xpose.msra.mxu0 0.0
  %3691 = vmatpush.xpose.msra.mxu0 0.0
  %3692 = vmatpush.xpose.msra.mxu0 0.0
  %3693 = vmatpush.xpose.msra.mxu0 0.0
  %3694 = vmatpush.xpose.msra.mxu0 0.0
  %3695 = vmatpush.xpose.msra.mxu0 0.0
  %3696 = vmatpush.xpose.msra.mxu0 0.0
  %3697 = vmatpush.xpose.msra.mxu0 0.0
  %3698 = vmatpush.xpose.msra.mxu0 0.0
  %3699 = vmatpush.xpose.msra.mxu0 0.0
  %3700 = vmatpush.xpose.msra.mxu0 0.0
  %3701 = vmatpush.xpose.msra.mxu0 %v1185
  %3702 = vmatmul.f32.gmra.mxu0 %v3684
  %v3703 = vpop.f32.mrf.mxu0
  %v3704 = vadd.f32 0.0, %v3703
  %3705 = vdwg.mxu0
  %v3707 = vsel %vm481, %v3102, 0
  %3709 = vmatpush.xpose.msra.mxu0 0.0
  %3710 = vmatpush.xpose.msra.mxu0 0.0
  %3711 = vmatpush.xpose.msra.mxu0 0.0
  %3712 = vmatpush.xpose.msra.mxu0 0.0
  %3713 = vmatpush.xpose.msra.mxu0 0.0
  %3714 = vmatpush.xpose.msra.mxu0 0.0
  %3715 = vmatpush.xpose.msra.mxu0 0.0
  %3716 = vmatpush.xpose.msra.mxu0 0.0
  %3717 = vmatpush.xpose.msra.mxu0 0.0
  %3718 = vmatpush.xpose.msra.mxu0 0.0
  %3719 = vmatpush.xpose.msra.mxu0 0.0
  %3720 = vmatpush.xpose.msra.mxu0 0.0
  %3721 = vmatpush.xpose.msra.mxu0 0.0
  %3722 = vmatpush.xpose.msra.mxu0 0.0
  %3723 = vmatpush.xpose.msra.mxu0 0.0
  %3724 = vmatpush.xpose.msra.mxu0 %v1213
  %3725 = vmatmul.f32.gmra.mxu0 %v3707
  %v3726 = vpop.f32.mrf.mxu0
  %v3727 = vadd.f32 0.0, %v3726
  %3728 = vdwg.mxu0
  %v3730 = vsel %vm481, %v3103, 0
  %3732 = vmatpush.xpose.msra.mxu0 0.0
  %3733 = vmatpush.xpose.msra.mxu0 0.0
  %3734 = vmatpush.xpose.msra.mxu0 0.0
  %3735 = vmatpush.xpose.msra.mxu0 0.0
  %3736 = vmatpush.xpose.msra.mxu0 0.0
  %3737 = vmatpush.xpose.msra.mxu0 0.0
  %3738 = vmatpush.xpose.msra.mxu0 0.0
  %3739 = vmatpush.xpose.msra.mxu0 0.0
  %3740 = vmatpush.xpose.msra.mxu0 0.0
  %3741 = vmatpush.xpose.msra.mxu0 0.0
  %3742 = vmatpush.xpose.msra.mxu0 0.0
  %3743 = vmatpush.xpose.msra.mxu0 0.0
  %3744 = vmatpush.xpose.msra.mxu0 0.0
  %3745 = vmatpush.xpose.msra.mxu0 0.0
  %3746 = vmatpush.xpose.msra.mxu0 0.0
  %3747 = vmatpush.xpose.msra.mxu0 %v1241
  %3748 = vmatmul.f32.gmra.mxu0 %v3730
  %v3749 = vpop.f32.mrf.mxu0
  %v3750 = vadd.f32 0.0, %v3749
  %3751 = vdwg.mxu0
  %v3753 = vsel %vm481, %v3104, 0
  %3755 = vmatpush.xpose.msra.mxu0 0.0
  %3756 = vmatpush.xpose.msra.mxu0 0.0
  %3757 = vmatpush.xpose.msra.mxu0 0.0
  %3758 = vmatpush.xpose.msra.mxu0 0.0
  %3759 = vmatpush.xpose.msra.mxu0 0.0
  %3760 = vmatpush.xpose.msra.mxu0 0.0
  %3761 = vmatpush.xpose.msra.mxu0 0.0
  %3762 = vmatpush.xpose.msra.mxu0 0.0
  %3763 = vmatpush.xpose.msra.mxu0 0.0
  %3764 = vmatpush.xpose.msra.mxu0 0.0
  %3765 = vmatpush.xpose.msra.mxu0 0.0
  %3766 = vmatpush.xpose.msra.mxu0 0.0
  %3767 = vmatpush.xpose.msra.mxu0 0.0
  %3768 = vmatpush.xpose.msra.mxu0 0.0
  %3769 = vmatpush.xpose.msra.mxu0 0.0
  %3770 = vmatpush.xpose.msra.mxu0 %v1269
  %3771 = vmatmul.f32.gmra.mxu0 %v3753
  %v3772 = vpop.f32.mrf.mxu0
  %v3773 = vadd.f32 0.0, %v3772
  %3774 = vdwg.mxu0
  %v3776 = vsel %vm481, %v3105, 0
  %3778 = vmatpush.xpose.msra.mxu0 0.0
  %3779 = vmatpush.xpose.msra.mxu0 0.0
  %3780 = vmatpush.xpose.msra.mxu0 0.0
  %3781 = vmatpush.xpose.msra.mxu0 0.0
  %3782 = vmatpush.xpose.msra.mxu0 0.0
  %3783 = vmatpush.xpose.msra.mxu0 0.0
  %3784 = vmatpush.xpose.msra.mxu0 0.0
  %3785 = vmatpush.xpose.msra.mxu0 0.0
  %3786 = vmatpush.xpose.msra.mxu0 0.0
  %3787 = vmatpush.xpose.msra.mxu0 0.0
  %3788 = vmatpush.xpose.msra.mxu0 0.0
  %3789 = vmatpush.xpose.msra.mxu0 0.0
  %3790 = vmatpush.xpose.msra.mxu0 0.0
  %3791 = vmatpush.xpose.msra.mxu0 0.0
  %3792 = vmatpush.xpose.msra.mxu0 0.0
  %3793 = vmatpush.xpose.msra.mxu0 %v1297
  %3794 = vmatmul.f32.gmra.mxu0 %v3776
  %v3795 = vpop.f32.mrf.mxu0
  %v3796 = vadd.f32 0.0, %v3795
  %3797 = vdwg.mxu0
  %v3799 = vsel %vm481, %v3106, 0
  %3801 = vmatpush.xpose.msra.mxu0 0.0
  %3802 = vmatpush.xpose.msra.mxu0 0.0
  %3803 = vmatpush.xpose.msra.mxu0 0.0
  %3804 = vmatpush.xpose.msra.mxu0 0.0
  %3805 = vmatpush.xpose.msra.mxu0 0.0
  %3806 = vmatpush.xpose.msra.mxu0 0.0
  %3807 = vmatpush.xpose.msra.mxu0 0.0
  %3808 = vmatpush.xpose.msra.mxu0 0.0
  %3809 = vmatpush.xpose.msra.mxu0 0.0
  %3810 = vmatpush.xpose.msra.mxu0 0.0
  %3811 = vmatpush.xpose.msra.mxu0 0.0
  %3812 = vmatpush.xpose.msra.mxu0 0.0
  %3813 = vmatpush.xpose.msra.mxu0 0.0
  %3814 = vmatpush.xpose.msra.mxu0 0.0
  %3815 = vmatpush.xpose.msra.mxu0 0.0
  %3816 = vmatpush.xpose.msra.mxu0 %v1325
  %3817 = vmatmul.f32.gmra.mxu0 %v3799
  %v3818 = vpop.f32.mrf.mxu0
  %v3819 = vadd.f32 0.0, %v3818
  %3820 = vdwg.mxu0
  %v3822 = vsel %vm481, %v3107, 0
  %3824 = vmatpush.xpose.msra.mxu0 0.0
  %3825 = vmatpush.xpose.msra.mxu0 0.0
  %3826 = vmatpush.xpose.msra.mxu0 0.0
  %3827 = vmatpush.xpose.msra.mxu0 0.0
  %3828 = vmatpush.xpose.msra.mxu0 0.0
  %3829 = vmatpush.xpose.msra.mxu0 0.0
  %3830 = vmatpush.xpose.msra.mxu0 0.0
  %3831 = vmatpush.xpose.msra.mxu0 0.0
  %3832 = vmatpush.xpose.msra.mxu0 0.0
  %3833 = vmatpush.xpose.msra.mxu0 0.0
  %3834 = vmatpush.xpose.msra.mxu0 0.0
  %3835 = vmatpush.xpose.msra.mxu0 0.0
  %3836 = vmatpush.xpose.msra.mxu0 0.0
  %3837 = vmatpush.xpose.msra.mxu0 0.0
  %3838 = vmatpush.xpose.msra.mxu0 0.0
  %3839 = vmatpush.xpose.msra.mxu0 %v1353
  %3840 = vmatmul.f32.gmra.mxu0 %v3822
  %v3841 = vpop.f32.mrf.mxu0
  %v3842 = vadd.f32 0.0, %v3841
  %3843 = vdwg.mxu0
  %v3844 = vmul.f32 %v3129, 0.35355338
  %v3845 = vmul.f32 %v3152, 0.35355338
  %v3846 = vmul.f32 %v3175, 0.35355338
  %v3847 = vmul.f32 %v3198, 0.35355338
  %v3848 = vmul.f32 %v3221, 0.35355338
  %v3849 = vmul.f32 %v3244, 0.35355338
  %v3850 = vmul.f32 %v3267, 0.35355338
  %v3851 = vmul.f32 %v3290, 0.35355338
  %v3852 = vmul.f32 %v3313, 0.35355338
  %v3853 = vmul.f32 %v3336, 0.35355338
  %v3854 = vmul.f32 %v3359, 0.35355338
  %v3855 = vmul.f32 %v3382, 0.35355338
  %v3856 = vmul.f32 %v3405, 0.35355338
  %v3857 = vmul.f32 %v3428, 0.35355338
  %v3858 = vmul.f32 %v3451, 0.35355338
  %v3859 = vmul.f32 %v3474, 0.35355338
  %v3860 = vmul.f32 %v3497, 0.35355338
  %v3861 = vmul.f32 %v3520, 0.35355338
  %v3862 = vmul.f32 %v3543, 0.35355338
  %v3863 = vmul.f32 %v3566, 0.35355338
  %v3864 = vmul.f32 %v3589, 0.35355338
  %v3865 = vmul.f32 %v3612, 0.35355338
  %v3866 = vmul.f32 %v3635, 0.35355338
  %v3867 = vmul.f32 %v3658, 0.35355338
  %v3868 = vmul.f32 %v3681, 0.35355338
  %v3869 = vmul.f32 %v3704, 0.35355338
  %v3870 = vmul.f32 %v3727, 0.35355338
  %v3871 = vmul.f32 %v3750, 0.35355338
  %v3872 = vmul.f32 %v3773, 0.35355338
  %v3873 = vmul.f32 %v3796, 0.35355338
  %v3874 = vmul.f32 %v3819, 0.35355338
  %v3875 = vmul.f32 %v3842, 0.35355338
  %v3876 = vsel %vm1407, %v3844, -inf
  %3877 = vmax.xlane.f32.xlu0 %v3876
  %v3878 = vpop.xlane.xlu0 %3877
  %v3879 = vsel %vm1407, %v3845, -inf
  %3880 = vmax.xlane.f32.xlu0 %v3879
  %v3881 = vpop.xlane.xlu0 %3880
  %v3882 = vsel %vm1407, %v3846, -inf
  %3883 = vmax.xlane.f32.xlu0 %v3882
  %v3884 = vpop.xlane.xlu0 %3883
  %v3885 = vsel %vm1407, %v3847, -inf
  %3886 = vmax.xlane.f32.xlu0 %v3885
  %v3887 = vpop.xlane.xlu0 %3886
  %v3888 = vsel %vm1407, %v3848, -inf
  %3889 = vmax.xlane.f32.xlu0 %v3888
  %v3890 = vpop.xlane.xlu0 %3889
  %v3891 = vsel %vm1407, %v3849, -inf
  %3892 = vmax.xlane.f32.xlu0 %v3891
  %v3893 = vpop.xlane.xlu0 %3892
  %v3894 = vsel %vm1407, %v3850, -inf
  %3895 = vmax.xlane.f32.xlu0 %v3894
  %v3896 = vpop.xlane.xlu0 %3895
  %v3897 = vsel %vm1407, %v3851, -inf
  %3898 = vmax.xlane.f32.xlu0 %v3897
  %v3899 = vpop.xlane.xlu0 %3898
  %v3900 = vsel %vm1407, %v3852, -inf
  %3901 = vmax.xlane.f32.xlu0 %v3900
  %v3902 = vpop.xlane.xlu0 %3901
  %v3903 = vsel %vm1407, %v3853, -inf
  %3904 = vmax.xlane.f32.xlu0 %v3903
  %v3905 = vpop.xlane.xlu0 %3904
  %v3906 = vsel %vm1407, %v3854, -inf
  %3907 = vmax.xlane.f32.xlu0 %v3906
  %v3908 = vpop.xlane.xlu0 %3907
  %v3909 = vsel %vm1407, %v3855, -inf
  %3910 = vmax.xlane.f32.xlu0 %v3909
  %v3911 = vpop.xlane.xlu0 %3910
  %v3912 = vsel %vm1407, %v3856, -inf
  %3913 = vmax.xlane.f32.xlu0 %v3912
  %v3914 = vpop.xlane.xlu0 %3913
  %v3915 = vsel %vm1407, %v3857, -inf
  %3916 = vmax.xlane.f32.xlu0 %v3915
  %v3917 = vpop.xlane.xlu0 %3916
  %v3918 = vsel %vm1407, %v3858, -inf
  %3919 = vmax.xlane.f32.xlu0 %v3918
  %v3920 = vpop.xlane.xlu0 %3919
  %v3921 = vsel %vm1407, %v3859, -inf
  %3922 = vmax.xlane.f32.xlu0 %v3921
  %v3923 = vpop.xlane.xlu0 %3922
  %v3924 = vsel %vm1407, %v3860, -inf
  %3925 = vmax.xlane.f32.xlu0 %v3924
  %v3926 = vpop.xlane.xlu0 %3925
  %v3927 = vsel %vm1407, %v3861, -inf
  %3928 = vmax.xlane.f32.xlu0 %v3927
  %v3929 = vpop.xlane.xlu0 %3928
  %v3930 = vsel %vm1407, %v3862, -inf
  %3931 = vmax.xlane.f32.xlu0 %v3930
  %v3932 = vpop.xlane.xlu0 %3931
  %v3933 = vsel %vm1407, %v3863, -inf
  %3934 = vmax.xlane.f32.xlu0 %v3933
  %v3935 = vpop.xlane.xlu0 %3934
  %v3936 = vsel %vm1407, %v3864, -inf
  %3937 = vmax.xlane.f32.xlu0 %v3936
  %v3938 = vpop.xlane.xlu0 %3937
  %v3939 = vsel %vm1407, %v3865, -inf
  %3940 = vmax.xlane.f32.xlu0 %v3939
  %v3941 = vpop.xlane.xlu0 %3940
  %v3942 = vsel %vm1407, %v3866, -inf
  %3943 = vmax.xlane.f32.xlu0 %v3942
  %v3944 = vpop.xlane.xlu0 %3943
  %v3945 = vsel %vm1407, %v3867, -inf
  %3946 = vmax.xlane.f32.xlu0 %v3945
  %v3947 = vpop.xlane.xlu0 %3946
  %v3948 = vsel %vm1407, %v3868, -inf
  %3949 = vmax.xlane.f32.xlu0 %v3948
  %v3950 = vpop.xlane.xlu0 %3949
  %v3951 = vsel %vm1407, %v3869, -inf
  %3952 = vmax.xlane.f32.xlu0 %v3951
  %v3953 = vpop.xlane.xlu0 %3952
  %v3954 = vsel %vm1407, %v3870, -inf
  %3955 = vmax.xlane.f32.xlu0 %v3954
  %v3956 = vpop.xlane.xlu0 %3955
  %v3957 = vsel %vm1407, %v3871, -inf
  %3958 = vmax.xlane.f32.xlu0 %v3957
  %v3959 = vpop.xlane.xlu0 %3958
  %v3960 = vsel %vm1407, %v3872, -inf
  %3961 = vmax.xlane.f32.xlu0 %v3960
  %v3962 = vpop.xlane.xlu0 %3961
  %v3963 = vsel %vm1407, %v3873, -inf
  %3964 = vmax.xlane.f32.xlu0 %v3963
  %v3965 = vpop.xlane.xlu0 %3964
  %v3966 = vsel %vm1407, %v3874, -inf
  %3967 = vmax.xlane.f32.xlu0 %v3966
  %v3968 = vpop.xlane.xlu0 %3967
  %v3969 = vsel %vm1407, %v3875, -inf
  %3970 = vmax.xlane.f32.xlu0 %v3969
  %v3971 = vpop.xlane.xlu0 %3970
  %v3972 = vsub.f32 %v3844, %v3878
  %v3973 = vsub.f32 %v3845, %v3881
  %v3974 = vsub.f32 %v3846, %v3884
  %v3975 = vsub.f32 %v3847, %v3887
  %v3976 = vsub.f32 %v3848, %v3890
  %v3977 = vsub.f32 %v3849, %v3893
  %v3978 = vsub.f32 %v3850, %v3896
  %v3979 = vsub.f32 %v3851, %v3899
  %v3980 = vsub.f32 %v3852, %v3902
  %v3981 = vsub.f32 %v3853, %v3905
  %v3982 = vsub.f32 %v3854, %v3908
  %v3983 = vsub.f32 %v3855, %v3911
  %v3984 = vsub.f32 %v3856, %v3914
  %v3985 = vsub.f32 %v3857, %v3917
  %v3986 = vsub.f32 %v3858, %v3920
  %v3987 = vsub.f32 %v3859, %v3923
  %v3988 = vsub.f32 %v3860, %v3926
  %v3989 = vsub.f32 %v3861, %v3929
  %v3990 = vsub.f32 %v3862, %v3932
  %v3991 = vsub.f32 %v3863, %v3935
  %v3992 = vsub.f32 %v3864, %v3938
  %v3993 = vsub.f32 %v3865, %v3941
  %v3994 = vsub.f32 %v3866, %v3944
  %v3995 = vsub.f32 %v3867, %v3947
  %v3996 = vsub.f32 %v3868, %v3950
  %v3997 = vsub.f32 %v3869, %v3953
  %v3998 = vsub.f32 %v3870, %v3956
  %v3999 = vsub.f32 %v3871, %v3959
  %v4000 = vsub.f32 %v3872, %v3962
  %v4001 = vsub.f32 %v3873, %v3965
  %v4002 = vsub.f32 %v3874, %v3968
  %v4003 = vsub.f32 %v3875, %v3971
  %v4004 = vmul.f32 %v3972, 1.442695
  %v4005 = vpow.pop %v4004
  %v4006 = vmul.f32 %v3973, 1.442695
  %v4007 = vpow.pop %v4006
  %v4008 = vmul.f32 %v3974, 1.442695
  %v4009 = vpow.pop %v4008
  %v4010 = vmul.f32 %v3975, 1.442695
  %v4011 = vpow.pop %v4010
  %v4012 = vmul.f32 %v3976, 1.442695
  %v4013 = vpow.pop %v4012
  %v4014 = vmul.f32 %v3977, 1.442695
  %v4015 = vpow.pop %v4014
  %v4016 = vmul.f32 %v3978, 1.442695
  %v4017 = vpow.pop %v4016
  %v4018 = vmul.f32 %v3979, 1.442695
  %v4019 = vpow.pop %v4018
  %v4020 = vmul.f32 %v3980, 1.442695
  %v4021 = vpow.pop %v4020
  %v4022 = vmul.f32 %v3981, 1.442695
  %v4023 = vpow.pop %v4022
  %v4024 = vmul.f32 %v3982, 1.442695
  %v4025 = vpow.pop %v4024
  %v4026 = vmul.f32 %v3983, 1.442695
  %v4027 = vpow.pop %v4026
  %v4028 = vmul.f32 %v3984, 1.442695
  %v4029 = vpow.pop %v4028
  %v4030 = vmul.f32 %v3985, 1.442695
  %v4031 = vpow.pop %v4030
  %v4032 = vmul.f32 %v3986, 1.442695
  %v4033 = vpow.pop %v4032
  %v4034 = vmul.f32 %v3987, 1.442695
  %v4035 = vpow.pop %v4034
  %v4036 = vmul.f32 %v3988, 1.442695
  %v4037 = vpow.pop %v4036
  %v4038 = vmul.f32 %v3989, 1.442695
  %v4039 = vpow.pop %v4038
  %v4040 = vmul.f32 %v3990, 1.442695
  %v4041 = vpow.pop %v4040
  %v4042 = vmul.f32 %v3991, 1.442695
  %v4043 = vpow.pop %v4042
  %v4044 = vmul.f32 %v3992, 1.442695
  %v4045 = vpow.pop %v4044
  %v4046 = vmul.f32 %v3993, 1.442695
  %v4047 = vpow.pop %v4046
  %v4048 = vmul.f32 %v3994, 1.442695
  %v4049 = vpow.pop %v4048
  %v4050 = vmul.f32 %v3995, 1.442695
  %v4051 = vpow.pop %v4050
  %v4052 = vmul.f32 %v3996, 1.442695
  %v4053 = vpow.pop %v4052
  %v4054 = vmul.f32 %v3997, 1.442695
  %v4055 = vpow.pop %v4054
  %v4056 = vmul.f32 %v3998, 1.442695
  %v4057 = vpow.pop %v4056
  %v4058 = vmul.f32 %v3999, 1.442695
  %v4059 = vpow.pop %v4058
  %v4060 = vmul.f32 %v4000, 1.442695
  %v4061 = vpow.pop %v4060
  %v4062 = vmul.f32 %v4001, 1.442695
  %v4063 = vpow.pop %v4062
  %v4064 = vmul.f32 %v4002, 1.442695
  %v4065 = vpow.pop %v4064
  %v4066 = vmul.f32 %v4003, 1.442695
  %v4067 = vpow.pop %v4066
  %v4068 = vsel %vm1407, %v4005, 0.0
  %4069 = vadd.xlane.f32.xlu0 %v4068
  %v4070 = vpop.xlane.xlu0 %4069
  %v4071 = vsel %vm1407, %v4007, 0.0
  %4072 = vadd.xlane.f32.xlu0 %v4071
  %v4073 = vpop.xlane.xlu0 %4072
  %v4074 = vsel %vm1407, %v4009, 0.0
  %4075 = vadd.xlane.f32.xlu0 %v4074
  %v4076 = vpop.xlane.xlu0 %4075
  %v4077 = vsel %vm1407, %v4011, 0.0
  %4078 = vadd.xlane.f32.xlu0 %v4077
  %v4079 = vpop.xlane.xlu0 %4078
  %v4080 = vsel %vm1407, %v4013, 0.0
  %4081 = vadd.xlane.f32.xlu0 %v4080
  %v4082 = vpop.xlane.xlu0 %4081
  %v4083 = vsel %vm1407, %v4015, 0.0
  %4084 = vadd.xlane.f32.xlu0 %v4083
  %v4085 = vpop.xlane.xlu0 %4084
  %v4086 = vsel %vm1407, %v4017, 0.0
  %4087 = vadd.xlane.f32.xlu0 %v4086
  %v4088 = vpop.xlane.xlu0 %4087
  %v4089 = vsel %vm1407, %v4019, 0.0
  %4090 = vadd.xlane.f32.xlu0 %v4089
  %v4091 = vpop.xlane.xlu0 %4090
  %v4092 = vsel %vm1407, %v4021, 0.0
  %4093 = vadd.xlane.f32.xlu0 %v4092
  %v4094 = vpop.xlane.xlu0 %4093
  %v4095 = vsel %vm1407, %v4023, 0.0
  %4096 = vadd.xlane.f32.xlu0 %v4095
  %v4097 = vpop.xlane.xlu0 %4096
  %v4098 = vsel %vm1407, %v4025, 0.0
  %4099 = vadd.xlane.f32.xlu0 %v4098
  %v4100 = vpop.xlane.xlu0 %4099
  %v4101 = vsel %vm1407, %v4027, 0.0
  %4102 = vadd.xlane.f32.xlu0 %v4101
  %v4103 = vpop.xlane.xlu0 %4102
  %v4104 = vsel %vm1407, %v4029, 0.0
  %4105 = vadd.xlane.f32.xlu0 %v4104
  %v4106 = vpop.xlane.xlu0 %4105
  %v4107 = vsel %vm1407, %v4031, 0.0
  %4108 = vadd.xlane.f32.xlu0 %v4107
  %v4109 = vpop.xlane.xlu0 %4108
  %v4110 = vsel %vm1407, %v4033, 0.0
  %4111 = vadd.xlane.f32.xlu0 %v4110
  %v4112 = vpop.xlane.xlu0 %4111
  %v4113 = vsel %vm1407, %v4035, 0.0
  %4114 = vadd.xlane.f32.xlu0 %v4113
  %v4115 = vpop.xlane.xlu0 %4114
  %v4116 = vsel %vm1407, %v4037, 0.0
  %4117 = vadd.xlane.f32.xlu0 %v4116
  %v4118 = vpop.xlane.xlu0 %4117
  %v4119 = vsel %vm1407, %v4039, 0.0
  %4120 = vadd.xlane.f32.xlu0 %v4119
  %v4121 = vpop.xlane.xlu0 %4120
  %v4122 = vsel %vm1407, %v4041, 0.0
  %4123 = vadd.xlane.f32.xlu0 %v4122
  %v4124 = vpop.xlane.xlu0 %4123
  %v4125 = vsel %vm1407, %v4043, 0.0
  %4126 = vadd.xlane.f32.xlu0 %v4125
  %v4127 = vpop.xlane.xlu0 %4126
  %v4128 = vsel %vm1407, %v4045, 0.0
  %4129 = vadd.xlane.f32.xlu0 %v4128
  %v4130 = vpop.xlane.xlu0 %4129
  %v4131 = vsel %vm1407, %v4047, 0.0
  %4132 = vadd.xlane.f32.xlu0 %v4131
  %v4133 = vpop.xlane.xlu0 %4132
  %v4134 = vsel %vm1407, %v4049, 0.0
  %4135 = vadd.xlane.f32.xlu0 %v4134
  %v4136 = vpop.xlane.xlu0 %4135
  %v4137 = vsel %vm1407, %v4051, 0.0
  %4138 = vadd.xlane.f32.xlu0 %v4137
  %v4139 = vpop.xlane.xlu0 %4138
  %v4140 = vsel %vm1407, %v4053, 0.0
  %4141 = vadd.xlane.f32.xlu0 %v4140
  %v4142 = vpop.xlane.xlu0 %4141
  %v4143 = vsel %vm1407, %v4055, 0.0
  %4144 = vadd.xlane.f32.xlu0 %v4143
  %v4145 = vpop.xlane.xlu0 %4144
  %v4146 = vsel %vm1407, %v4057, 0.0
  %4147 = vadd.xlane.f32.xlu0 %v4146
  %v4148 = vpop.xlane.xlu0 %4147
  %v4149 = vsel %vm1407, %v4059, 0.0
  %4150 = vadd.xlane.f32.xlu0 %v4149
  %v4151 = vpop.xlane.xlu0 %4150
  %v4152 = vsel %vm1407, %v4061, 0.0
  %4153 = vadd.xlane.f32.xlu0 %v4152
  %v4154 = vpop.xlane.xlu0 %4153
  %v4155 = vsel %vm1407, %v4063, 0.0
  %4156 = vadd.xlane.f32.xlu0 %v4155
  %v4157 = vpop.xlane.xlu0 %4156
  %v4158 = vsel %vm1407, %v4065, 0.0
  %4159 = vadd.xlane.f32.xlu0 %v4158
  %v4160 = vpop.xlane.xlu0 %4159
  %v4161 = vsel %vm1407, %v4067, 0.0
  %4162 = vadd.xlane.f32.xlu0 %v4161
  %v4163 = vpop.xlane.xlu0 %4162
  %v4164 = vrcp.pop %v4070
  %v4165 = vmul.f32 %v4070, %v4164
  %v4166 = vsub.f32 1.0, %v4165
  %v4167 = vmul.f32 %v4164, %v4166
  %v4168 = vadd.f32 %v4164, %v4167
  %vm4169 = vweird.f32 %v4070
  %vm4170 = vweird.f32 %v4164
  %vm4171 = vmor %vm4169, %vm4170
  %v4172 = vsel %vm4171, %v4164, %v4168
  %v4173 = vand.u32 2147483647, %v4070
  %vm4174 = vcmp.eq.f32.partialorder %v4173, 8.507059e+37
  %v4175 = vand.u32 %v4070, 2147483648
  %v4176 = vor.u32 1.1754944e-38, %v4175
  %v4177 = vsel %vm4174, %v4176, %v4172
  %v4178 = vrcp.pop %v4073
  %v4179 = vmul.f32 %v4073, %v4178
  %v4180 = vsub.f32 1.0, %v4179
  %v4181 = vmul.f32 %v4178, %v4180
  %v4182 = vadd.f32 %v4178, %v4181
  %vm4183 = vweird.f32 %v4073
  %vm4184 = vweird.f32 %v4178
  %vm4185 = vmor %vm4183, %vm4184
  %v4186 = vsel %vm4185, %v4178, %v4182
  %v4187 = vand.u32 2147483647, %v4073
  %vm4188 = vcmp.eq.f32.partialorder %v4187, 8.507059e+37
  %v4189 = vand.u32 %v4073, 2147483648
  %v4190 = vor.u32 1.1754944e-38, %v4189
  %v4191 = vsel %vm4188, %v4190, %v4186
  %v4192 = vrcp.pop %v4076
  %v4193 = vmul.f32 %v4076, %v4192
  %v4194 = vsub.f32 1.0, %v4193
  %v4195 = vmul.f32 %v4192, %v4194
  %v4196 = vadd.f32 %v4192, %v4195
  %vm4197 = vweird.f32 %v4076
  %vm4198 = vweird.f32 %v4192
  %vm4199 = vmor %vm4197, %vm4198
  %v4200 = vsel %vm4199, %v4192, %v4196
  %v4201 = vand.u32 2147483647, %v4076
  %vm4202 = vcmp.eq.f32.partialorder %v4201, 8.507059e+37
  %v4203 = vand.u32 %v4076, 2147483648
  %v4204 = vor.u32 1.1754944e-38, %v4203
  %v4205 = vsel %vm4202, %v4204, %v4200
  %v4206 = vrcp.pop %v4079
  %v4207 = vmul.f32 %v4079, %v4206
  %v4208 = vsub.f32 1.0, %v4207
  %v4209 = vmul.f32 %v4206, %v4208
  %v4210 = vadd.f32 %v4206, %v4209
  %vm4211 = vweird.f32 %v4079
  %vm4212 = vweird.f32 %v4206
  %vm4213 = vmor %vm4211, %vm4212
  %v4214 = vsel %vm4213, %v4206, %v4210
  %v4215 = vand.u32 2147483647, %v4079
  %vm4216 = vcmp.eq.f32.partialorder %v4215, 8.507059e+37
  %v4217 = vand.u32 %v4079, 2147483648
  %v4218 = vor.u32 1.1754944e-38, %v4217
  %v4219 = vsel %vm4216, %v4218, %v4214
  %v4220 = vrcp.pop %v4082
  %v4221 = vmul.f32 %v4082, %v4220
  %v4222 = vsub.f32 1.0, %v4221
  %v4223 = vmul.f32 %v4220, %v4222
  %v4224 = vadd.f32 %v4220, %v4223
  %vm4225 = vweird.f32 %v4082
  %vm4226 = vweird.f32 %v4220
  %vm4227 = vmor %vm4225, %vm4226
  %v4228 = vsel %vm4227, %v4220, %v4224
  %v4229 = vand.u32 2147483647, %v4082
  %vm4230 = vcmp.eq.f32.partialorder %v4229, 8.507059e+37
  %v4231 = vand.u32 %v4082, 2147483648
  %v4232 = vor.u32 1.1754944e-38, %v4231
  %v4233 = vsel %vm4230, %v4232, %v4228
  %v4234 = vrcp.pop %v4085
  %v4235 = vmul.f32 %v4085, %v4234
  %v4236 = vsub.f32 1.0, %v4235
  %v4237 = vmul.f32 %v4234, %v4236
  %v4238 = vadd.f32 %v4234, %v4237
  %vm4239 = vweird.f32 %v4085
  %vm4240 = vweird.f32 %v4234
  %vm4241 = vmor %vm4239, %vm4240
  %v4242 = vsel %vm4241, %v4234, %v4238
  %v4243 = vand.u32 2147483647, %v4085
  %vm4244 = vcmp.eq.f32.partialorder %v4243, 8.507059e+37
  %v4245 = vand.u32 %v4085, 2147483648
  %v4246 = vor.u32 1.1754944e-38, %v4245
  %v4247 = vsel %vm4244, %v4246, %v4242
  %v4248 = vrcp.pop %v4088
  %v4249 = vmul.f32 %v4088, %v4248
  %v4250 = vsub.f32 1.0, %v4249
  %v4251 = vmul.f32 %v4248, %v4250
  %v4252 = vadd.f32 %v4248, %v4251
  %vm4253 = vweird.f32 %v4088
  %vm4254 = vweird.f32 %v4248
  %vm4255 = vmor %vm4253, %vm4254
  %v4256 = vsel %vm4255, %v4248, %v4252
  %v4257 = vand.u32 2147483647, %v4088
  %vm4258 = vcmp.eq.f32.partialorder %v4257, 8.507059e+37
  %v4259 = vand.u32 %v4088, 2147483648
  %v4260 = vor.u32 1.1754944e-38, %v4259
  %v4261 = vsel %vm4258, %v4260, %v4256
  %v4262 = vrcp.pop %v4091
  %v4263 = vmul.f32 %v4091, %v4262
  %v4264 = vsub.f32 1.0, %v4263
  %v4265 = vmul.f32 %v4262, %v4264
  %v4266 = vadd.f32 %v4262, %v4265
  %vm4267 = vweird.f32 %v4091
  %vm4268 = vweird.f32 %v4262
  %vm4269 = vmor %vm4267, %vm4268
  %v4270 = vsel %vm4269, %v4262, %v4266
  %v4271 = vand.u32 2147483647, %v4091
  %vm4272 = vcmp.eq.f32.partialorder %v4271, 8.507059e+37
  %v4273 = vand.u32 %v4091, 2147483648
  %v4274 = vor.u32 1.1754944e-38, %v4273
  %v4275 = vsel %vm4272, %v4274, %v4270
  %v4276 = vrcp.pop %v4094
  %v4277 = vmul.f32 %v4094, %v4276
  %v4278 = vsub.f32 1.0, %v4277
  %v4279 = vmul.f32 %v4276, %v4278
  %v4280 = vadd.f32 %v4276, %v4279
  %vm4281 = vweird.f32 %v4094
  %vm4282 = vweird.f32 %v4276
  %vm4283 = vmor %vm4281, %vm4282
  %v4284 = vsel %vm4283, %v4276, %v4280
  %v4285 = vand.u32 2147483647, %v4094
  %vm4286 = vcmp.eq.f32.partialorder %v4285, 8.507059e+37
  %v4287 = vand.u32 %v4094, 2147483648
  %v4288 = vor.u32 1.1754944e-38, %v4287
  %v4289 = vsel %vm4286, %v4288, %v4284
  %v4290 = vrcp.pop %v4097
  %v4291 = vmul.f32 %v4097, %v4290
  %v4292 = vsub.f32 1.0, %v4291
  %v4293 = vmul.f32 %v4290, %v4292
  %v4294 = vadd.f32 %v4290, %v4293
  %vm4295 = vweird.f32 %v4097
  %vm4296 = vweird.f32 %v4290
  %vm4297 = vmor %vm4295, %vm4296
  %v4298 = vsel %vm4297, %v4290, %v4294
  %v4299 = vand.u32 2147483647, %v4097
  %vm4300 = vcmp.eq.f32.partialorder %v4299, 8.507059e+37
  %v4301 = vand.u32 %v4097, 2147483648
  %v4302 = vor.u32 1.1754944e-38, %v4301
  %v4303 = vsel %vm4300, %v4302, %v4298
  %v4304 = vrcp.pop %v4100
  %v4305 = vmul.f32 %v4100, %v4304
  %v4306 = vsub.f32 1.0, %v4305
  %v4307 = vmul.f32 %v4304, %v4306
  %v4308 = vadd.f32 %v4304, %v4307
  %vm4309 = vweird.f32 %v4100
  %vm4310 = vweird.f32 %v4304
  %vm4311 = vmor %vm4309, %vm4310
  %v4312 = vsel %vm4311, %v4304, %v4308
  %v4313 = vand.u32 2147483647, %v4100
  %vm4314 = vcmp.eq.f32.partialorder %v4313, 8.507059e+37
  %v4315 = vand.u32 %v4100, 2147483648
  %v4316 = vor.u32 1.1754944e-38, %v4315
  %v4317 = vsel %vm4314, %v4316, %v4312
  %v4318 = vrcp.pop %v4103
  %v4319 = vmul.f32 %v4103, %v4318
  %v4320 = vsub.f32 1.0, %v4319
  %v4321 = vmul.f32 %v4318, %v4320
  %v4322 = vadd.f32 %v4318, %v4321
  %vm4323 = vweird.f32 %v4103
  %vm4324 = vweird.f32 %v4318
  %vm4325 = vmor %vm4323, %vm4324
  %v4326 = vsel %vm4325, %v4318, %v4322
  %v4327 = vand.u32 2147483647, %v4103
  %vm4328 = vcmp.eq.f32.partialorder %v4327, 8.507059e+37
  %v4329 = vand.u32 %v4103, 2147483648
  %v4330 = vor.u32 1.1754944e-38, %v4329
  %v4331 = vsel %vm4328, %v4330, %v4326
  %v4332 = vrcp.pop %v4106
  %v4333 = vmul.f32 %v4106, %v4332
  %v4334 = vsub.f32 1.0, %v4333
  %v4335 = vmul.f32 %v4332, %v4334
  %v4336 = vadd.f32 %v4332, %v4335
  %vm4337 = vweird.f32 %v4106
  %vm4338 = vweird.f32 %v4332
  %vm4339 = vmor %vm4337, %vm4338
  %v4340 = vsel %vm4339, %v4332, %v4336
  %v4341 = vand.u32 2147483647, %v4106
  %vm4342 = vcmp.eq.f32.partialorder %v4341, 8.507059e+37
  %v4343 = vand.u32 %v4106, 2147483648
  %v4344 = vor.u32 1.1754944e-38, %v4343
  %v4345 = vsel %vm4342, %v4344, %v4340
  %v4346 = vrcp.pop %v4109
  %v4347 = vmul.f32 %v4109, %v4346
  %v4348 = vsub.f32 1.0, %v4347
  %v4349 = vmul.f32 %v4346, %v4348
  %v4350 = vadd.f32 %v4346, %v4349
  %vm4351 = vweird.f32 %v4109
  %vm4352 = vweird.f32 %v4346
  %vm4353 = vmor %vm4351, %vm4352
  %v4354 = vsel %vm4353, %v4346, %v4350
  %v4355 = vand.u32 2147483647, %v4109
  %vm4356 = vcmp.eq.f32.partialorder %v4355, 8.507059e+37
  %v4357 = vand.u32 %v4109, 2147483648
  %v4358 = vor.u32 1.1754944e-38, %v4357
  %v4359 = vsel %vm4356, %v4358, %v4354
  %v4360 = vrcp.pop %v4112
  %v4361 = vmul.f32 %v4112, %v4360
  %v4362 = vsub.f32 1.0, %v4361
  %v4363 = vmul.f32 %v4360, %v4362
  %v4364 = vadd.f32 %v4360, %v4363
  %vm4365 = vweird.f32 %v4112
  %vm4366 = vweird.f32 %v4360
  %vm4367 = vmor %vm4365, %vm4366
  %v4368 = vsel %vm4367, %v4360, %v4364
  %v4369 = vand.u32 2147483647, %v4112
  %vm4370 = vcmp.eq.f32.partialorder %v4369, 8.507059e+37
  %v4371 = vand.u32 %v4112, 2147483648
  %v4372 = vor.u32 1.1754944e-38, %v4371
  %v4373 = vsel %vm4370, %v4372, %v4368
  %v4374 = vrcp.pop %v4115
  %v4375 = vmul.f32 %v4115, %v4374
  %v4376 = vsub.f32 1.0, %v4375
  %v4377 = vmul.f32 %v4374, %v4376
  %v4378 = vadd.f32 %v4374, %v4377
  %vm4379 = vweird.f32 %v4115
  %vm4380 = vweird.f32 %v4374
  %vm4381 = vmor %vm4379, %vm4380
  %v4382 = vsel %vm4381, %v4374, %v4378
  %v4383 = vand.u32 2147483647, %v4115
  %vm4384 = vcmp.eq.f32.partialorder %v4383, 8.507059e+37
  %v4385 = vand.u32 %v4115, 2147483648
  %v4386 = vor.u32 1.1754944e-38, %v4385
  %v4387 = vsel %vm4384, %v4386, %v4382
  %v4388 = vrcp.pop %v4118
  %v4389 = vmul.f32 %v4118, %v4388
  %v4390 = vsub.f32 1.0, %v4389
  %v4391 = vmul.f32 %v4388, %v4390
  %v4392 = vadd.f32 %v4388, %v4391
  %vm4393 = vweird.f32 %v4118
  %vm4394 = vweird.f32 %v4388
  %vm4395 = vmor %vm4393, %vm4394
  %v4396 = vsel %vm4395, %v4388, %v4392
  %v4397 = vand.u32 2147483647, %v4118
  %vm4398 = vcmp.eq.f32.partialorder %v4397, 8.507059e+37
  %v4399 = vand.u32 %v4118, 2147483648
  %v4400 = vor.u32 1.1754944e-38, %v4399
  %v4401 = vsel %vm4398, %v4400, %v4396
  %v4402 = vrcp.pop %v4121
  %v4403 = vmul.f32 %v4121, %v4402
  %v4404 = vsub.f32 1.0, %v4403
  %v4405 = vmul.f32 %v4402, %v4404
  %v4406 = vadd.f32 %v4402, %v4405
  %vm4407 = vweird.f32 %v4121
  %vm4408 = vweird.f32 %v4402
  %vm4409 = vmor %vm4407, %vm4408
  %v4410 = vsel %vm4409, %v4402, %v4406
  %v4411 = vand.u32 2147483647, %v4121
  %vm4412 = vcmp.eq.f32.partialorder %v4411, 8.507059e+37
  %v4413 = vand.u32 %v4121, 2147483648
  %v4414 = vor.u32 1.1754944e-38, %v4413
  %v4415 = vsel %vm4412, %v4414, %v4410
  %v4416 = vrcp.pop %v4124
  %v4417 = vmul.f32 %v4124, %v4416
  %v4418 = vsub.f32 1.0, %v4417
  %v4419 = vmul.f32 %v4416, %v4418
  %v4420 = vadd.f32 %v4416, %v4419
  %vm4421 = vweird.f32 %v4124
  %vm4422 = vweird.f32 %v4416
  %vm4423 = vmor %vm4421, %vm4422
  %v4424 = vsel %vm4423, %v4416, %v4420
  %v4425 = vand.u32 2147483647, %v4124
  %vm4426 = vcmp.eq.f32.partialorder %v4425, 8.507059e+37
  %v4427 = vand.u32 %v4124, 2147483648
  %v4428 = vor.u32 1.1754944e-38, %v4427
  %v4429 = vsel %vm4426, %v4428, %v4424
  %v4430 = vrcp.pop %v4127
  %v4431 = vmul.f32 %v4127, %v4430
  %v4432 = vsub.f32 1.0, %v4431
  %v4433 = vmul.f32 %v4430, %v4432
  %v4434 = vadd.f32 %v4430, %v4433
  %vm4435 = vweird.f32 %v4127
  %vm4436 = vweird.f32 %v4430
  %vm4437 = vmor %vm4435, %vm4436
  %v4438 = vsel %vm4437, %v4430, %v4434
  %v4439 = vand.u32 2147483647, %v4127
  %vm4440 = vcmp.eq.f32.partialorder %v4439, 8.507059e+37
  %v4441 = vand.u32 %v4127, 2147483648
  %v4442 = vor.u32 1.1754944e-38, %v4441
  %v4443 = vsel %vm4440, %v4442, %v4438
  %v4444 = vrcp.pop %v4130
  %v4445 = vmul.f32 %v4130, %v4444
  %v4446 = vsub.f32 1.0, %v4445
  %v4447 = vmul.f32 %v4444, %v4446
  %v4448 = vadd.f32 %v4444, %v4447
  %vm4449 = vweird.f32 %v4130
  %vm4450 = vweird.f32 %v4444
  %vm4451 = vmor %vm4449, %vm4450
  %v4452 = vsel %vm4451, %v4444, %v4448
  %v4453 = vand.u32 2147483647, %v4130
  %vm4454 = vcmp.eq.f32.partialorder %v4453, 8.507059e+37
  %v4455 = vand.u32 %v4130, 2147483648
  %v4456 = vor.u32 1.1754944e-38, %v4455
  %v4457 = vsel %vm4454, %v4456, %v4452
  %v4458 = vrcp.pop %v4133
  %v4459 = vmul.f32 %v4133, %v4458
  %v4460 = vsub.f32 1.0, %v4459
  %v4461 = vmul.f32 %v4458, %v4460
  %v4462 = vadd.f32 %v4458, %v4461
  %vm4463 = vweird.f32 %v4133
  %vm4464 = vweird.f32 %v4458
  %vm4465 = vmor %vm4463, %vm4464
  %v4466 = vsel %vm4465, %v4458, %v4462
  %v4467 = vand.u32 2147483647, %v4133
  %vm4468 = vcmp.eq.f32.partialorder %v4467, 8.507059e+37
  %v4469 = vand.u32 %v4133, 2147483648
  %v4470 = vor.u32 1.1754944e-38, %v4469
  %v4471 = vsel %vm4468, %v4470, %v4466
  %v4472 = vrcp.pop %v4136
  %v4473 = vmul.f32 %v4136, %v4472
  %v4474 = vsub.f32 1.0, %v4473
  %v4475 = vmul.f32 %v4472, %v4474
  %v4476 = vadd.f32 %v4472, %v4475
  %vm4477 = vweird.f32 %v4136
  %vm4478 = vweird.f32 %v4472
  %vm4479 = vmor %vm4477, %vm4478
  %v4480 = vsel %vm4479, %v4472, %v4476
  %v4481 = vand.u32 2147483647, %v4136
  %vm4482 = vcmp.eq.f32.partialorder %v4481, 8.507059e+37
  %v4483 = vand.u32 %v4136, 2147483648
  %v4484 = vor.u32 1.1754944e-38, %v4483
  %v4485 = vsel %vm4482, %v4484, %v4480
  %v4486 = vrcp.pop %v4139
  %v4487 = vmul.f32 %v4139, %v4486
  %v4488 = vsub.f32 1.0, %v4487
  %v4489 = vmul.f32 %v4486, %v4488
  %v4490 = vadd.f32 %v4486, %v4489
  %vm4491 = vweird.f32 %v4139
  %vm4492 = vweird.f32 %v4486
  %vm4493 = vmor %vm4491, %vm4492
  %v4494 = vsel %vm4493, %v4486, %v4490
  %v4495 = vand.u32 2147483647, %v4139
  %vm4496 = vcmp.eq.f32.partialorder %v4495, 8.507059e+37
  %v4497 = vand.u32 %v4139, 2147483648
  %v4498 = vor.u32 1.1754944e-38, %v4497
  %v4499 = vsel %vm4496, %v4498, %v4494
  %v4500 = vrcp.pop %v4142
  %v4501 = vmul.f32 %v4142, %v4500
  %v4502 = vsub.f32 1.0, %v4501
  %v4503 = vmul.f32 %v4500, %v4502
  %v4504 = vadd.f32 %v4500, %v4503
  %vm4505 = vweird.f32 %v4142
  %vm4506 = vweird.f32 %v4500
  %vm4507 = vmor %vm4505, %vm4506
  %v4508 = vsel %vm4507, %v4500, %v4504
  %v4509 = vand.u32 2147483647, %v4142
  %vm4510 = vcmp.eq.f32.partialorder %v4509, 8.507059e+37
  %v4511 = vand.u32 %v4142, 2147483648
  %v4512 = vor.u32 1.1754944e-38, %v4511
  %v4513 = vsel %vm4510, %v4512, %v4508
  %v4514 = vrcp.pop %v4145
  %v4515 = vmul.f32 %v4145, %v4514
  %v4516 = vsub.f32 1.0, %v4515
  %v4517 = vmul.f32 %v4514, %v4516
  %v4518 = vadd.f32 %v4514, %v4517
  %vm4519 = vweird.f32 %v4145
  %vm4520 = vweird.f32 %v4514
  %vm4521 = vmor %vm4519, %vm4520
  %v4522 = vsel %vm4521, %v4514, %v4518
  %v4523 = vand.u32 2147483647, %v4145
  %vm4524 = vcmp.eq.f32.partialorder %v4523, 8.507059e+37
  %v4525 = vand.u32 %v4145, 2147483648
  %v4526 = vor.u32 1.1754944e-38, %v4525
  %v4527 = vsel %vm4524, %v4526, %v4522
  %v4528 = vrcp.pop %v4148
  %v4529 = vmul.f32 %v4148, %v4528
  %v4530 = vsub.f32 1.0, %v4529
  %v4531 = vmul.f32 %v4528, %v4530
  %v4532 = vadd.f32 %v4528, %v4531
  %vm4533 = vweird.f32 %v4148
  %vm4534 = vweird.f32 %v4528
  %vm4535 = vmor %vm4533, %vm4534
  %v4536 = vsel %vm4535, %v4528, %v4532
  %v4537 = vand.u32 2147483647, %v4148
  %vm4538 = vcmp.eq.f32.partialorder %v4537, 8.507059e+37
  %v4539 = vand.u32 %v4148, 2147483648
  %v4540 = vor.u32 1.1754944e-38, %v4539
  %v4541 = vsel %vm4538, %v4540, %v4536
  %v4542 = vrcp.pop %v4151
  %v4543 = vmul.f32 %v4151, %v4542
  %v4544 = vsub.f32 1.0, %v4543
  %v4545 = vmul.f32 %v4542, %v4544
  %v4546 = vadd.f32 %v4542, %v4545
  %vm4547 = vweird.f32 %v4151
  %vm4548 = vweird.f32 %v4542
  %vm4549 = vmor %vm4547, %vm4548
  %v4550 = vsel %vm4549, %v4542, %v4546
  %v4551 = vand.u32 2147483647, %v4151
  %vm4552 = vcmp.eq.f32.partialorder %v4551, 8.507059e+37
  %v4553 = vand.u32 %v4151, 2147483648
  %v4554 = vor.u32 1.1754944e-38, %v4553
  %v4555 = vsel %vm4552, %v4554, %v4550
  %v4556 = vrcp.pop %v4154
  %v4557 = vmul.f32 %v4154, %v4556
  %v4558 = vsub.f32 1.0, %v4557
  %v4559 = vmul.f32 %v4556, %v4558
  %v4560 = vadd.f32 %v4556, %v4559
  %vm4561 = vweird.f32 %v4154
  %vm4562 = vweird.f32 %v4556
  %vm4563 = vmor %vm4561, %vm4562
  %v4564 = vsel %vm4563, %v4556, %v4560
  %v4565 = vand.u32 2147483647, %v4154
  %vm4566 = vcmp.eq.f32.partialorder %v4565, 8.507059e+37
  %v4567 = vand.u32 %v4154, 2147483648
  %v4568 = vor.u32 1.1754944e-38, %v4567
  %v4569 = vsel %vm4566, %v4568, %v4564
  %v4570 = vrcp.pop %v4157
  %v4571 = vmul.f32 %v4157, %v4570
  %v4572 = vsub.f32 1.0, %v4571
  %v4573 = vmul.f32 %v4570, %v4572
  %v4574 = vadd.f32 %v4570, %v4573
  %vm4575 = vweird.f32 %v4157
  %vm4576 = vweird.f32 %v4570
  %vm4577 = vmor %vm4575, %vm4576
  %v4578 = vsel %vm4577, %v4570, %v4574
  %v4579 = vand.u32 2147483647, %v4157
  %vm4580 = vcmp.eq.f32.partialorder %v4579, 8.507059e+37
  %v4581 = vand.u32 %v4157, 2147483648
  %v4582 = vor.u32 1.1754944e-38, %v4581
  %v4583 = vsel %vm4580, %v4582, %v4578
  %v4584 = vrcp.pop %v4160
  %v4585 = vmul.f32 %v4160, %v4584
  %v4586 = vsub.f32 1.0, %v4585
  %v4587 = vmul.f32 %v4584, %v4586
  %v4588 = vadd.f32 %v4584, %v4587
  %vm4589 = vweird.f32 %v4160
  %vm4590 = vweird.f32 %v4584
  %vm4591 = vmor %vm4589, %vm4590
  %v4592 = vsel %vm4591, %v4584, %v4588
  %v4593 = vand.u32 2147483647, %v4160
  %vm4594 = vcmp.eq.f32.partialorder %v4593, 8.507059e+37
  %v4595 = vand.u32 %v4160, 2147483648
  %v4596 = vor.u32 1.1754944e-38, %v4595
  %v4597 = vsel %vm4594, %v4596, %v4592
  %v4598 = vrcp.pop %v4163
  %v4599 = vmul.f32 %v4163, %v4598
  %v4600 = vsub.f32 1.0, %v4599
  %v4601 = vmul.f32 %v4598, %v4600
  %v4602 = vadd.f32 %v4598, %v4601
  %vm4603 = vweird.f32 %v4163
  %vm4604 = vweird.f32 %v4598
  %vm4605 = vmor %vm4603, %vm4604
  %v4606 = vsel %vm4605, %v4598, %v4602
  %v4607 = vand.u32 2147483647, %v4163
  %vm4608 = vcmp.eq.f32.partialorder %v4607, 8.507059e+37
  %v4609 = vand.u32 %v4163, 2147483648
  %v4610 = vor.u32 1.1754944e-38, %v4609
  %v4611 = vsel %vm4608, %v4610, %v4606
  %v4612 = vmul.f32 %v4005, %v4177
  %v4613 = vmul.f32 %v4007, %v4191
  %v4614 = vmul.f32 %v4009, %v4205
  %v4615 = vmul.f32 %v4011, %v4219
  %v4616 = vmul.f32 %v4013, %v4233
  %v4617 = vmul.f32 %v4015, %v4247
  %v4618 = vmul.f32 %v4017, %v4261
  %v4619 = vmul.f32 %v4019, %v4275
  %v4620 = vmul.f32 %v4021, %v4289
  %v4621 = vmul.f32 %v4023, %v4303
  %v4622 = vmul.f32 %v4025, %v4317
  %v4623 = vmul.f32 %v4027, %v4331
  %v4624 = vmul.f32 %v4029, %v4345
  %v4625 = vmul.f32 %v4031, %v4359
  %v4626 = vmul.f32 %v4033, %v4373
  %v4627 = vmul.f32 %v4035, %v4387
  %v4628 = vmul.f32 %v4037, %v4401
  %v4629 = vmul.f32 %v4039, %v4415
  %v4630 = vmul.f32 %v4041, %v4429
  %v4631 = vmul.f32 %v4043, %v4443
  %v4632 = vmul.f32 %v4045, %v4457
  %v4633 = vmul.f32 %v4047, %v4471
  %v4634 = vmul.f32 %v4049, %v4485
  %v4635 = vmul.f32 %v4051, %v4499
  %v4636 = vmul.f32 %v4053, %v4513
  %v4637 = vmul.f32 %v4055, %v4527
  %v4638 = vmul.f32 %v4057, %v4541
  %v4639 = vmul.f32 %v4059, %v4555
  %v4640 = vmul.f32 %v4061, %v4569
  %v4641 = vmul.f32 %v4063, %v4583
  %v4642 = vmul.f32 %v4065, %v4597
  %v4643 = vmul.f32 %v4067, %v4611
  %v4645 = vsel %vm1407, %v4612, 0
  %4647 = vmatpush.msra.mxu0 0.0
  %4648 = vmatpush.msra.mxu0 0.0
  %4649 = vmatpush.msra.mxu0 0.0
  %4650 = vmatpush.msra.mxu0 0.0
  %4651 = vmatpush.msra.mxu0 0.0
  %4652 = vmatpush.msra.mxu0 0.0
  %4653 = vmatpush.msra.mxu0 0.0
  %4654 = vmatpush.msra.mxu0 0.0
  %4655 = vmatpush.msra.mxu0 0.0
  %4656 = vmatpush.msra.mxu0 0.0
  %4657 = vmatpush.msra.mxu0 0.0
  %4658 = vmatpush.msra.mxu0 0.0
  %4659 = vmatpush.msra.mxu0 0.0
  %4660 = vmatpush.msra.mxu0 0.0
  %4661 = vmatpush.msra.mxu0 0.0
  %4662 = vmatpush.msra.mxu0 %v2177
  %4663 = vmatmul.f32.gmra.mxu0 %v4645
  %v4664 = vpop.f32.mrf.mxu0
  %v4665 = vadd.f32 0.0, %v4664
  %4666 = vdwg.mxu0
  %v4668 = vsel %vm1407, %v4613, 0
  %4670 = vmatpush.msra.mxu0 0.0
  %4671 = vmatpush.msra.mxu0 0.0
  %4672 = vmatpush.msra.mxu0 0.0
  %4673 = vmatpush.msra.mxu0 0.0
  %4674 = vmatpush.msra.mxu0 0.0
  %4675 = vmatpush.msra.mxu0 0.0
  %4676 = vmatpush.msra.mxu0 0.0
  %4677 = vmatpush.msra.mxu0 0.0
  %4678 = vmatpush.msra.mxu0 0.0
  %4679 = vmatpush.msra.mxu0 0.0
  %4680 = vmatpush.msra.mxu0 0.0
  %4681 = vmatpush.msra.mxu0 0.0
  %4682 = vmatpush.msra.mxu0 0.0
  %4683 = vmatpush.msra.mxu0 0.0
  %4684 = vmatpush.msra.mxu0 0.0
  %4685 = vmatpush.msra.mxu0 %v2203
  %4686 = vmatmul.f32.gmra.mxu0 %v4668
  %v4687 = vpop.f32.mrf.mxu0
  %v4688 = vadd.f32 0.0, %v4687
  %4689 = vdwg.mxu0
  %v4691 = vsel %vm1407, %v4614, 0
  %4693 = vmatpush.msra.mxu0 0.0
  %4694 = vmatpush.msra.mxu0 0.0
  %4695 = vmatpush.msra.mxu0 0.0
  %4696 = vmatpush.msra.mxu0 0.0
  %4697 = vmatpush.msra.mxu0 0.0
  %4698 = vmatpush.msra.mxu0 0.0
  %4699 = vmatpush.msra.mxu0 0.0
  %4700 = vmatpush.msra.mxu0 0.0
  %4701 = vmatpush.msra.mxu0 0.0
  %4702 = vmatpush.msra.mxu0 0.0
  %4703 = vmatpush.msra.mxu0 0.0
  %4704 = vmatpush.msra.mxu0 0.0
  %4705 = vmatpush.msra.mxu0 0.0
  %4706 = vmatpush.msra.mxu0 0.0
  %4707 = vmatpush.msra.mxu0 0.0
  %4708 = vmatpush.msra.mxu0 %v2229
  %4709 = vmatmul.f32.gmra.mxu0 %v4691
  %v4710 = vpop.f32.mrf.mxu0
  %v4711 = vadd.f32 0.0, %v4710
  %4712 = vdwg.mxu0
  %v4714 = vsel %vm1407, %v4615, 0
  %4716 = vmatpush.msra.mxu0 0.0
  %4717 = vmatpush.msra.mxu0 0.0
  %4718 = vmatpush.msra.mxu0 0.0
  %4719 = vmatpush.msra.mxu0 0.0
  %4720 = vmatpush.msra.mxu0 0.0
  %4721 = vmatpush.msra.mxu0 0.0
  %4722 = vmatpush.msra.mxu0 0.0
  %4723 = vmatpush.msra.mxu0 0.0
  %4724 = vmatpush.msra.mxu0 0.0
  %4725 = vmatpush.msra.mxu0 0.0
  %4726 = vmatpush.msra.mxu0 0.0
  %4727 = vmatpush.msra.mxu0 0.0
  %4728 = vmatpush.msra.mxu0 0.0
  %4729 = vmatpush.msra.mxu0 0.0
  %4730 = vmatpush.msra.mxu0 0.0
  %4731 = vmatpush.msra.mxu0 %v2255
  %4732 = vmatmul.f32.gmra.mxu0 %v4714
  %v4733 = vpop.f32.mrf.mxu0
  %v4734 = vadd.f32 0.0, %v4733
  %4735 = vdwg.mxu0
  %v4737 = vsel %vm1407, %v4616, 0
  %4739 = vmatpush.msra.mxu0 0.0
  %4740 = vmatpush.msra.mxu0 0.0
  %4741 = vmatpush.msra.mxu0 0.0
  %4742 = vmatpush.msra.mxu0 0.0
  %4743 = vmatpush.msra.mxu0 0.0
  %4744 = vmatpush.msra.mxu0 0.0
  %4745 = vmatpush.msra.mxu0 0.0
  %4746 = vmatpush.msra.mxu0 0.0
  %4747 = vmatpush.msra.mxu0 0.0
  %4748 = vmatpush.msra.mxu0 0.0
  %4749 = vmatpush.msra.mxu0 0.0
  %4750 = vmatpush.msra.mxu0 0.0
  %4751 = vmatpush.msra.mxu0 0.0
  %4752 = vmatpush.msra.mxu0 0.0
  %4753 = vmatpush.msra.mxu0 0.0
  %4754 = vmatpush.msra.mxu0 %v2281
  %4755 = vmatmul.f32.gmra.mxu0 %v4737
  %v4756 = vpop.f32.mrf.mxu0
  %v4757 = vadd.f32 0.0, %v4756
  %4758 = vdwg.mxu0
  %v4760 = vsel %vm1407, %v4617, 0
  %4762 = vmatpush.msra.mxu0 0.0
  %4763 = vmatpush.msra.mxu0 0.0
  %4764 = vmatpush.msra.mxu0 0.0
  %4765 = vmatpush.msra.mxu0 0.0
  %4766 = vmatpush.msra.mxu0 0.0
  %4767 = vmatpush.msra.mxu0 0.0
  %4768 = vmatpush.msra.mxu0 0.0
  %4769 = vmatpush.msra.mxu0 0.0
  %4770 = vmatpush.msra.mxu0 0.0
  %4771 = vmatpush.msra.mxu0 0.0
  %4772 = vmatpush.msra.mxu0 0.0
  %4773 = vmatpush.msra.mxu0 0.0
  %4774 = vmatpush.msra.mxu0 0.0
  %4775 = vmatpush.msra.mxu0 0.0
  %4776 = vmatpush.msra.mxu0 0.0
  %4777 = vmatpush.msra.mxu0 %v2307
  %4778 = vmatmul.f32.gmra.mxu0 %v4760
  %v4779 = vpop.f32.mrf.mxu0
  %v4780 = vadd.f32 0.0, %v4779
  %4781 = vdwg.mxu0
  %v4783 = vsel %vm1407, %v4618, 0
  %4785 = vmatpush.msra.mxu0 0.0
  %4786 = vmatpush.msra.mxu0 0.0
  %4787 = vmatpush.msra.mxu0 0.0
  %4788 = vmatpush.msra.mxu0 0.0
  %4789 = vmatpush.msra.mxu0 0.0
  %4790 = vmatpush.msra.mxu0 0.0
  %4791 = vmatpush.msra.mxu0 0.0
  %4792 = vmatpush.msra.mxu0 0.0
  %4793 = vmatpush.msra.mxu0 0.0
  %4794 = vmatpush.msra.mxu0 0.0
  %4795 = vmatpush.msra.mxu0 0.0
  %4796 = vmatpush.msra.mxu0 0.0
  %4797 = vmatpush.msra.mxu0 0.0
  %4798 = vmatpush.msra.mxu0 0.0
  %4799 = vmatpush.msra.mxu0 0.0
  %4800 = vmatpush.msra.mxu0 %v2333
  %4801 = vmatmul.f32.gmra.mxu0 %v4783
  %v4802 = vpop.f32.mrf.mxu0
  %v4803 = vadd.f32 0.0, %v4802
  %4804 = vdwg.mxu0
  %v4806 = vsel %vm1407, %v4619, 0
  %4808 = vmatpush.msra.mxu0 0.0
  %4809 = vmatpush.msra.mxu0 0.0
  %4810 = vmatpush.msra.mxu0 0.0
  %4811 = vmatpush.msra.mxu0 0.0
  %4812 = vmatpush.msra.mxu0 0.0
  %4813 = vmatpush.msra.mxu0 0.0
  %4814 = vmatpush.msra.mxu0 0.0
  %4815 = vmatpush.msra.mxu0 0.0
  %4816 = vmatpush.msra.mxu0 0.0
  %4817 = vmatpush.msra.mxu0 0.0
  %4818 = vmatpush.msra.mxu0 0.0
  %4819 = vmatpush.msra.mxu0 0.0
  %4820 = vmatpush.msra.mxu0 0.0
  %4821 = vmatpush.msra.mxu0 0.0
  %4822 = vmatpush.msra.mxu0 0.0
  %4823 = vmatpush.msra.mxu0 %v2359
  %4824 = vmatmul.f32.gmra.mxu0 %v4806
  %v4825 = vpop.f32.mrf.mxu0
  %v4826 = vadd.f32 0.0, %v4825
  %4827 = vdwg.mxu0
  %v4829 = vsel %vm1407, %v4620, 0
  %4831 = vmatpush.msra.mxu0 0.0
  %4832 = vmatpush.msra.mxu0 0.0
  %4833 = vmatpush.msra.mxu0 0.0
  %4834 = vmatpush.msra.mxu0 0.0
  %4835 = vmatpush.msra.mxu0 0.0
  %4836 = vmatpush.msra.mxu0 0.0
  %4837 = vmatpush.msra.mxu0 0.0
  %4838 = vmatpush.msra.mxu0 0.0
  %4839 = vmatpush.msra.mxu0 0.0
  %4840 = vmatpush.msra.mxu0 0.0
  %4841 = vmatpush.msra.mxu0 0.0
  %4842 = vmatpush.msra.mxu0 0.0
  %4843 = vmatpush.msra.mxu0 0.0
  %4844 = vmatpush.msra.mxu0 0.0
  %4845 = vmatpush.msra.mxu0 0.0
  %4846 = vmatpush.msra.mxu0 %v2385
  %4847 = vmatmul.f32.gmra.mxu0 %v4829
  %v4848 = vpop.f32.mrf.mxu0
  %v4849 = vadd.f32 0.0, %v4848
  %4850 = vdwg.mxu0
  %v4852 = vsel %vm1407, %v4621, 0
  %4854 = vmatpush.msra.mxu0 0.0
  %4855 = vmatpush.msra.mxu0 0.0
  %4856 = vmatpush.msra.mxu0 0.0
  %4857 = vmatpush.msra.mxu0 0.0
  %4858 = vmatpush.msra.mxu0 0.0
  %4859 = vmatpush.msra.mxu0 0.0
  %4860 = vmatpush.msra.mxu0 0.0
  %4861 = vmatpush.msra.mxu0 0.0
  %4862 = vmatpush.msra.mxu0 0.0
  %4863 = vmatpush.msra.mxu0 0.0
  %4864 = vmatpush.msra.mxu0 0.0
  %4865 = vmatpush.msra.mxu0 0.0
  %4866 = vmatpush.msra.mxu0 0.0
  %4867 = vmatpush.msra.mxu0 0.0
  %4868 = vmatpush.msra.mxu0 0.0
  %4869 = vmatpush.msra.mxu0 %v2411
  %4870 = vmatmul.f32.gmra.mxu0 %v4852
  %v4871 = vpop.f32.mrf.mxu0
  %v4872 = vadd.f32 0.0, %v4871
  %4873 = vdwg.mxu0
  %v4875 = vsel %vm1407, %v4622, 0
  %4877 = vmatpush.msra.mxu0 0.0
  %4878 = vmatpush.msra.mxu0 0.0
  %4879 = vmatpush.msra.mxu0 0.0
  %4880 = vmatpush.msra.mxu0 0.0
  %4881 = vmatpush.msra.mxu0 0.0
  %4882 = vmatpush.msra.mxu0 0.0
  %4883 = vmatpush.msra.mxu0 0.0
  %4884 = vmatpush.msra.mxu0 0.0
  %4885 = vmatpush.msra.mxu0 0.0
  %4886 = vmatpush.msra.mxu0 0.0
  %4887 = vmatpush.msra.mxu0 0.0
  %4888 = vmatpush.msra.mxu0 0.0
  %4889 = vmatpush.msra.mxu0 0.0
  %4890 = vmatpush.msra.mxu0 0.0
  %4891 = vmatpush.msra.mxu0 0.0
  %4892 = vmatpush.msra.mxu0 %v2437
  %4893 = vmatmul.f32.gmra.mxu0 %v4875
  %v4894 = vpop.f32.mrf.mxu0
  %v4895 = vadd.f32 0.0, %v4894
  %4896 = vdwg.mxu0
  %v4898 = vsel %vm1407, %v4623, 0
  %4900 = vmatpush.msra.mxu0 0.0
  %4901 = vmatpush.msra.mxu0 0.0
  %4902 = vmatpush.msra.mxu0 0.0
  %4903 = vmatpush.msra.mxu0 0.0
  %4904 = vmatpush.msra.mxu0 0.0
  %4905 = vmatpush.msra.mxu0 0.0
  %4906 = vmatpush.msra.mxu0 0.0
  %4907 = vmatpush.msra.mxu0 0.0
  %4908 = vmatpush.msra.mxu0 0.0
  %4909 = vmatpush.msra.mxu0 0.0
  %4910 = vmatpush.msra.mxu0 0.0
  %4911 = vmatpush.msra.mxu0 0.0
  %4912 = vmatpush.msra.mxu0 0.0
  %4913 = vmatpush.msra.mxu0 0.0
  %4914 = vmatpush.msra.mxu0 0.0
  %4915 = vmatpush.msra.mxu0 %v2463
  %4916 = vmatmul.f32.gmra.mxu0 %v4898
  %v4917 = vpop.f32.mrf.mxu0
  %v4918 = vadd.f32 0.0, %v4917
  %4919 = vdwg.mxu0
  %v4921 = vsel %vm1407, %v4624, 0
  %4923 = vmatpush.msra.mxu0 0.0
  %4924 = vmatpush.msra.mxu0 0.0
  %4925 = vmatpush.msra.mxu0 0.0
  %4926 = vmatpush.msra.mxu0 0.0
  %4927 = vmatpush.msra.mxu0 0.0
  %4928 = vmatpush.msra.mxu0 0.0
  %4929 = vmatpush.msra.mxu0 0.0
  %4930 = vmatpush.msra.mxu0 0.0
  %4931 = vmatpush.msra.mxu0 0.0
  %4932 = vmatpush.msra.mxu0 0.0
  %4933 = vmatpush.msra.mxu0 0.0
  %4934 = vmatpush.msra.mxu0 0.0
  %4935 = vmatpush.msra.mxu0 0.0
  %4936 = vmatpush.msra.mxu0 0.0
  %4937 = vmatpush.msra.mxu0 0.0
  %4938 = vmatpush.msra.mxu0 %v2489
  %4939 = vmatmul.f32.gmra.mxu0 %v4921
  %v4940 = vpop.f32.mrf.mxu0
  %v4941 = vadd.f32 0.0, %v4940
  %4942 = vdwg.mxu0
  %v4944 = vsel %vm1407, %v4625, 0
  %4946 = vmatpush.msra.mxu0 0.0
  %4947 = vmatpush.msra.mxu0 0.0
  %4948 = vmatpush.msra.mxu0 0.0
  %4949 = vmatpush.msra.mxu0 0.0
  %4950 = vmatpush.msra.mxu0 0.0
  %4951 = vmatpush.msra.mxu0 0.0
  %4952 = vmatpush.msra.mxu0 0.0
  %4953 = vmatpush.msra.mxu0 0.0
  %4954 = vmatpush.msra.mxu0 0.0
  %4955 = vmatpush.msra.mxu0 0.0
  %4956 = vmatpush.msra.mxu0 0.0
  %4957 = vmatpush.msra.mxu0 0.0
  %4958 = vmatpush.msra.mxu0 0.0
  %4959 = vmatpush.msra.mxu0 0.0
  %4960 = vmatpush.msra.mxu0 0.0
  %4961 = vmatpush.msra.mxu0 %v2515
  %4962 = vmatmul.f32.gmra.mxu0 %v4944
  %v4963 = vpop.f32.mrf.mxu0
  %v4964 = vadd.f32 0.0, %v4963
  %4965 = vdwg.mxu0
  %v4967 = vsel %vm1407, %v4626, 0
  %4969 = vmatpush.msra.mxu0 0.0
  %4970 = vmatpush.msra.mxu0 0.0
  %4971 = vmatpush.msra.mxu0 0.0
  %4972 = vmatpush.msra.mxu0 0.0
  %4973 = vmatpush.msra.mxu0 0.0
  %4974 = vmatpush.msra.mxu0 0.0
  %4975 = vmatpush.msra.mxu0 0.0
  %4976 = vmatpush.msra.mxu0 0.0
  %4977 = vmatpush.msra.mxu0 0.0
  %4978 = vmatpush.msra.mxu0 0.0
  %4979 = vmatpush.msra.mxu0 0.0
  %4980 = vmatpush.msra.mxu0 0.0
  %4981 = vmatpush.msra.mxu0 0.0
  %4982 = vmatpush.msra.mxu0 0.0
  %4983 = vmatpush.msra.mxu0 0.0
  %4984 = vmatpush.msra.mxu0 %v2541
  %4985 = vmatmul.f32.gmra.mxu0 %v4967
  %v4986 = vpop.f32.mrf.mxu0
  %v4987 = vadd.f32 0.0, %v4986
  %4988 = vdwg.mxu0
  %v4990 = vsel %vm1407, %v4627, 0
  %4992 = vmatpush.msra.mxu0 0.0
  %4993 = vmatpush.msra.mxu0 0.0
  %4994 = vmatpush.msra.mxu0 0.0
  %4995 = vmatpush.msra.mxu0 0.0
  %4996 = vmatpush.msra.mxu0 0.0
  %4997 = vmatpush.msra.mxu0 0.0
  %4998 = vmatpush.msra.mxu0 0.0
  %4999 = vmatpush.msra.mxu0 0.0
  %5000 = vmatpush.msra.mxu0 0.0
  %5001 = vmatpush.msra.mxu0 0.0
  %5002 = vmatpush.msra.mxu0 0.0
  %5003 = vmatpush.msra.mxu0 0.0
  %5004 = vmatpush.msra.mxu0 0.0
  %5005 = vmatpush.msra.mxu0 0.0
  %5006 = vmatpush.msra.mxu0 0.0
  %5007 = vmatpush.msra.mxu0 %v2567
  %5008 = vmatmul.f32.gmra.mxu0 %v4990
  %v5009 = vpop.f32.mrf.mxu0
  %v5010 = vadd.f32 0.0, %v5009
  %5011 = vdwg.mxu0
  %v5013 = vsel %vm1407, %v4628, 0
  %5015 = vmatpush.msra.mxu0 0.0
  %5016 = vmatpush.msra.mxu0 0.0
  %5017 = vmatpush.msra.mxu0 0.0
  %5018 = vmatpush.msra.mxu0 0.0
  %5019 = vmatpush.msra.mxu0 0.0
  %5020 = vmatpush.msra.mxu0 0.0
  %5021 = vmatpush.msra.mxu0 0.0
  %5022 = vmatpush.msra.mxu0 0.0
  %5023 = vmatpush.msra.mxu0 0.0
  %5024 = vmatpush.msra.mxu0 0.0
  %5025 = vmatpush.msra.mxu0 0.0
  %5026 = vmatpush.msra.mxu0 0.0
  %5027 = vmatpush.msra.mxu0 0.0
  %5028 = vmatpush.msra.mxu0 0.0
  %5029 = vmatpush.msra.mxu0 0.0
  %5030 = vmatpush.msra.mxu0 %v2593
  %5031 = vmatmul.f32.gmra.mxu0 %v5013
  %v5032 = vpop.f32.mrf.mxu0
  %v5033 = vadd.f32 0.0, %v5032
  %5034 = vdwg.mxu0
  %v5036 = vsel %vm1407, %v4629, 0
  %5038 = vmatpush.msra.mxu0 0.0
  %5039 = vmatpush.msra.mxu0 0.0
  %5040 = vmatpush.msra.mxu0 0.0
  %5041 = vmatpush.msra.mxu0 0.0
  %5042 = vmatpush.msra.mxu0 0.0
  %5043 = vmatpush.msra.mxu0 0.0
  %5044 = vmatpush.msra.mxu0 0.0
  %5045 = vmatpush.msra.mxu0 0.0
  %5046 = vmatpush.msra.mxu0 0.0
  %5047 = vmatpush.msra.mxu0 0.0
  %5048 = vmatpush.msra.mxu0 0.0
  %5049 = vmatpush.msra.mxu0 0.0
  %5050 = vmatpush.msra.mxu0 0.0
  %5051 = vmatpush.msra.mxu0 0.0
  %5052 = vmatpush.msra.mxu0 0.0
  %5053 = vmatpush.msra.mxu0 %v2619
  %5054 = vmatmul.f32.gmra.mxu0 %v5036
  %v5055 = vpop.f32.mrf.mxu0
  %v5056 = vadd.f32 0.0, %v5055
  %5057 = vdwg.mxu0
  %v5059 = vsel %vm1407, %v4630, 0
  %5061 = vmatpush.msra.mxu0 0.0
  %5062 = vmatpush.msra.mxu0 0.0
  %5063 = vmatpush.msra.mxu0 0.0
  %5064 = vmatpush.msra.mxu0 0.0
  %5065 = vmatpush.msra.mxu0 0.0
  %5066 = vmatpush.msra.mxu0 0.0
  %5067 = vmatpush.msra.mxu0 0.0
  %5068 = vmatpush.msra.mxu0 0.0
  %5069 = vmatpush.msra.mxu0 0.0
  %5070 = vmatpush.msra.mxu0 0.0
  %5071 = vmatpush.msra.mxu0 0.0
  %5072 = vmatpush.msra.mxu0 0.0
  %5073 = vmatpush.msra.mxu0 0.0
  %5074 = vmatpush.msra.mxu0 0.0
  %5075 = vmatpush.msra.mxu0 0.0
  %5076 = vmatpush.msra.mxu0 %v2645
  %5077 = vmatmul.f32.gmra.mxu0 %v5059
  %v5078 = vpop.f32.mrf.mxu0
  %v5079 = vadd.f32 0.0, %v5078
  %5080 = vdwg.mxu0
  %v5082 = vsel %vm1407, %v4631, 0
  %5084 = vmatpush.msra.mxu0 0.0
  %5085 = vmatpush.msra.mxu0 0.0
  %5086 = vmatpush.msra.mxu0 0.0
  %5087 = vmatpush.msra.mxu0 0.0
  %5088 = vmatpush.msra.mxu0 0.0
  %5089 = vmatpush.msra.mxu0 0.0
  %5090 = vmatpush.msra.mxu0 0.0
  %5091 = vmatpush.msra.mxu0 0.0
  %5092 = vmatpush.msra.mxu0 0.0
  %5093 = vmatpush.msra.mxu0 0.0
  %5094 = vmatpush.msra.mxu0 0.0
  %5095 = vmatpush.msra.mxu0 0.0
  %5096 = vmatpush.msra.mxu0 0.0
  %5097 = vmatpush.msra.mxu0 0.0
  %5098 = vmatpush.msra.mxu0 0.0
  %5099 = vmatpush.msra.mxu0 %v2671
  %5100 = vmatmul.f32.gmra.mxu0 %v5082
  %v5101 = vpop.f32.mrf.mxu0
  %v5102 = vadd.f32 0.0, %v5101
  %5103 = vdwg.mxu0
  %v5105 = vsel %vm1407, %v4632, 0
  %5107 = vmatpush.msra.mxu0 0.0
  %5108 = vmatpush.msra.mxu0 0.0
  %5109 = vmatpush.msra.mxu0 0.0
  %5110 = vmatpush.msra.mxu0 0.0
  %5111 = vmatpush.msra.mxu0 0.0
  %5112 = vmatpush.msra.mxu0 0.0
  %5113 = vmatpush.msra.mxu0 0.0
  %5114 = vmatpush.msra.mxu0 0.0
  %5115 = vmatpush.msra.mxu0 0.0
  %5116 = vmatpush.msra.mxu0 0.0
  %5117 = vmatpush.msra.mxu0 0.0
  %5118 = vmatpush.msra.mxu0 0.0
  %5119 = vmatpush.msra.mxu0 0.0
  %5120 = vmatpush.msra.mxu0 0.0
  %5121 = vmatpush.msra.mxu0 0.0
  %5122 = vmatpush.msra.mxu0 %v2697
  %5123 = vmatmul.f32.gmra.mxu0 %v5105
  %v5124 = vpop.f32.mrf.mxu0
  %v5125 = vadd.f32 0.0, %v5124
  %5126 = vdwg.mxu0
  %v5128 = vsel %vm1407, %v4633, 0
  %5130 = vmatpush.msra.mxu0 0.0
  %5131 = vmatpush.msra.mxu0 0.0
  %5132 = vmatpush.msra.mxu0 0.0
  %5133 = vmatpush.msra.mxu0 0.0
  %5134 = vmatpush.msra.mxu0 0.0
  %5135 = vmatpush.msra.mxu0 0.0
  %5136 = vmatpush.msra.mxu0 0.0
  %5137 = vmatpush.msra.mxu0 0.0
  %5138 = vmatpush.msra.mxu0 0.0
  %5139 = vmatpush.msra.mxu0 0.0
  %5140 = vmatpush.msra.mxu0 0.0
  %5141 = vmatpush.msra.mxu0 0.0
  %5142 = vmatpush.msra.mxu0 0.0
  %5143 = vmatpush.msra.mxu0 0.0
  %5144 = vmatpush.msra.mxu0 0.0
  %5145 = vmatpush.msra.mxu0 %v2723
  %5146 = vmatmul.f32.gmra.mxu0 %v5128
  %v5147 = vpop.f32.mrf.mxu0
  %v5148 = vadd.f32 0.0, %v5147
  %5149 = vdwg.mxu0
  %v5151 = vsel %vm1407, %v4634, 0
  %5153 = vmatpush.msra.mxu0 0.0
  %5154 = vmatpush.msra.mxu0 0.0
  %5155 = vmatpush.msra.mxu0 0.0
  %5156 = vmatpush.msra.mxu0 0.0
  %5157 = vmatpush.msra.mxu0 0.0
  %5158 = vmatpush.msra.mxu0 0.0
  %5159 = vmatpush.msra.mxu0 0.0
  %5160 = vmatpush.msra.mxu0 0.0
  %5161 = vmatpush.msra.mxu0 0.0
  %5162 = vmatpush.msra.mxu0 0.0
  %5163 = vmatpush.msra.mxu0 0.0
  %5164 = vmatpush.msra.mxu0 0.0
  %5165 = vmatpush.msra.mxu0 0.0
  %5166 = vmatpush.msra.mxu0 0.0
  %5167 = vmatpush.msra.mxu0 0.0
  %5168 = vmatpush.msra.mxu0 %v2749
  %5169 = vmatmul.f32.gmra.mxu0 %v5151
  %v5170 = vpop.f32.mrf.mxu0
  %v5171 = vadd.f32 0.0, %v5170
  %5172 = vdwg.mxu0
  %v5174 = vsel %vm1407, %v4635, 0
  %5176 = vmatpush.msra.mxu0 0.0
  %5177 = vmatpush.msra.mxu0 0.0
  %5178 = vmatpush.msra.mxu0 0.0
  %5179 = vmatpush.msra.mxu0 0.0
  %5180 = vmatpush.msra.mxu0 0.0
  %5181 = vmatpush.msra.mxu0 0.0
  %5182 = vmatpush.msra.mxu0 0.0
  %5183 = vmatpush.msra.mxu0 0.0
  %5184 = vmatpush.msra.mxu0 0.0
  %5185 = vmatpush.msra.mxu0 0.0
  %5186 = vmatpush.msra.mxu0 0.0
  %5187 = vmatpush.msra.mxu0 0.0
  %5188 = vmatpush.msra.mxu0 0.0
  %5189 = vmatpush.msra.mxu0 0.0
  %5190 = vmatpush.msra.mxu0 0.0
  %5191 = vmatpush.msra.mxu0 %v2775
  %5192 = vmatmul.f32.gmra.mxu0 %v5174
  %v5193 = vpop.f32.mrf.mxu0
  %v5194 = vadd.f32 0.0, %v5193
  %5195 = vdwg.mxu0
  %v5197 = vsel %vm1407, %v4636, 0
  %5199 = vmatpush.msra.mxu0 0.0
  %5200 = vmatpush.msra.mxu0 0.0
  %5201 = vmatpush.msra.mxu0 0.0
  %5202 = vmatpush.msra.mxu0 0.0
  %5203 = vmatpush.msra.mxu0 0.0
  %5204 = vmatpush.msra.mxu0 0.0
  %5205 = vmatpush.msra.mxu0 0.0
  %5206 = vmatpush.msra.mxu0 0.0
  %5207 = vmatpush.msra.mxu0 0.0
  %5208 = vmatpush.msra.mxu0 0.0
  %5209 = vmatpush.msra.mxu0 0.0
  %5210 = vmatpush.msra.mxu0 0.0
  %5211 = vmatpush.msra.mxu0 0.0
  %5212 = vmatpush.msra.mxu0 0.0
  %5213 = vmatpush.msra.mxu0 0.0
  %5214 = vmatpush.msra.mxu0 %v2801
  %5215 = vmatmul.f32.gmra.mxu0 %v5197
  %v5216 = vpop.f32.mrf.mxu0
  %v5217 = vadd.f32 0.0, %v5216
  %5218 = vdwg.mxu0
  %v5220 = vsel %vm1407, %v4637, 0
  %5222 = vmatpush.msra.mxu0 0.0
  %5223 = vmatpush.msra.mxu0 0.0
  %5224 = vmatpush.msra.mxu0 0.0
  %5225 = vmatpush.msra.mxu0 0.0
  %5226 = vmatpush.msra.mxu0 0.0
  %5227 = vmatpush.msra.mxu0 0.0
  %5228 = vmatpush.msra.mxu0 0.0
  %5229 = vmatpush.msra.mxu0 0.0
  %5230 = vmatpush.msra.mxu0 0.0
  %5231 = vmatpush.msra.mxu0 0.0
  %5232 = vmatpush.msra.mxu0 0.0
  %5233 = vmatpush.msra.mxu0 0.0
  %5234 = vmatpush.msra.mxu0 0.0
  %5235 = vmatpush.msra.mxu0 0.0
  %5236 = vmatpush.msra.mxu0 0.0
  %5237 = vmatpush.msra.mxu0 %v2827
  %5238 = vmatmul.f32.gmra.mxu0 %v5220
  %v5239 = vpop.f32.mrf.mxu0
  %v5240 = vadd.f32 0.0, %v5239
  %5241 = vdwg.mxu0
  %v5243 = vsel %vm1407, %v4638, 0
  %5245 = vmatpush.msra.mxu0 0.0
  %5246 = vmatpush.msra.mxu0 0.0
  %5247 = vmatpush.msra.mxu0 0.0
  %5248 = vmatpush.msra.mxu0 0.0
  %5249 = vmatpush.msra.mxu0 0.0
  %5250 = vmatpush.msra.mxu0 0.0
  %5251 = vmatpush.msra.mxu0 0.0
  %5252 = vmatpush.msra.mxu0 0.0
  %5253 = vmatpush.msra.mxu0 0.0
  %5254 = vmatpush.msra.mxu0 0.0
  %5255 = vmatpush.msra.mxu0 0.0
  %5256 = vmatpush.msra.mxu0 0.0
  %5257 = vmatpush.msra.mxu0 0.0
  %5258 = vmatpush.msra.mxu0 0.0
  %5259 = vmatpush.msra.mxu0 0.0
  %5260 = vmatpush.msra.mxu0 %v2853
  %5261 = vmatmul.f32.gmra.mxu0 %v5243
  %v5262 = vpop.f32.mrf.mxu0
  %v5263 = vadd.f32 0.0, %v5262
  %5264 = vdwg.mxu0
  %v5266 = vsel %vm1407, %v4639, 0
  %5268 = vmatpush.msra.mxu0 0.0
  %5269 = vmatpush.msra.mxu0 0.0
  %5270 = vmatpush.msra.mxu0 0.0
  %5271 = vmatpush.msra.mxu0 0.0
  %5272 = vmatpush.msra.mxu0 0.0
  %5273 = vmatpush.msra.mxu0 0.0
  %5274 = vmatpush.msra.mxu0 0.0
  %5275 = vmatpush.msra.mxu0 0.0
  %5276 = vmatpush.msra.mxu0 0.0
  %5277 = vmatpush.msra.mxu0 0.0
  %5278 = vmatpush.msra.mxu0 0.0
  %5279 = vmatpush.msra.mxu0 0.0
  %5280 = vmatpush.msra.mxu0 0.0
  %5281 = vmatpush.msra.mxu0 0.0
  %5282 = vmatpush.msra.mxu0 0.0
  %5283 = vmatpush.msra.mxu0 %v2879
  %5284 = vmatmul.f32.gmra.mxu0 %v5266
  %v5285 = vpop.f32.mrf.mxu0
  %v5286 = vadd.f32 0.0, %v5285
  %5287 = vdwg.mxu0
  %v5289 = vsel %vm1407, %v4640, 0
  %5291 = vmatpush.msra.mxu0 0.0
  %5292 = vmatpush.msra.mxu0 0.0
  %5293 = vmatpush.msra.mxu0 0.0
  %5294 = vmatpush.msra.mxu0 0.0
  %5295 = vmatpush.msra.mxu0 0.0
  %5296 = vmatpush.msra.mxu0 0.0
  %5297 = vmatpush.msra.mxu0 0.0
  %5298 = vmatpush.msra.mxu0 0.0
  %5299 = vmatpush.msra.mxu0 0.0
  %5300 = vmatpush.msra.mxu0 0.0
  %5301 = vmatpush.msra.mxu0 0.0
  %5302 = vmatpush.msra.mxu0 0.0
  %5303 = vmatpush.msra.mxu0 0.0
  %5304 = vmatpush.msra.mxu0 0.0
  %5305 = vmatpush.msra.mxu0 0.0
  %5306 = vmatpush.msra.mxu0 %v2905
  %5307 = vmatmul.f32.gmra.mxu0 %v5289
  %v5308 = vpop.f32.mrf.mxu0
  %v5309 = vadd.f32 0.0, %v5308
  %5310 = vdwg.mxu0
  %v5312 = vsel %vm1407, %v4641, 0
  %5314 = vmatpush.msra.mxu0 0.0
  %5315 = vmatpush.msra.mxu0 0.0
  %5316 = vmatpush.msra.mxu0 0.0
  %5317 = vmatpush.msra.mxu0 0.0
  %5318 = vmatpush.msra.mxu0 0.0
  %5319 = vmatpush.msra.mxu0 0.0
  %5320 = vmatpush.msra.mxu0 0.0
  %5321 = vmatpush.msra.mxu0 0.0
  %5322 = vmatpush.msra.mxu0 0.0
  %5323 = vmatpush.msra.mxu0 0.0
  %5324 = vmatpush.msra.mxu0 0.0
  %5325 = vmatpush.msra.mxu0 0.0
  %5326 = vmatpush.msra.mxu0 0.0
  %5327 = vmatpush.msra.mxu0 0.0
  %5328 = vmatpush.msra.mxu0 0.0
  %5329 = vmatpush.msra.mxu0 %v2931
  %5330 = vmatmul.f32.gmra.mxu0 %v5312
  %v5331 = vpop.f32.mrf.mxu0
  %v5332 = vadd.f32 0.0, %v5331
  %5333 = vdwg.mxu0
  %v5335 = vsel %vm1407, %v4642, 0
  %5337 = vmatpush.msra.mxu0 0.0
  %5338 = vmatpush.msra.mxu0 0.0
  %5339 = vmatpush.msra.mxu0 0.0
  %5340 = vmatpush.msra.mxu0 0.0
  %5341 = vmatpush.msra.mxu0 0.0
  %5342 = vmatpush.msra.mxu0 0.0
  %5343 = vmatpush.msra.mxu0 0.0
  %5344 = vmatpush.msra.mxu0 0.0
  %5345 = vmatpush.msra.mxu0 0.0
  %5346 = vmatpush.msra.mxu0 0.0
  %5347 = vmatpush.msra.mxu0 0.0
  %5348 = vmatpush.msra.mxu0 0.0
  %5349 = vmatpush.msra.mxu0 0.0
  %5350 = vmatpush.msra.mxu0 0.0
  %5351 = vmatpush.msra.mxu0 0.0
  %5352 = vmatpush.msra.mxu0 %v2957
  %5353 = vmatmul.f32.gmra.mxu0 %v5335
  %v5354 = vpop.f32.mrf.mxu0
  %v5355 = vadd.f32 0.0, %v5354
  %5356 = vdwg.mxu0
  %v5358 = vsel %vm1407, %v4643, 0
  %5360 = vmatpush.msra.mxu0 0.0
  %5361 = vmatpush.msra.mxu0 0.0
  %5362 = vmatpush.msra.mxu0 0.0
  %5363 = vmatpush.msra.mxu0 0.0
  %5364 = vmatpush.msra.mxu0 0.0
  %5365 = vmatpush.msra.mxu0 0.0
  %5366 = vmatpush.msra.mxu0 0.0
  %5367 = vmatpush.msra.mxu0 0.0
  %5368 = vmatpush.msra.mxu0 0.0
  %5369 = vmatpush.msra.mxu0 0.0
  %5370 = vmatpush.msra.mxu0 0.0
  %5371 = vmatpush.msra.mxu0 0.0
  %5372 = vmatpush.msra.mxu0 0.0
  %5373 = vmatpush.msra.mxu0 0.0
  %5374 = vmatpush.msra.mxu0 0.0
  %5375 = vmatpush.msra.mxu0 %v2983
  %5376 = vmatmul.f32.gmra.mxu0 %v5358
  %v5377 = vpop.f32.mrf.mxu0
  %v5378 = vadd.f32 0.0, %v5377
  %5379 = vdwg.mxu0
  %v5380 = vmul.f32 %v4665, %v3075
  %v5381 = vmul.f32 %v4688, %v3075
  %v5382 = vmul.f32 %v4711, %v3075
  %v5383 = vmul.f32 %v4734, %v3075
  %v5384 = vmul.f32 %v4757, %v3075
  %v5385 = vmul.f32 %v4780, %v3075
  %v5386 = vmul.f32 %v4803, %v3075
  %v5387 = vmul.f32 %v4826, %v3075
  %v5388 = vmul.f32 %v4849, %v3075
  %v5389 = vmul.f32 %v4872, %v3075
  %v5390 = vmul.f32 %v4895, %v3075
  %v5391 = vmul.f32 %v4918, %v3075
  %v5392 = vmul.f32 %v4941, %v3075
  %v5393 = vmul.f32 %v4964, %v3075
  %v5394 = vmul.f32 %v4987, %v3075
  %v5395 = vmul.f32 %v5010, %v3075
  %v5396 = vmul.f32 %v5033, %v3075
  %v5397 = vmul.f32 %v5056, %v3075
  %v5398 = vmul.f32 %v5079, %v3075
  %v5399 = vmul.f32 %v5102, %v3075
  %v5400 = vmul.f32 %v5125, %v3075
  %v5401 = vmul.f32 %v5148, %v3075
  %v5402 = vmul.f32 %v5171, %v3075
  %v5403 = vmul.f32 %v5194, %v3075
  %v5404 = vmul.f32 %v5217, %v3075
  %v5405 = vmul.f32 %v5240, %v3075
  %v5406 = vmul.f32 %v5263, %v3075
  %v5407 = vmul.f32 %v5286, %v3075
  %v5408 = vmul.f32 %v5309, %v3075
  %v5409 = vmul.f32 %v5332, %v3075
  %v5410 = vmul.f32 %v5355, %v3075
  %v5411 = vmul.f32 %v5378, %v3075
  %v5412 = vadd.f32 %v3040, %v5380
  %v5413 = vadd.f32 %v3041, %v5381
  %v5414 = vadd.f32 %v3042, %v5382
  %v5415 = vadd.f32 %v3043, %v5383
  %v5416 = vadd.f32 %v3044, %v5384
  %v5417 = vadd.f32 %v3045, %v5385
  %v5418 = vadd.f32 %v3046, %v5386
  %v5419 = vadd.f32 %v3047, %v5387
  %v5420 = vadd.f32 %v3048, %v5388
  %v5421 = vadd.f32 %v3049, %v5389
  %v5422 = vadd.f32 %v3050, %v5390
  %v5423 = vadd.f32 %v3051, %v5391
  %v5424 = vadd.f32 %v3052, %v5392
  %v5425 = vadd.f32 %v3053, %v5393
  %v5426 = vadd.f32 %v3054, %v5394
  %v5427 = vadd.f32 %v3055, %v5395
  %v5428 = vadd.f32 %v3056, %v5396
  %v5429 = vadd.f32 %v3057, %v5397
  %v5430 = vadd.f32 %v3058, %v5398
  %v5431 = vadd.f32 %v3059, %v5399
  %v5432 = vadd.f32 %v3060, %v5400
  %v5433 = vadd.f32 %v3061, %v5401
  %v5434 = vadd.f32 %v3062, %v5402
  %v5435 = vadd.f32 %v3063, %v5403
  %v5436 = vadd.f32 %v3064, %v5404
  %v5437 = vadd.f32 %v3065, %v5405
  %v5438 = vadd.f32 %v3066, %v5406
  %v5439 = vadd.f32 %v3067, %v5407
  %v5440 = vadd.f32 %v3068, %v5408
  %v5441 = vadd.f32 %v3069, %v5409
  %v5442 = vadd.f32 %v3070, %v5410
  %v5443 = vadd.f32 %v3071, %v5411
  %vm5444 = vcmp.ge.s32.totalorder %v56, 16
  %vm5445 = vcmp.lt.s32.totalorder %v56, 24
  %vm5446 = vmand %vm5444, %vm5445
  %v5447 = vsel %vm5446, 1.0, 0.0
  %v5448 = vmul.f32 %v347, %v5447
  %v5449 = vmul.f32 %v350, %v5447
  %v5450 = vmul.f32 %v353, %v5447
  %v5451 = vmul.f32 %v356, %v5447
  %v5452 = vmul.f32 %v359, %v5447
  %v5453 = vmul.f32 %v362, %v5447
  %v5454 = vmul.f32 %v365, %v5447
  %v5455 = vmul.f32 %v368, %v5447
  %v5456 = vmul.f32 %v371, %v5447
  %v5457 = vmul.f32 %v374, %v5447
  %v5458 = vmul.f32 %v377, %v5447
  %v5459 = vmul.f32 %v380, %v5447
  %v5460 = vmul.f32 %v383, %v5447
  %v5461 = vmul.f32 %v386, %v5447
  %v5462 = vmul.f32 %v389, %v5447
  %v5463 = vmul.f32 %v392, %v5447
  %v5464 = vmul.f32 %v395, %v5447
  %v5465 = vmul.f32 %v398, %v5447
  %v5466 = vmul.f32 %v401, %v5447
  %v5467 = vmul.f32 %v404, %v5447
  %v5468 = vmul.f32 %v407, %v5447
  %v5469 = vmul.f32 %v410, %v5447
  %v5470 = vmul.f32 %v413, %v5447
  %v5471 = vmul.f32 %v416, %v5447
  %v5472 = vmul.f32 %v419, %v5447
  %v5473 = vmul.f32 %v422, %v5447
  %v5474 = vmul.f32 %v425, %v5447
  %v5475 = vmul.f32 %v428, %v5447
  %v5476 = vmul.f32 %v431, %v5447
  %v5477 = vmul.f32 %v434, %v5447
  %v5478 = vmul.f32 %v437, %v5447
  %v5479 = vmul.f32 %v440, %v5447
  %v5481 = vsel %vm481, %v5448, 0
  %5483 = vmatpush.xpose.msra.mxu0 0.0
  %5484 = vmatpush.xpose.msra.mxu0 0.0
  %5485 = vmatpush.xpose.msra.mxu0 0.0
  %5486 = vmatpush.xpose.msra.mxu0 0.0
  %5487 = vmatpush.xpose.msra.mxu0 0.0
  %5488 = vmatpush.xpose.msra.mxu0 0.0
  %5489 = vmatpush.xpose.msra.mxu0 0.0
  %5490 = vmatpush.xpose.msra.mxu0 0.0
  %5491 = vmatpush.xpose.msra.mxu0 0.0
  %5492 = vmatpush.xpose.msra.mxu0 0.0
  %5493 = vmatpush.xpose.msra.mxu0 0.0
  %5494 = vmatpush.xpose.msra.mxu0 0.0
  %5495 = vmatpush.xpose.msra.mxu0 0.0
  %5496 = vmatpush.xpose.msra.mxu0 0.0
  %5497 = vmatpush.xpose.msra.mxu0 0.0
  %5498 = vmatpush.xpose.msra.mxu0 %v485
  %5499 = vmatmul.f32.gmra.mxu0 %v5481
  %v5500 = vpop.f32.mrf.mxu0
  %v5501 = vadd.f32 0.0, %v5500
  %5502 = vdwg.mxu0
  %v5504 = vsel %vm481, %v5449, 0
  %5506 = vmatpush.xpose.msra.mxu0 0.0
  %5507 = vmatpush.xpose.msra.mxu0 0.0
  %5508 = vmatpush.xpose.msra.mxu0 0.0
  %5509 = vmatpush.xpose.msra.mxu0 0.0
  %5510 = vmatpush.xpose.msra.mxu0 0.0
  %5511 = vmatpush.xpose.msra.mxu0 0.0
  %5512 = vmatpush.xpose.msra.mxu0 0.0
  %5513 = vmatpush.xpose.msra.mxu0 0.0
  %5514 = vmatpush.xpose.msra.mxu0 0.0
  %5515 = vmatpush.xpose.msra.mxu0 0.0
  %5516 = vmatpush.xpose.msra.mxu0 0.0
  %5517 = vmatpush.xpose.msra.mxu0 0.0
  %5518 = vmatpush.xpose.msra.mxu0 0.0
  %5519 = vmatpush.xpose.msra.mxu0 0.0
  %5520 = vmatpush.xpose.msra.mxu0 0.0
  %5521 = vmatpush.xpose.msra.mxu0 %v513
  %5522 = vmatmul.f32.gmra.mxu0 %v5504
  %v5523 = vpop.f32.mrf.mxu0
  %v5524 = vadd.f32 0.0, %v5523
  %5525 = vdwg.mxu0
  %v5527 = vsel %vm481, %v5450, 0
  %5529 = vmatpush.xpose.msra.mxu0 0.0
  %5530 = vmatpush.xpose.msra.mxu0 0.0
  %5531 = vmatpush.xpose.msra.mxu0 0.0
  %5532 = vmatpush.xpose.msra.mxu0 0.0
  %5533 = vmatpush.xpose.msra.mxu0 0.0
  %5534 = vmatpush.xpose.msra.mxu0 0.0
  %5535 = vmatpush.xpose.msra.mxu0 0.0
  %5536 = vmatpush.xpose.msra.mxu0 0.0
  %5537 = vmatpush.xpose.msra.mxu0 0.0
  %5538 = vmatpush.xpose.msra.mxu0 0.0
  %5539 = vmatpush.xpose.msra.mxu0 0.0
  %5540 = vmatpush.xpose.msra.mxu0 0.0
  %5541 = vmatpush.xpose.msra.mxu0 0.0
  %5542 = vmatpush.xpose.msra.mxu0 0.0
  %5543 = vmatpush.xpose.msra.mxu0 0.0
  %5544 = vmatpush.xpose.msra.mxu0 %v541
  %5545 = vmatmul.f32.gmra.mxu0 %v5527
  %v5546 = vpop.f32.mrf.mxu0
  %v5547 = vadd.f32 0.0, %v5546
  %5548 = vdwg.mxu0
  %v5550 = vsel %vm481, %v5451, 0
  %5552 = vmatpush.xpose.msra.mxu0 0.0
  %5553 = vmatpush.xpose.msra.mxu0 0.0
  %5554 = vmatpush.xpose.msra.mxu0 0.0
  %5555 = vmatpush.xpose.msra.mxu0 0.0
  %5556 = vmatpush.xpose.msra.mxu0 0.0
  %5557 = vmatpush.xpose.msra.mxu0 0.0
  %5558 = vmatpush.xpose.msra.mxu0 0.0
  %5559 = vmatpush.xpose.msra.mxu0 0.0
  %5560 = vmatpush.xpose.msra.mxu0 0.0
  %5561 = vmatpush.xpose.msra.mxu0 0.0
  %5562 = vmatpush.xpose.msra.mxu0 0.0
  %5563 = vmatpush.xpose.msra.mxu0 0.0
  %5564 = vmatpush.xpose.msra.mxu0 0.0
  %5565 = vmatpush.xpose.msra.mxu0 0.0
  %5566 = vmatpush.xpose.msra.mxu0 0.0
  %5567 = vmatpush.xpose.msra.mxu0 %v569
  %5568 = vmatmul.f32.gmra.mxu0 %v5550
  %v5569 = vpop.f32.mrf.mxu0
  %v5570 = vadd.f32 0.0, %v5569
  %5571 = vdwg.mxu0
  %v5573 = vsel %vm481, %v5452, 0
  %5575 = vmatpush.xpose.msra.mxu0 0.0
  %5576 = vmatpush.xpose.msra.mxu0 0.0
  %5577 = vmatpush.xpose.msra.mxu0 0.0
  %5578 = vmatpush.xpose.msra.mxu0 0.0
  %5579 = vmatpush.xpose.msra.mxu0 0.0
  %5580 = vmatpush.xpose.msra.mxu0 0.0
  %5581 = vmatpush.xpose.msra.mxu0 0.0
  %5582 = vmatpush.xpose.msra.mxu0 0.0
  %5583 = vmatpush.xpose.msra.mxu0 0.0
  %5584 = vmatpush.xpose.msra.mxu0 0.0
  %5585 = vmatpush.xpose.msra.mxu0 0.0
  %5586 = vmatpush.xpose.msra.mxu0 0.0
  %5587 = vmatpush.xpose.msra.mxu0 0.0
  %5588 = vmatpush.xpose.msra.mxu0 0.0
  %5589 = vmatpush.xpose.msra.mxu0 0.0
  %5590 = vmatpush.xpose.msra.mxu0 %v597
  %5591 = vmatmul.f32.gmra.mxu0 %v5573
  %v5592 = vpop.f32.mrf.mxu0
  %v5593 = vadd.f32 0.0, %v5592
  %5594 = vdwg.mxu0
  %v5596 = vsel %vm481, %v5453, 0
  %5598 = vmatpush.xpose.msra.mxu0 0.0
  %5599 = vmatpush.xpose.msra.mxu0 0.0
  %5600 = vmatpush.xpose.msra.mxu0 0.0
  %5601 = vmatpush.xpose.msra.mxu0 0.0
  %5602 = vmatpush.xpose.msra.mxu0 0.0
  %5603 = vmatpush.xpose.msra.mxu0 0.0
  %5604 = vmatpush.xpose.msra.mxu0 0.0
  %5605 = vmatpush.xpose.msra.mxu0 0.0
  %5606 = vmatpush.xpose.msra.mxu0 0.0
  %5607 = vmatpush.xpose.msra.mxu0 0.0
  %5608 = vmatpush.xpose.msra.mxu0 0.0
  %5609 = vmatpush.xpose.msra.mxu0 0.0
  %5610 = vmatpush.xpose.msra.mxu0 0.0
  %5611 = vmatpush.xpose.msra.mxu0 0.0
  %5612 = vmatpush.xpose.msra.mxu0 0.0
  %5613 = vmatpush.xpose.msra.mxu0 %v625
  %5614 = vmatmul.f32.gmra.mxu0 %v5596
  %v5615 = vpop.f32.mrf.mxu0
  %v5616 = vadd.f32 0.0, %v5615
  %5617 = vdwg.mxu0
  %v5619 = vsel %vm481, %v5454, 0
  %5621 = vmatpush.xpose.msra.mxu0 0.0
  %5622 = vmatpush.xpose.msra.mxu0 0.0
  %5623 = vmatpush.xpose.msra.mxu0 0.0
  %5624 = vmatpush.xpose.msra.mxu0 0.0
  %5625 = vmatpush.xpose.msra.mxu0 0.0
  %5626 = vmatpush.xpose.msra.mxu0 0.0
  %5627 = vmatpush.xpose.msra.mxu0 0.0
  %5628 = vmatpush.xpose.msra.mxu0 0.0
  %5629 = vmatpush.xpose.msra.mxu0 0.0
  %5630 = vmatpush.xpose.msra.mxu0 0.0
  %5631 = vmatpush.xpose.msra.mxu0 0.0
  %5632 = vmatpush.xpose.msra.mxu0 0.0
  %5633 = vmatpush.xpose.msra.mxu0 0.0
  %5634 = vmatpush.xpose.msra.mxu0 0.0
  %5635 = vmatpush.xpose.msra.mxu0 0.0
  %5636 = vmatpush.xpose.msra.mxu0 %v653
  %5637 = vmatmul.f32.gmra.mxu0 %v5619
  %v5638 = vpop.f32.mrf.mxu0
  %v5639 = vadd.f32 0.0, %v5638
  %5640 = vdwg.mxu0
  %v5642 = vsel %vm481, %v5455, 0
  %5644 = vmatpush.xpose.msra.mxu0 0.0
  %5645 = vmatpush.xpose.msra.mxu0 0.0
  %5646 = vmatpush.xpose.msra.mxu0 0.0
  %5647 = vmatpush.xpose.msra.mxu0 0.0
  %5648 = vmatpush.xpose.msra.mxu0 0.0
  %5649 = vmatpush.xpose.msra.mxu0 0.0
  %5650 = vmatpush.xpose.msra.mxu0 0.0
  %5651 = vmatpush.xpose.msra.mxu0 0.0
  %5652 = vmatpush.xpose.msra.mxu0 0.0
  %5653 = vmatpush.xpose.msra.mxu0 0.0
  %5654 = vmatpush.xpose.msra.mxu0 0.0
  %5655 = vmatpush.xpose.msra.mxu0 0.0
  %5656 = vmatpush.xpose.msra.mxu0 0.0
  %5657 = vmatpush.xpose.msra.mxu0 0.0
  %5658 = vmatpush.xpose.msra.mxu0 0.0
  %5659 = vmatpush.xpose.msra.mxu0 %v681
  %5660 = vmatmul.f32.gmra.mxu0 %v5642
  %v5661 = vpop.f32.mrf.mxu0
  %v5662 = vadd.f32 0.0, %v5661
  %5663 = vdwg.mxu0
  %v5665 = vsel %vm481, %v5456, 0
  %5667 = vmatpush.xpose.msra.mxu0 0.0
  %5668 = vmatpush.xpose.msra.mxu0 0.0
  %5669 = vmatpush.xpose.msra.mxu0 0.0
  %5670 = vmatpush.xpose.msra.mxu0 0.0
  %5671 = vmatpush.xpose.msra.mxu0 0.0
  %5672 = vmatpush.xpose.msra.mxu0 0.0
  %5673 = vmatpush.xpose.msra.mxu0 0.0
  %5674 = vmatpush.xpose.msra.mxu0 0.0
  %5675 = vmatpush.xpose.msra.mxu0 0.0
  %5676 = vmatpush.xpose.msra.mxu0 0.0
  %5677 = vmatpush.xpose.msra.mxu0 0.0
  %5678 = vmatpush.xpose.msra.mxu0 0.0
  %5679 = vmatpush.xpose.msra.mxu0 0.0
  %5680 = vmatpush.xpose.msra.mxu0 0.0
  %5681 = vmatpush.xpose.msra.mxu0 0.0
  %5682 = vmatpush.xpose.msra.mxu0 %v709
  %5683 = vmatmul.f32.gmra.mxu0 %v5665
  %v5684 = vpop.f32.mrf.mxu0
  %v5685 = vadd.f32 0.0, %v5684
  %5686 = vdwg.mxu0
  %v5688 = vsel %vm481, %v5457, 0
  %5690 = vmatpush.xpose.msra.mxu0 0.0
  %5691 = vmatpush.xpose.msra.mxu0 0.0
  %5692 = vmatpush.xpose.msra.mxu0 0.0
  %5693 = vmatpush.xpose.msra.mxu0 0.0
  %5694 = vmatpush.xpose.msra.mxu0 0.0
  %5695 = vmatpush.xpose.msra.mxu0 0.0
  %5696 = vmatpush.xpose.msra.mxu0 0.0
  %5697 = vmatpush.xpose.msra.mxu0 0.0
  %5698 = vmatpush.xpose.msra.mxu0 0.0
  %5699 = vmatpush.xpose.msra.mxu0 0.0
  %5700 = vmatpush.xpose.msra.mxu0 0.0
  %5701 = vmatpush.xpose.msra.mxu0 0.0
  %5702 = vmatpush.xpose.msra.mxu0 0.0
  %5703 = vmatpush.xpose.msra.mxu0 0.0
  %5704 = vmatpush.xpose.msra.mxu0 0.0
  %5705 = vmatpush.xpose.msra.mxu0 %v737
  %5706 = vmatmul.f32.gmra.mxu0 %v5688
  %v5707 = vpop.f32.mrf.mxu0
  %v5708 = vadd.f32 0.0, %v5707
  %5709 = vdwg.mxu0
  %v5711 = vsel %vm481, %v5458, 0
  %5713 = vmatpush.xpose.msra.mxu0 0.0
  %5714 = vmatpush.xpose.msra.mxu0 0.0
  %5715 = vmatpush.xpose.msra.mxu0 0.0
  %5716 = vmatpush.xpose.msra.mxu0 0.0
  %5717 = vmatpush.xpose.msra.mxu0 0.0
  %5718 = vmatpush.xpose.msra.mxu0 0.0
  %5719 = vmatpush.xpose.msra.mxu0 0.0
  %5720 = vmatpush.xpose.msra.mxu0 0.0
  %5721 = vmatpush.xpose.msra.mxu0 0.0
  %5722 = vmatpush.xpose.msra.mxu0 0.0
  %5723 = vmatpush.xpose.msra.mxu0 0.0
  %5724 = vmatpush.xpose.msra.mxu0 0.0
  %5725 = vmatpush.xpose.msra.mxu0 0.0
  %5726 = vmatpush.xpose.msra.mxu0 0.0
  %5727 = vmatpush.xpose.msra.mxu0 0.0
  %5728 = vmatpush.xpose.msra.mxu0 %v765
  %5729 = vmatmul.f32.gmra.mxu0 %v5711
  %v5730 = vpop.f32.mrf.mxu0
  %v5731 = vadd.f32 0.0, %v5730
  %5732 = vdwg.mxu0
  %v5734 = vsel %vm481, %v5459, 0
  %5736 = vmatpush.xpose.msra.mxu0 0.0
  %5737 = vmatpush.xpose.msra.mxu0 0.0
  %5738 = vmatpush.xpose.msra.mxu0 0.0
  %5739 = vmatpush.xpose.msra.mxu0 0.0
  %5740 = vmatpush.xpose.msra.mxu0 0.0
  %5741 = vmatpush.xpose.msra.mxu0 0.0
  %5742 = vmatpush.xpose.msra.mxu0 0.0
  %5743 = vmatpush.xpose.msra.mxu0 0.0
  %5744 = vmatpush.xpose.msra.mxu0 0.0
  %5745 = vmatpush.xpose.msra.mxu0 0.0
  %5746 = vmatpush.xpose.msra.mxu0 0.0
  %5747 = vmatpush.xpose.msra.mxu0 0.0
  %5748 = vmatpush.xpose.msra.mxu0 0.0
  %5749 = vmatpush.xpose.msra.mxu0 0.0
  %5750 = vmatpush.xpose.msra.mxu0 0.0
  %5751 = vmatpush.xpose.msra.mxu0 %v793
  %5752 = vmatmul.f32.gmra.mxu0 %v5734
  %v5753 = vpop.f32.mrf.mxu0
  %v5754 = vadd.f32 0.0, %v5753
  %5755 = vdwg.mxu0
  %v5757 = vsel %vm481, %v5460, 0
  %5759 = vmatpush.xpose.msra.mxu0 0.0
  %5760 = vmatpush.xpose.msra.mxu0 0.0
  %5761 = vmatpush.xpose.msra.mxu0 0.0
  %5762 = vmatpush.xpose.msra.mxu0 0.0
  %5763 = vmatpush.xpose.msra.mxu0 0.0
  %5764 = vmatpush.xpose.msra.mxu0 0.0
  %5765 = vmatpush.xpose.msra.mxu0 0.0
  %5766 = vmatpush.xpose.msra.mxu0 0.0
  %5767 = vmatpush.xpose.msra.mxu0 0.0
  %5768 = vmatpush.xpose.msra.mxu0 0.0
  %5769 = vmatpush.xpose.msra.mxu0 0.0
  %5770 = vmatpush.xpose.msra.mxu0 0.0
  %5771 = vmatpush.xpose.msra.mxu0 0.0
  %5772 = vmatpush.xpose.msra.mxu0 0.0
  %5773 = vmatpush.xpose.msra.mxu0 0.0
  %5774 = vmatpush.xpose.msra.mxu0 %v821
  %5775 = vmatmul.f32.gmra.mxu0 %v5757
  %v5776 = vpop.f32.mrf.mxu0
  %v5777 = vadd.f32 0.0, %v5776
  %5778 = vdwg.mxu0
  %v5780 = vsel %vm481, %v5461, 0
  %5782 = vmatpush.xpose.msra.mxu0 0.0
  %5783 = vmatpush.xpose.msra.mxu0 0.0
  %5784 = vmatpush.xpose.msra.mxu0 0.0
  %5785 = vmatpush.xpose.msra.mxu0 0.0
  %5786 = vmatpush.xpose.msra.mxu0 0.0
  %5787 = vmatpush.xpose.msra.mxu0 0.0
  %5788 = vmatpush.xpose.msra.mxu0 0.0
  %5789 = vmatpush.xpose.msra.mxu0 0.0
  %5790 = vmatpush.xpose.msra.mxu0 0.0
  %5791 = vmatpush.xpose.msra.mxu0 0.0
  %5792 = vmatpush.xpose.msra.mxu0 0.0
  %5793 = vmatpush.xpose.msra.mxu0 0.0
  %5794 = vmatpush.xpose.msra.mxu0 0.0
  %5795 = vmatpush.xpose.msra.mxu0 0.0
  %5796 = vmatpush.xpose.msra.mxu0 0.0
  %5797 = vmatpush.xpose.msra.mxu0 %v849
  %5798 = vmatmul.f32.gmra.mxu0 %v5780
  %v5799 = vpop.f32.mrf.mxu0
  %v5800 = vadd.f32 0.0, %v5799
  %5801 = vdwg.mxu0
  %v5803 = vsel %vm481, %v5462, 0
  %5805 = vmatpush.xpose.msra.mxu0 0.0
  %5806 = vmatpush.xpose.msra.mxu0 0.0
  %5807 = vmatpush.xpose.msra.mxu0 0.0
  %5808 = vmatpush.xpose.msra.mxu0 0.0
  %5809 = vmatpush.xpose.msra.mxu0 0.0
  %5810 = vmatpush.xpose.msra.mxu0 0.0
  %5811 = vmatpush.xpose.msra.mxu0 0.0
  %5812 = vmatpush.xpose.msra.mxu0 0.0
  %5813 = vmatpush.xpose.msra.mxu0 0.0
  %5814 = vmatpush.xpose.msra.mxu0 0.0
  %5815 = vmatpush.xpose.msra.mxu0 0.0
  %5816 = vmatpush.xpose.msra.mxu0 0.0
  %5817 = vmatpush.xpose.msra.mxu0 0.0
  %5818 = vmatpush.xpose.msra.mxu0 0.0
  %5819 = vmatpush.xpose.msra.mxu0 0.0
  %5820 = vmatpush.xpose.msra.mxu0 %v877
  %5821 = vmatmul.f32.gmra.mxu0 %v5803
  %v5822 = vpop.f32.mrf.mxu0
  %v5823 = vadd.f32 0.0, %v5822
  %5824 = vdwg.mxu0
  %v5826 = vsel %vm481, %v5463, 0
  %5828 = vmatpush.xpose.msra.mxu0 0.0
  %5829 = vmatpush.xpose.msra.mxu0 0.0
  %5830 = vmatpush.xpose.msra.mxu0 0.0
  %5831 = vmatpush.xpose.msra.mxu0 0.0
  %5832 = vmatpush.xpose.msra.mxu0 0.0
  %5833 = vmatpush.xpose.msra.mxu0 0.0
  %5834 = vmatpush.xpose.msra.mxu0 0.0
  %5835 = vmatpush.xpose.msra.mxu0 0.0
  %5836 = vmatpush.xpose.msra.mxu0 0.0
  %5837 = vmatpush.xpose.msra.mxu0 0.0
  %5838 = vmatpush.xpose.msra.mxu0 0.0
  %5839 = vmatpush.xpose.msra.mxu0 0.0
  %5840 = vmatpush.xpose.msra.mxu0 0.0
  %5841 = vmatpush.xpose.msra.mxu0 0.0
  %5842 = vmatpush.xpose.msra.mxu0 0.0
  %5843 = vmatpush.xpose.msra.mxu0 %v905
  %5844 = vmatmul.f32.gmra.mxu0 %v5826
  %v5845 = vpop.f32.mrf.mxu0
  %v5846 = vadd.f32 0.0, %v5845
  %5847 = vdwg.mxu0
  %v5849 = vsel %vm481, %v5464, 0
  %5851 = vmatpush.xpose.msra.mxu0 0.0
  %5852 = vmatpush.xpose.msra.mxu0 0.0
  %5853 = vmatpush.xpose.msra.mxu0 0.0
  %5854 = vmatpush.xpose.msra.mxu0 0.0
  %5855 = vmatpush.xpose.msra.mxu0 0.0
  %5856 = vmatpush.xpose.msra.mxu0 0.0
  %5857 = vmatpush.xpose.msra.mxu0 0.0
  %5858 = vmatpush.xpose.msra.mxu0 0.0
  %5859 = vmatpush.xpose.msra.mxu0 0.0
  %5860 = vmatpush.xpose.msra.mxu0 0.0
  %5861 = vmatpush.xpose.msra.mxu0 0.0
  %5862 = vmatpush.xpose.msra.mxu0 0.0
  %5863 = vmatpush.xpose.msra.mxu0 0.0
  %5864 = vmatpush.xpose.msra.mxu0 0.0
  %5865 = vmatpush.xpose.msra.mxu0 0.0
  %5866 = vmatpush.xpose.msra.mxu0 %v933
  %5867 = vmatmul.f32.gmra.mxu0 %v5849
  %v5868 = vpop.f32.mrf.mxu0
  %v5869 = vadd.f32 0.0, %v5868
  %5870 = vdwg.mxu0
  %v5872 = vsel %vm481, %v5465, 0
  %5874 = vmatpush.xpose.msra.mxu0 0.0
  %5875 = vmatpush.xpose.msra.mxu0 0.0
  %5876 = vmatpush.xpose.msra.mxu0 0.0
  %5877 = vmatpush.xpose.msra.mxu0 0.0
  %5878 = vmatpush.xpose.msra.mxu0 0.0
  %5879 = vmatpush.xpose.msra.mxu0 0.0
  %5880 = vmatpush.xpose.msra.mxu0 0.0
  %5881 = vmatpush.xpose.msra.mxu0 0.0
  %5882 = vmatpush.xpose.msra.mxu0 0.0
  %5883 = vmatpush.xpose.msra.mxu0 0.0
  %5884 = vmatpush.xpose.msra.mxu0 0.0
  %5885 = vmatpush.xpose.msra.mxu0 0.0
  %5886 = vmatpush.xpose.msra.mxu0 0.0
  %5887 = vmatpush.xpose.msra.mxu0 0.0
  %5888 = vmatpush.xpose.msra.mxu0 0.0
  %5889 = vmatpush.xpose.msra.mxu0 %v961
  %5890 = vmatmul.f32.gmra.mxu0 %v5872
  %v5891 = vpop.f32.mrf.mxu0
  %v5892 = vadd.f32 0.0, %v5891
  %5893 = vdwg.mxu0
  %v5895 = vsel %vm481, %v5466, 0
  %5897 = vmatpush.xpose.msra.mxu0 0.0
  %5898 = vmatpush.xpose.msra.mxu0 0.0
  %5899 = vmatpush.xpose.msra.mxu0 0.0
  %5900 = vmatpush.xpose.msra.mxu0 0.0
  %5901 = vmatpush.xpose.msra.mxu0 0.0
  %5902 = vmatpush.xpose.msra.mxu0 0.0
  %5903 = vmatpush.xpose.msra.mxu0 0.0
  %5904 = vmatpush.xpose.msra.mxu0 0.0
  %5905 = vmatpush.xpose.msra.mxu0 0.0
  %5906 = vmatpush.xpose.msra.mxu0 0.0
  %5907 = vmatpush.xpose.msra.mxu0 0.0
  %5908 = vmatpush.xpose.msra.mxu0 0.0
  %5909 = vmatpush.xpose.msra.mxu0 0.0
  %5910 = vmatpush.xpose.msra.mxu0 0.0
  %5911 = vmatpush.xpose.msra.mxu0 0.0
  %5912 = vmatpush.xpose.msra.mxu0 %v989
  %5913 = vmatmul.f32.gmra.mxu0 %v5895
  %v5914 = vpop.f32.mrf.mxu0
  %v5915 = vadd.f32 0.0, %v5914
  %5916 = vdwg.mxu0
  %v5918 = vsel %vm481, %v5467, 0
  %5920 = vmatpush.xpose.msra.mxu0 0.0
  %5921 = vmatpush.xpose.msra.mxu0 0.0
  %5922 = vmatpush.xpose.msra.mxu0 0.0
  %5923 = vmatpush.xpose.msra.mxu0 0.0
  %5924 = vmatpush.xpose.msra.mxu0 0.0
  %5925 = vmatpush.xpose.msra.mxu0 0.0
  %5926 = vmatpush.xpose.msra.mxu0 0.0
  %5927 = vmatpush.xpose.msra.mxu0 0.0
  %5928 = vmatpush.xpose.msra.mxu0 0.0
  %5929 = vmatpush.xpose.msra.mxu0 0.0
  %5930 = vmatpush.xpose.msra.mxu0 0.0
  %5931 = vmatpush.xpose.msra.mxu0 0.0
  %5932 = vmatpush.xpose.msra.mxu0 0.0
  %5933 = vmatpush.xpose.msra.mxu0 0.0
  %5934 = vmatpush.xpose.msra.mxu0 0.0
  %5935 = vmatpush.xpose.msra.mxu0 %v1017
  %5936 = vmatmul.f32.gmra.mxu0 %v5918
  %v5937 = vpop.f32.mrf.mxu0
  %v5938 = vadd.f32 0.0, %v5937
  %5939 = vdwg.mxu0
  %v5941 = vsel %vm481, %v5468, 0
  %5943 = vmatpush.xpose.msra.mxu0 0.0
  %5944 = vmatpush.xpose.msra.mxu0 0.0
  %5945 = vmatpush.xpose.msra.mxu0 0.0
  %5946 = vmatpush.xpose.msra.mxu0 0.0
  %5947 = vmatpush.xpose.msra.mxu0 0.0
  %5948 = vmatpush.xpose.msra.mxu0 0.0
  %5949 = vmatpush.xpose.msra.mxu0 0.0
  %5950 = vmatpush.xpose.msra.mxu0 0.0
  %5951 = vmatpush.xpose.msra.mxu0 0.0
  %5952 = vmatpush.xpose.msra.mxu0 0.0
  %5953 = vmatpush.xpose.msra.mxu0 0.0
  %5954 = vmatpush.xpose.msra.mxu0 0.0
  %5955 = vmatpush.xpose.msra.mxu0 0.0
  %5956 = vmatpush.xpose.msra.mxu0 0.0
  %5957 = vmatpush.xpose.msra.mxu0 0.0
  %5958 = vmatpush.xpose.msra.mxu0 %v1045
  %5959 = vmatmul.f32.gmra.mxu0 %v5941
  %v5960 = vpop.f32.mrf.mxu0
  %v5961 = vadd.f32 0.0, %v5960
  %5962 = vdwg.mxu0
  %v5964 = vsel %vm481, %v5469, 0
  %5966 = vmatpush.xpose.msra.mxu0 0.0
  %5967 = vmatpush.xpose.msra.mxu0 0.0
  %5968 = vmatpush.xpose.msra.mxu0 0.0
  %5969 = vmatpush.xpose.msra.mxu0 0.0
  %5970 = vmatpush.xpose.msra.mxu0 0.0
  %5971 = vmatpush.xpose.msra.mxu0 0.0
  %5972 = vmatpush.xpose.msra.mxu0 0.0
  %5973 = vmatpush.xpose.msra.mxu0 0.0
  %5974 = vmatpush.xpose.msra.mxu0 0.0
  %5975 = vmatpush.xpose.msra.mxu0 0.0
  %5976 = vmatpush.xpose.msra.mxu0 0.0
  %5977 = vmatpush.xpose.msra.mxu0 0.0
  %5978 = vmatpush.xpose.msra.mxu0 0.0
  %5979 = vmatpush.xpose.msra.mxu0 0.0
  %5980 = vmatpush.xpose.msra.mxu0 0.0
  %5981 = vmatpush.xpose.msra.mxu0 %v1073
  %5982 = vmatmul.f32.gmra.mxu0 %v5964
  %v5983 = vpop.f32.mrf.mxu0
  %v5984 = vadd.f32 0.0, %v5983
  %5985 = vdwg.mxu0
  %v5987 = vsel %vm481, %v5470, 0
  %5989 = vmatpush.xpose.msra.mxu0 0.0
  %5990 = vmatpush.xpose.msra.mxu0 0.0
  %5991 = vmatpush.xpose.msra.mxu0 0.0
  %5992 = vmatpush.xpose.msra.mxu0 0.0
  %5993 = vmatpush.xpose.msra.mxu0 0.0
  %5994 = vmatpush.xpose.msra.mxu0 0.0
  %5995 = vmatpush.xpose.msra.mxu0 0.0
  %5996 = vmatpush.xpose.msra.mxu0 0.0
  %5997 = vmatpush.xpose.msra.mxu0 0.0
  %5998 = vmatpush.xpose.msra.mxu0 0.0
  %5999 = vmatpush.xpose.msra.mxu0 0.0
  %6000 = vmatpush.xpose.msra.mxu0 0.0
  %6001 = vmatpush.xpose.msra.mxu0 0.0
  %6002 = vmatpush.xpose.msra.mxu0 0.0
  %6003 = vmatpush.xpose.msra.mxu0 0.0
  %6004 = vmatpush.xpose.msra.mxu0 %v1101
  %6005 = vmatmul.f32.gmra.mxu0 %v5987
  %v6006 = vpop.f32.mrf.mxu0
  %v6007 = vadd.f32 0.0, %v6006
  %6008 = vdwg.mxu0
  %v6010 = vsel %vm481, %v5471, 0
  %6012 = vmatpush.xpose.msra.mxu0 0.0
  %6013 = vmatpush.xpose.msra.mxu0 0.0
  %6014 = vmatpush.xpose.msra.mxu0 0.0
  %6015 = vmatpush.xpose.msra.mxu0 0.0
  %6016 = vmatpush.xpose.msra.mxu0 0.0
  %6017 = vmatpush.xpose.msra.mxu0 0.0
  %6018 = vmatpush.xpose.msra.mxu0 0.0
  %6019 = vmatpush.xpose.msra.mxu0 0.0
  %6020 = vmatpush.xpose.msra.mxu0 0.0
  %6021 = vmatpush.xpose.msra.mxu0 0.0
  %6022 = vmatpush.xpose.msra.mxu0 0.0
  %6023 = vmatpush.xpose.msra.mxu0 0.0
  %6024 = vmatpush.xpose.msra.mxu0 0.0
  %6025 = vmatpush.xpose.msra.mxu0 0.0
  %6026 = vmatpush.xpose.msra.mxu0 0.0
  %6027 = vmatpush.xpose.msra.mxu0 %v1129
  %6028 = vmatmul.f32.gmra.mxu0 %v6010
  %v6029 = vpop.f32.mrf.mxu0
  %v6030 = vadd.f32 0.0, %v6029
  %6031 = vdwg.mxu0
  %v6033 = vsel %vm481, %v5472, 0
  %6035 = vmatpush.xpose.msra.mxu0 0.0
  %6036 = vmatpush.xpose.msra.mxu0 0.0
  %6037 = vmatpush.xpose.msra.mxu0 0.0
  %6038 = vmatpush.xpose.msra.mxu0 0.0
  %6039 = vmatpush.xpose.msra.mxu0 0.0
  %6040 = vmatpush.xpose.msra.mxu0 0.0
  %6041 = vmatpush.xpose.msra.mxu0 0.0
  %6042 = vmatpush.xpose.msra.mxu0 0.0
  %6043 = vmatpush.xpose.msra.mxu0 0.0
  %6044 = vmatpush.xpose.msra.mxu0 0.0
  %6045 = vmatpush.xpose.msra.mxu0 0.0
  %6046 = vmatpush.xpose.msra.mxu0 0.0
  %6047 = vmatpush.xpose.msra.mxu0 0.0
  %6048 = vmatpush.xpose.msra.mxu0 0.0
  %6049 = vmatpush.xpose.msra.mxu0 0.0
  %6050 = vmatpush.xpose.msra.mxu0 %v1157
  %6051 = vmatmul.f32.gmra.mxu0 %v6033
  %v6052 = vpop.f32.mrf.mxu0
  %v6053 = vadd.f32 0.0, %v6052
  %6054 = vdwg.mxu0
  %v6056 = vsel %vm481, %v5473, 0
  %6058 = vmatpush.xpose.msra.mxu0 0.0
  %6059 = vmatpush.xpose.msra.mxu0 0.0
  %6060 = vmatpush.xpose.msra.mxu0 0.0
  %6061 = vmatpush.xpose.msra.mxu0 0.0
  %6062 = vmatpush.xpose.msra.mxu0 0.0
  %6063 = vmatpush.xpose.msra.mxu0 0.0
  %6064 = vmatpush.xpose.msra.mxu0 0.0
  %6065 = vmatpush.xpose.msra.mxu0 0.0
  %6066 = vmatpush.xpose.msra.mxu0 0.0
  %6067 = vmatpush.xpose.msra.mxu0 0.0
  %6068 = vmatpush.xpose.msra.mxu0 0.0
  %6069 = vmatpush.xpose.msra.mxu0 0.0
  %6070 = vmatpush.xpose.msra.mxu0 0.0
  %6071 = vmatpush.xpose.msra.mxu0 0.0
  %6072 = vmatpush.xpose.msra.mxu0 0.0
  %6073 = vmatpush.xpose.msra.mxu0 %v1185
  %6074 = vmatmul.f32.gmra.mxu0 %v6056
  %v6075 = vpop.f32.mrf.mxu0
  %v6076 = vadd.f32 0.0, %v6075
  %6077 = vdwg.mxu0
  %v6079 = vsel %vm481, %v5474, 0
  %6081 = vmatpush.xpose.msra.mxu0 0.0
  %6082 = vmatpush.xpose.msra.mxu0 0.0
  %6083 = vmatpush.xpose.msra.mxu0 0.0
  %6084 = vmatpush.xpose.msra.mxu0 0.0
  %6085 = vmatpush.xpose.msra.mxu0 0.0
  %6086 = vmatpush.xpose.msra.mxu0 0.0
  %6087 = vmatpush.xpose.msra.mxu0 0.0
  %6088 = vmatpush.xpose.msra.mxu0 0.0
  %6089 = vmatpush.xpose.msra.mxu0 0.0
  %6090 = vmatpush.xpose.msra.mxu0 0.0
  %6091 = vmatpush.xpose.msra.mxu0 0.0
  %6092 = vmatpush.xpose.msra.mxu0 0.0
  %6093 = vmatpush.xpose.msra.mxu0 0.0
  %6094 = vmatpush.xpose.msra.mxu0 0.0
  %6095 = vmatpush.xpose.msra.mxu0 0.0
  %6096 = vmatpush.xpose.msra.mxu0 %v1213
  %6097 = vmatmul.f32.gmra.mxu0 %v6079
  %v6098 = vpop.f32.mrf.mxu0
  %v6099 = vadd.f32 0.0, %v6098
  %6100 = vdwg.mxu0
  %v6102 = vsel %vm481, %v5475, 0
  %6104 = vmatpush.xpose.msra.mxu0 0.0
  %6105 = vmatpush.xpose.msra.mxu0 0.0
  %6106 = vmatpush.xpose.msra.mxu0 0.0
  %6107 = vmatpush.xpose.msra.mxu0 0.0
  %6108 = vmatpush.xpose.msra.mxu0 0.0
  %6109 = vmatpush.xpose.msra.mxu0 0.0
  %6110 = vmatpush.xpose.msra.mxu0 0.0
  %6111 = vmatpush.xpose.msra.mxu0 0.0
  %6112 = vmatpush.xpose.msra.mxu0 0.0
  %6113 = vmatpush.xpose.msra.mxu0 0.0
  %6114 = vmatpush.xpose.msra.mxu0 0.0
  %6115 = vmatpush.xpose.msra.mxu0 0.0
  %6116 = vmatpush.xpose.msra.mxu0 0.0
  %6117 = vmatpush.xpose.msra.mxu0 0.0
  %6118 = vmatpush.xpose.msra.mxu0 0.0
  %6119 = vmatpush.xpose.msra.mxu0 %v1241
  %6120 = vmatmul.f32.gmra.mxu0 %v6102
  %v6121 = vpop.f32.mrf.mxu0
  %v6122 = vadd.f32 0.0, %v6121
  %6123 = vdwg.mxu0
  %v6125 = vsel %vm481, %v5476, 0
  %6127 = vmatpush.xpose.msra.mxu0 0.0
  %6128 = vmatpush.xpose.msra.mxu0 0.0
  %6129 = vmatpush.xpose.msra.mxu0 0.0
  %6130 = vmatpush.xpose.msra.mxu0 0.0
  %6131 = vmatpush.xpose.msra.mxu0 0.0
  %6132 = vmatpush.xpose.msra.mxu0 0.0
  %6133 = vmatpush.xpose.msra.mxu0 0.0
  %6134 = vmatpush.xpose.msra.mxu0 0.0
  %6135 = vmatpush.xpose.msra.mxu0 0.0
  %6136 = vmatpush.xpose.msra.mxu0 0.0
  %6137 = vmatpush.xpose.msra.mxu0 0.0
  %6138 = vmatpush.xpose.msra.mxu0 0.0
  %6139 = vmatpush.xpose.msra.mxu0 0.0
  %6140 = vmatpush.xpose.msra.mxu0 0.0
  %6141 = vmatpush.xpose.msra.mxu0 0.0
  %6142 = vmatpush.xpose.msra.mxu0 %v1269
  %6143 = vmatmul.f32.gmra.mxu0 %v6125
  %v6144 = vpop.f32.mrf.mxu0
  %v6145 = vadd.f32 0.0, %v6144
  %6146 = vdwg.mxu0
  %v6148 = vsel %vm481, %v5477, 0
  %6150 = vmatpush.xpose.msra.mxu0 0.0
  %6151 = vmatpush.xpose.msra.mxu0 0.0
  %6152 = vmatpush.xpose.msra.mxu0 0.0
  %6153 = vmatpush.xpose.msra.mxu0 0.0
  %6154 = vmatpush.xpose.msra.mxu0 0.0
  %6155 = vmatpush.xpose.msra.mxu0 0.0
  %6156 = vmatpush.xpose.msra.mxu0 0.0
  %6157 = vmatpush.xpose.msra.mxu0 0.0
  %6158 = vmatpush.xpose.msra.mxu0 0.0
  %6159 = vmatpush.xpose.msra.mxu0 0.0
  %6160 = vmatpush.xpose.msra.mxu0 0.0
  %6161 = vmatpush.xpose.msra.mxu0 0.0
  %6162 = vmatpush.xpose.msra.mxu0 0.0
  %6163 = vmatpush.xpose.msra.mxu0 0.0
  %6164 = vmatpush.xpose.msra.mxu0 0.0
  %6165 = vmatpush.xpose.msra.mxu0 %v1297
  %6166 = vmatmul.f32.gmra.mxu0 %v6148
  %v6167 = vpop.f32.mrf.mxu0
  %v6168 = vadd.f32 0.0, %v6167
  %6169 = vdwg.mxu0
  %v6171 = vsel %vm481, %v5478, 0
  %6173 = vmatpush.xpose.msra.mxu0 0.0
  %6174 = vmatpush.xpose.msra.mxu0 0.0
  %6175 = vmatpush.xpose.msra.mxu0 0.0
  %6176 = vmatpush.xpose.msra.mxu0 0.0
  %6177 = vmatpush.xpose.msra.mxu0 0.0
  %6178 = vmatpush.xpose.msra.mxu0 0.0
  %6179 = vmatpush.xpose.msra.mxu0 0.0
  %6180 = vmatpush.xpose.msra.mxu0 0.0
  %6181 = vmatpush.xpose.msra.mxu0 0.0
  %6182 = vmatpush.xpose.msra.mxu0 0.0
  %6183 = vmatpush.xpose.msra.mxu0 0.0
  %6184 = vmatpush.xpose.msra.mxu0 0.0
  %6185 = vmatpush.xpose.msra.mxu0 0.0
  %6186 = vmatpush.xpose.msra.mxu0 0.0
  %6187 = vmatpush.xpose.msra.mxu0 0.0
  %6188 = vmatpush.xpose.msra.mxu0 %v1325
  %6189 = vmatmul.f32.gmra.mxu0 %v6171
  %v6190 = vpop.f32.mrf.mxu0
  %v6191 = vadd.f32 0.0, %v6190
  %6192 = vdwg.mxu0
  %v6194 = vsel %vm481, %v5479, 0
  %6196 = vmatpush.xpose.msra.mxu0 0.0
  %6197 = vmatpush.xpose.msra.mxu0 0.0
  %6198 = vmatpush.xpose.msra.mxu0 0.0
  %6199 = vmatpush.xpose.msra.mxu0 0.0
  %6200 = vmatpush.xpose.msra.mxu0 0.0
  %6201 = vmatpush.xpose.msra.mxu0 0.0
  %6202 = vmatpush.xpose.msra.mxu0 0.0
  %6203 = vmatpush.xpose.msra.mxu0 0.0
  %6204 = vmatpush.xpose.msra.mxu0 0.0
  %6205 = vmatpush.xpose.msra.mxu0 0.0
  %6206 = vmatpush.xpose.msra.mxu0 0.0
  %6207 = vmatpush.xpose.msra.mxu0 0.0
  %6208 = vmatpush.xpose.msra.mxu0 0.0
  %6209 = vmatpush.xpose.msra.mxu0 0.0
  %6210 = vmatpush.xpose.msra.mxu0 0.0
  %6211 = vmatpush.xpose.msra.mxu0 %v1353
  %6212 = vmatmul.f32.gmra.mxu0 %v6194
  %v6213 = vpop.f32.mrf.mxu0
  %v6214 = vadd.f32 0.0, %v6213
  %6215 = vdwg.mxu0
  %v6216 = vmul.f32 %v5501, 0.35355338
  %v6217 = vmul.f32 %v5524, 0.35355338
  %v6218 = vmul.f32 %v5547, 0.35355338
  %v6219 = vmul.f32 %v5570, 0.35355338
  %v6220 = vmul.f32 %v5593, 0.35355338
  %v6221 = vmul.f32 %v5616, 0.35355338
  %v6222 = vmul.f32 %v5639, 0.35355338
  %v6223 = vmul.f32 %v5662, 0.35355338
  %v6224 = vmul.f32 %v5685, 0.35355338
  %v6225 = vmul.f32 %v5708, 0.35355338
  %v6226 = vmul.f32 %v5731, 0.35355338
  %v6227 = vmul.f32 %v5754, 0.35355338
  %v6228 = vmul.f32 %v5777, 0.35355338
  %v6229 = vmul.f32 %v5800, 0.35355338
  %v6230 = vmul.f32 %v5823, 0.35355338
  %v6231 = vmul.f32 %v5846, 0.35355338
  %v6232 = vmul.f32 %v5869, 0.35355338
  %v6233 = vmul.f32 %v5892, 0.35355338
  %v6234 = vmul.f32 %v5915, 0.35355338
  %v6235 = vmul.f32 %v5938, 0.35355338
  %v6236 = vmul.f32 %v5961, 0.35355338
  %v6237 = vmul.f32 %v5984, 0.35355338
  %v6238 = vmul.f32 %v6007, 0.35355338
  %v6239 = vmul.f32 %v6030, 0.35355338
  %v6240 = vmul.f32 %v6053, 0.35355338
  %v6241 = vmul.f32 %v6076, 0.35355338
  %v6242 = vmul.f32 %v6099, 0.35355338
  %v6243 = vmul.f32 %v6122, 0.35355338
  %v6244 = vmul.f32 %v6145, 0.35355338
  %v6245 = vmul.f32 %v6168, 0.35355338
  %v6246 = vmul.f32 %v6191, 0.35355338
  %v6247 = vmul.f32 %v6214, 0.35355338
  %v6248 = vsel %vm1407, %v6216, -inf
  %6249 = vmax.xlane.f32.xlu0 %v6248
  %v6250 = vpop.xlane.xlu0 %6249
  %v6251 = vsel %vm1407, %v6217, -inf
  %6252 = vmax.xlane.f32.xlu0 %v6251
  %v6253 = vpop.xlane.xlu0 %6252
  %v6254 = vsel %vm1407, %v6218, -inf
  %6255 = vmax.xlane.f32.xlu0 %v6254
  %v6256 = vpop.xlane.xlu0 %6255
  %v6257 = vsel %vm1407, %v6219, -inf
  %6258 = vmax.xlane.f32.xlu0 %v6257
  %v6259 = vpop.xlane.xlu0 %6258
  %v6260 = vsel %vm1407, %v6220, -inf
  %6261 = vmax.xlane.f32.xlu0 %v6260
  %v6262 = vpop.xlane.xlu0 %6261
  %v6263 = vsel %vm1407, %v6221, -inf
  %6264 = vmax.xlane.f32.xlu0 %v6263
  %v6265 = vpop.xlane.xlu0 %6264
  %v6266 = vsel %vm1407, %v6222, -inf
  %6267 = vmax.xlane.f32.xlu0 %v6266
  %v6268 = vpop.xlane.xlu0 %6267
  %v6269 = vsel %vm1407, %v6223, -inf
  %6270 = vmax.xlane.f32.xlu0 %v6269
  %v6271 = vpop.xlane.xlu0 %6270
  %v6272 = vsel %vm1407, %v6224, -inf
  %6273 = vmax.xlane.f32.xlu0 %v6272
  %v6274 = vpop.xlane.xlu0 %6273
  %v6275 = vsel %vm1407, %v6225, -inf
  %6276 = vmax.xlane.f32.xlu0 %v6275
  %v6277 = vpop.xlane.xlu0 %6276
  %v6278 = vsel %vm1407, %v6226, -inf
  %6279 = vmax.xlane.f32.xlu0 %v6278
  %v6280 = vpop.xlane.xlu0 %6279
  %v6281 = vsel %vm1407, %v6227, -inf
  %6282 = vmax.xlane.f32.xlu0 %v6281
  %v6283 = vpop.xlane.xlu0 %6282
  %v6284 = vsel %vm1407, %v6228, -inf
  %6285 = vmax.xlane.f32.xlu0 %v6284
  %v6286 = vpop.xlane.xlu0 %6285
  %v6287 = vsel %vm1407, %v6229, -inf
  %6288 = vmax.xlane.f32.xlu0 %v6287
  %v6289 = vpop.xlane.xlu0 %6288
  %v6290 = vsel %vm1407, %v6230, -inf
  %6291 = vmax.xlane.f32.xlu0 %v6290
  %v6292 = vpop.xlane.xlu0 %6291
  %v6293 = vsel %vm1407, %v6231, -inf
  %6294 = vmax.xlane.f32.xlu0 %v6293
  %v6295 = vpop.xlane.xlu0 %6294
  %v6296 = vsel %vm1407, %v6232, -inf
  %6297 = vmax.xlane.f32.xlu0 %v6296
  %v6298 = vpop.xlane.xlu0 %6297
  %v6299 = vsel %vm1407, %v6233, -inf
  %6300 = vmax.xlane.f32.xlu0 %v6299
  %v6301 = vpop.xlane.xlu0 %6300
  %v6302 = vsel %vm1407, %v6234, -inf
  %6303 = vmax.xlane.f32.xlu0 %v6302
  %v6304 = vpop.xlane.xlu0 %6303
  %v6305 = vsel %vm1407, %v6235, -inf
  %6306 = vmax.xlane.f32.xlu0 %v6305
  %v6307 = vpop.xlane.xlu0 %6306
  %v6308 = vsel %vm1407, %v6236, -inf
  %6309 = vmax.xlane.f32.xlu0 %v6308
  %v6310 = vpop.xlane.xlu0 %6309
  %v6311 = vsel %vm1407, %v6237, -inf
  %6312 = vmax.xlane.f32.xlu0 %v6311
  %v6313 = vpop.xlane.xlu0 %6312
  %v6314 = vsel %vm1407, %v6238, -inf
  %6315 = vmax.xlane.f32.xlu0 %v6314
  %v6316 = vpop.xlane.xlu0 %6315
  %v6317 = vsel %vm1407, %v6239, -inf
  %6318 = vmax.xlane.f32.xlu0 %v6317
  %v6319 = vpop.xlane.xlu0 %6318
  %v6320 = vsel %vm1407, %v6240, -inf
  %6321 = vmax.xlane.f32.xlu0 %v6320
  %v6322 = vpop.xlane.xlu0 %6321
  %v6323 = vsel %vm1407, %v6241, -inf
  %6324 = vmax.xlane.f32.xlu0 %v6323
  %v6325 = vpop.xlane.xlu0 %6324
  %v6326 = vsel %vm1407, %v6242, -inf
  %6327 = vmax.xlane.f32.xlu0 %v6326
  %v6328 = vpop.xlane.xlu0 %6327
  %v6329 = vsel %vm1407, %v6243, -inf
  %6330 = vmax.xlane.f32.xlu0 %v6329
  %v6331 = vpop.xlane.xlu0 %6330
  %v6332 = vsel %vm1407, %v6244, -inf
  %6333 = vmax.xlane.f32.xlu0 %v6332
  %v6334 = vpop.xlane.xlu0 %6333
  %v6335 = vsel %vm1407, %v6245, -inf
  %6336 = vmax.xlane.f32.xlu0 %v6335
  %v6337 = vpop.xlane.xlu0 %6336
  %v6338 = vsel %vm1407, %v6246, -inf
  %6339 = vmax.xlane.f32.xlu0 %v6338
  %v6340 = vpop.xlane.xlu0 %6339
  %v6341 = vsel %vm1407, %v6247, -inf
  %6342 = vmax.xlane.f32.xlu0 %v6341
  %v6343 = vpop.xlane.xlu0 %6342
  %v6344 = vsub.f32 %v6216, %v6250
  %v6345 = vsub.f32 %v6217, %v6253
  %v6346 = vsub.f32 %v6218, %v6256
  %v6347 = vsub.f32 %v6219, %v6259
  %v6348 = vsub.f32 %v6220, %v6262
  %v6349 = vsub.f32 %v6221, %v6265
  %v6350 = vsub.f32 %v6222, %v6268
  %v6351 = vsub.f32 %v6223, %v6271
  %v6352 = vsub.f32 %v6224, %v6274
  %v6353 = vsub.f32 %v6225, %v6277
  %v6354 = vsub.f32 %v6226, %v6280
  %v6355 = vsub.f32 %v6227, %v6283
  %v6356 = vsub.f32 %v6228, %v6286
  %v6357 = vsub.f32 %v6229, %v6289
  %v6358 = vsub.f32 %v6230, %v6292
  %v6359 = vsub.f32 %v6231, %v6295
  %v6360 = vsub.f32 %v6232, %v6298
  %v6361 = vsub.f32 %v6233, %v6301
  %v6362 = vsub.f32 %v6234, %v6304
  %v6363 = vsub.f32 %v6235, %v6307
  %v6364 = vsub.f32 %v6236, %v6310
  %v6365 = vsub.f32 %v6237, %v6313
  %v6366 = vsub.f32 %v6238, %v6316
  %v6367 = vsub.f32 %v6239, %v6319
  %v6368 = vsub.f32 %v6240, %v6322
  %v6369 = vsub.f32 %v6241, %v6325
  %v6370 = vsub.f32 %v6242, %v6328
  %v6371 = vsub.f32 %v6243, %v6331
  %v6372 = vsub.f32 %v6244, %v6334
  %v6373 = vsub.f32 %v6245, %v6337
  %v6374 = vsub.f32 %v6246, %v6340
  %v6375 = vsub.f32 %v6247, %v6343
  %v6376 = vmul.f32 %v6344, 1.442695
  %v6377 = vpow.pop %v6376
  %v6378 = vmul.f32 %v6345, 1.442695
  %v6379 = vpow.pop %v6378
  %v6380 = vmul.f32 %v6346, 1.442695
  %v6381 = vpow.pop %v6380
  %v6382 = vmul.f32 %v6347, 1.442695
  %v6383 = vpow.pop %v6382
  %v6384 = vmul.f32 %v6348, 1.442695
  %v6385 = vpow.pop %v6384
  %v6386 = vmul.f32 %v6349, 1.442695
  %v6387 = vpow.pop %v6386
  %v6388 = vmul.f32 %v6350, 1.442695
  %v6389 = vpow.pop %v6388
  %v6390 = vmul.f32 %v6351, 1.442695
  %v6391 = vpow.pop %v6390
  %v6392 = vmul.f32 %v6352, 1.442695
  %v6393 = vpow.pop %v6392
  %v6394 = vmul.f32 %v6353, 1.442695
  %v6395 = vpow.pop %v6394
  %v6396 = vmul.f32 %v6354, 1.442695
  %v6397 = vpow.pop %v6396
  %v6398 = vmul.f32 %v6355, 1.442695
  %v6399 = vpow.pop %v6398
  %v6400 = vmul.f32 %v6356, 1.442695
  %v6401 = vpow.pop %v6400
  %v6402 = vmul.f32 %v6357, 1.442695
  %v6403 = vpow.pop %v6402
  %v6404 = vmul.f32 %v6358, 1.442695
  %v6405 = vpow.pop %v6404
  %v6406 = vmul.f32 %v6359, 1.442695
  %v6407 = vpow.pop %v6406
  %v6408 = vmul.f32 %v6360, 1.442695
  %v6409 = vpow.pop %v6408
  %v6410 = vmul.f32 %v6361, 1.442695
  %v6411 = vpow.pop %v6410
  %v6412 = vmul.f32 %v6362, 1.442695
  %v6413 = vpow.pop %v6412
  %v6414 = vmul.f32 %v6363, 1.442695
  %v6415 = vpow.pop %v6414
  %v6416 = vmul.f32 %v6364, 1.442695
  %v6417 = vpow.pop %v6416
  %v6418 = vmul.f32 %v6365, 1.442695
  %v6419 = vpow.pop %v6418
  %v6420 = vmul.f32 %v6366, 1.442695
  %v6421 = vpow.pop %v6420
  %v6422 = vmul.f32 %v6367, 1.442695
  %v6423 = vpow.pop %v6422
  %v6424 = vmul.f32 %v6368, 1.442695
  %v6425 = vpow.pop %v6424
  %v6426 = vmul.f32 %v6369, 1.442695
  %v6427 = vpow.pop %v6426
  %v6428 = vmul.f32 %v6370, 1.442695
  %v6429 = vpow.pop %v6428
  %v6430 = vmul.f32 %v6371, 1.442695
  %v6431 = vpow.pop %v6430
  %v6432 = vmul.f32 %v6372, 1.442695
  %v6433 = vpow.pop %v6432
  %v6434 = vmul.f32 %v6373, 1.442695
  %v6435 = vpow.pop %v6434
  %v6436 = vmul.f32 %v6374, 1.442695
  %v6437 = vpow.pop %v6436
  %v6438 = vmul.f32 %v6375, 1.442695
  %v6439 = vpow.pop %v6438
  %v6440 = vsel %vm1407, %v6377, 0.0
  %6441 = vadd.xlane.f32.xlu0 %v6440
  %v6442 = vpop.xlane.xlu0 %6441
  %v6443 = vsel %vm1407, %v6379, 0.0
  %6444 = vadd.xlane.f32.xlu0 %v6443
  %v6445 = vpop.xlane.xlu0 %6444
  %v6446 = vsel %vm1407, %v6381, 0.0
  %6447 = vadd.xlane.f32.xlu0 %v6446
  %v6448 = vpop.xlane.xlu0 %6447
  %v6449 = vsel %vm1407, %v6383, 0.0
  %6450 = vadd.xlane.f32.xlu0 %v6449
  %v6451 = vpop.xlane.xlu0 %6450
  %v6452 = vsel %vm1407, %v6385, 0.0
  %6453 = vadd.xlane.f32.xlu0 %v6452
  %v6454 = vpop.xlane.xlu0 %6453
  %v6455 = vsel %vm1407, %v6387, 0.0
  %6456 = vadd.xlane.f32.xlu0 %v6455
  %v6457 = vpop.xlane.xlu0 %6456
  %v6458 = vsel %vm1407, %v6389, 0.0
  %6459 = vadd.xlane.f32.xlu0 %v6458
  %v6460 = vpop.xlane.xlu0 %6459
  %v6461 = vsel %vm1407, %v6391, 0.0
  %6462 = vadd.xlane.f32.xlu0 %v6461
  %v6463 = vpop.xlane.xlu0 %6462
  %v6464 = vsel %vm1407, %v6393, 0.0
  %6465 = vadd.xlane.f32.xlu0 %v6464
  %v6466 = vpop.xlane.xlu0 %6465
  %v6467 = vsel %vm1407, %v6395, 0.0
  %6468 = vadd.xlane.f32.xlu0 %v6467
  %v6469 = vpop.xlane.xlu0 %6468
  %v6470 = vsel %vm1407, %v6397, 0.0
  %6471 = vadd.xlane.f32.xlu0 %v6470
  %v6472 = vpop.xlane.xlu0 %6471
  %v6473 = vsel %vm1407, %v6399, 0.0
  %6474 = vadd.xlane.f32.xlu0 %v6473
  %v6475 = vpop.xlane.xlu0 %6474
  %v6476 = vsel %vm1407, %v6401, 0.0
  %6477 = vadd.xlane.f32.xlu0 %v6476
  %v6478 = vpop.xlane.xlu0 %6477
  %v6479 = vsel %vm1407, %v6403, 0.0
  %6480 = vadd.xlane.f32.xlu0 %v6479
  %v6481 = vpop.xlane.xlu0 %6480
  %v6482 = vsel %vm1407, %v6405, 0.0
  %6483 = vadd.xlane.f32.xlu0 %v6482
  %v6484 = vpop.xlane.xlu0 %6483
  %v6485 = vsel %vm1407, %v6407, 0.0
  %6486 = vadd.xlane.f32.xlu0 %v6485
  %v6487 = vpop.xlane.xlu0 %6486
  %v6488 = vsel %vm1407, %v6409, 0.0
  %6489 = vadd.xlane.f32.xlu0 %v6488
  %v6490 = vpop.xlane.xlu0 %6489
  %v6491 = vsel %vm1407, %v6411, 0.0
  %6492 = vadd.xlane.f32.xlu0 %v6491
  %v6493 = vpop.xlane.xlu0 %6492
  %v6494 = vsel %vm1407, %v6413, 0.0
  %6495 = vadd.xlane.f32.xlu0 %v6494
  %v6496 = vpop.xlane.xlu0 %6495
  %v6497 = vsel %vm1407, %v6415, 0.0
  %6498 = vadd.xlane.f32.xlu0 %v6497
  %v6499 = vpop.xlane.xlu0 %6498
  %v6500 = vsel %vm1407, %v6417, 0.0
  %6501 = vadd.xlane.f32.xlu0 %v6500
  %v6502 = vpop.xlane.xlu0 %6501
  %v6503 = vsel %vm1407, %v6419, 0.0
  %6504 = vadd.xlane.f32.xlu0 %v6503
  %v6505 = vpop.xlane.xlu0 %6504
  %v6506 = vsel %vm1407, %v6421, 0.0
  %6507 = vadd.xlane.f32.xlu0 %v6506
  %v6508 = vpop.xlane.xlu0 %6507
  %v6509 = vsel %vm1407, %v6423, 0.0
  %6510 = vadd.xlane.f32.xlu0 %v6509
  %v6511 = vpop.xlane.xlu0 %6510
  %v6512 = vsel %vm1407, %v6425, 0.0
  %6513 = vadd.xlane.f32.xlu0 %v6512
  %v6514 = vpop.xlane.xlu0 %6513
  %v6515 = vsel %vm1407, %v6427, 0.0
  %6516 = vadd.xlane.f32.xlu0 %v6515
  %v6517 = vpop.xlane.xlu0 %6516
  %v6518 = vsel %vm1407, %v6429, 0.0
  %6519 = vadd.xlane.f32.xlu0 %v6518
  %v6520 = vpop.xlane.xlu0 %6519
  %v6521 = vsel %vm1407, %v6431, 0.0
  %6522 = vadd.xlane.f32.xlu0 %v6521
  %v6523 = vpop.xlane.xlu0 %6522
  %v6524 = vsel %vm1407, %v6433, 0.0
  %6525 = vadd.xlane.f32.xlu0 %v6524
  %v6526 = vpop.xlane.xlu0 %6525
  %v6527 = vsel %vm1407, %v6435, 0.0
  %6528 = vadd.xlane.f32.xlu0 %v6527
  %v6529 = vpop.xlane.xlu0 %6528
  %v6530 = vsel %vm1407, %v6437, 0.0
  %6531 = vadd.xlane.f32.xlu0 %v6530
  %v6532 = vpop.xlane.xlu0 %6531
  %v6533 = vsel %vm1407, %v6439, 0.0
  %6534 = vadd.xlane.f32.xlu0 %v6533
  %v6535 = vpop.xlane.xlu0 %6534
  %v6536 = vrcp.pop %v6442
  %v6537 = vmul.f32 %v6442, %v6536
  %v6538 = vsub.f32 1.0, %v6537
  %v6539 = vmul.f32 %v6536, %v6538
  %v6540 = vadd.f32 %v6536, %v6539
  %vm6541 = vweird.f32 %v6442
  %vm6542 = vweird.f32 %v6536
  %vm6543 = vmor %vm6541, %vm6542
  %v6544 = vsel %vm6543, %v6536, %v6540
  %v6545 = vand.u32 2147483647, %v6442
  %vm6546 = vcmp.eq.f32.partialorder %v6545, 8.507059e+37
  %v6547 = vand.u32 %v6442, 2147483648
  %v6548 = vor.u32 1.1754944e-38, %v6547
  %v6549 = vsel %vm6546, %v6548, %v6544
  %v6550 = vrcp.pop %v6445
  %v6551 = vmul.f32 %v6445, %v6550
  %v6552 = vsub.f32 1.0, %v6551
  %v6553 = vmul.f32 %v6550, %v6552
  %v6554 = vadd.f32 %v6550, %v6553
  %vm6555 = vweird.f32 %v6445
  %vm6556 = vweird.f32 %v6550
  %vm6557 = vmor %vm6555, %vm6556
  %v6558 = vsel %vm6557, %v6550, %v6554
  %v6559 = vand.u32 2147483647, %v6445
  %vm6560 = vcmp.eq.f32.partialorder %v6559, 8.507059e+37
  %v6561 = vand.u32 %v6445, 2147483648
  %v6562 = vor.u32 1.1754944e-38, %v6561
  %v6563 = vsel %vm6560, %v6562, %v6558
  %v6564 = vrcp.pop %v6448
  %v6565 = vmul.f32 %v6448, %v6564
  %v6566 = vsub.f32 1.0, %v6565
  %v6567 = vmul.f32 %v6564, %v6566
  %v6568 = vadd.f32 %v6564, %v6567
  %vm6569 = vweird.f32 %v6448
  %vm6570 = vweird.f32 %v6564
  %vm6571 = vmor %vm6569, %vm6570
  %v6572 = vsel %vm6571, %v6564, %v6568
  %v6573 = vand.u32 2147483647, %v6448
  %vm6574 = vcmp.eq.f32.partialorder %v6573, 8.507059e+37
  %v6575 = vand.u32 %v6448, 2147483648
  %v6576 = vor.u32 1.1754944e-38, %v6575
  %v6577 = vsel %vm6574, %v6576, %v6572
  %v6578 = vrcp.pop %v6451
  %v6579 = vmul.f32 %v6451, %v6578
  %v6580 = vsub.f32 1.0, %v6579
  %v6581 = vmul.f32 %v6578, %v6580
  %v6582 = vadd.f32 %v6578, %v6581
  %vm6583 = vweird.f32 %v6451
  %vm6584 = vweird.f32 %v6578
  %vm6585 = vmor %vm6583, %vm6584
  %v6586 = vsel %vm6585, %v6578, %v6582
  %v6587 = vand.u32 2147483647, %v6451
  %vm6588 = vcmp.eq.f32.partialorder %v6587, 8.507059e+37
  %v6589 = vand.u32 %v6451, 2147483648
  %v6590 = vor.u32 1.1754944e-38, %v6589
  %v6591 = vsel %vm6588, %v6590, %v6586
  %v6592 = vrcp.pop %v6454
  %v6593 = vmul.f32 %v6454, %v6592
  %v6594 = vsub.f32 1.0, %v6593
  %v6595 = vmul.f32 %v6592, %v6594
  %v6596 = vadd.f32 %v6592, %v6595
  %vm6597 = vweird.f32 %v6454
  %vm6598 = vweird.f32 %v6592
  %vm6599 = vmor %vm6597, %vm6598
  %v6600 = vsel %vm6599, %v6592, %v6596
  %v6601 = vand.u32 2147483647, %v6454
  %vm6602 = vcmp.eq.f32.partialorder %v6601, 8.507059e+37
  %v6603 = vand.u32 %v6454, 2147483648
  %v6604 = vor.u32 1.1754944e-38, %v6603
  %v6605 = vsel %vm6602, %v6604, %v6600
  %v6606 = vrcp.pop %v6457
  %v6607 = vmul.f32 %v6457, %v6606
  %v6608 = vsub.f32 1.0, %v6607
  %v6609 = vmul.f32 %v6606, %v6608
  %v6610 = vadd.f32 %v6606, %v6609
  %vm6611 = vweird.f32 %v6457
  %vm6612 = vweird.f32 %v6606
  %vm6613 = vmor %vm6611, %vm6612
  %v6614 = vsel %vm6613, %v6606, %v6610
  %v6615 = vand.u32 2147483647, %v6457
  %vm6616 = vcmp.eq.f32.partialorder %v6615, 8.507059e+37
  %v6617 = vand.u32 %v6457, 2147483648
  %v6618 = vor.u32 1.1754944e-38, %v6617
  %v6619 = vsel %vm6616, %v6618, %v6614
  %v6620 = vrcp.pop %v6460
  %v6621 = vmul.f32 %v6460, %v6620
  %v6622 = vsub.f32 1.0, %v6621
  %v6623 = vmul.f32 %v6620, %v6622
  %v6624 = vadd.f32 %v6620, %v6623
  %vm6625 = vweird.f32 %v6460
  %vm6626 = vweird.f32 %v6620
  %vm6627 = vmor %vm6625, %vm6626
  %v6628 = vsel %vm6627, %v6620, %v6624
  %v6629 = vand.u32 2147483647, %v6460
  %vm6630 = vcmp.eq.f32.partialorder %v6629, 8.507059e+37
  %v6631 = vand.u32 %v6460, 2147483648
  %v6632 = vor.u32 1.1754944e-38, %v6631
  %v6633 = vsel %vm6630, %v6632, %v6628
  %v6634 = vrcp.pop %v6463
  %v6635 = vmul.f32 %v6463, %v6634
  %v6636 = vsub.f32 1.0, %v6635
  %v6637 = vmul.f32 %v6634, %v6636
  %v6638 = vadd.f32 %v6634, %v6637
  %vm6639 = vweird.f32 %v6463
  %vm6640 = vweird.f32 %v6634
  %vm6641 = vmor %vm6639, %vm6640
  %v6642 = vsel %vm6641, %v6634, %v6638
  %v6643 = vand.u32 2147483647, %v6463
  %vm6644 = vcmp.eq.f32.partialorder %v6643, 8.507059e+37
  %v6645 = vand.u32 %v6463, 2147483648
  %v6646 = vor.u32 1.1754944e-38, %v6645
  %v6647 = vsel %vm6644, %v6646, %v6642
  %v6648 = vrcp.pop %v6466
  %v6649 = vmul.f32 %v6466, %v6648
  %v6650 = vsub.f32 1.0, %v6649
  %v6651 = vmul.f32 %v6648, %v6650
  %v6652 = vadd.f32 %v6648, %v6651
  %vm6653 = vweird.f32 %v6466
  %vm6654 = vweird.f32 %v6648
  %vm6655 = vmor %vm6653, %vm6654
  %v6656 = vsel %vm6655, %v6648, %v6652
  %v6657 = vand.u32 2147483647, %v6466
  %vm6658 = vcmp.eq.f32.partialorder %v6657, 8.507059e+37
  %v6659 = vand.u32 %v6466, 2147483648
  %v6660 = vor.u32 1.1754944e-38, %v6659
  %v6661 = vsel %vm6658, %v6660, %v6656
  %v6662 = vrcp.pop %v6469
  %v6663 = vmul.f32 %v6469, %v6662
  %v6664 = vsub.f32 1.0, %v6663
  %v6665 = vmul.f32 %v6662, %v6664
  %v6666 = vadd.f32 %v6662, %v6665
  %vm6667 = vweird.f32 %v6469
  %vm6668 = vweird.f32 %v6662
  %vm6669 = vmor %vm6667, %vm6668
  %v6670 = vsel %vm6669, %v6662, %v6666
  %v6671 = vand.u32 2147483647, %v6469
  %vm6672 = vcmp.eq.f32.partialorder %v6671, 8.507059e+37
  %v6673 = vand.u32 %v6469, 2147483648
  %v6674 = vor.u32 1.1754944e-38, %v6673
  %v6675 = vsel %vm6672, %v6674, %v6670
  %v6676 = vrcp.pop %v6472
  %v6677 = vmul.f32 %v6472, %v6676
  %v6678 = vsub.f32 1.0, %v6677
  %v6679 = vmul.f32 %v6676, %v6678
  %v6680 = vadd.f32 %v6676, %v6679
  %vm6681 = vweird.f32 %v6472
  %vm6682 = vweird.f32 %v6676
  %vm6683 = vmor %vm6681, %vm6682
  %v6684 = vsel %vm6683, %v6676, %v6680
  %v6685 = vand.u32 2147483647, %v6472
  %vm6686 = vcmp.eq.f32.partialorder %v6685, 8.507059e+37
  %v6687 = vand.u32 %v6472, 2147483648
  %v6688 = vor.u32 1.1754944e-38, %v6687
  %v6689 = vsel %vm6686, %v6688, %v6684
  %v6690 = vrcp.pop %v6475
  %v6691 = vmul.f32 %v6475, %v6690
  %v6692 = vsub.f32 1.0, %v6691
  %v6693 = vmul.f32 %v6690, %v6692
  %v6694 = vadd.f32 %v6690, %v6693
  %vm6695 = vweird.f32 %v6475
  %vm6696 = vweird.f32 %v6690
  %vm6697 = vmor %vm6695, %vm6696
  %v6698 = vsel %vm6697, %v6690, %v6694
  %v6699 = vand.u32 2147483647, %v6475
  %vm6700 = vcmp.eq.f32.partialorder %v6699, 8.507059e+37
  %v6701 = vand.u32 %v6475, 2147483648
  %v6702 = vor.u32 1.1754944e-38, %v6701
  %v6703 = vsel %vm6700, %v6702, %v6698
  %v6704 = vrcp.pop %v6478
  %v6705 = vmul.f32 %v6478, %v6704
  %v6706 = vsub.f32 1.0, %v6705
  %v6707 = vmul.f32 %v6704, %v6706
  %v6708 = vadd.f32 %v6704, %v6707
  %vm6709 = vweird.f32 %v6478
  %vm6710 = vweird.f32 %v6704
  %vm6711 = vmor %vm6709, %vm6710
  %v6712 = vsel %vm6711, %v6704, %v6708
  %v6713 = vand.u32 2147483647, %v6478
  %vm6714 = vcmp.eq.f32.partialorder %v6713, 8.507059e+37
  %v6715 = vand.u32 %v6478, 2147483648
  %v6716 = vor.u32 1.1754944e-38, %v6715
  %v6717 = vsel %vm6714, %v6716, %v6712
  %v6718 = vrcp.pop %v6481
  %v6719 = vmul.f32 %v6481, %v6718
  %v6720 = vsub.f32 1.0, %v6719
  %v6721 = vmul.f32 %v6718, %v6720
  %v6722 = vadd.f32 %v6718, %v6721
  %vm6723 = vweird.f32 %v6481
  %vm6724 = vweird.f32 %v6718
  %vm6725 = vmor %vm6723, %vm6724
  %v6726 = vsel %vm6725, %v6718, %v6722
  %v6727 = vand.u32 2147483647, %v6481
  %vm6728 = vcmp.eq.f32.partialorder %v6727, 8.507059e+37
  %v6729 = vand.u32 %v6481, 2147483648
  %v6730 = vor.u32 1.1754944e-38, %v6729
  %v6731 = vsel %vm6728, %v6730, %v6726
  %v6732 = vrcp.pop %v6484
  %v6733 = vmul.f32 %v6484, %v6732
  %v6734 = vsub.f32 1.0, %v6733
  %v6735 = vmul.f32 %v6732, %v6734
  %v6736 = vadd.f32 %v6732, %v6735
  %vm6737 = vweird.f32 %v6484
  %vm6738 = vweird.f32 %v6732
  %vm6739 = vmor %vm6737, %vm6738
  %v6740 = vsel %vm6739, %v6732, %v6736
  %v6741 = vand.u32 2147483647, %v6484
  %vm6742 = vcmp.eq.f32.partialorder %v6741, 8.507059e+37
  %v6743 = vand.u32 %v6484, 2147483648
  %v6744 = vor.u32 1.1754944e-38, %v6743
  %v6745 = vsel %vm6742, %v6744, %v6740
  %v6746 = vrcp.pop %v6487
  %v6747 = vmul.f32 %v6487, %v6746
  %v6748 = vsub.f32 1.0, %v6747
  %v6749 = vmul.f32 %v6746, %v6748
  %v6750 = vadd.f32 %v6746, %v6749
  %vm6751 = vweird.f32 %v6487
  %vm6752 = vweird.f32 %v6746
  %vm6753 = vmor %vm6751, %vm6752
  %v6754 = vsel %vm6753, %v6746, %v6750
  %v6755 = vand.u32 2147483647, %v6487
  %vm6756 = vcmp.eq.f32.partialorder %v6755, 8.507059e+37
  %v6757 = vand.u32 %v6487, 2147483648
  %v6758 = vor.u32 1.1754944e-38, %v6757
  %v6759 = vsel %vm6756, %v6758, %v6754
  %v6760 = vrcp.pop %v6490
  %v6761 = vmul.f32 %v6490, %v6760
  %v6762 = vsub.f32 1.0, %v6761
  %v6763 = vmul.f32 %v6760, %v6762
  %v6764 = vadd.f32 %v6760, %v6763
  %vm6765 = vweird.f32 %v6490
  %vm6766 = vweird.f32 %v6760
  %vm6767 = vmor %vm6765, %vm6766
  %v6768 = vsel %vm6767, %v6760, %v6764
  %v6769 = vand.u32 2147483647, %v6490
  %vm6770 = vcmp.eq.f32.partialorder %v6769, 8.507059e+37
  %v6771 = vand.u32 %v6490, 2147483648
  %v6772 = vor.u32 1.1754944e-38, %v6771
  %v6773 = vsel %vm6770, %v6772, %v6768
  %v6774 = vrcp.pop %v6493
  %v6775 = vmul.f32 %v6493, %v6774
  %v6776 = vsub.f32 1.0, %v6775
  %v6777 = vmul.f32 %v6774, %v6776
  %v6778 = vadd.f32 %v6774, %v6777
  %vm6779 = vweird.f32 %v6493
  %vm6780 = vweird.f32 %v6774
  %vm6781 = vmor %vm6779, %vm6780
  %v6782 = vsel %vm6781, %v6774, %v6778
  %v6783 = vand.u32 2147483647, %v6493
  %vm6784 = vcmp.eq.f32.partialorder %v6783, 8.507059e+37
  %v6785 = vand.u32 %v6493, 2147483648
  %v6786 = vor.u32 1.1754944e-38, %v6785
  %v6787 = vsel %vm6784, %v6786, %v6782
  %v6788 = vrcp.pop %v6496
  %v6789 = vmul.f32 %v6496, %v6788
  %v6790 = vsub.f32 1.0, %v6789
  %v6791 = vmul.f32 %v6788, %v6790
  %v6792 = vadd.f32 %v6788, %v6791
  %vm6793 = vweird.f32 %v6496
  %vm6794 = vweird.f32 %v6788
  %vm6795 = vmor %vm6793, %vm6794
  %v6796 = vsel %vm6795, %v6788, %v6792
  %v6797 = vand.u32 2147483647, %v6496
  %vm6798 = vcmp.eq.f32.partialorder %v6797, 8.507059e+37
  %v6799 = vand.u32 %v6496, 2147483648
  %v6800 = vor.u32 1.1754944e-38, %v6799
  %v6801 = vsel %vm6798, %v6800, %v6796
  %v6802 = vrcp.pop %v6499
  %v6803 = vmul.f32 %v6499, %v6802
  %v6804 = vsub.f32 1.0, %v6803
  %v6805 = vmul.f32 %v6802, %v6804
  %v6806 = vadd.f32 %v6802, %v6805
  %vm6807 = vweird.f32 %v6499
  %vm6808 = vweird.f32 %v6802
  %vm6809 = vmor %vm6807, %vm6808
  %v6810 = vsel %vm6809, %v6802, %v6806
  %v6811 = vand.u32 2147483647, %v6499
  %vm6812 = vcmp.eq.f32.partialorder %v6811, 8.507059e+37
  %v6813 = vand.u32 %v6499, 2147483648
  %v6814 = vor.u32 1.1754944e-38, %v6813
  %v6815 = vsel %vm6812, %v6814, %v6810
  %v6816 = vrcp.pop %v6502
  %v6817 = vmul.f32 %v6502, %v6816
  %v6818 = vsub.f32 1.0, %v6817
  %v6819 = vmul.f32 %v6816, %v6818
  %v6820 = vadd.f32 %v6816, %v6819
  %vm6821 = vweird.f32 %v6502
  %vm6822 = vweird.f32 %v6816
  %vm6823 = vmor %vm6821, %vm6822
  %v6824 = vsel %vm6823, %v6816, %v6820
  %v6825 = vand.u32 2147483647, %v6502
  %vm6826 = vcmp.eq.f32.partialorder %v6825, 8.507059e+37
  %v6827 = vand.u32 %v6502, 2147483648
  %v6828 = vor.u32 1.1754944e-38, %v6827
  %v6829 = vsel %vm6826, %v6828, %v6824
  %v6830 = vrcp.pop %v6505
  %v6831 = vmul.f32 %v6505, %v6830
  %v6832 = vsub.f32 1.0, %v6831
  %v6833 = vmul.f32 %v6830, %v6832
  %v6834 = vadd.f32 %v6830, %v6833
  %vm6835 = vweird.f32 %v6505
  %vm6836 = vweird.f32 %v6830
  %vm6837 = vmor %vm6835, %vm6836
  %v6838 = vsel %vm6837, %v6830, %v6834
  %v6839 = vand.u32 2147483647, %v6505
  %vm6840 = vcmp.eq.f32.partialorder %v6839, 8.507059e+37
  %v6841 = vand.u32 %v6505, 2147483648
  %v6842 = vor.u32 1.1754944e-38, %v6841
  %v6843 = vsel %vm6840, %v6842, %v6838
  %v6844 = vrcp.pop %v6508
  %v6845 = vmul.f32 %v6508, %v6844
  %v6846 = vsub.f32 1.0, %v6845
  %v6847 = vmul.f32 %v6844, %v6846
  %v6848 = vadd.f32 %v6844, %v6847
  %vm6849 = vweird.f32 %v6508
  %vm6850 = vweird.f32 %v6844
  %vm6851 = vmor %vm6849, %vm6850
  %v6852 = vsel %vm6851, %v6844, %v6848
  %v6853 = vand.u32 2147483647, %v6508
  %vm6854 = vcmp.eq.f32.partialorder %v6853, 8.507059e+37
  %v6855 = vand.u32 %v6508, 2147483648
  %v6856 = vor.u32 1.1754944e-38, %v6855
  %v6857 = vsel %vm6854, %v6856, %v6852
  %v6858 = vrcp.pop %v6511
  %v6859 = vmul.f32 %v6511, %v6858
  %v6860 = vsub.f32 1.0, %v6859
  %v6861 = vmul.f32 %v6858, %v6860
  %v6862 = vadd.f32 %v6858, %v6861
  %vm6863 = vweird.f32 %v6511
  %vm6864 = vweird.f32 %v6858
  %vm6865 = vmor %vm6863, %vm6864
  %v6866 = vsel %vm6865, %v6858, %v6862
  %v6867 = vand.u32 2147483647, %v6511
  %vm6868 = vcmp.eq.f32.partialorder %v6867, 8.507059e+37
  %v6869 = vand.u32 %v6511, 2147483648
  %v6870 = vor.u32 1.1754944e-38, %v6869
  %v6871 = vsel %vm6868, %v6870, %v6866
  %v6872 = vrcp.pop %v6514
  %v6873 = vmul.f32 %v6514, %v6872
  %v6874 = vsub.f32 1.0, %v6873
  %v6875 = vmul.f32 %v6872, %v6874
  %v6876 = vadd.f32 %v6872, %v6875
  %vm6877 = vweird.f32 %v6514
  %vm6878 = vweird.f32 %v6872
  %vm6879 = vmor %vm6877, %vm6878
  %v6880 = vsel %vm6879, %v6872, %v6876
  %v6881 = vand.u32 2147483647, %v6514
  %vm6882 = vcmp.eq.f32.partialorder %v6881, 8.507059e+37
  %v6883 = vand.u32 %v6514, 2147483648
  %v6884 = vor.u32 1.1754944e-38, %v6883
  %v6885 = vsel %vm6882, %v6884, %v6880
  %v6886 = vrcp.pop %v6517
  %v6887 = vmul.f32 %v6517, %v6886
  %v6888 = vsub.f32 1.0, %v6887
  %v6889 = vmul.f32 %v6886, %v6888
  %v6890 = vadd.f32 %v6886, %v6889
  %vm6891 = vweird.f32 %v6517
  %vm6892 = vweird.f32 %v6886
  %vm6893 = vmor %vm6891, %vm6892
  %v6894 = vsel %vm6893, %v6886, %v6890
  %v6895 = vand.u32 2147483647, %v6517
  %vm6896 = vcmp.eq.f32.partialorder %v6895, 8.507059e+37
  %v6897 = vand.u32 %v6517, 2147483648
  %v6898 = vor.u32 1.1754944e-38, %v6897
  %v6899 = vsel %vm6896, %v6898, %v6894
  %v6900 = vrcp.pop %v6520
  %v6901 = vmul.f32 %v6520, %v6900
  %v6902 = vsub.f32 1.0, %v6901
  %v6903 = vmul.f32 %v6900, %v6902
  %v6904 = vadd.f32 %v6900, %v6903
  %vm6905 = vweird.f32 %v6520
  %vm6906 = vweird.f32 %v6900
  %vm6907 = vmor %vm6905, %vm6906
  %v6908 = vsel %vm6907, %v6900, %v6904
  %v6909 = vand.u32 2147483647, %v6520
  %vm6910 = vcmp.eq.f32.partialorder %v6909, 8.507059e+37
  %v6911 = vand.u32 %v6520, 2147483648
  %v6912 = vor.u32 1.1754944e-38, %v6911
  %v6913 = vsel %vm6910, %v6912, %v6908
  %v6914 = vrcp.pop %v6523
  %v6915 = vmul.f32 %v6523, %v6914
  %v6916 = vsub.f32 1.0, %v6915
  %v6917 = vmul.f32 %v6914, %v6916
  %v6918 = vadd.f32 %v6914, %v6917
  %vm6919 = vweird.f32 %v6523
  %vm6920 = vweird.f32 %v6914
  %vm6921 = vmor %vm6919, %vm6920
  %v6922 = vsel %vm6921, %v6914, %v6918
  %v6923 = vand.u32 2147483647, %v6523
  %vm6924 = vcmp.eq.f32.partialorder %v6923, 8.507059e+37
  %v6925 = vand.u32 %v6523, 2147483648
  %v6926 = vor.u32 1.1754944e-38, %v6925
  %v6927 = vsel %vm6924, %v6926, %v6922
  %v6928 = vrcp.pop %v6526
  %v6929 = vmul.f32 %v6526, %v6928
  %v6930 = vsub.f32 1.0, %v6929
  %v6931 = vmul.f32 %v6928, %v6930
  %v6932 = vadd.f32 %v6928, %v6931
  %vm6933 = vweird.f32 %v6526
  %vm6934 = vweird.f32 %v6928
  %vm6935 = vmor %vm6933, %vm6934
  %v6936 = vsel %vm6935, %v6928, %v6932
  %v6937 = vand.u32 2147483647, %v6526
  %vm6938 = vcmp.eq.f32.partialorder %v6937, 8.507059e+37
  %v6939 = vand.u32 %v6526, 2147483648
  %v6940 = vor.u32 1.1754944e-38, %v6939
  %v6941 = vsel %vm6938, %v6940, %v6936
  %v6942 = vrcp.pop %v6529
  %v6943 = vmul.f32 %v6529, %v6942
  %v6944 = vsub.f32 1.0, %v6943
  %v6945 = vmul.f32 %v6942, %v6944
  %v6946 = vadd.f32 %v6942, %v6945
  %vm6947 = vweird.f32 %v6529
  %vm6948 = vweird.f32 %v6942
  %vm6949 = vmor %vm6947, %vm6948
  %v6950 = vsel %vm6949, %v6942, %v6946
  %v6951 = vand.u32 2147483647, %v6529
  %vm6952 = vcmp.eq.f32.partialorder %v6951, 8.507059e+37
  %v6953 = vand.u32 %v6529, 2147483648
  %v6954 = vor.u32 1.1754944e-38, %v6953
  %v6955 = vsel %vm6952, %v6954, %v6950
  %v6956 = vrcp.pop %v6532
  %v6957 = vmul.f32 %v6532, %v6956
  %v6958 = vsub.f32 1.0, %v6957
  %v6959 = vmul.f32 %v6956, %v6958
  %v6960 = vadd.f32 %v6956, %v6959
  %vm6961 = vweird.f32 %v6532
  %vm6962 = vweird.f32 %v6956
  %vm6963 = vmor %vm6961, %vm6962
  %v6964 = vsel %vm6963, %v6956, %v6960
  %v6965 = vand.u32 2147483647, %v6532
  %vm6966 = vcmp.eq.f32.partialorder %v6965, 8.507059e+37
  %v6967 = vand.u32 %v6532, 2147483648
  %v6968 = vor.u32 1.1754944e-38, %v6967
  %v6969 = vsel %vm6966, %v6968, %v6964
  %v6970 = vrcp.pop %v6535
  %v6971 = vmul.f32 %v6535, %v6970
  %v6972 = vsub.f32 1.0, %v6971
  %v6973 = vmul.f32 %v6970, %v6972
  %v6974 = vadd.f32 %v6970, %v6973
  %vm6975 = vweird.f32 %v6535
  %vm6976 = vweird.f32 %v6970
  %vm6977 = vmor %vm6975, %vm6976
  %v6978 = vsel %vm6977, %v6970, %v6974
  %v6979 = vand.u32 2147483647, %v6535
  %vm6980 = vcmp.eq.f32.partialorder %v6979, 8.507059e+37
  %v6981 = vand.u32 %v6535, 2147483648
  %v6982 = vor.u32 1.1754944e-38, %v6981
  %v6983 = vsel %vm6980, %v6982, %v6978
  %v6984 = vmul.f32 %v6377, %v6549
  %v6985 = vmul.f32 %v6379, %v6563
  %v6986 = vmul.f32 %v6381, %v6577
  %v6987 = vmul.f32 %v6383, %v6591
  %v6988 = vmul.f32 %v6385, %v6605
  %v6989 = vmul.f32 %v6387, %v6619
  %v6990 = vmul.f32 %v6389, %v6633
  %v6991 = vmul.f32 %v6391, %v6647
  %v6992 = vmul.f32 %v6393, %v6661
  %v6993 = vmul.f32 %v6395, %v6675
  %v6994 = vmul.f32 %v6397, %v6689
  %v6995 = vmul.f32 %v6399, %v6703
  %v6996 = vmul.f32 %v6401, %v6717
  %v6997 = vmul.f32 %v6403, %v6731
  %v6998 = vmul.f32 %v6405, %v6745
  %v6999 = vmul.f32 %v6407, %v6759
  %v7000 = vmul.f32 %v6409, %v6773
  %v7001 = vmul.f32 %v6411, %v6787
  %v7002 = vmul.f32 %v6413, %v6801
  %v7003 = vmul.f32 %v6415, %v6815
  %v7004 = vmul.f32 %v6417, %v6829
  %v7005 = vmul.f32 %v6419, %v6843
  %v7006 = vmul.f32 %v6421, %v6857
  %v7007 = vmul.f32 %v6423, %v6871
  %v7008 = vmul.f32 %v6425, %v6885
  %v7009 = vmul.f32 %v6427, %v6899
  %v7010 = vmul.f32 %v6429, %v6913
  %v7011 = vmul.f32 %v6431, %v6927
  %v7012 = vmul.f32 %v6433, %v6941
  %v7013 = vmul.f32 %v6435, %v6955
  %v7014 = vmul.f32 %v6437, %v6969
  %v7015 = vmul.f32 %v6439, %v6983
  %v7017 = vsel %vm1407, %v6984, 0
  %7019 = vmatpush.msra.mxu0 0.0
  %7020 = vmatpush.msra.mxu0 0.0
  %7021 = vmatpush.msra.mxu0 0.0
  %7022 = vmatpush.msra.mxu0 0.0
  %7023 = vmatpush.msra.mxu0 0.0
  %7024 = vmatpush.msra.mxu0 0.0
  %7025 = vmatpush.msra.mxu0 0.0
  %7026 = vmatpush.msra.mxu0 0.0
  %7027 = vmatpush.msra.mxu0 0.0
  %7028 = vmatpush.msra.mxu0 0.0
  %7029 = vmatpush.msra.mxu0 0.0
  %7030 = vmatpush.msra.mxu0 0.0
  %7031 = vmatpush.msra.mxu0 0.0
  %7032 = vmatpush.msra.mxu0 0.0
  %7033 = vmatpush.msra.mxu0 0.0
  %7034 = vmatpush.msra.mxu0 %v2177
  %7035 = vmatmul.f32.gmra.mxu0 %v7017
  %v7036 = vpop.f32.mrf.mxu0
  %v7037 = vadd.f32 0.0, %v7036
  %7038 = vdwg.mxu0
  %v7040 = vsel %vm1407, %v6985, 0
  %7042 = vmatpush.msra.mxu0 0.0
  %7043 = vmatpush.msra.mxu0 0.0
  %7044 = vmatpush.msra.mxu0 0.0
  %7045 = vmatpush.msra.mxu0 0.0
  %7046 = vmatpush.msra.mxu0 0.0
  %7047 = vmatpush.msra.mxu0 0.0
  %7048 = vmatpush.msra.mxu0 0.0
  %7049 = vmatpush.msra.mxu0 0.0
  %7050 = vmatpush.msra.mxu0 0.0
  %7051 = vmatpush.msra.mxu0 0.0
  %7052 = vmatpush.msra.mxu0 0.0
  %7053 = vmatpush.msra.mxu0 0.0
  %7054 = vmatpush.msra.mxu0 0.0
  %7055 = vmatpush.msra.mxu0 0.0
  %7056 = vmatpush.msra.mxu0 0.0
  %7057 = vmatpush.msra.mxu0 %v2203
  %7058 = vmatmul.f32.gmra.mxu0 %v7040
  %v7059 = vpop.f32.mrf.mxu0
  %v7060 = vadd.f32 0.0, %v7059
  %7061 = vdwg.mxu0
  %v7063 = vsel %vm1407, %v6986, 0
  %7065 = vmatpush.msra.mxu0 0.0
  %7066 = vmatpush.msra.mxu0 0.0
  %7067 = vmatpush.msra.mxu0 0.0
  %7068 = vmatpush.msra.mxu0 0.0
  %7069 = vmatpush.msra.mxu0 0.0
  %7070 = vmatpush.msra.mxu0 0.0
  %7071 = vmatpush.msra.mxu0 0.0
  %7072 = vmatpush.msra.mxu0 0.0
  %7073 = vmatpush.msra.mxu0 0.0
  %7074 = vmatpush.msra.mxu0 0.0
  %7075 = vmatpush.msra.mxu0 0.0
  %7076 = vmatpush.msra.mxu0 0.0
  %7077 = vmatpush.msra.mxu0 0.0
  %7078 = vmatpush.msra.mxu0 0.0
  %7079 = vmatpush.msra.mxu0 0.0
  %7080 = vmatpush.msra.mxu0 %v2229
  %7081 = vmatmul.f32.gmra.mxu0 %v7063
  %v7082 = vpop.f32.mrf.mxu0
  %v7083 = vadd.f32 0.0, %v7082
  %7084 = vdwg.mxu0
  %v7086 = vsel %vm1407, %v6987, 0
  %7088 = vmatpush.msra.mxu0 0.0
  %7089 = vmatpush.msra.mxu0 0.0
  %7090 = vmatpush.msra.mxu0 0.0
  %7091 = vmatpush.msra.mxu0 0.0
  %7092 = vmatpush.msra.mxu0 0.0
  %7093 = vmatpush.msra.mxu0 0.0
  %7094 = vmatpush.msra.mxu0 0.0
  %7095 = vmatpush.msra.mxu0 0.0
  %7096 = vmatpush.msra.mxu0 0.0
  %7097 = vmatpush.msra.mxu0 0.0
  %7098 = vmatpush.msra.mxu0 0.0
  %7099 = vmatpush.msra.mxu0 0.0
  %7100 = vmatpush.msra.mxu0 0.0
  %7101 = vmatpush.msra.mxu0 0.0
  %7102 = vmatpush.msra.mxu0 0.0
  %7103 = vmatpush.msra.mxu0 %v2255
  %7104 = vmatmul.f32.gmra.mxu0 %v7086
  %v7105 = vpop.f32.mrf.mxu0
  %v7106 = vadd.f32 0.0, %v7105
  %7107 = vdwg.mxu0
  %v7109 = vsel %vm1407, %v6988, 0
  %7111 = vmatpush.msra.mxu0 0.0
  %7112 = vmatpush.msra.mxu0 0.0
  %7113 = vmatpush.msra.mxu0 0.0
  %7114 = vmatpush.msra.mxu0 0.0
  %7115 = vmatpush.msra.mxu0 0.0
  %7116 = vmatpush.msra.mxu0 0.0
  %7117 = vmatpush.msra.mxu0 0.0
  %7118 = vmatpush.msra.mxu0 0.0
  %7119 = vmatpush.msra.mxu0 0.0
  %7120 = vmatpush.msra.mxu0 0.0
  %7121 = vmatpush.msra.mxu0 0.0
  %7122 = vmatpush.msra.mxu0 0.0
  %7123 = vmatpush.msra.mxu0 0.0
  %7124 = vmatpush.msra.mxu0 0.0
  %7125 = vmatpush.msra.mxu0 0.0
  %7126 = vmatpush.msra.mxu0 %v2281
  %7127 = vmatmul.f32.gmra.mxu0 %v7109
  %v7128 = vpop.f32.mrf.mxu0
  %v7129 = vadd.f32 0.0, %v7128
  %7130 = vdwg.mxu0
  %v7132 = vsel %vm1407, %v6989, 0
  %7134 = vmatpush.msra.mxu0 0.0
  %7135 = vmatpush.msra.mxu0 0.0
  %7136 = vmatpush.msra.mxu0 0.0
  %7137 = vmatpush.msra.mxu0 0.0
  %7138 = vmatpush.msra.mxu0 0.0
  %7139 = vmatpush.msra.mxu0 0.0
  %7140 = vmatpush.msra.mxu0 0.0
  %7141 = vmatpush.msra.mxu0 0.0
  %7142 = vmatpush.msra.mxu0 0.0
  %7143 = vmatpush.msra.mxu0 0.0
  %7144 = vmatpush.msra.mxu0 0.0
  %7145 = vmatpush.msra.mxu0 0.0
  %7146 = vmatpush.msra.mxu0 0.0
  %7147 = vmatpush.msra.mxu0 0.0
  %7148 = vmatpush.msra.mxu0 0.0
  %7149 = vmatpush.msra.mxu0 %v2307
  %7150 = vmatmul.f32.gmra.mxu0 %v7132
  %v7151 = vpop.f32.mrf.mxu0
  %v7152 = vadd.f32 0.0, %v7151
  %7153 = vdwg.mxu0
  %v7155 = vsel %vm1407, %v6990, 0
  %7157 = vmatpush.msra.mxu0 0.0
  %7158 = vmatpush.msra.mxu0 0.0
  %7159 = vmatpush.msra.mxu0 0.0
  %7160 = vmatpush.msra.mxu0 0.0
  %7161 = vmatpush.msra.mxu0 0.0
  %7162 = vmatpush.msra.mxu0 0.0
  %7163 = vmatpush.msra.mxu0 0.0
  %7164 = vmatpush.msra.mxu0 0.0
  %7165 = vmatpush.msra.mxu0 0.0
  %7166 = vmatpush.msra.mxu0 0.0
  %7167 = vmatpush.msra.mxu0 0.0
  %7168 = vmatpush.msra.mxu0 0.0
  %7169 = vmatpush.msra.mxu0 0.0
  %7170 = vmatpush.msra.mxu0 0.0
  %7171 = vmatpush.msra.mxu0 0.0
  %7172 = vmatpush.msra.mxu0 %v2333
  %7173 = vmatmul.f32.gmra.mxu0 %v7155
  %v7174 = vpop.f32.mrf.mxu0
  %v7175 = vadd.f32 0.0, %v7174
  %7176 = vdwg.mxu0
  %v7178 = vsel %vm1407, %v6991, 0
  %7180 = vmatpush.msra.mxu0 0.0
  %7181 = vmatpush.msra.mxu0 0.0
  %7182 = vmatpush.msra.mxu0 0.0
  %7183 = vmatpush.msra.mxu0 0.0
  %7184 = vmatpush.msra.mxu0 0.0
  %7185 = vmatpush.msra.mxu0 0.0
  %7186 = vmatpush.msra.mxu0 0.0
  %7187 = vmatpush.msra.mxu0 0.0
  %7188 = vmatpush.msra.mxu0 0.0
  %7189 = vmatpush.msra.mxu0 0.0
  %7190 = vmatpush.msra.mxu0 0.0
  %7191 = vmatpush.msra.mxu0 0.0
  %7192 = vmatpush.msra.mxu0 0.0
  %7193 = vmatpush.msra.mxu0 0.0
  %7194 = vmatpush.msra.mxu0 0.0
  %7195 = vmatpush.msra.mxu0 %v2359
  %7196 = vmatmul.f32.gmra.mxu0 %v7178
  %v7197 = vpop.f32.mrf.mxu0
  %v7198 = vadd.f32 0.0, %v7197
  %7199 = vdwg.mxu0
  %v7201 = vsel %vm1407, %v6992, 0
  %7203 = vmatpush.msra.mxu0 0.0
  %7204 = vmatpush.msra.mxu0 0.0
  %7205 = vmatpush.msra.mxu0 0.0
  %7206 = vmatpush.msra.mxu0 0.0
  %7207 = vmatpush.msra.mxu0 0.0
  %7208 = vmatpush.msra.mxu0 0.0
  %7209 = vmatpush.msra.mxu0 0.0
  %7210 = vmatpush.msra.mxu0 0.0
  %7211 = vmatpush.msra.mxu0 0.0
  %7212 = vmatpush.msra.mxu0 0.0
  %7213 = vmatpush.msra.mxu0 0.0
  %7214 = vmatpush.msra.mxu0 0.0
  %7215 = vmatpush.msra.mxu0 0.0
  %7216 = vmatpush.msra.mxu0 0.0
  %7217 = vmatpush.msra.mxu0 0.0
  %7218 = vmatpush.msra.mxu0 %v2385
  %7219 = vmatmul.f32.gmra.mxu0 %v7201
  %v7220 = vpop.f32.mrf.mxu0
  %v7221 = vadd.f32 0.0, %v7220
  %7222 = vdwg.mxu0
  %v7224 = vsel %vm1407, %v6993, 0
  %7226 = vmatpush.msra.mxu0 0.0
  %7227 = vmatpush.msra.mxu0 0.0
  %7228 = vmatpush.msra.mxu0 0.0
  %7229 = vmatpush.msra.mxu0 0.0
  %7230 = vmatpush.msra.mxu0 0.0
  %7231 = vmatpush.msra.mxu0 0.0
  %7232 = vmatpush.msra.mxu0 0.0
  %7233 = vmatpush.msra.mxu0 0.0
  %7234 = vmatpush.msra.mxu0 0.0
  %7235 = vmatpush.msra.mxu0 0.0
  %7236 = vmatpush.msra.mxu0 0.0
  %7237 = vmatpush.msra.mxu0 0.0
  %7238 = vmatpush.msra.mxu0 0.0
  %7239 = vmatpush.msra.mxu0 0.0
  %7240 = vmatpush.msra.mxu0 0.0
  %7241 = vmatpush.msra.mxu0 %v2411
  %7242 = vmatmul.f32.gmra.mxu0 %v7224
  %v7243 = vpop.f32.mrf.mxu0
  %v7244 = vadd.f32 0.0, %v7243
  %7245 = vdwg.mxu0
  %v7247 = vsel %vm1407, %v6994, 0
  %7249 = vmatpush.msra.mxu0 0.0
  %7250 = vmatpush.msra.mxu0 0.0
  %7251 = vmatpush.msra.mxu0 0.0
  %7252 = vmatpush.msra.mxu0 0.0
  %7253 = vmatpush.msra.mxu0 0.0
  %7254 = vmatpush.msra.mxu0 0.0
  %7255 = vmatpush.msra.mxu0 0.0
  %7256 = vmatpush.msra.mxu0 0.0
  %7257 = vmatpush.msra.mxu0 0.0
  %7258 = vmatpush.msra.mxu0 0.0
  %7259 = vmatpush.msra.mxu0 0.0
  %7260 = vmatpush.msra.mxu0 0.0
  %7261 = vmatpush.msra.mxu0 0.0
  %7262 = vmatpush.msra.mxu0 0.0
  %7263 = vmatpush.msra.mxu0 0.0
  %7264 = vmatpush.msra.mxu0 %v2437
  %7265 = vmatmul.f32.gmra.mxu0 %v7247
  %v7266 = vpop.f32.mrf.mxu0
  %v7267 = vadd.f32 0.0, %v7266
  %7268 = vdwg.mxu0
  %v7270 = vsel %vm1407, %v6995, 0
  %7272 = vmatpush.msra.mxu0 0.0
  %7273 = vmatpush.msra.mxu0 0.0
  %7274 = vmatpush.msra.mxu0 0.0
  %7275 = vmatpush.msra.mxu0 0.0
  %7276 = vmatpush.msra.mxu0 0.0
  %7277 = vmatpush.msra.mxu0 0.0
  %7278 = vmatpush.msra.mxu0 0.0
  %7279 = vmatpush.msra.mxu0 0.0
  %7280 = vmatpush.msra.mxu0 0.0
  %7281 = vmatpush.msra.mxu0 0.0
  %7282 = vmatpush.msra.mxu0 0.0
  %7283 = vmatpush.msra.mxu0 0.0
  %7284 = vmatpush.msra.mxu0 0.0
  %7285 = vmatpush.msra.mxu0 0.0
  %7286 = vmatpush.msra.mxu0 0.0
  %7287 = vmatpush.msra.mxu0 %v2463
  %7288 = vmatmul.f32.gmra.mxu0 %v7270
  %v7289 = vpop.f32.mrf.mxu0
  %v7290 = vadd.f32 0.0, %v7289
  %7291 = vdwg.mxu0
  %v7293 = vsel %vm1407, %v6996, 0
  %7295 = vmatpush.msra.mxu0 0.0
  %7296 = vmatpush.msra.mxu0 0.0
  %7297 = vmatpush.msra.mxu0 0.0
  %7298 = vmatpush.msra.mxu0 0.0
  %7299 = vmatpush.msra.mxu0 0.0
  %7300 = vmatpush.msra.mxu0 0.0
  %7301 = vmatpush.msra.mxu0 0.0
  %7302 = vmatpush.msra.mxu0 0.0
  %7303 = vmatpush.msra.mxu0 0.0
  %7304 = vmatpush.msra.mxu0 0.0
  %7305 = vmatpush.msra.mxu0 0.0
  %7306 = vmatpush.msra.mxu0 0.0
  %7307 = vmatpush.msra.mxu0 0.0
  %7308 = vmatpush.msra.mxu0 0.0
  %7309 = vmatpush.msra.mxu0 0.0
  %7310 = vmatpush.msra.mxu0 %v2489
  %7311 = vmatmul.f32.gmra.mxu0 %v7293
  %v7312 = vpop.f32.mrf.mxu0
  %v7313 = vadd.f32 0.0, %v7312
  %7314 = vdwg.mxu0
  %v7316 = vsel %vm1407, %v6997, 0
  %7318 = vmatpush.msra.mxu0 0.0
  %7319 = vmatpush.msra.mxu0 0.0
  %7320 = vmatpush.msra.mxu0 0.0
  %7321 = vmatpush.msra.mxu0 0.0
  %7322 = vmatpush.msra.mxu0 0.0
  %7323 = vmatpush.msra.mxu0 0.0
  %7324 = vmatpush.msra.mxu0 0.0
  %7325 = vmatpush.msra.mxu0 0.0
  %7326 = vmatpush.msra.mxu0 0.0
  %7327 = vmatpush.msra.mxu0 0.0
  %7328 = vmatpush.msra.mxu0 0.0
  %7329 = vmatpush.msra.mxu0 0.0
  %7330 = vmatpush.msra.mxu0 0.0
  %7331 = vmatpush.msra.mxu0 0.0
  %7332 = vmatpush.msra.mxu0 0.0
  %7333 = vmatpush.msra.mxu0 %v2515
  %7334 = vmatmul.f32.gmra.mxu0 %v7316
  %v7335 = vpop.f32.mrf.mxu0
  %v7336 = vadd.f32 0.0, %v7335
  %7337 = vdwg.mxu0
  %v7339 = vsel %vm1407, %v6998, 0
  %7341 = vmatpush.msra.mxu0 0.0
  %7342 = vmatpush.msra.mxu0 0.0
  %7343 = vmatpush.msra.mxu0 0.0
  %7344 = vmatpush.msra.mxu0 0.0
  %7345 = vmatpush.msra.mxu0 0.0
  %7346 = vmatpush.msra.mxu0 0.0
  %7347 = vmatpush.msra.mxu0 0.0
  %7348 = vmatpush.msra.mxu0 0.0
  %7349 = vmatpush.msra.mxu0 0.0
  %7350 = vmatpush.msra.mxu0 0.0
  %7351 = vmatpush.msra.mxu0 0.0
  %7352 = vmatpush.msra.mxu0 0.0
  %7353 = vmatpush.msra.mxu0 0.0
  %7354 = vmatpush.msra.mxu0 0.0
  %7355 = vmatpush.msra.mxu0 0.0
  %7356 = vmatpush.msra.mxu0 %v2541
  %7357 = vmatmul.f32.gmra.mxu0 %v7339
  %v7358 = vpop.f32.mrf.mxu0
  %v7359 = vadd.f32 0.0, %v7358
  %7360 = vdwg.mxu0
  %v7362 = vsel %vm1407, %v6999, 0
  %7364 = vmatpush.msra.mxu0 0.0
  %7365 = vmatpush.msra.mxu0 0.0
  %7366 = vmatpush.msra.mxu0 0.0
  %7367 = vmatpush.msra.mxu0 0.0
  %7368 = vmatpush.msra.mxu0 0.0
  %7369 = vmatpush.msra.mxu0 0.0
  %7370 = vmatpush.msra.mxu0 0.0
  %7371 = vmatpush.msra.mxu0 0.0
  %7372 = vmatpush.msra.mxu0 0.0
  %7373 = vmatpush.msra.mxu0 0.0
  %7374 = vmatpush.msra.mxu0 0.0
  %7375 = vmatpush.msra.mxu0 0.0
  %7376 = vmatpush.msra.mxu0 0.0
  %7377 = vmatpush.msra.mxu0 0.0
  %7378 = vmatpush.msra.mxu0 0.0
  %7379 = vmatpush.msra.mxu0 %v2567
  %7380 = vmatmul.f32.gmra.mxu0 %v7362
  %v7381 = vpop.f32.mrf.mxu0
  %v7382 = vadd.f32 0.0, %v7381
  %7383 = vdwg.mxu0
  %v7385 = vsel %vm1407, %v7000, 0
  %7387 = vmatpush.msra.mxu0 0.0
  %7388 = vmatpush.msra.mxu0 0.0
  %7389 = vmatpush.msra.mxu0 0.0
  %7390 = vmatpush.msra.mxu0 0.0
  %7391 = vmatpush.msra.mxu0 0.0
  %7392 = vmatpush.msra.mxu0 0.0
  %7393 = vmatpush.msra.mxu0 0.0
  %7394 = vmatpush.msra.mxu0 0.0
  %7395 = vmatpush.msra.mxu0 0.0
  %7396 = vmatpush.msra.mxu0 0.0
  %7397 = vmatpush.msra.mxu0 0.0
  %7398 = vmatpush.msra.mxu0 0.0
  %7399 = vmatpush.msra.mxu0 0.0
  %7400 = vmatpush.msra.mxu0 0.0
  %7401 = vmatpush.msra.mxu0 0.0
  %7402 = vmatpush.msra.mxu0 %v2593
  %7403 = vmatmul.f32.gmra.mxu0 %v7385
  %v7404 = vpop.f32.mrf.mxu0
  %v7405 = vadd.f32 0.0, %v7404
  %7406 = vdwg.mxu0
  %v7408 = vsel %vm1407, %v7001, 0
  %7410 = vmatpush.msra.mxu0 0.0
  %7411 = vmatpush.msra.mxu0 0.0
  %7412 = vmatpush.msra.mxu0 0.0
  %7413 = vmatpush.msra.mxu0 0.0
  %7414 = vmatpush.msra.mxu0 0.0
  %7415 = vmatpush.msra.mxu0 0.0
  %7416 = vmatpush.msra.mxu0 0.0
  %7417 = vmatpush.msra.mxu0 0.0
  %7418 = vmatpush.msra.mxu0 0.0
  %7419 = vmatpush.msra.mxu0 0.0
  %7420 = vmatpush.msra.mxu0 0.0
  %7421 = vmatpush.msra.mxu0 0.0
  %7422 = vmatpush.msra.mxu0 0.0
  %7423 = vmatpush.msra.mxu0 0.0
  %7424 = vmatpush.msra.mxu0 0.0
  %7425 = vmatpush.msra.mxu0 %v2619
  %7426 = vmatmul.f32.gmra.mxu0 %v7408
  %v7427 = vpop.f32.mrf.mxu0
  %v7428 = vadd.f32 0.0, %v7427
  %7429 = vdwg.mxu0
  %v7431 = vsel %vm1407, %v7002, 0
  %7433 = vmatpush.msra.mxu0 0.0
  %7434 = vmatpush.msra.mxu0 0.0
  %7435 = vmatpush.msra.mxu0 0.0
  %7436 = vmatpush.msra.mxu0 0.0
  %7437 = vmatpush.msra.mxu0 0.0
  %7438 = vmatpush.msra.mxu0 0.0
  %7439 = vmatpush.msra.mxu0 0.0
  %7440 = vmatpush.msra.mxu0 0.0
  %7441 = vmatpush.msra.mxu0 0.0
  %7442 = vmatpush.msra.mxu0 0.0
  %7443 = vmatpush.msra.mxu0 0.0
  %7444 = vmatpush.msra.mxu0 0.0
  %7445 = vmatpush.msra.mxu0 0.0
  %7446 = vmatpush.msra.mxu0 0.0
  %7447 = vmatpush.msra.mxu0 0.0
  %7448 = vmatpush.msra.mxu0 %v2645
  %7449 = vmatmul.f32.gmra.mxu0 %v7431
  %v7450 = vpop.f32.mrf.mxu0
  %v7451 = vadd.f32 0.0, %v7450
  %7452 = vdwg.mxu0
  %v7454 = vsel %vm1407, %v7003, 0
  %7456 = vmatpush.msra.mxu0 0.0
  %7457 = vmatpush.msra.mxu0 0.0
  %7458 = vmatpush.msra.mxu0 0.0
  %7459 = vmatpush.msra.mxu0 0.0
  %7460 = vmatpush.msra.mxu0 0.0
  %7461 = vmatpush.msra.mxu0 0.0
  %7462 = vmatpush.msra.mxu0 0.0
  %7463 = vmatpush.msra.mxu0 0.0
  %7464 = vmatpush.msra.mxu0 0.0
  %7465 = vmatpush.msra.mxu0 0.0
  %7466 = vmatpush.msra.mxu0 0.0
  %7467 = vmatpush.msra.mxu0 0.0
  %7468 = vmatpush.msra.mxu0 0.0
  %7469 = vmatpush.msra.mxu0 0.0
  %7470 = vmatpush.msra.mxu0 0.0
  %7471 = vmatpush.msra.mxu0 %v2671
  %7472 = vmatmul.f32.gmra.mxu0 %v7454
  %v7473 = vpop.f32.mrf.mxu0
  %v7474 = vadd.f32 0.0, %v7473
  %7475 = vdwg.mxu0
  %v7477 = vsel %vm1407, %v7004, 0
  %7479 = vmatpush.msra.mxu0 0.0
  %7480 = vmatpush.msra.mxu0 0.0
  %7481 = vmatpush.msra.mxu0 0.0
  %7482 = vmatpush.msra.mxu0 0.0
  %7483 = vmatpush.msra.mxu0 0.0
  %7484 = vmatpush.msra.mxu0 0.0
  %7485 = vmatpush.msra.mxu0 0.0
  %7486 = vmatpush.msra.mxu0 0.0
  %7487 = vmatpush.msra.mxu0 0.0
  %7488 = vmatpush.msra.mxu0 0.0
  %7489 = vmatpush.msra.mxu0 0.0
  %7490 = vmatpush.msra.mxu0 0.0
  %7491 = vmatpush.msra.mxu0 0.0
  %7492 = vmatpush.msra.mxu0 0.0
  %7493 = vmatpush.msra.mxu0 0.0
  %7494 = vmatpush.msra.mxu0 %v2697
  %7495 = vmatmul.f32.gmra.mxu0 %v7477
  %v7496 = vpop.f32.mrf.mxu0
  %v7497 = vadd.f32 0.0, %v7496
  %7498 = vdwg.mxu0
  %v7500 = vsel %vm1407, %v7005, 0
  %7502 = vmatpush.msra.mxu0 0.0
  %7503 = vmatpush.msra.mxu0 0.0
  %7504 = vmatpush.msra.mxu0 0.0
  %7505 = vmatpush.msra.mxu0 0.0
  %7506 = vmatpush.msra.mxu0 0.0
  %7507 = vmatpush.msra.mxu0 0.0
  %7508 = vmatpush.msra.mxu0 0.0
  %7509 = vmatpush.msra.mxu0 0.0
  %7510 = vmatpush.msra.mxu0 0.0
  %7511 = vmatpush.msra.mxu0 0.0
  %7512 = vmatpush.msra.mxu0 0.0
  %7513 = vmatpush.msra.mxu0 0.0
  %7514 = vmatpush.msra.mxu0 0.0
  %7515 = vmatpush.msra.mxu0 0.0
  %7516 = vmatpush.msra.mxu0 0.0
  %7517 = vmatpush.msra.mxu0 %v2723
  %7518 = vmatmul.f32.gmra.mxu0 %v7500
  %v7519 = vpop.f32.mrf.mxu0
  %v7520 = vadd.f32 0.0, %v7519
  %7521 = vdwg.mxu0
  %v7523 = vsel %vm1407, %v7006, 0
  %7525 = vmatpush.msra.mxu0 0.0
  %7526 = vmatpush.msra.mxu0 0.0
  %7527 = vmatpush.msra.mxu0 0.0
  %7528 = vmatpush.msra.mxu0 0.0
  %7529 = vmatpush.msra.mxu0 0.0
  %7530 = vmatpush.msra.mxu0 0.0
  %7531 = vmatpush.msra.mxu0 0.0
  %7532 = vmatpush.msra.mxu0 0.0
  %7533 = vmatpush.msra.mxu0 0.0
  %7534 = vmatpush.msra.mxu0 0.0
  %7535 = vmatpush.msra.mxu0 0.0
  %7536 = vmatpush.msra.mxu0 0.0
  %7537 = vmatpush.msra.mxu0 0.0
  %7538 = vmatpush.msra.mxu0 0.0
  %7539 = vmatpush.msra.mxu0 0.0
  %7540 = vmatpush.msra.mxu0 %v2749
  %7541 = vmatmul.f32.gmra.mxu0 %v7523
  %v7542 = vpop.f32.mrf.mxu0
  %v7543 = vadd.f32 0.0, %v7542
  %7544 = vdwg.mxu0
  %v7546 = vsel %vm1407, %v7007, 0
  %7548 = vmatpush.msra.mxu0 0.0
  %7549 = vmatpush.msra.mxu0 0.0
  %7550 = vmatpush.msra.mxu0 0.0
  %7551 = vmatpush.msra.mxu0 0.0
  %7552 = vmatpush.msra.mxu0 0.0
  %7553 = vmatpush.msra.mxu0 0.0
  %7554 = vmatpush.msra.mxu0 0.0
  %7555 = vmatpush.msra.mxu0 0.0
  %7556 = vmatpush.msra.mxu0 0.0
  %7557 = vmatpush.msra.mxu0 0.0
  %7558 = vmatpush.msra.mxu0 0.0
  %7559 = vmatpush.msra.mxu0 0.0
  %7560 = vmatpush.msra.mxu0 0.0
  %7561 = vmatpush.msra.mxu0 0.0
  %7562 = vmatpush.msra.mxu0 0.0
  %7563 = vmatpush.msra.mxu0 %v2775
  %7564 = vmatmul.f32.gmra.mxu0 %v7546
  %v7565 = vpop.f32.mrf.mxu0
  %v7566 = vadd.f32 0.0, %v7565
  %7567 = vdwg.mxu0
  %v7569 = vsel %vm1407, %v7008, 0
  %7571 = vmatpush.msra.mxu0 0.0
  %7572 = vmatpush.msra.mxu0 0.0
  %7573 = vmatpush.msra.mxu0 0.0
  %7574 = vmatpush.msra.mxu0 0.0
  %7575 = vmatpush.msra.mxu0 0.0
  %7576 = vmatpush.msra.mxu0 0.0
  %7577 = vmatpush.msra.mxu0 0.0
  %7578 = vmatpush.msra.mxu0 0.0
  %7579 = vmatpush.msra.mxu0 0.0
  %7580 = vmatpush.msra.mxu0 0.0
  %7581 = vmatpush.msra.mxu0 0.0
  %7582 = vmatpush.msra.mxu0 0.0
  %7583 = vmatpush.msra.mxu0 0.0
  %7584 = vmatpush.msra.mxu0 0.0
  %7585 = vmatpush.msra.mxu0 0.0
  %7586 = vmatpush.msra.mxu0 %v2801
  %7587 = vmatmul.f32.gmra.mxu0 %v7569
  %v7588 = vpop.f32.mrf.mxu0
  %v7589 = vadd.f32 0.0, %v7588
  %7590 = vdwg.mxu0
  %v7592 = vsel %vm1407, %v7009, 0
  %7594 = vmatpush.msra.mxu0 0.0
  %7595 = vmatpush.msra.mxu0 0.0
  %7596 = vmatpush.msra.mxu0 0.0
  %7597 = vmatpush.msra.mxu0 0.0
  %7598 = vmatpush.msra.mxu0 0.0
  %7599 = vmatpush.msra.mxu0 0.0
  %7600 = vmatpush.msra.mxu0 0.0
  %7601 = vmatpush.msra.mxu0 0.0
  %7602 = vmatpush.msra.mxu0 0.0
  %7603 = vmatpush.msra.mxu0 0.0
  %7604 = vmatpush.msra.mxu0 0.0
  %7605 = vmatpush.msra.mxu0 0.0
  %7606 = vmatpush.msra.mxu0 0.0
  %7607 = vmatpush.msra.mxu0 0.0
  %7608 = vmatpush.msra.mxu0 0.0
  %7609 = vmatpush.msra.mxu0 %v2827
  %7610 = vmatmul.f32.gmra.mxu0 %v7592
  %v7611 = vpop.f32.mrf.mxu0
  %v7612 = vadd.f32 0.0, %v7611
  %7613 = vdwg.mxu0
  %v7615 = vsel %vm1407, %v7010, 0
  %7617 = vmatpush.msra.mxu0 0.0
  %7618 = vmatpush.msra.mxu0 0.0
  %7619 = vmatpush.msra.mxu0 0.0
  %7620 = vmatpush.msra.mxu0 0.0
  %7621 = vmatpush.msra.mxu0 0.0
  %7622 = vmatpush.msra.mxu0 0.0
  %7623 = vmatpush.msra.mxu0 0.0
  %7624 = vmatpush.msra.mxu0 0.0
  %7625 = vmatpush.msra.mxu0 0.0
  %7626 = vmatpush.msra.mxu0 0.0
  %7627 = vmatpush.msra.mxu0 0.0
  %7628 = vmatpush.msra.mxu0 0.0
  %7629 = vmatpush.msra.mxu0 0.0
  %7630 = vmatpush.msra.mxu0 0.0
  %7631 = vmatpush.msra.mxu0 0.0
  %7632 = vmatpush.msra.mxu0 %v2853
  %7633 = vmatmul.f32.gmra.mxu0 %v7615
  %v7634 = vpop.f32.mrf.mxu0
  %v7635 = vadd.f32 0.0, %v7634
  %7636 = vdwg.mxu0
  %v7638 = vsel %vm1407, %v7011, 0
  %7640 = vmatpush.msra.mxu0 0.0
  %7641 = vmatpush.msra.mxu0 0.0
  %7642 = vmatpush.msra.mxu0 0.0
  %7643 = vmatpush.msra.mxu0 0.0
  %7644 = vmatpush.msra.mxu0 0.0
  %7645 = vmatpush.msra.mxu0 0.0
  %7646 = vmatpush.msra.mxu0 0.0
  %7647 = vmatpush.msra.mxu0 0.0
  %7648 = vmatpush.msra.mxu0 0.0
  %7649 = vmatpush.msra.mxu0 0.0
  %7650 = vmatpush.msra.mxu0 0.0
  %7651 = vmatpush.msra.mxu0 0.0
  %7652 = vmatpush.msra.mxu0 0.0
  %7653 = vmatpush.msra.mxu0 0.0
  %7654 = vmatpush.msra.mxu0 0.0
  %7655 = vmatpush.msra.mxu0 %v2879
  %7656 = vmatmul.f32.gmra.mxu0 %v7638
  %v7657 = vpop.f32.mrf.mxu0
  %v7658 = vadd.f32 0.0, %v7657
  %7659 = vdwg.mxu0
  %v7661 = vsel %vm1407, %v7012, 0
  %7663 = vmatpush.msra.mxu0 0.0
  %7664 = vmatpush.msra.mxu0 0.0
  %7665 = vmatpush.msra.mxu0 0.0
  %7666 = vmatpush.msra.mxu0 0.0
  %7667 = vmatpush.msra.mxu0 0.0
  %7668 = vmatpush.msra.mxu0 0.0
  %7669 = vmatpush.msra.mxu0 0.0
  %7670 = vmatpush.msra.mxu0 0.0
  %7671 = vmatpush.msra.mxu0 0.0
  %7672 = vmatpush.msra.mxu0 0.0
  %7673 = vmatpush.msra.mxu0 0.0
  %7674 = vmatpush.msra.mxu0 0.0
  %7675 = vmatpush.msra.mxu0 0.0
  %7676 = vmatpush.msra.mxu0 0.0
  %7677 = vmatpush.msra.mxu0 0.0
  %7678 = vmatpush.msra.mxu0 %v2905
  %7679 = vmatmul.f32.gmra.mxu0 %v7661
  %v7680 = vpop.f32.mrf.mxu0
  %v7681 = vadd.f32 0.0, %v7680
  %7682 = vdwg.mxu0
  %v7684 = vsel %vm1407, %v7013, 0
  %7686 = vmatpush.msra.mxu0 0.0
  %7687 = vmatpush.msra.mxu0 0.0
  %7688 = vmatpush.msra.mxu0 0.0
  %7689 = vmatpush.msra.mxu0 0.0
  %7690 = vmatpush.msra.mxu0 0.0
  %7691 = vmatpush.msra.mxu0 0.0
  %7692 = vmatpush.msra.mxu0 0.0
  %7693 = vmatpush.msra.mxu0 0.0
  %7694 = vmatpush.msra.mxu0 0.0
  %7695 = vmatpush.msra.mxu0 0.0
  %7696 = vmatpush.msra.mxu0 0.0
  %7697 = vmatpush.msra.mxu0 0.0
  %7698 = vmatpush.msra.mxu0 0.0
  %7699 = vmatpush.msra.mxu0 0.0
  %7700 = vmatpush.msra.mxu0 0.0
  %7701 = vmatpush.msra.mxu0 %v2931
  %7702 = vmatmul.f32.gmra.mxu0 %v7684
  %v7703 = vpop.f32.mrf.mxu0
  %v7704 = vadd.f32 0.0, %v7703
  %7705 = vdwg.mxu0
  %v7707 = vsel %vm1407, %v7014, 0
  %7709 = vmatpush.msra.mxu0 0.0
  %7710 = vmatpush.msra.mxu0 0.0
  %7711 = vmatpush.msra.mxu0 0.0
  %7712 = vmatpush.msra.mxu0 0.0
  %7713 = vmatpush.msra.mxu0 0.0
  %7714 = vmatpush.msra.mxu0 0.0
  %7715 = vmatpush.msra.mxu0 0.0
  %7716 = vmatpush.msra.mxu0 0.0
  %7717 = vmatpush.msra.mxu0 0.0
  %7718 = vmatpush.msra.mxu0 0.0
  %7719 = vmatpush.msra.mxu0 0.0
  %7720 = vmatpush.msra.mxu0 0.0
  %7721 = vmatpush.msra.mxu0 0.0
  %7722 = vmatpush.msra.mxu0 0.0
  %7723 = vmatpush.msra.mxu0 0.0
  %7724 = vmatpush.msra.mxu0 %v2957
  %7725 = vmatmul.f32.gmra.mxu0 %v7707
  %v7726 = vpop.f32.mrf.mxu0
  %v7727 = vadd.f32 0.0, %v7726
  %7728 = vdwg.mxu0
  %v7730 = vsel %vm1407, %v7015, 0
  %7732 = vmatpush.msra.mxu0 0.0
  %7733 = vmatpush.msra.mxu0 0.0
  %7734 = vmatpush.msra.mxu0 0.0
  %7735 = vmatpush.msra.mxu0 0.0
  %7736 = vmatpush.msra.mxu0 0.0
  %7737 = vmatpush.msra.mxu0 0.0
  %7738 = vmatpush.msra.mxu0 0.0
  %7739 = vmatpush.msra.mxu0 0.0
  %7740 = vmatpush.msra.mxu0 0.0
  %7741 = vmatpush.msra.mxu0 0.0
  %7742 = vmatpush.msra.mxu0 0.0
  %7743 = vmatpush.msra.mxu0 0.0
  %7744 = vmatpush.msra.mxu0 0.0
  %7745 = vmatpush.msra.mxu0 0.0
  %7746 = vmatpush.msra.mxu0 0.0
  %7747 = vmatpush.msra.mxu0 %v2983
  %7748 = vmatmul.f32.gmra.mxu0 %v7730
  %v7749 = vpop.f32.mrf.mxu0
  %v7750 = vadd.f32 0.0, %v7749
  %7751 = vdwg.mxu0
  %v7752 = vmul.f32 %v7037, %v5447
  %v7753 = vmul.f32 %v7060, %v5447
  %v7754 = vmul.f32 %v7083, %v5447
  %v7755 = vmul.f32 %v7106, %v5447
  %v7756 = vmul.f32 %v7129, %v5447
  %v7757 = vmul.f32 %v7152, %v5447
  %v7758 = vmul.f32 %v7175, %v5447
  %v7759 = vmul.f32 %v7198, %v5447
  %v7760 = vmul.f32 %v7221, %v5447
  %v7761 = vmul.f32 %v7244, %v5447
  %v7762 = vmul.f32 %v7267, %v5447
  %v7763 = vmul.f32 %v7290, %v5447
  %v7764 = vmul.f32 %v7313, %v5447
  %v7765 = vmul.f32 %v7336, %v5447
  %v7766 = vmul.f32 %v7359, %v5447
  %v7767 = vmul.f32 %v7382, %v5447
  %v7768 = vmul.f32 %v7405, %v5447
  %v7769 = vmul.f32 %v7428, %v5447
  %v7770 = vmul.f32 %v7451, %v5447
  %v7771 = vmul.f32 %v7474, %v5447
  %v7772 = vmul.f32 %v7497, %v5447
  %v7773 = vmul.f32 %v7520, %v5447
  %v7774 = vmul.f32 %v7543, %v5447
  %v7775 = vmul.f32 %v7566, %v5447
  %v7776 = vmul.f32 %v7589, %v5447
  %v7777 = vmul.f32 %v7612, %v5447
  %v7778 = vmul.f32 %v7635, %v5447
  %v7779 = vmul.f32 %v7658, %v5447
  %v7780 = vmul.f32 %v7681, %v5447
  %v7781 = vmul.f32 %v7704, %v5447
  %v7782 = vmul.f32 %v7727, %v5447
  %v7783 = vmul.f32 %v7750, %v5447
  %v7784 = vadd.f32 %v5412, %v7752
  %v7785 = vadd.f32 %v5413, %v7753
  %v7786 = vadd.f32 %v5414, %v7754
  %v7787 = vadd.f32 %v5415, %v7755
  %v7788 = vadd.f32 %v5416, %v7756
  %v7789 = vadd.f32 %v5417, %v7757
  %v7790 = vadd.f32 %v5418, %v7758
  %v7791 = vadd.f32 %v5419, %v7759
  %v7792 = vadd.f32 %v5420, %v7760
  %v7793 = vadd.f32 %v5421, %v7761
  %v7794 = vadd.f32 %v5422, %v7762
  %v7795 = vadd.f32 %v5423, %v7763
  %v7796 = vadd.f32 %v5424, %v7764
  %v7797 = vadd.f32 %v5425, %v7765
  %v7798 = vadd.f32 %v5426, %v7766
  %v7799 = vadd.f32 %v5427, %v7767
  %v7800 = vadd.f32 %v5428, %v7768
  %v7801 = vadd.f32 %v5429, %v7769
  %v7802 = vadd.f32 %v5430, %v7770
  %v7803 = vadd.f32 %v5431, %v7771
  %v7804 = vadd.f32 %v5432, %v7772
  %v7805 = vadd.f32 %v5433, %v7773
  %v7806 = vadd.f32 %v5434, %v7774
  %v7807 = vadd.f32 %v5435, %v7775
  %v7808 = vadd.f32 %v5436, %v7776
  %v7809 = vadd.f32 %v5437, %v7777
  %v7810 = vadd.f32 %v5438, %v7778
  %v7811 = vadd.f32 %v5439, %v7779
  %v7812 = vadd.f32 %v5440, %v7780
  %v7813 = vadd.f32 %v5441, %v7781
  %v7814 = vadd.f32 %v5442, %v7782
  %v7815 = vadd.f32 %v5443, %v7783
  %vm7816 = vcmp.ge.s32.totalorder %v56, 24
  %vm7817 = vcmp.lt.s32.totalorder %v56, 32
  %vm7818 = vmand %vm7816, %vm7817
  %v7819 = vsel %vm7818, 1.0, 0.0
  %v7820 = vmul.f32 %v347, %v7819
  %v7821 = vmul.f32 %v350, %v7819
  %v7822 = vmul.f32 %v353, %v7819
  %v7823 = vmul.f32 %v356, %v7819
  %v7824 = vmul.f32 %v359, %v7819
  %v7825 = vmul.f32 %v362, %v7819
  %v7826 = vmul.f32 %v365, %v7819
  %v7827 = vmul.f32 %v368, %v7819
  %v7828 = vmul.f32 %v371, %v7819
  %v7829 = vmul.f32 %v374, %v7819
  %v7830 = vmul.f32 %v377, %v7819
  %v7831 = vmul.f32 %v380, %v7819
  %v7832 = vmul.f32 %v383, %v7819
  %v7833 = vmul.f32 %v386, %v7819
  %v7834 = vmul.f32 %v389, %v7819
  %v7835 = vmul.f32 %v392, %v7819
  %v7836 = vmul.f32 %v395, %v7819
  %v7837 = vmul.f32 %v398, %v7819
  %v7838 = vmul.f32 %v401, %v7819
  %v7839 = vmul.f32 %v404, %v7819
  %v7840 = vmul.f32 %v407, %v7819
  %v7841 = vmul.f32 %v410, %v7819
  %v7842 = vmul.f32 %v413, %v7819
  %v7843 = vmul.f32 %v416, %v7819
  %v7844 = vmul.f32 %v419, %v7819
  %v7845 = vmul.f32 %v422, %v7819
  %v7846 = vmul.f32 %v425, %v7819
  %v7847 = vmul.f32 %v428, %v7819
  %v7848 = vmul.f32 %v431, %v7819
  %v7849 = vmul.f32 %v434, %v7819
  %v7850 = vmul.f32 %v437, %v7819
  %v7851 = vmul.f32 %v440, %v7819
  %v7853 = vsel %vm481, %v7820, 0
  %7855 = vmatpush.xpose.msra.mxu0 0.0
  %7856 = vmatpush.xpose.msra.mxu0 0.0
  %7857 = vmatpush.xpose.msra.mxu0 0.0
  %7858 = vmatpush.xpose.msra.mxu0 0.0
  %7859 = vmatpush.xpose.msra.mxu0 0.0
  %7860 = vmatpush.xpose.msra.mxu0 0.0
  %7861 = vmatpush.xpose.msra.mxu0 0.0
  %7862 = vmatpush.xpose.msra.mxu0 0.0
  %7863 = vmatpush.xpose.msra.mxu0 0.0
  %7864 = vmatpush.xpose.msra.mxu0 0.0
  %7865 = vmatpush.xpose.msra.mxu0 0.0
  %7866 = vmatpush.xpose.msra.mxu0 0.0
  %7867 = vmatpush.xpose.msra.mxu0 0.0
  %7868 = vmatpush.xpose.msra.mxu0 0.0
  %7869 = vmatpush.xpose.msra.mxu0 0.0
  %7870 = vmatpush.xpose.msra.mxu0 %v485
  %7871 = vmatmul.f32.gmra.mxu0 %v7853
  %v7872 = vpop.f32.mrf.mxu0
  %v7873 = vadd.f32 0.0, %v7872
  %7874 = vdwg.mxu0
  %v7876 = vsel %vm481, %v7821, 0
  %7878 = vmatpush.xpose.msra.mxu0 0.0
  %7879 = vmatpush.xpose.msra.mxu0 0.0
  %7880 = vmatpush.xpose.msra.mxu0 0.0
  %7881 = vmatpush.xpose.msra.mxu0 0.0
  %7882 = vmatpush.xpose.msra.mxu0 0.0
  %7883 = vmatpush.xpose.msra.mxu0 0.0
  %7884 = vmatpush.xpose.msra.mxu0 0.0
  %7885 = vmatpush.xpose.msra.mxu0 0.0
  %7886 = vmatpush.xpose.msra.mxu0 0.0
  %7887 = vmatpush.xpose.msra.mxu0 0.0
  %7888 = vmatpush.xpose.msra.mxu0 0.0
  %7889 = vmatpush.xpose.msra.mxu0 0.0
  %7890 = vmatpush.xpose.msra.mxu0 0.0
  %7891 = vmatpush.xpose.msra.mxu0 0.0
  %7892 = vmatpush.xpose.msra.mxu0 0.0
  %7893 = vmatpush.xpose.msra.mxu0 %v513
  %7894 = vmatmul.f32.gmra.mxu0 %v7876
  %v7895 = vpop.f32.mrf.mxu0
  %v7896 = vadd.f32 0.0, %v7895
  %7897 = vdwg.mxu0
  %v7899 = vsel %vm481, %v7822, 0
  %7901 = vmatpush.xpose.msra.mxu0 0.0
  %7902 = vmatpush.xpose.msra.mxu0 0.0
  %7903 = vmatpush.xpose.msra.mxu0 0.0
  %7904 = vmatpush.xpose.msra.mxu0 0.0
  %7905 = vmatpush.xpose.msra.mxu0 0.0
  %7906 = vmatpush.xpose.msra.mxu0 0.0
  %7907 = vmatpush.xpose.msra.mxu0 0.0
  %7908 = vmatpush.xpose.msra.mxu0 0.0
  %7909 = vmatpush.xpose.msra.mxu0 0.0
  %7910 = vmatpush.xpose.msra.mxu0 0.0
  %7911 = vmatpush.xpose.msra.mxu0 0.0
  %7912 = vmatpush.xpose.msra.mxu0 0.0
  %7913 = vmatpush.xpose.msra.mxu0 0.0
  %7914 = vmatpush.xpose.msra.mxu0 0.0
  %7915 = vmatpush.xpose.msra.mxu0 0.0
  %7916 = vmatpush.xpose.msra.mxu0 %v541
  %7917 = vmatmul.f32.gmra.mxu0 %v7899
  %v7918 = vpop.f32.mrf.mxu0
  %v7919 = vadd.f32 0.0, %v7918
  %7920 = vdwg.mxu0
  %v7922 = vsel %vm481, %v7823, 0
  %7924 = vmatpush.xpose.msra.mxu0 0.0
  %7925 = vmatpush.xpose.msra.mxu0 0.0
  %7926 = vmatpush.xpose.msra.mxu0 0.0
  %7927 = vmatpush.xpose.msra.mxu0 0.0
  %7928 = vmatpush.xpose.msra.mxu0 0.0
  %7929 = vmatpush.xpose.msra.mxu0 0.0
  %7930 = vmatpush.xpose.msra.mxu0 0.0
  %7931 = vmatpush.xpose.msra.mxu0 0.0
  %7932 = vmatpush.xpose.msra.mxu0 0.0
  %7933 = vmatpush.xpose.msra.mxu0 0.0
  %7934 = vmatpush.xpose.msra.mxu0 0.0
  %7935 = vmatpush.xpose.msra.mxu0 0.0
  %7936 = vmatpush.xpose.msra.mxu0 0.0
  %7937 = vmatpush.xpose.msra.mxu0 0.0
  %7938 = vmatpush.xpose.msra.mxu0 0.0
  %7939 = vmatpush.xpose.msra.mxu0 %v569
  %7940 = vmatmul.f32.gmra.mxu0 %v7922
  %v7941 = vpop.f32.mrf.mxu0
  %v7942 = vadd.f32 0.0, %v7941
  %7943 = vdwg.mxu0
  %v7945 = vsel %vm481, %v7824, 0
  %7947 = vmatpush.xpose.msra.mxu0 0.0
  %7948 = vmatpush.xpose.msra.mxu0 0.0
  %7949 = vmatpush.xpose.msra.mxu0 0.0
  %7950 = vmatpush.xpose.msra.mxu0 0.0
  %7951 = vmatpush.xpose.msra.mxu0 0.0
  %7952 = vmatpush.xpose.msra.mxu0 0.0
  %7953 = vmatpush.xpose.msra.mxu0 0.0
  %7954 = vmatpush.xpose.msra.mxu0 0.0
  %7955 = vmatpush.xpose.msra.mxu0 0.0
  %7956 = vmatpush.xpose.msra.mxu0 0.0
  %7957 = vmatpush.xpose.msra.mxu0 0.0
  %7958 = vmatpush.xpose.msra.mxu0 0.0
  %7959 = vmatpush.xpose.msra.mxu0 0.0
  %7960 = vmatpush.xpose.msra.mxu0 0.0
  %7961 = vmatpush.xpose.msra.mxu0 0.0
  %7962 = vmatpush.xpose.msra.mxu0 %v597
  %7963 = vmatmul.f32.gmra.mxu0 %v7945
  %v7964 = vpop.f32.mrf.mxu0
  %v7965 = vadd.f32 0.0, %v7964
  %7966 = vdwg.mxu0
  %v7968 = vsel %vm481, %v7825, 0
  %7970 = vmatpush.xpose.msra.mxu0 0.0
  %7971 = vmatpush.xpose.msra.mxu0 0.0
  %7972 = vmatpush.xpose.msra.mxu0 0.0
  %7973 = vmatpush.xpose.msra.mxu0 0.0
  %7974 = vmatpush.xpose.msra.mxu0 0.0
  %7975 = vmatpush.xpose.msra.mxu0 0.0
  %7976 = vmatpush.xpose.msra.mxu0 0.0
  %7977 = vmatpush.xpose.msra.mxu0 0.0
  %7978 = vmatpush.xpose.msra.mxu0 0.0
  %7979 = vmatpush.xpose.msra.mxu0 0.0
  %7980 = vmatpush.xpose.msra.mxu0 0.0
  %7981 = vmatpush.xpose.msra.mxu0 0.0
  %7982 = vmatpush.xpose.msra.mxu0 0.0
  %7983 = vmatpush.xpose.msra.mxu0 0.0
  %7984 = vmatpush.xpose.msra.mxu0 0.0
  %7985 = vmatpush.xpose.msra.mxu0 %v625
  %7986 = vmatmul.f32.gmra.mxu0 %v7968
  %v7987 = vpop.f32.mrf.mxu0
  %v7988 = vadd.f32 0.0, %v7987
  %7989 = vdwg.mxu0
  %v7991 = vsel %vm481, %v7826, 0
  %7993 = vmatpush.xpose.msra.mxu0 0.0
  %7994 = vmatpush.xpose.msra.mxu0 0.0
  %7995 = vmatpush.xpose.msra.mxu0 0.0
  %7996 = vmatpush.xpose.msra.mxu0 0.0
  %7997 = vmatpush.xpose.msra.mxu0 0.0
  %7998 = vmatpush.xpose.msra.mxu0 0.0
  %7999 = vmatpush.xpose.msra.mxu0 0.0
  %8000 = vmatpush.xpose.msra.mxu0 0.0
  %8001 = vmatpush.xpose.msra.mxu0 0.0
  %8002 = vmatpush.xpose.msra.mxu0 0.0
  %8003 = vmatpush.xpose.msra.mxu0 0.0
  %8004 = vmatpush.xpose.msra.mxu0 0.0
  %8005 = vmatpush.xpose.msra.mxu0 0.0
  %8006 = vmatpush.xpose.msra.mxu0 0.0
  %8007 = vmatpush.xpose.msra.mxu0 0.0
  %8008 = vmatpush.xpose.msra.mxu0 %v653
  %8009 = vmatmul.f32.gmra.mxu0 %v7991
  %v8010 = vpop.f32.mrf.mxu0
  %v8011 = vadd.f32 0.0, %v8010
  %8012 = vdwg.mxu0
  %v8014 = vsel %vm481, %v7827, 0
  %8016 = vmatpush.xpose.msra.mxu0 0.0
  %8017 = vmatpush.xpose.msra.mxu0 0.0
  %8018 = vmatpush.xpose.msra.mxu0 0.0
  %8019 = vmatpush.xpose.msra.mxu0 0.0
  %8020 = vmatpush.xpose.msra.mxu0 0.0
  %8021 = vmatpush.xpose.msra.mxu0 0.0
  %8022 = vmatpush.xpose.msra.mxu0 0.0
  %8023 = vmatpush.xpose.msra.mxu0 0.0
  %8024 = vmatpush.xpose.msra.mxu0 0.0
  %8025 = vmatpush.xpose.msra.mxu0 0.0
  %8026 = vmatpush.xpose.msra.mxu0 0.0
  %8027 = vmatpush.xpose.msra.mxu0 0.0
  %8028 = vmatpush.xpose.msra.mxu0 0.0
  %8029 = vmatpush.xpose.msra.mxu0 0.0
  %8030 = vmatpush.xpose.msra.mxu0 0.0
  %8031 = vmatpush.xpose.msra.mxu0 %v681
  %8032 = vmatmul.f32.gmra.mxu0 %v8014
  %v8033 = vpop.f32.mrf.mxu0
  %v8034 = vadd.f32 0.0, %v8033
  %8035 = vdwg.mxu0
  %v8037 = vsel %vm481, %v7828, 0
  %8039 = vmatpush.xpose.msra.mxu0 0.0
  %8040 = vmatpush.xpose.msra.mxu0 0.0
  %8041 = vmatpush.xpose.msra.mxu0 0.0
  %8042 = vmatpush.xpose.msra.mxu0 0.0
  %8043 = vmatpush.xpose.msra.mxu0 0.0
  %8044 = vmatpush.xpose.msra.mxu0 0.0
  %8045 = vmatpush.xpose.msra.mxu0 0.0
  %8046 = vmatpush.xpose.msra.mxu0 0.0
  %8047 = vmatpush.xpose.msra.mxu0 0.0
  %8048 = vmatpush.xpose.msra.mxu0 0.0
  %8049 = vmatpush.xpose.msra.mxu0 0.0
  %8050 = vmatpush.xpose.msra.mxu0 0.0
  %8051 = vmatpush.xpose.msra.mxu0 0.0
  %8052 = vmatpush.xpose.msra.mxu0 0.0
  %8053 = vmatpush.xpose.msra.mxu0 0.0
  %8054 = vmatpush.xpose.msra.mxu0 %v709
  %8055 = vmatmul.f32.gmra.mxu0 %v8037
  %v8056 = vpop.f32.mrf.mxu0
  %v8057 = vadd.f32 0.0, %v8056
  %8058 = vdwg.mxu0
  %v8060 = vsel %vm481, %v7829, 0
  %8062 = vmatpush.xpose.msra.mxu0 0.0
  %8063 = vmatpush.xpose.msra.mxu0 0.0
  %8064 = vmatpush.xpose.msra.mxu0 0.0
  %8065 = vmatpush.xpose.msra.mxu0 0.0
  %8066 = vmatpush.xpose.msra.mxu0 0.0
  %8067 = vmatpush.xpose.msra.mxu0 0.0
  %8068 = vmatpush.xpose.msra.mxu0 0.0
  %8069 = vmatpush.xpose.msra.mxu0 0.0
  %8070 = vmatpush.xpose.msra.mxu0 0.0
  %8071 = vmatpush.xpose.msra.mxu0 0.0
  %8072 = vmatpush.xpose.msra.mxu0 0.0
  %8073 = vmatpush.xpose.msra.mxu0 0.0
  %8074 = vmatpush.xpose.msra.mxu0 0.0
  %8075 = vmatpush.xpose.msra.mxu0 0.0
  %8076 = vmatpush.xpose.msra.mxu0 0.0
  %8077 = vmatpush.xpose.msra.mxu0 %v737
  %8078 = vmatmul.f32.gmra.mxu0 %v8060
  %v8079 = vpop.f32.mrf.mxu0
  %v8080 = vadd.f32 0.0, %v8079
  %8081 = vdwg.mxu0
  %v8083 = vsel %vm481, %v7830, 0
  %8085 = vmatpush.xpose.msra.mxu0 0.0
  %8086 = vmatpush.xpose.msra.mxu0 0.0
  %8087 = vmatpush.xpose.msra.mxu0 0.0
  %8088 = vmatpush.xpose.msra.mxu0 0.0
  %8089 = vmatpush.xpose.msra.mxu0 0.0
  %8090 = vmatpush.xpose.msra.mxu0 0.0
  %8091 = vmatpush.xpose.msra.mxu0 0.0
  %8092 = vmatpush.xpose.msra.mxu0 0.0
  %8093 = vmatpush.xpose.msra.mxu0 0.0
  %8094 = vmatpush.xpose.msra.mxu0 0.0
  %8095 = vmatpush.xpose.msra.mxu0 0.0
  %8096 = vmatpush.xpose.msra.mxu0 0.0
  %8097 = vmatpush.xpose.msra.mxu0 0.0
  %8098 = vmatpush.xpose.msra.mxu0 0.0
  %8099 = vmatpush.xpose.msra.mxu0 0.0
  %8100 = vmatpush.xpose.msra.mxu0 %v765
  %8101 = vmatmul.f32.gmra.mxu0 %v8083
  %v8102 = vpop.f32.mrf.mxu0
  %v8103 = vadd.f32 0.0, %v8102
  %8104 = vdwg.mxu0
  %v8106 = vsel %vm481, %v7831, 0
  %8108 = vmatpush.xpose.msra.mxu0 0.0
  %8109 = vmatpush.xpose.msra.mxu0 0.0
  %8110 = vmatpush.xpose.msra.mxu0 0.0
  %8111 = vmatpush.xpose.msra.mxu0 0.0
  %8112 = vmatpush.xpose.msra.mxu0 0.0
  %8113 = vmatpush.xpose.msra.mxu0 0.0
  %8114 = vmatpush.xpose.msra.mxu0 0.0
  %8115 = vmatpush.xpose.msra.mxu0 0.0
  %8116 = vmatpush.xpose.msra.mxu0 0.0
  %8117 = vmatpush.xpose.msra.mxu0 0.0
  %8118 = vmatpush.xpose.msra.mxu0 0.0
  %8119 = vmatpush.xpose.msra.mxu0 0.0
  %8120 = vmatpush.xpose.msra.mxu0 0.0
  %8121 = vmatpush.xpose.msra.mxu0 0.0
  %8122 = vmatpush.xpose.msra.mxu0 0.0
  %8123 = vmatpush.xpose.msra.mxu0 %v793
  %8124 = vmatmul.f32.gmra.mxu0 %v8106
  %v8125 = vpop.f32.mrf.mxu0
  %v8126 = vadd.f32 0.0, %v8125
  %8127 = vdwg.mxu0
  %v8129 = vsel %vm481, %v7832, 0
  %8131 = vmatpush.xpose.msra.mxu0 0.0
  %8132 = vmatpush.xpose.msra.mxu0 0.0
  %8133 = vmatpush.xpose.msra.mxu0 0.0
  %8134 = vmatpush.xpose.msra.mxu0 0.0
  %8135 = vmatpush.xpose.msra.mxu0 0.0
  %8136 = vmatpush.xpose.msra.mxu0 0.0
  %8137 = vmatpush.xpose.msra.mxu0 0.0
  %8138 = vmatpush.xpose.msra.mxu0 0.0
  %8139 = vmatpush.xpose.msra.mxu0 0.0
  %8140 = vmatpush.xpose.msra.mxu0 0.0
  %8141 = vmatpush.xpose.msra.mxu0 0.0
  %8142 = vmatpush.xpose.msra.mxu0 0.0
  %8143 = vmatpush.xpose.msra.mxu0 0.0
  %8144 = vmatpush.xpose.msra.mxu0 0.0
  %8145 = vmatpush.xpose.msra.mxu0 0.0
  %8146 = vmatpush.xpose.msra.mxu0 %v821
  %8147 = vmatmul.f32.gmra.mxu0 %v8129
  %v8148 = vpop.f32.mrf.mxu0
  %v8149 = vadd.f32 0.0, %v8148
  %8150 = vdwg.mxu0
  %v8152 = vsel %vm481, %v7833, 0
  %8154 = vmatpush.xpose.msra.mxu0 0.0
  %8155 = vmatpush.xpose.msra.mxu0 0.0
  %8156 = vmatpush.xpose.msra.mxu0 0.0
  %8157 = vmatpush.xpose.msra.mxu0 0.0
  %8158 = vmatpush.xpose.msra.mxu0 0.0
  %8159 = vmatpush.xpose.msra.mxu0 0.0
  %8160 = vmatpush.xpose.msra.mxu0 0.0
  %8161 = vmatpush.xpose.msra.mxu0 0.0
  %8162 = vmatpush.xpose.msra.mxu0 0.0
  %8163 = vmatpush.xpose.msra.mxu0 0.0
  %8164 = vmatpush.xpose.msra.mxu0 0.0
  %8165 = vmatpush.xpose.msra.mxu0 0.0
  %8166 = vmatpush.xpose.msra.mxu0 0.0
  %8167 = vmatpush.xpose.msra.mxu0 0.0
  %8168 = vmatpush.xpose.msra.mxu0 0.0
  %8169 = vmatpush.xpose.msra.mxu0 %v849
  %8170 = vmatmul.f32.gmra.mxu0 %v8152
  %v8171 = vpop.f32.mrf.mxu0
  %v8172 = vadd.f32 0.0, %v8171
  %8173 = vdwg.mxu0
  %v8175 = vsel %vm481, %v7834, 0
  %8177 = vmatpush.xpose.msra.mxu0 0.0
  %8178 = vmatpush.xpose.msra.mxu0 0.0
  %8179 = vmatpush.xpose.msra.mxu0 0.0
  %8180 = vmatpush.xpose.msra.mxu0 0.0
  %8181 = vmatpush.xpose.msra.mxu0 0.0
  %8182 = vmatpush.xpose.msra.mxu0 0.0
  %8183 = vmatpush.xpose.msra.mxu0 0.0
  %8184 = vmatpush.xpose.msra.mxu0 0.0
  %8185 = vmatpush.xpose.msra.mxu0 0.0
  %8186 = vmatpush.xpose.msra.mxu0 0.0
  %8187 = vmatpush.xpose.msra.mxu0 0.0
  %8188 = vmatpush.xpose.msra.mxu0 0.0
  %8189 = vmatpush.xpose.msra.mxu0 0.0
  %8190 = vmatpush.xpose.msra.mxu0 0.0
  %8191 = vmatpush.xpose.msra.mxu0 0.0
  %8192 = vmatpush.xpose.msra.mxu0 %v877
  %8193 = vmatmul.f32.gmra.mxu0 %v8175
  %v8194 = vpop.f32.mrf.mxu0
  %v8195 = vadd.f32 0.0, %v8194
  %8196 = vdwg.mxu0
  %v8198 = vsel %vm481, %v7835, 0
  %8200 = vmatpush.xpose.msra.mxu0 0.0
  %8201 = vmatpush.xpose.msra.mxu0 0.0
  %8202 = vmatpush.xpose.msra.mxu0 0.0
  %8203 = vmatpush.xpose.msra.mxu0 0.0
  %8204 = vmatpush.xpose.msra.mxu0 0.0
  %8205 = vmatpush.xpose.msra.mxu0 0.0
  %8206 = vmatpush.xpose.msra.mxu0 0.0
  %8207 = vmatpush.xpose.msra.mxu0 0.0
  %8208 = vmatpush.xpose.msra.mxu0 0.0
  %8209 = vmatpush.xpose.msra.mxu0 0.0
  %8210 = vmatpush.xpose.msra.mxu0 0.0
  %8211 = vmatpush.xpose.msra.mxu0 0.0
  %8212 = vmatpush.xpose.msra.mxu0 0.0
  %8213 = vmatpush.xpose.msra.mxu0 0.0
  %8214 = vmatpush.xpose.msra.mxu0 0.0
  %8215 = vmatpush.xpose.msra.mxu0 %v905
  %8216 = vmatmul.f32.gmra.mxu0 %v8198
  %v8217 = vpop.f32.mrf.mxu0
  %v8218 = vadd.f32 0.0, %v8217
  %8219 = vdwg.mxu0
  %v8221 = vsel %vm481, %v7836, 0
  %8223 = vmatpush.xpose.msra.mxu0 0.0
  %8224 = vmatpush.xpose.msra.mxu0 0.0
  %8225 = vmatpush.xpose.msra.mxu0 0.0
  %8226 = vmatpush.xpose.msra.mxu0 0.0
  %8227 = vmatpush.xpose.msra.mxu0 0.0
  %8228 = vmatpush.xpose.msra.mxu0 0.0
  %8229 = vmatpush.xpose.msra.mxu0 0.0
  %8230 = vmatpush.xpose.msra.mxu0 0.0
  %8231 = vmatpush.xpose.msra.mxu0 0.0
  %8232 = vmatpush.xpose.msra.mxu0 0.0
  %8233 = vmatpush.xpose.msra.mxu0 0.0
  %8234 = vmatpush.xpose.msra.mxu0 0.0
  %8235 = vmatpush.xpose.msra.mxu0 0.0
  %8236 = vmatpush.xpose.msra.mxu0 0.0
  %8237 = vmatpush.xpose.msra.mxu0 0.0
  %8238 = vmatpush.xpose.msra.mxu0 %v933
  %8239 = vmatmul.f32.gmra.mxu0 %v8221
  %v8240 = vpop.f32.mrf.mxu0
  %v8241 = vadd.f32 0.0, %v8240
  %8242 = vdwg.mxu0
  %v8244 = vsel %vm481, %v7837, 0
  %8246 = vmatpush.xpose.msra.mxu0 0.0
  %8247 = vmatpush.xpose.msra.mxu0 0.0
  %8248 = vmatpush.xpose.msra.mxu0 0.0
  %8249 = vmatpush.xpose.msra.mxu0 0.0
  %8250 = vmatpush.xpose.msra.mxu0 0.0
  %8251 = vmatpush.xpose.msra.mxu0 0.0
  %8252 = vmatpush.xpose.msra.mxu0 0.0
  %8253 = vmatpush.xpose.msra.mxu0 0.0
  %8254 = vmatpush.xpose.msra.mxu0 0.0
  %8255 = vmatpush.xpose.msra.mxu0 0.0
  %8256 = vmatpush.xpose.msra.mxu0 0.0
  %8257 = vmatpush.xpose.msra.mxu0 0.0
  %8258 = vmatpush.xpose.msra.mxu0 0.0
  %8259 = vmatpush.xpose.msra.mxu0 0.0
  %8260 = vmatpush.xpose.msra.mxu0 0.0
  %8261 = vmatpush.xpose.msra.mxu0 %v961
  %8262 = vmatmul.f32.gmra.mxu0 %v8244
  %v8263 = vpop.f32.mrf.mxu0
  %v8264 = vadd.f32 0.0, %v8263
  %8265 = vdwg.mxu0
  %v8267 = vsel %vm481, %v7838, 0
  %8269 = vmatpush.xpose.msra.mxu0 0.0
  %8270 = vmatpush.xpose.msra.mxu0 0.0
  %8271 = vmatpush.xpose.msra.mxu0 0.0
  %8272 = vmatpush.xpose.msra.mxu0 0.0
  %8273 = vmatpush.xpose.msra.mxu0 0.0
  %8274 = vmatpush.xpose.msra.mxu0 0.0
  %8275 = vmatpush.xpose.msra.mxu0 0.0
  %8276 = vmatpush.xpose.msra.mxu0 0.0
  %8277 = vmatpush.xpose.msra.mxu0 0.0
  %8278 = vmatpush.xpose.msra.mxu0 0.0
  %8279 = vmatpush.xpose.msra.mxu0 0.0
  %8280 = vmatpush.xpose.msra.mxu0 0.0
  %8281 = vmatpush.xpose.msra.mxu0 0.0
  %8282 = vmatpush.xpose.msra.mxu0 0.0
  %8283 = vmatpush.xpose.msra.mxu0 0.0
  %8284 = vmatpush.xpose.msra.mxu0 %v989
  %8285 = vmatmul.f32.gmra.mxu0 %v8267
  %v8286 = vpop.f32.mrf.mxu0
  %v8287 = vadd.f32 0.0, %v8286
  %8288 = vdwg.mxu0
  %v8290 = vsel %vm481, %v7839, 0
  %8292 = vmatpush.xpose.msra.mxu0 0.0
  %8293 = vmatpush.xpose.msra.mxu0 0.0
  %8294 = vmatpush.xpose.msra.mxu0 0.0
  %8295 = vmatpush.xpose.msra.mxu0 0.0
  %8296 = vmatpush.xpose.msra.mxu0 0.0
  %8297 = vmatpush.xpose.msra.mxu0 0.0
  %8298 = vmatpush.xpose.msra.mxu0 0.0
  %8299 = vmatpush.xpose.msra.mxu0 0.0
  %8300 = vmatpush.xpose.msra.mxu0 0.0
  %8301 = vmatpush.xpose.msra.mxu0 0.0
  %8302 = vmatpush.xpose.msra.mxu0 0.0
  %8303 = vmatpush.xpose.msra.mxu0 0.0
  %8304 = vmatpush.xpose.msra.mxu0 0.0
  %8305 = vmatpush.xpose.msra.mxu0 0.0
  %8306 = vmatpush.xpose.msra.mxu0 0.0
  %8307 = vmatpush.xpose.msra.mxu0 %v1017
  %8308 = vmatmul.f32.gmra.mxu0 %v8290
  %v8309 = vpop.f32.mrf.mxu0
  %v8310 = vadd.f32 0.0, %v8309
  %8311 = vdwg.mxu0
  %v8313 = vsel %vm481, %v7840, 0
  %8315 = vmatpush.xpose.msra.mxu0 0.0
  %8316 = vmatpush.xpose.msra.mxu0 0.0
  %8317 = vmatpush.xpose.msra.mxu0 0.0
  %8318 = vmatpush.xpose.msra.mxu0 0.0
  %8319 = vmatpush.xpose.msra.mxu0 0.0
  %8320 = vmatpush.xpose.msra.mxu0 0.0
  %8321 = vmatpush.xpose.msra.mxu0 0.0
  %8322 = vmatpush.xpose.msra.mxu0 0.0
  %8323 = vmatpush.xpose.msra.mxu0 0.0
  %8324 = vmatpush.xpose.msra.mxu0 0.0
  %8325 = vmatpush.xpose.msra.mxu0 0.0
  %8326 = vmatpush.xpose.msra.mxu0 0.0
  %8327 = vmatpush.xpose.msra.mxu0 0.0
  %8328 = vmatpush.xpose.msra.mxu0 0.0
  %8329 = vmatpush.xpose.msra.mxu0 0.0
  %8330 = vmatpush.xpose.msra.mxu0 %v1045
  %8331 = vmatmul.f32.gmra.mxu0 %v8313
  %v8332 = vpop.f32.mrf.mxu0
  %v8333 = vadd.f32 0.0, %v8332
  %8334 = vdwg.mxu0
  %v8336 = vsel %vm481, %v7841, 0
  %8338 = vmatpush.xpose.msra.mxu0 0.0
  %8339 = vmatpush.xpose.msra.mxu0 0.0
  %8340 = vmatpush.xpose.msra.mxu0 0.0
  %8341 = vmatpush.xpose.msra.mxu0 0.0
  %8342 = vmatpush.xpose.msra.mxu0 0.0
  %8343 = vmatpush.xpose.msra.mxu0 0.0
  %8344 = vmatpush.xpose.msra.mxu0 0.0
  %8345 = vmatpush.xpose.msra.mxu0 0.0
  %8346 = vmatpush.xpose.msra.mxu0 0.0
  %8347 = vmatpush.xpose.msra.mxu0 0.0
  %8348 = vmatpush.xpose.msra.mxu0 0.0
  %8349 = vmatpush.xpose.msra.mxu0 0.0
  %8350 = vmatpush.xpose.msra.mxu0 0.0
  %8351 = vmatpush.xpose.msra.mxu0 0.0
  %8352 = vmatpush.xpose.msra.mxu0 0.0
  %8353 = vmatpush.xpose.msra.mxu0 %v1073
  %8354 = vmatmul.f32.gmra.mxu0 %v8336
  %v8355 = vpop.f32.mrf.mxu0
  %v8356 = vadd.f32 0.0, %v8355
  %8357 = vdwg.mxu0
  %v8359 = vsel %vm481, %v7842, 0
  %8361 = vmatpush.xpose.msra.mxu0 0.0
  %8362 = vmatpush.xpose.msra.mxu0 0.0
  %8363 = vmatpush.xpose.msra.mxu0 0.0
  %8364 = vmatpush.xpose.msra.mxu0 0.0
  %8365 = vmatpush.xpose.msra.mxu0 0.0
  %8366 = vmatpush.xpose.msra.mxu0 0.0
  %8367 = vmatpush.xpose.msra.mxu0 0.0
  %8368 = vmatpush.xpose.msra.mxu0 0.0
  %8369 = vmatpush.xpose.msra.mxu0 0.0
  %8370 = vmatpush.xpose.msra.mxu0 0.0
  %8371 = vmatpush.xpose.msra.mxu0 0.0
  %8372 = vmatpush.xpose.msra.mxu0 0.0
  %8373 = vmatpush.xpose.msra.mxu0 0.0
  %8374 = vmatpush.xpose.msra.mxu0 0.0
  %8375 = vmatpush.xpose.msra.mxu0 0.0
  %8376 = vmatpush.xpose.msra.mxu0 %v1101
  %8377 = vmatmul.f32.gmra.mxu0 %v8359
  %v8378 = vpop.f32.mrf.mxu0
  %v8379 = vadd.f32 0.0, %v8378
  %8380 = vdwg.mxu0
  %v8382 = vsel %vm481, %v7843, 0
  %8384 = vmatpush.xpose.msra.mxu0 0.0
  %8385 = vmatpush.xpose.msra.mxu0 0.0
  %8386 = vmatpush.xpose.msra.mxu0 0.0
  %8387 = vmatpush.xpose.msra.mxu0 0.0
  %8388 = vmatpush.xpose.msra.mxu0 0.0
  %8389 = vmatpush.xpose.msra.mxu0 0.0
  %8390 = vmatpush.xpose.msra.mxu0 0.0
  %8391 = vmatpush.xpose.msra.mxu0 0.0
  %8392 = vmatpush.xpose.msra.mxu0 0.0
  %8393 = vmatpush.xpose.msra.mxu0 0.0
  %8394 = vmatpush.xpose.msra.mxu0 0.0
  %8395 = vmatpush.xpose.msra.mxu0 0.0
  %8396 = vmatpush.xpose.msra.mxu0 0.0
  %8397 = vmatpush.xpose.msra.mxu0 0.0
  %8398 = vmatpush.xpose.msra.mxu0 0.0
  %8399 = vmatpush.xpose.msra.mxu0 %v1129
  %8400 = vmatmul.f32.gmra.mxu0 %v8382
  %v8401 = vpop.f32.mrf.mxu0
  %v8402 = vadd.f32 0.0, %v8401
  %8403 = vdwg.mxu0
  %v8405 = vsel %vm481, %v7844, 0
  %8407 = vmatpush.xpose.msra.mxu0 0.0
  %8408 = vmatpush.xpose.msra.mxu0 0.0
  %8409 = vmatpush.xpose.msra.mxu0 0.0
  %8410 = vmatpush.xpose.msra.mxu0 0.0
  %8411 = vmatpush.xpose.msra.mxu0 0.0
  %8412 = vmatpush.xpose.msra.mxu0 0.0
  %8413 = vmatpush.xpose.msra.mxu0 0.0
  %8414 = vmatpush.xpose.msra.mxu0 0.0
  %8415 = vmatpush.xpose.msra.mxu0 0.0
  %8416 = vmatpush.xpose.msra.mxu0 0.0
  %8417 = vmatpush.xpose.msra.mxu0 0.0
  %8418 = vmatpush.xpose.msra.mxu0 0.0
  %8419 = vmatpush.xpose.msra.mxu0 0.0
  %8420 = vmatpush.xpose.msra.mxu0 0.0
  %8421 = vmatpush.xpose.msra.mxu0 0.0
  %8422 = vmatpush.xpose.msra.mxu0 %v1157
  %8423 = vmatmul.f32.gmra.mxu0 %v8405
  %v8424 = vpop.f32.mrf.mxu0
  %v8425 = vadd.f32 0.0, %v8424
  %8426 = vdwg.mxu0
  %v8428 = vsel %vm481, %v7845, 0
  %8430 = vmatpush.xpose.msra.mxu0 0.0
  %8431 = vmatpush.xpose.msra.mxu0 0.0
  %8432 = vmatpush.xpose.msra.mxu0 0.0
  %8433 = vmatpush.xpose.msra.mxu0 0.0
  %8434 = vmatpush.xpose.msra.mxu0 0.0
  %8435 = vmatpush.xpose.msra.mxu0 0.0
  %8436 = vmatpush.xpose.msra.mxu0 0.0
  %8437 = vmatpush.xpose.msra.mxu0 0.0
  %8438 = vmatpush.xpose.msra.mxu0 0.0
  %8439 = vmatpush.xpose.msra.mxu0 0.0
  %8440 = vmatpush.xpose.msra.mxu0 0.0
  %8441 = vmatpush.xpose.msra.mxu0 0.0
  %8442 = vmatpush.xpose.msra.mxu0 0.0
  %8443 = vmatpush.xpose.msra.mxu0 0.0
  %8444 = vmatpush.xpose.msra.mxu0 0.0
  %8445 = vmatpush.xpose.msra.mxu0 %v1185
  %8446 = vmatmul.f32.gmra.mxu0 %v8428
  %v8447 = vpop.f32.mrf.mxu0
  %v8448 = vadd.f32 0.0, %v8447
  %8449 = vdwg.mxu0
  %v8451 = vsel %vm481, %v7846, 0
  %8453 = vmatpush.xpose.msra.mxu0 0.0
  %8454 = vmatpush.xpose.msra.mxu0 0.0
  %8455 = vmatpush.xpose.msra.mxu0 0.0
  %8456 = vmatpush.xpose.msra.mxu0 0.0
  %8457 = vmatpush.xpose.msra.mxu0 0.0
  %8458 = vmatpush.xpose.msra.mxu0 0.0
  %8459 = vmatpush.xpose.msra.mxu0 0.0
  %8460 = vmatpush.xpose.msra.mxu0 0.0
  %8461 = vmatpush.xpose.msra.mxu0 0.0
  %8462 = vmatpush.xpose.msra.mxu0 0.0
  %8463 = vmatpush.xpose.msra.mxu0 0.0
  %8464 = vmatpush.xpose.msra.mxu0 0.0
  %8465 = vmatpush.xpose.msra.mxu0 0.0
  %8466 = vmatpush.xpose.msra.mxu0 0.0
  %8467 = vmatpush.xpose.msra.mxu0 0.0
  %8468 = vmatpush.xpose.msra.mxu0 %v1213
  %8469 = vmatmul.f32.gmra.mxu0 %v8451
  %v8470 = vpop.f32.mrf.mxu0
  %v8471 = vadd.f32 0.0, %v8470
  %8472 = vdwg.mxu0
  %v8474 = vsel %vm481, %v7847, 0
  %8476 = vmatpush.xpose.msra.mxu0 0.0
  %8477 = vmatpush.xpose.msra.mxu0 0.0
  %8478 = vmatpush.xpose.msra.mxu0 0.0
  %8479 = vmatpush.xpose.msra.mxu0 0.0
  %8480 = vmatpush.xpose.msra.mxu0 0.0
  %8481 = vmatpush.xpose.msra.mxu0 0.0
  %8482 = vmatpush.xpose.msra.mxu0 0.0
  %8483 = vmatpush.xpose.msra.mxu0 0.0
  %8484 = vmatpush.xpose.msra.mxu0 0.0
  %8485 = vmatpush.xpose.msra.mxu0 0.0
  %8486 = vmatpush.xpose.msra.mxu0 0.0
  %8487 = vmatpush.xpose.msra.mxu0 0.0
  %8488 = vmatpush.xpose.msra.mxu0 0.0
  %8489 = vmatpush.xpose.msra.mxu0 0.0
  %8490 = vmatpush.xpose.msra.mxu0 0.0
  %8491 = vmatpush.xpose.msra.mxu0 %v1241
  %8492 = vmatmul.f32.gmra.mxu0 %v8474
  %v8493 = vpop.f32.mrf.mxu0
  %v8494 = vadd.f32 0.0, %v8493
  %8495 = vdwg.mxu0
  %v8497 = vsel %vm481, %v7848, 0
  %8499 = vmatpush.xpose.msra.mxu0 0.0
  %8500 = vmatpush.xpose.msra.mxu0 0.0
  %8501 = vmatpush.xpose.msra.mxu0 0.0
  %8502 = vmatpush.xpose.msra.mxu0 0.0
  %8503 = vmatpush.xpose.msra.mxu0 0.0
  %8504 = vmatpush.xpose.msra.mxu0 0.0
  %8505 = vmatpush.xpose.msra.mxu0 0.0
  %8506 = vmatpush.xpose.msra.mxu0 0.0
  %8507 = vmatpush.xpose.msra.mxu0 0.0
  %8508 = vmatpush.xpose.msra.mxu0 0.0
  %8509 = vmatpush.xpose.msra.mxu0 0.0
  %8510 = vmatpush.xpose.msra.mxu0 0.0
  %8511 = vmatpush.xpose.msra.mxu0 0.0
  %8512 = vmatpush.xpose.msra.mxu0 0.0
  %8513 = vmatpush.xpose.msra.mxu0 0.0
  %8514 = vmatpush.xpose.msra.mxu0 %v1269
  %8515 = vmatmul.f32.gmra.mxu0 %v8497
  %v8516 = vpop.f32.mrf.mxu0
  %v8517 = vadd.f32 0.0, %v8516
  %8518 = vdwg.mxu0
  %v8520 = vsel %vm481, %v7849, 0
  %8522 = vmatpush.xpose.msra.mxu0 0.0
  %8523 = vmatpush.xpose.msra.mxu0 0.0
  %8524 = vmatpush.xpose.msra.mxu0 0.0
  %8525 = vmatpush.xpose.msra.mxu0 0.0
  %8526 = vmatpush.xpose.msra.mxu0 0.0
  %8527 = vmatpush.xpose.msra.mxu0 0.0
  %8528 = vmatpush.xpose.msra.mxu0 0.0
  %8529 = vmatpush.xpose.msra.mxu0 0.0
  %8530 = vmatpush.xpose.msra.mxu0 0.0
  %8531 = vmatpush.xpose.msra.mxu0 0.0
  %8532 = vmatpush.xpose.msra.mxu0 0.0
  %8533 = vmatpush.xpose.msra.mxu0 0.0
  %8534 = vmatpush.xpose.msra.mxu0 0.0
  %8535 = vmatpush.xpose.msra.mxu0 0.0
  %8536 = vmatpush.xpose.msra.mxu0 0.0
  %8537 = vmatpush.xpose.msra.mxu0 %v1297
  %8538 = vmatmul.f32.gmra.mxu0 %v8520
  %v8539 = vpop.f32.mrf.mxu0
  %v8540 = vadd.f32 0.0, %v8539
  %8541 = vdwg.mxu0
  %v8543 = vsel %vm481, %v7850, 0
  %8545 = vmatpush.xpose.msra.mxu0 0.0
  %8546 = vmatpush.xpose.msra.mxu0 0.0
  %8547 = vmatpush.xpose.msra.mxu0 0.0
  %8548 = vmatpush.xpose.msra.mxu0 0.0
  %8549 = vmatpush.xpose.msra.mxu0 0.0
  %8550 = vmatpush.xpose.msra.mxu0 0.0
  %8551 = vmatpush.xpose.msra.mxu0 0.0
  %8552 = vmatpush.xpose.msra.mxu0 0.0
  %8553 = vmatpush.xpose.msra.mxu0 0.0
  %8554 = vmatpush.xpose.msra.mxu0 0.0
  %8555 = vmatpush.xpose.msra.mxu0 0.0
  %8556 = vmatpush.xpose.msra.mxu0 0.0
  %8557 = vmatpush.xpose.msra.mxu0 0.0
  %8558 = vmatpush.xpose.msra.mxu0 0.0
  %8559 = vmatpush.xpose.msra.mxu0 0.0
  %8560 = vmatpush.xpose.msra.mxu0 %v1325
  %8561 = vmatmul.f32.gmra.mxu0 %v8543
  %v8562 = vpop.f32.mrf.mxu0
  %v8563 = vadd.f32 0.0, %v8562
  %8564 = vdwg.mxu0
  %v8566 = vsel %vm481, %v7851, 0
  %8568 = vmatpush.xpose.msra.mxu0 0.0
  %8569 = vmatpush.xpose.msra.mxu0 0.0
  %8570 = vmatpush.xpose.msra.mxu0 0.0
  %8571 = vmatpush.xpose.msra.mxu0 0.0
  %8572 = vmatpush.xpose.msra.mxu0 0.0
  %8573 = vmatpush.xpose.msra.mxu0 0.0
  %8574 = vmatpush.xpose.msra.mxu0 0.0
  %8575 = vmatpush.xpose.msra.mxu0 0.0
  %8576 = vmatpush.xpose.msra.mxu0 0.0
  %8577 = vmatpush.xpose.msra.mxu0 0.0
  %8578 = vmatpush.xpose.msra.mxu0 0.0
  %8579 = vmatpush.xpose.msra.mxu0 0.0
  %8580 = vmatpush.xpose.msra.mxu0 0.0
  %8581 = vmatpush.xpose.msra.mxu0 0.0
  %8582 = vmatpush.xpose.msra.mxu0 0.0
  %8583 = vmatpush.xpose.msra.mxu0 %v1353
  %8584 = vmatmul.f32.gmra.mxu0 %v8566
  %v8585 = vpop.f32.mrf.mxu0
  %v8586 = vadd.f32 0.0, %v8585
  %8587 = vdwg.mxu0
  %v8588 = vmul.f32 %v7873, 0.35355338
  %v8589 = vmul.f32 %v7896, 0.35355338
  %v8590 = vmul.f32 %v7919, 0.35355338
  %v8591 = vmul.f32 %v7942, 0.35355338
  %v8592 = vmul.f32 %v7965, 0.35355338
  %v8593 = vmul.f32 %v7988, 0.35355338
  %v8594 = vmul.f32 %v8011, 0.35355338
  %v8595 = vmul.f32 %v8034, 0.35355338
  %v8596 = vmul.f32 %v8057, 0.35355338
  %v8597 = vmul.f32 %v8080, 0.35355338
  %v8598 = vmul.f32 %v8103, 0.35355338
  %v8599 = vmul.f32 %v8126, 0.35355338
  %v8600 = vmul.f32 %v8149, 0.35355338
  %v8601 = vmul.f32 %v8172, 0.35355338
  %v8602 = vmul.f32 %v8195, 0.35355338
  %v8603 = vmul.f32 %v8218, 0.35355338
  %v8604 = vmul.f32 %v8241, 0.35355338
  %v8605 = vmul.f32 %v8264, 0.35355338
  %v8606 = vmul.f32 %v8287, 0.35355338
  %v8607 = vmul.f32 %v8310, 0.35355338
  %v8608 = vmul.f32 %v8333, 0.35355338
  %v8609 = vmul.f32 %v8356, 0.35355338
  %v8610 = vmul.f32 %v8379, 0.35355338
  %v8611 = vmul.f32 %v8402, 0.35355338
  %v8612 = vmul.f32 %v8425, 0.35355338
  %v8613 = vmul.f32 %v8448, 0.35355338
  %v8614 = vmul.f32 %v8471, 0.35355338
  %v8615 = vmul.f32 %v8494, 0.35355338
  %v8616 = vmul.f32 %v8517, 0.35355338
  %v8617 = vmul.f32 %v8540, 0.35355338
  %v8618 = vmul.f32 %v8563, 0.35355338
  %v8619 = vmul.f32 %v8586, 0.35355338
  %v8620 = vsel %vm1407, %v8588, -inf
  %8621 = vmax.xlane.f32.xlu0 %v8620
  %v8622 = vpop.xlane.xlu0 %8621
  %v8623 = vsel %vm1407, %v8589, -inf
  %8624 = vmax.xlane.f32.xlu0 %v8623
  %v8625 = vpop.xlane.xlu0 %8624
  %v8626 = vsel %vm1407, %v8590, -inf
  %8627 = vmax.xlane.f32.xlu0 %v8626
  %v8628 = vpop.xlane.xlu0 %8627
  %v8629 = vsel %vm1407, %v8591, -inf
  %8630 = vmax.xlane.f32.xlu0 %v8629
  %v8631 = vpop.xlane.xlu0 %8630
  %v8632 = vsel %vm1407, %v8592, -inf
  %8633 = vmax.xlane.f32.xlu0 %v8632
  %v8634 = vpop.xlane.xlu0 %8633
  %v8635 = vsel %vm1407, %v8593, -inf
  %8636 = vmax.xlane.f32.xlu0 %v8635
  %v8637 = vpop.xlane.xlu0 %8636
  %v8638 = vsel %vm1407, %v8594, -inf
  %8639 = vmax.xlane.f32.xlu0 %v8638
  %v8640 = vpop.xlane.xlu0 %8639
  %v8641 = vsel %vm1407, %v8595, -inf
  %8642 = vmax.xlane.f32.xlu0 %v8641
  %v8643 = vpop.xlane.xlu0 %8642
  %v8644 = vsel %vm1407, %v8596, -inf
  %8645 = vmax.xlane.f32.xlu0 %v8644
  %v8646 = vpop.xlane.xlu0 %8645
  %v8647 = vsel %vm1407, %v8597, -inf
  %8648 = vmax.xlane.f32.xlu0 %v8647
  %v8649 = vpop.xlane.xlu0 %8648
  %v8650 = vsel %vm1407, %v8598, -inf
  %8651 = vmax.xlane.f32.xlu0 %v8650
  %v8652 = vpop.xlane.xlu0 %8651
  %v8653 = vsel %vm1407, %v8599, -inf
  %8654 = vmax.xlane.f32.xlu0 %v8653
  %v8655 = vpop.xlane.xlu0 %8654
  %v8656 = vsel %vm1407, %v8600, -inf
  %8657 = vmax.xlane.f32.xlu0 %v8656
  %v8658 = vpop.xlane.xlu0 %8657
  %v8659 = vsel %vm1407, %v8601, -inf
  %8660 = vmax.xlane.f32.xlu0 %v8659
  %v8661 = vpop.xlane.xlu0 %8660
  %v8662 = vsel %vm1407, %v8602, -inf
  %8663 = vmax.xlane.f32.xlu0 %v8662
  %v8664 = vpop.xlane.xlu0 %8663
  %v8665 = vsel %vm1407, %v8603, -inf
  %8666 = vmax.xlane.f32.xlu0 %v8665
  %v8667 = vpop.xlane.xlu0 %8666
  %v8668 = vsel %vm1407, %v8604, -inf
  %8669 = vmax.xlane.f32.xlu0 %v8668
  %v8670 = vpop.xlane.xlu0 %8669
  %v8671 = vsel %vm1407, %v8605, -inf
  %8672 = vmax.xlane.f32.xlu0 %v8671
  %v8673 = vpop.xlane.xlu0 %8672
  %v8674 = vsel %vm1407, %v8606, -inf
  %8675 = vmax.xlane.f32.xlu0 %v8674
  %v8676 = vpop.xlane.xlu0 %8675
  %v8677 = vsel %vm1407, %v8607, -inf
  %8678 = vmax.xlane.f32.xlu0 %v8677
  %v8679 = vpop.xlane.xlu0 %8678
  %v8680 = vsel %vm1407, %v8608, -inf
  %8681 = vmax.xlane.f32.xlu0 %v8680
  %v8682 = vpop.xlane.xlu0 %8681
  %v8683 = vsel %vm1407, %v8609, -inf
  %8684 = vmax.xlane.f32.xlu0 %v8683
  %v8685 = vpop.xlane.xlu0 %8684
  %v8686 = vsel %vm1407, %v8610, -inf
  %8687 = vmax.xlane.f32.xlu0 %v8686
  %v8688 = vpop.xlane.xlu0 %8687
  %v8689 = vsel %vm1407, %v8611, -inf
  %8690 = vmax.xlane.f32.xlu0 %v8689
  %v8691 = vpop.xlane.xlu0 %8690
  %v8692 = vsel %vm1407, %v8612, -inf
  %8693 = vmax.xlane.f32.xlu0 %v8692
  %v8694 = vpop.xlane.xlu0 %8693
  %v8695 = vsel %vm1407, %v8613, -inf
  %8696 = vmax.xlane.f32.xlu0 %v8695
  %v8697 = vpop.xlane.xlu0 %8696
  %v8698 = vsel %vm1407, %v8614, -inf
  %8699 = vmax.xlane.f32.xlu0 %v8698
  %v8700 = vpop.xlane.xlu0 %8699
  %v8701 = vsel %vm1407, %v8615, -inf
  %8702 = vmax.xlane.f32.xlu0 %v8701
  %v8703 = vpop.xlane.xlu0 %8702
  %v8704 = vsel %vm1407, %v8616, -inf
  %8705 = vmax.xlane.f32.xlu0 %v8704
  %v8706 = vpop.xlane.xlu0 %8705
  %v8707 = vsel %vm1407, %v8617, -inf
  %8708 = vmax.xlane.f32.xlu0 %v8707
  %v8709 = vpop.xlane.xlu0 %8708
  %v8710 = vsel %vm1407, %v8618, -inf
  %8711 = vmax.xlane.f32.xlu0 %v8710
  %v8712 = vpop.xlane.xlu0 %8711
  %v8713 = vsel %vm1407, %v8619, -inf
  %8714 = vmax.xlane.f32.xlu0 %v8713
  %v8715 = vpop.xlane.xlu0 %8714
  %v8716 = vsub.f32 %v8588, %v8622
  %v8717 = vsub.f32 %v8589, %v8625
  %v8718 = vsub.f32 %v8590, %v8628
  %v8719 = vsub.f32 %v8591, %v8631
  %v8720 = vsub.f32 %v8592, %v8634
  %v8721 = vsub.f32 %v8593, %v8637
  %v8722 = vsub.f32 %v8594, %v8640
  %v8723 = vsub.f32 %v8595, %v8643
  %v8724 = vsub.f32 %v8596, %v8646
  %v8725 = vsub.f32 %v8597, %v8649
  %v8726 = vsub.f32 %v8598, %v8652
  %v8727 = vsub.f32 %v8599, %v8655
  %v8728 = vsub.f32 %v8600, %v8658
  %v8729 = vsub.f32 %v8601, %v8661
  %v8730 = vsub.f32 %v8602, %v8664
  %v8731 = vsub.f32 %v8603, %v8667
  %v8732 = vsub.f32 %v8604, %v8670
  %v8733 = vsub.f32 %v8605, %v8673
  %v8734 = vsub.f32 %v8606, %v8676
  %v8735 = vsub.f32 %v8607, %v8679
  %v8736 = vsub.f32 %v8608, %v8682
  %v8737 = vsub.f32 %v8609, %v8685
  %v8738 = vsub.f32 %v8610, %v8688
  %v8739 = vsub.f32 %v8611, %v8691
  %v8740 = vsub.f32 %v8612, %v8694
  %v8741 = vsub.f32 %v8613, %v8697
  %v8742 = vsub.f32 %v8614, %v8700
  %v8743 = vsub.f32 %v8615, %v8703
  %v8744 = vsub.f32 %v8616, %v8706
  %v8745 = vsub.f32 %v8617, %v8709
  %v8746 = vsub.f32 %v8618, %v8712
  %v8747 = vsub.f32 %v8619, %v8715
  %v8748 = vmul.f32 %v8716, 1.442695
  %v8749 = vpow.pop %v8748
  %v8750 = vmul.f32 %v8717, 1.442695
  %v8751 = vpow.pop %v8750
  %v8752 = vmul.f32 %v8718, 1.442695
  %v8753 = vpow.pop %v8752
  %v8754 = vmul.f32 %v8719, 1.442695
  %v8755 = vpow.pop %v8754
  %v8756 = vmul.f32 %v8720, 1.442695
  %v8757 = vpow.pop %v8756
  %v8758 = vmul.f32 %v8721, 1.442695
  %v8759 = vpow.pop %v8758
  %v8760 = vmul.f32 %v8722, 1.442695
  %v8761 = vpow.pop %v8760
  %v8762 = vmul.f32 %v8723, 1.442695
  %v8763 = vpow.pop %v8762
  %v8764 = vmul.f32 %v8724, 1.442695
  %v8765 = vpow.pop %v8764
  %v8766 = vmul.f32 %v8725, 1.442695
  %v8767 = vpow.pop %v8766
  %v8768 = vmul.f32 %v8726, 1.442695
  %v8769 = vpow.pop %v8768
  %v8770 = vmul.f32 %v8727, 1.442695
  %v8771 = vpow.pop %v8770
  %v8772 = vmul.f32 %v8728, 1.442695
  %v8773 = vpow.pop %v8772
  %v8774 = vmul.f32 %v8729, 1.442695
  %v8775 = vpow.pop %v8774
  %v8776 = vmul.f32 %v8730, 1.442695
  %v8777 = vpow.pop %v8776
  %v8778 = vmul.f32 %v8731, 1.442695
  %v8779 = vpow.pop %v8778
  %v8780 = vmul.f32 %v8732, 1.442695
  %v8781 = vpow.pop %v8780
  %v8782 = vmul.f32 %v8733, 1.442695
  %v8783 = vpow.pop %v8782
  %v8784 = vmul.f32 %v8734, 1.442695
  %v8785 = vpow.pop %v8784
  %v8786 = vmul.f32 %v8735, 1.442695
  %v8787 = vpow.pop %v8786
  %v8788 = vmul.f32 %v8736, 1.442695
  %v8789 = vpow.pop %v8788
  %v8790 = vmul.f32 %v8737, 1.442695
  %v8791 = vpow.pop %v8790
  %v8792 = vmul.f32 %v8738, 1.442695
  %v8793 = vpow.pop %v8792
  %v8794 = vmul.f32 %v8739, 1.442695
  %v8795 = vpow.pop %v8794
  %v8796 = vmul.f32 %v8740, 1.442695
  %v8797 = vpow.pop %v8796
  %v8798 = vmul.f32 %v8741, 1.442695
  %v8799 = vpow.pop %v8798
  %v8800 = vmul.f32 %v8742, 1.442695
  %v8801 = vpow.pop %v8800
  %v8802 = vmul.f32 %v8743, 1.442695
  %v8803 = vpow.pop %v8802
  %v8804 = vmul.f32 %v8744, 1.442695
  %v8805 = vpow.pop %v8804
  %v8806 = vmul.f32 %v8745, 1.442695
  %v8807 = vpow.pop %v8806
  %v8808 = vmul.f32 %v8746, 1.442695
  %v8809 = vpow.pop %v8808
  %v8810 = vmul.f32 %v8747, 1.442695
  %v8811 = vpow.pop %v8810
  %v8812 = vsel %vm1407, %v8749, 0.0
  %8813 = vadd.xlane.f32.xlu0 %v8812
  %v8814 = vpop.xlane.xlu0 %8813
  %v8815 = vsel %vm1407, %v8751, 0.0
  %8816 = vadd.xlane.f32.xlu0 %v8815
  %v8817 = vpop.xlane.xlu0 %8816
  %v8818 = vsel %vm1407, %v8753, 0.0
  %8819 = vadd.xlane.f32.xlu0 %v8818
  %v8820 = vpop.xlane.xlu0 %8819
  %v8821 = vsel %vm1407, %v8755, 0.0
  %8822 = vadd.xlane.f32.xlu0 %v8821
  %v8823 = vpop.xlane.xlu0 %8822
  %v8824 = vsel %vm1407, %v8757, 0.0
  %8825 = vadd.xlane.f32.xlu0 %v8824
  %v8826 = vpop.xlane.xlu0 %8825
  %v8827 = vsel %vm1407, %v8759, 0.0
  %8828 = vadd.xlane.f32.xlu0 %v8827
  %v8829 = vpop.xlane.xlu0 %8828
  %v8830 = vsel %vm1407, %v8761, 0.0
  %8831 = vadd.xlane.f32.xlu0 %v8830
  %v8832 = vpop.xlane.xlu0 %8831
  %v8833 = vsel %vm1407, %v8763, 0.0
  %8834 = vadd.xlane.f32.xlu0 %v8833
  %v8835 = vpop.xlane.xlu0 %8834
  %v8836 = vsel %vm1407, %v8765, 0.0
  %8837 = vadd.xlane.f32.xlu0 %v8836
  %v8838 = vpop.xlane.xlu0 %8837
  %v8839 = vsel %vm1407, %v8767, 0.0
  %8840 = vadd.xlane.f32.xlu0 %v8839
  %v8841 = vpop.xlane.xlu0 %8840
  %v8842 = vsel %vm1407, %v8769, 0.0
  %8843 = vadd.xlane.f32.xlu0 %v8842
  %v8844 = vpop.xlane.xlu0 %8843
  %v8845 = vsel %vm1407, %v8771, 0.0
  %8846 = vadd.xlane.f32.xlu0 %v8845
  %v8847 = vpop.xlane.xlu0 %8846
  %v8848 = vsel %vm1407, %v8773, 0.0
  %8849 = vadd.xlane.f32.xlu0 %v8848
  %v8850 = vpop.xlane.xlu0 %8849
  %v8851 = vsel %vm1407, %v8775, 0.0
  %8852 = vadd.xlane.f32.xlu0 %v8851
  %v8853 = vpop.xlane.xlu0 %8852
  %v8854 = vsel %vm1407, %v8777, 0.0
  %8855 = vadd.xlane.f32.xlu0 %v8854
  %v8856 = vpop.xlane.xlu0 %8855
  %v8857 = vsel %vm1407, %v8779, 0.0
  %8858 = vadd.xlane.f32.xlu0 %v8857
  %v8859 = vpop.xlane.xlu0 %8858
  %v8860 = vsel %vm1407, %v8781, 0.0
  %8861 = vadd.xlane.f32.xlu0 %v8860
  %v8862 = vpop.xlane.xlu0 %8861
  %v8863 = vsel %vm1407, %v8783, 0.0
  %8864 = vadd.xlane.f32.xlu0 %v8863
  %v8865 = vpop.xlane.xlu0 %8864
  %v8866 = vsel %vm1407, %v8785, 0.0
  %8867 = vadd.xlane.f32.xlu0 %v8866
  %v8868 = vpop.xlane.xlu0 %8867
  %v8869 = vsel %vm1407, %v8787, 0.0
  %8870 = vadd.xlane.f32.xlu0 %v8869
  %v8871 = vpop.xlane.xlu0 %8870
  %v8872 = vsel %vm1407, %v8789, 0.0
  %8873 = vadd.xlane.f32.xlu0 %v8872
  %v8874 = vpop.xlane.xlu0 %8873
  %v8875 = vsel %vm1407, %v8791, 0.0
  %8876 = vadd.xlane.f32.xlu0 %v8875
  %v8877 = vpop.xlane.xlu0 %8876
  %v8878 = vsel %vm1407, %v8793, 0.0
  %8879 = vadd.xlane.f32.xlu0 %v8878
  %v8880 = vpop.xlane.xlu0 %8879
  %v8881 = vsel %vm1407, %v8795, 0.0
  %8882 = vadd.xlane.f32.xlu0 %v8881
  %v8883 = vpop.xlane.xlu0 %8882
  %v8884 = vsel %vm1407, %v8797, 0.0
  %8885 = vadd.xlane.f32.xlu0 %v8884
  %v8886 = vpop.xlane.xlu0 %8885
  %v8887 = vsel %vm1407, %v8799, 0.0
  %8888 = vadd.xlane.f32.xlu0 %v8887
  %v8889 = vpop.xlane.xlu0 %8888
  %v8890 = vsel %vm1407, %v8801, 0.0
  %8891 = vadd.xlane.f32.xlu0 %v8890
  %v8892 = vpop.xlane.xlu0 %8891
  %v8893 = vsel %vm1407, %v8803, 0.0
  %8894 = vadd.xlane.f32.xlu0 %v8893
  %v8895 = vpop.xlane.xlu0 %8894
  %v8896 = vsel %vm1407, %v8805, 0.0
  %8897 = vadd.xlane.f32.xlu0 %v8896
  %v8898 = vpop.xlane.xlu0 %8897
  %v8899 = vsel %vm1407, %v8807, 0.0
  %8900 = vadd.xlane.f32.xlu0 %v8899
  %v8901 = vpop.xlane.xlu0 %8900
  %v8902 = vsel %vm1407, %v8809, 0.0
  %8903 = vadd.xlane.f32.xlu0 %v8902
  %v8904 = vpop.xlane.xlu0 %8903
  %v8905 = vsel %vm1407, %v8811, 0.0
  %8906 = vadd.xlane.f32.xlu0 %v8905
  %v8907 = vpop.xlane.xlu0 %8906
  %v8908 = vrcp.pop %v8814
  %v8909 = vmul.f32 %v8814, %v8908
  %v8910 = vsub.f32 1.0, %v8909
  %v8911 = vmul.f32 %v8908, %v8910
  %v8912 = vadd.f32 %v8908, %v8911
  %vm8913 = vweird.f32 %v8814
  %vm8914 = vweird.f32 %v8908
  %vm8915 = vmor %vm8913, %vm8914
  %v8916 = vsel %vm8915, %v8908, %v8912
  %v8917 = vand.u32 2147483647, %v8814
  %vm8918 = vcmp.eq.f32.partialorder %v8917, 8.507059e+37
  %v8919 = vand.u32 %v8814, 2147483648
  %v8920 = vor.u32 1.1754944e-38, %v8919
  %v8921 = vsel %vm8918, %v8920, %v8916
  %v8922 = vrcp.pop %v8817
  %v8923 = vmul.f32 %v8817, %v8922
  %v8924 = vsub.f32 1.0, %v8923
  %v8925 = vmul.f32 %v8922, %v8924
  %v8926 = vadd.f32 %v8922, %v8925
  %vm8927 = vweird.f32 %v8817
  %vm8928 = vweird.f32 %v8922
  %vm8929 = vmor %vm8927, %vm8928
  %v8930 = vsel %vm8929, %v8922, %v8926
  %v8931 = vand.u32 2147483647, %v8817
  %vm8932 = vcmp.eq.f32.partialorder %v8931, 8.507059e+37
  %v8933 = vand.u32 %v8817, 2147483648
  %v8934 = vor.u32 1.1754944e-38, %v8933
  %v8935 = vsel %vm8932, %v8934, %v8930
  %v8936 = vrcp.pop %v8820
  %v8937 = vmul.f32 %v8820, %v8936
  %v8938 = vsub.f32 1.0, %v8937
  %v8939 = vmul.f32 %v8936, %v8938
  %v8940 = vadd.f32 %v8936, %v8939
  %vm8941 = vweird.f32 %v8820
  %vm8942 = vweird.f32 %v8936
  %vm8943 = vmor %vm8941, %vm8942
  %v8944 = vsel %vm8943, %v8936, %v8940
  %v8945 = vand.u32 2147483647, %v8820
  %vm8946 = vcmp.eq.f32.partialorder %v8945, 8.507059e+37
  %v8947 = vand.u32 %v8820, 2147483648
  %v8948 = vor.u32 1.1754944e-38, %v8947
  %v8949 = vsel %vm8946, %v8948, %v8944
  %v8950 = vrcp.pop %v8823
  %v8951 = vmul.f32 %v8823, %v8950
  %v8952 = vsub.f32 1.0, %v8951
  %v8953 = vmul.f32 %v8950, %v8952
  %v8954 = vadd.f32 %v8950, %v8953
  %vm8955 = vweird.f32 %v8823
  %vm8956 = vweird.f32 %v8950
  %vm8957 = vmor %vm8955, %vm8956
  %v8958 = vsel %vm8957, %v8950, %v8954
  %v8959 = vand.u32 2147483647, %v8823
  %vm8960 = vcmp.eq.f32.partialorder %v8959, 8.507059e+37
  %v8961 = vand.u32 %v8823, 2147483648
  %v8962 = vor.u32 1.1754944e-38, %v8961
  %v8963 = vsel %vm8960, %v8962, %v8958
  %v8964 = vrcp.pop %v8826
  %v8965 = vmul.f32 %v8826, %v8964
  %v8966 = vsub.f32 1.0, %v8965
  %v8967 = vmul.f32 %v8964, %v8966
  %v8968 = vadd.f32 %v8964, %v8967
  %vm8969 = vweird.f32 %v8826
  %vm8970 = vweird.f32 %v8964
  %vm8971 = vmor %vm8969, %vm8970
  %v8972 = vsel %vm8971, %v8964, %v8968
  %v8973 = vand.u32 2147483647, %v8826
  %vm8974 = vcmp.eq.f32.partialorder %v8973, 8.507059e+37
  %v8975 = vand.u32 %v8826, 2147483648
  %v8976 = vor.u32 1.1754944e-38, %v8975
  %v8977 = vsel %vm8974, %v8976, %v8972
  %v8978 = vrcp.pop %v8829
  %v8979 = vmul.f32 %v8829, %v8978
  %v8980 = vsub.f32 1.0, %v8979
  %v8981 = vmul.f32 %v8978, %v8980
  %v8982 = vadd.f32 %v8978, %v8981
  %vm8983 = vweird.f32 %v8829
  %vm8984 = vweird.f32 %v8978
  %vm8985 = vmor %vm8983, %vm8984
  %v8986 = vsel %vm8985, %v8978, %v8982
  %v8987 = vand.u32 2147483647, %v8829
  %vm8988 = vcmp.eq.f32.partialorder %v8987, 8.507059e+37
  %v8989 = vand.u32 %v8829, 2147483648
  %v8990 = vor.u32 1.1754944e-38, %v8989
  %v8991 = vsel %vm8988, %v8990, %v8986
  %v8992 = vrcp.pop %v8832
  %v8993 = vmul.f32 %v8832, %v8992
  %v8994 = vsub.f32 1.0, %v8993
  %v8995 = vmul.f32 %v8992, %v8994
  %v8996 = vadd.f32 %v8992, %v8995
  %vm8997 = vweird.f32 %v8832
  %vm8998 = vweird.f32 %v8992
  %vm8999 = vmor %vm8997, %vm8998
  %v9000 = vsel %vm8999, %v8992, %v8996
  %v9001 = vand.u32 2147483647, %v8832
  %vm9002 = vcmp.eq.f32.partialorder %v9001, 8.507059e+37
  %v9003 = vand.u32 %v8832, 2147483648
  %v9004 = vor.u32 1.1754944e-38, %v9003
  %v9005 = vsel %vm9002, %v9004, %v9000
  %v9006 = vrcp.pop %v8835
  %v9007 = vmul.f32 %v8835, %v9006
  %v9008 = vsub.f32 1.0, %v9007
  %v9009 = vmul.f32 %v9006, %v9008
  %v9010 = vadd.f32 %v9006, %v9009
  %vm9011 = vweird.f32 %v8835
  %vm9012 = vweird.f32 %v9006
  %vm9013 = vmor %vm9011, %vm9012
  %v9014 = vsel %vm9013, %v9006, %v9010
  %v9015 = vand.u32 2147483647, %v8835
  %vm9016 = vcmp.eq.f32.partialorder %v9015, 8.507059e+37
  %v9017 = vand.u32 %v8835, 2147483648
  %v9018 = vor.u32 1.1754944e-38, %v9017
  %v9019 = vsel %vm9016, %v9018, %v9014
  %v9020 = vrcp.pop %v8838
  %v9021 = vmul.f32 %v8838, %v9020
  %v9022 = vsub.f32 1.0, %v9021
  %v9023 = vmul.f32 %v9020, %v9022
  %v9024 = vadd.f32 %v9020, %v9023
  %vm9025 = vweird.f32 %v8838
  %vm9026 = vweird.f32 %v9020
  %vm9027 = vmor %vm9025, %vm9026
  %v9028 = vsel %vm9027, %v9020, %v9024
  %v9029 = vand.u32 2147483647, %v8838
  %vm9030 = vcmp.eq.f32.partialorder %v9029, 8.507059e+37
  %v9031 = vand.u32 %v8838, 2147483648
  %v9032 = vor.u32 1.1754944e-38, %v9031
  %v9033 = vsel %vm9030, %v9032, %v9028
  %v9034 = vrcp.pop %v8841
  %v9035 = vmul.f32 %v8841, %v9034
  %v9036 = vsub.f32 1.0, %v9035
  %v9037 = vmul.f32 %v9034, %v9036
  %v9038 = vadd.f32 %v9034, %v9037
  %vm9039 = vweird.f32 %v8841
  %vm9040 = vweird.f32 %v9034
  %vm9041 = vmor %vm9039, %vm9040
  %v9042 = vsel %vm9041, %v9034, %v9038
  %v9043 = vand.u32 2147483647, %v8841
  %vm9044 = vcmp.eq.f32.partialorder %v9043, 8.507059e+37
  %v9045 = vand.u32 %v8841, 2147483648
  %v9046 = vor.u32 1.1754944e-38, %v9045
  %v9047 = vsel %vm9044, %v9046, %v9042
  %v9048 = vrcp.pop %v8844
  %v9049 = vmul.f32 %v8844, %v9048
  %v9050 = vsub.f32 1.0, %v9049
  %v9051 = vmul.f32 %v9048, %v9050
  %v9052 = vadd.f32 %v9048, %v9051
  %vm9053 = vweird.f32 %v8844
  %vm9054 = vweird.f32 %v9048
  %vm9055 = vmor %vm9053, %vm9054
  %v9056 = vsel %vm9055, %v9048, %v9052
  %v9057 = vand.u32 2147483647, %v8844
  %vm9058 = vcmp.eq.f32.partialorder %v9057, 8.507059e+37
  %v9059 = vand.u32 %v8844, 2147483648
  %v9060 = vor.u32 1.1754944e-38, %v9059
  %v9061 = vsel %vm9058, %v9060, %v9056
  %v9062 = vrcp.pop %v8847
  %v9063 = vmul.f32 %v8847, %v9062
  %v9064 = vsub.f32 1.0, %v9063
  %v9065 = vmul.f32 %v9062, %v9064
  %v9066 = vadd.f32 %v9062, %v9065
  %vm9067 = vweird.f32 %v8847
  %vm9068 = vweird.f32 %v9062
  %vm9069 = vmor %vm9067, %vm9068
  %v9070 = vsel %vm9069, %v9062, %v9066
  %v9071 = vand.u32 2147483647, %v8847
  %vm9072 = vcmp.eq.f32.partialorder %v9071, 8.507059e+37
  %v9073 = vand.u32 %v8847, 2147483648
  %v9074 = vor.u32 1.1754944e-38, %v9073
  %v9075 = vsel %vm9072, %v9074, %v9070
  %v9076 = vrcp.pop %v8850
  %v9077 = vmul.f32 %v8850, %v9076
  %v9078 = vsub.f32 1.0, %v9077
  %v9079 = vmul.f32 %v9076, %v9078
  %v9080 = vadd.f32 %v9076, %v9079
  %vm9081 = vweird.f32 %v8850
  %vm9082 = vweird.f32 %v9076
  %vm9083 = vmor %vm9081, %vm9082
  %v9084 = vsel %vm9083, %v9076, %v9080
  %v9085 = vand.u32 2147483647, %v8850
  %vm9086 = vcmp.eq.f32.partialorder %v9085, 8.507059e+37
  %v9087 = vand.u32 %v8850, 2147483648
  %v9088 = vor.u32 1.1754944e-38, %v9087
  %v9089 = vsel %vm9086, %v9088, %v9084
  %v9090 = vrcp.pop %v8853
  %v9091 = vmul.f32 %v8853, %v9090
  %v9092 = vsub.f32 1.0, %v9091
  %v9093 = vmul.f32 %v9090, %v9092
  %v9094 = vadd.f32 %v9090, %v9093
  %vm9095 = vweird.f32 %v8853
  %vm9096 = vweird.f32 %v9090
  %vm9097 = vmor %vm9095, %vm9096
  %v9098 = vsel %vm9097, %v9090, %v9094
  %v9099 = vand.u32 2147483647, %v8853
  %vm9100 = vcmp.eq.f32.partialorder %v9099, 8.507059e+37
  %v9101 = vand.u32 %v8853, 2147483648
  %v9102 = vor.u32 1.1754944e-38, %v9101
  %v9103 = vsel %vm9100, %v9102, %v9098
  %v9104 = vrcp.pop %v8856
  %v9105 = vmul.f32 %v8856, %v9104
  %v9106 = vsub.f32 1.0, %v9105
  %v9107 = vmul.f32 %v9104, %v9106
  %v9108 = vadd.f32 %v9104, %v9107
  %vm9109 = vweird.f32 %v8856
  %vm9110 = vweird.f32 %v9104
  %vm9111 = vmor %vm9109, %vm9110
  %v9112 = vsel %vm9111, %v9104, %v9108
  %v9113 = vand.u32 2147483647, %v8856
  %vm9114 = vcmp.eq.f32.partialorder %v9113, 8.507059e+37
  %v9115 = vand.u32 %v8856, 2147483648
  %v9116 = vor.u32 1.1754944e-38, %v9115
  %v9117 = vsel %vm9114, %v9116, %v9112
  %v9118 = vrcp.pop %v8859
  %v9119 = vmul.f32 %v8859, %v9118
  %v9120 = vsub.f32 1.0, %v9119
  %v9121 = vmul.f32 %v9118, %v9120
  %v9122 = vadd.f32 %v9118, %v9121
  %vm9123 = vweird.f32 %v8859
  %vm9124 = vweird.f32 %v9118
  %vm9125 = vmor %vm9123, %vm9124
  %v9126 = vsel %vm9125, %v9118, %v9122
  %v9127 = vand.u32 2147483647, %v8859
  %vm9128 = vcmp.eq.f32.partialorder %v9127, 8.507059e+37
  %v9129 = vand.u32 %v8859, 2147483648
  %v9130 = vor.u32 1.1754944e-38, %v9129
  %v9131 = vsel %vm9128, %v9130, %v9126
  %v9132 = vrcp.pop %v8862
  %v9133 = vmul.f32 %v8862, %v9132
  %v9134 = vsub.f32 1.0, %v9133
  %v9135 = vmul.f32 %v9132, %v9134
  %v9136 = vadd.f32 %v9132, %v9135
  %vm9137 = vweird.f32 %v8862
  %vm9138 = vweird.f32 %v9132
  %vm9139 = vmor %vm9137, %vm9138
  %v9140 = vsel %vm9139, %v9132, %v9136
  %v9141 = vand.u32 2147483647, %v8862
  %vm9142 = vcmp.eq.f32.partialorder %v9141, 8.507059e+37
  %v9143 = vand.u32 %v8862, 2147483648
  %v9144 = vor.u32 1.1754944e-38, %v9143
  %v9145 = vsel %vm9142, %v9144, %v9140
  %v9146 = vrcp.pop %v8865
  %v9147 = vmul.f32 %v8865, %v9146
  %v9148 = vsub.f32 1.0, %v9147
  %v9149 = vmul.f32 %v9146, %v9148
  %v9150 = vadd.f32 %v9146, %v9149
  %vm9151 = vweird.f32 %v8865
  %vm9152 = vweird.f32 %v9146
  %vm9153 = vmor %vm9151, %vm9152
  %v9154 = vsel %vm9153, %v9146, %v9150
  %v9155 = vand.u32 2147483647, %v8865
  %vm9156 = vcmp.eq.f32.partialorder %v9155, 8.507059e+37
  %v9157 = vand.u32 %v8865, 2147483648
  %v9158 = vor.u32 1.1754944e-38, %v9157
  %v9159 = vsel %vm9156, %v9158, %v9154
  %v9160 = vrcp.pop %v8868
  %v9161 = vmul.f32 %v8868, %v9160
  %v9162 = vsub.f32 1.0, %v9161
  %v9163 = vmul.f32 %v9160, %v9162
  %v9164 = vadd.f32 %v9160, %v9163
  %vm9165 = vweird.f32 %v8868
  %vm9166 = vweird.f32 %v9160
  %vm9167 = vmor %vm9165, %vm9166
  %v9168 = vsel %vm9167, %v9160, %v9164
  %v9169 = vand.u32 2147483647, %v8868
  %vm9170 = vcmp.eq.f32.partialorder %v9169, 8.507059e+37
  %v9171 = vand.u32 %v8868, 2147483648
  %v9172 = vor.u32 1.1754944e-38, %v9171
  %v9173 = vsel %vm9170, %v9172, %v9168
  %v9174 = vrcp.pop %v8871
  %v9175 = vmul.f32 %v8871, %v9174
  %v9176 = vsub.f32 1.0, %v9175
  %v9177 = vmul.f32 %v9174, %v9176
  %v9178 = vadd.f32 %v9174, %v9177
  %vm9179 = vweird.f32 %v8871
  %vm9180 = vweird.f32 %v9174
  %vm9181 = vmor %vm9179, %vm9180
  %v9182 = vsel %vm9181, %v9174, %v9178
  %v9183 = vand.u32 2147483647, %v8871
  %vm9184 = vcmp.eq.f32.partialorder %v9183, 8.507059e+37
  %v9185 = vand.u32 %v8871, 2147483648
  %v9186 = vor.u32 1.1754944e-38, %v9185
  %v9187 = vsel %vm9184, %v9186, %v9182
  %v9188 = vrcp.pop %v8874
  %v9189 = vmul.f32 %v8874, %v9188
  %v9190 = vsub.f32 1.0, %v9189
  %v9191 = vmul.f32 %v9188, %v9190
  %v9192 = vadd.f32 %v9188, %v9191
  %vm9193 = vweird.f32 %v8874
  %vm9194 = vweird.f32 %v9188
  %vm9195 = vmor %vm9193, %vm9194
  %v9196 = vsel %vm9195, %v9188, %v9192
  %v9197 = vand.u32 2147483647, %v8874
  %vm9198 = vcmp.eq.f32.partialorder %v9197, 8.507059e+37
  %v9199 = vand.u32 %v8874, 2147483648
  %v9200 = vor.u32 1.1754944e-38, %v9199
  %v9201 = vsel %vm9198, %v9200, %v9196
  %v9202 = vrcp.pop %v8877
  %v9203 = vmul.f32 %v8877, %v9202
  %v9204 = vsub.f32 1.0, %v9203
  %v9205 = vmul.f32 %v9202, %v9204
  %v9206 = vadd.f32 %v9202, %v9205
  %vm9207 = vweird.f32 %v8877
  %vm9208 = vweird.f32 %v9202
  %vm9209 = vmor %vm9207, %vm9208
  %v9210 = vsel %vm9209, %v9202, %v9206
  %v9211 = vand.u32 2147483647, %v8877
  %vm9212 = vcmp.eq.f32.partialorder %v9211, 8.507059e+37
  %v9213 = vand.u32 %v8877, 2147483648
  %v9214 = vor.u32 1.1754944e-38, %v9213
  %v9215 = vsel %vm9212, %v9214, %v9210
  %v9216 = vrcp.pop %v8880
  %v9217 = vmul.f32 %v8880, %v9216
  %v9218 = vsub.f32 1.0, %v9217
  %v9219 = vmul.f32 %v9216, %v9218
  %v9220 = vadd.f32 %v9216, %v9219
  %vm9221 = vweird.f32 %v8880
  %vm9222 = vweird.f32 %v9216
  %vm9223 = vmor %vm9221, %vm9222
  %v9224 = vsel %vm9223, %v9216, %v9220
  %v9225 = vand.u32 2147483647, %v8880
  %vm9226 = vcmp.eq.f32.partialorder %v9225, 8.507059e+37
  %v9227 = vand.u32 %v8880, 2147483648
  %v9228 = vor.u32 1.1754944e-38, %v9227
  %v9229 = vsel %vm9226, %v9228, %v9224
  %v9230 = vrcp.pop %v8883
  %v9231 = vmul.f32 %v8883, %v9230
  %v9232 = vsub.f32 1.0, %v9231
  %v9233 = vmul.f32 %v9230, %v9232
  %v9234 = vadd.f32 %v9230, %v9233
  %vm9235 = vweird.f32 %v8883
  %vm9236 = vweird.f32 %v9230
  %vm9237 = vmor %vm9235, %vm9236
  %v9238 = vsel %vm9237, %v9230, %v9234
  %v9239 = vand.u32 2147483647, %v8883
  %vm9240 = vcmp.eq.f32.partialorder %v9239, 8.507059e+37
  %v9241 = vand.u32 %v8883, 2147483648
  %v9242 = vor.u32 1.1754944e-38, %v9241
  %v9243 = vsel %vm9240, %v9242, %v9238
  %v9244 = vrcp.pop %v8886
  %v9245 = vmul.f32 %v8886, %v9244
  %v9246 = vsub.f32 1.0, %v9245
  %v9247 = vmul.f32 %v9244, %v9246
  %v9248 = vadd.f32 %v9244, %v9247
  %vm9249 = vweird.f32 %v8886
  %vm9250 = vweird.f32 %v9244
  %vm9251 = vmor %vm9249, %vm9250
  %v9252 = vsel %vm9251, %v9244, %v9248
  %v9253 = vand.u32 2147483647, %v8886
  %vm9254 = vcmp.eq.f32.partialorder %v9253, 8.507059e+37
  %v9255 = vand.u32 %v8886, 2147483648
  %v9256 = vor.u32 1.1754944e-38, %v9255
  %v9257 = vsel %vm9254, %v9256, %v9252
  %v9258 = vrcp.pop %v8889
  %v9259 = vmul.f32 %v8889, %v9258
  %v9260 = vsub.f32 1.0, %v9259
  %v9261 = vmul.f32 %v9258, %v9260
  %v9262 = vadd.f32 %v9258, %v9261
  %vm9263 = vweird.f32 %v8889
  %vm9264 = vweird.f32 %v9258
  %vm9265 = vmor %vm9263, %vm9264
  %v9266 = vsel %vm9265, %v9258, %v9262
  %v9267 = vand.u32 2147483647, %v8889
  %vm9268 = vcmp.eq.f32.partialorder %v9267, 8.507059e+37
  %v9269 = vand.u32 %v8889, 2147483648
  %v9270 = vor.u32 1.1754944e-38, %v9269
  %v9271 = vsel %vm9268, %v9270, %v9266
  %v9272 = vrcp.pop %v8892
  %v9273 = vmul.f32 %v8892, %v9272
  %v9274 = vsub.f32 1.0, %v9273
  %v9275 = vmul.f32 %v9272, %v9274
  %v9276 = vadd.f32 %v9272, %v9275
  %vm9277 = vweird.f32 %v8892
  %vm9278 = vweird.f32 %v9272
  %vm9279 = vmor %vm9277, %vm9278
  %v9280 = vsel %vm9279, %v9272, %v9276
  %v9281 = vand.u32 2147483647, %v8892
  %vm9282 = vcmp.eq.f32.partialorder %v9281, 8.507059e+37
  %v9283 = vand.u32 %v8892, 2147483648
  %v9284 = vor.u32 1.1754944e-38, %v9283
  %v9285 = vsel %vm9282, %v9284, %v9280
  %v9286 = vrcp.pop %v8895
  %v9287 = vmul.f32 %v8895, %v9286
  %v9288 = vsub.f32 1.0, %v9287
  %v9289 = vmul.f32 %v9286, %v9288
  %v9290 = vadd.f32 %v9286, %v9289
  %vm9291 = vweird.f32 %v8895
  %vm9292 = vweird.f32 %v9286
  %vm9293 = vmor %vm9291, %vm9292
  %v9294 = vsel %vm9293, %v9286, %v9290
  %v9295 = vand.u32 2147483647, %v8895
  %vm9296 = vcmp.eq.f32.partialorder %v9295, 8.507059e+37
  %v9297 = vand.u32 %v8895, 2147483648
  %v9298 = vor.u32 1.1754944e-38, %v9297
  %v9299 = vsel %vm9296, %v9298, %v9294
  %v9300 = vrcp.pop %v8898
  %v9301 = vmul.f32 %v8898, %v9300
  %v9302 = vsub.f32 1.0, %v9301
  %v9303 = vmul.f32 %v9300, %v9302
  %v9304 = vadd.f32 %v9300, %v9303
  %vm9305 = vweird.f32 %v8898
  %vm9306 = vweird.f32 %v9300
  %vm9307 = vmor %vm9305, %vm9306
  %v9308 = vsel %vm9307, %v9300, %v9304
  %v9309 = vand.u32 2147483647, %v8898
  %vm9310 = vcmp.eq.f32.partialorder %v9309, 8.507059e+37
  %v9311 = vand.u32 %v8898, 2147483648
  %v9312 = vor.u32 1.1754944e-38, %v9311
  %v9313 = vsel %vm9310, %v9312, %v9308
  %v9314 = vrcp.pop %v8901
  %v9315 = vmul.f32 %v8901, %v9314
  %v9316 = vsub.f32 1.0, %v9315
  %v9317 = vmul.f32 %v9314, %v9316
  %v9318 = vadd.f32 %v9314, %v9317
  %vm9319 = vweird.f32 %v8901
  %vm9320 = vweird.f32 %v9314
  %vm9321 = vmor %vm9319, %vm9320
  %v9322 = vsel %vm9321, %v9314, %v9318
  %v9323 = vand.u32 2147483647, %v8901
  %vm9324 = vcmp.eq.f32.partialorder %v9323, 8.507059e+37
  %v9325 = vand.u32 %v8901, 2147483648
  %v9326 = vor.u32 1.1754944e-38, %v9325
  %v9327 = vsel %vm9324, %v9326, %v9322
  %v9328 = vrcp.pop %v8904
  %v9329 = vmul.f32 %v8904, %v9328
  %v9330 = vsub.f32 1.0, %v9329
  %v9331 = vmul.f32 %v9328, %v9330
  %v9332 = vadd.f32 %v9328, %v9331
  %vm9333 = vweird.f32 %v8904
  %vm9334 = vweird.f32 %v9328
  %vm9335 = vmor %vm9333, %vm9334
  %v9336 = vsel %vm9335, %v9328, %v9332
  %v9337 = vand.u32 2147483647, %v8904
  %vm9338 = vcmp.eq.f32.partialorder %v9337, 8.507059e+37
  %v9339 = vand.u32 %v8904, 2147483648
  %v9340 = vor.u32 1.1754944e-38, %v9339
  %v9341 = vsel %vm9338, %v9340, %v9336
  %v9342 = vrcp.pop %v8907
  %v9343 = vmul.f32 %v8907, %v9342
  %v9344 = vsub.f32 1.0, %v9343
  %v9345 = vmul.f32 %v9342, %v9344
  %v9346 = vadd.f32 %v9342, %v9345
  %vm9347 = vweird.f32 %v8907
  %vm9348 = vweird.f32 %v9342
  %vm9349 = vmor %vm9347, %vm9348
  %v9350 = vsel %vm9349, %v9342, %v9346
  %v9351 = vand.u32 2147483647, %v8907
  %vm9352 = vcmp.eq.f32.partialorder %v9351, 8.507059e+37
  %v9353 = vand.u32 %v8907, 2147483648
  %v9354 = vor.u32 1.1754944e-38, %v9353
  %v9355 = vsel %vm9352, %v9354, %v9350
  %v9356 = vmul.f32 %v8749, %v8921
  %v9357 = vmul.f32 %v8751, %v8935
  %v9358 = vmul.f32 %v8753, %v8949
  %v9359 = vmul.f32 %v8755, %v8963
  %v9360 = vmul.f32 %v8757, %v8977
  %v9361 = vmul.f32 %v8759, %v8991
  %v9362 = vmul.f32 %v8761, %v9005
  %v9363 = vmul.f32 %v8763, %v9019
  %v9364 = vmul.f32 %v8765, %v9033
  %v9365 = vmul.f32 %v8767, %v9047
  %v9366 = vmul.f32 %v8769, %v9061
  %v9367 = vmul.f32 %v8771, %v9075
  %v9368 = vmul.f32 %v8773, %v9089
  %v9369 = vmul.f32 %v8775, %v9103
  %v9370 = vmul.f32 %v8777, %v9117
  %v9371 = vmul.f32 %v8779, %v9131
  %v9372 = vmul.f32 %v8781, %v9145
  %v9373 = vmul.f32 %v8783, %v9159
  %v9374 = vmul.f32 %v8785, %v9173
  %v9375 = vmul.f32 %v8787, %v9187
  %v9376 = vmul.f32 %v8789, %v9201
  %v9377 = vmul.f32 %v8791, %v9215
  %v9378 = vmul.f32 %v8793, %v9229
  %v9379 = vmul.f32 %v8795, %v9243
  %v9380 = vmul.f32 %v8797, %v9257
  %v9381 = vmul.f32 %v8799, %v9271
  %v9382 = vmul.f32 %v8801, %v9285
  %v9383 = vmul.f32 %v8803, %v9299
  %v9384 = vmul.f32 %v8805, %v9313
  %v9385 = vmul.f32 %v8807, %v9327
  %v9386 = vmul.f32 %v8809, %v9341
  %v9387 = vmul.f32 %v8811, %v9355
  %v9389 = vsel %vm1407, %v9356, 0
  %9391 = vmatpush.msra.mxu0 0.0
  %9392 = vmatpush.msra.mxu0 0.0
  %9393 = vmatpush.msra.mxu0 0.0
  %9394 = vmatpush.msra.mxu0 0.0
  %9395 = vmatpush.msra.mxu0 0.0
  %9396 = vmatpush.msra.mxu0 0.0
  %9397 = vmatpush.msra.mxu0 0.0
  %9398 = vmatpush.msra.mxu0 0.0
  %9399 = vmatpush.msra.mxu0 0.0
  %9400 = vmatpush.msra.mxu0 0.0
  %9401 = vmatpush.msra.mxu0 0.0
  %9402 = vmatpush.msra.mxu0 0.0
  %9403 = vmatpush.msra.mxu0 0.0
  %9404 = vmatpush.msra.mxu0 0.0
  %9405 = vmatpush.msra.mxu0 0.0
  %9406 = vmatpush.msra.mxu0 %v2177
  %9407 = vmatmul.f32.gmra.mxu0 %v9389
  %v9408 = vpop.f32.mrf.mxu0
  %v9409 = vadd.f32 0.0, %v9408
  %9410 = vdwg.mxu0
  %v9412 = vsel %vm1407, %v9357, 0
  %9414 = vmatpush.msra.mxu0 0.0
  %9415 = vmatpush.msra.mxu0 0.0
  %9416 = vmatpush.msra.mxu0 0.0
  %9417 = vmatpush.msra.mxu0 0.0
  %9418 = vmatpush.msra.mxu0 0.0
  %9419 = vmatpush.msra.mxu0 0.0
  %9420 = vmatpush.msra.mxu0 0.0
  %9421 = vmatpush.msra.mxu0 0.0
  %9422 = vmatpush.msra.mxu0 0.0
  %9423 = vmatpush.msra.mxu0 0.0
  %9424 = vmatpush.msra.mxu0 0.0
  %9425 = vmatpush.msra.mxu0 0.0
  %9426 = vmatpush.msra.mxu0 0.0
  %9427 = vmatpush.msra.mxu0 0.0
  %9428 = vmatpush.msra.mxu0 0.0
  %9429 = vmatpush.msra.mxu0 %v2203
  %9430 = vmatmul.f32.gmra.mxu0 %v9412
  %v9431 = vpop.f32.mrf.mxu0
  %v9432 = vadd.f32 0.0, %v9431
  %9433 = vdwg.mxu0
  %v9435 = vsel %vm1407, %v9358, 0
  %9437 = vmatpush.msra.mxu0 0.0
  %9438 = vmatpush.msra.mxu0 0.0
  %9439 = vmatpush.msra.mxu0 0.0
  %9440 = vmatpush.msra.mxu0 0.0
  %9441 = vmatpush.msra.mxu0 0.0
  %9442 = vmatpush.msra.mxu0 0.0
  %9443 = vmatpush.msra.mxu0 0.0
  %9444 = vmatpush.msra.mxu0 0.0
  %9445 = vmatpush.msra.mxu0 0.0
  %9446 = vmatpush.msra.mxu0 0.0
  %9447 = vmatpush.msra.mxu0 0.0
  %9448 = vmatpush.msra.mxu0 0.0
  %9449 = vmatpush.msra.mxu0 0.0
  %9450 = vmatpush.msra.mxu0 0.0
  %9451 = vmatpush.msra.mxu0 0.0
  %9452 = vmatpush.msra.mxu0 %v2229
  %9453 = vmatmul.f32.gmra.mxu0 %v9435
  %v9454 = vpop.f32.mrf.mxu0
  %v9455 = vadd.f32 0.0, %v9454
  %9456 = vdwg.mxu0
  %v9458 = vsel %vm1407, %v9359, 0
  %9460 = vmatpush.msra.mxu0 0.0
  %9461 = vmatpush.msra.mxu0 0.0
  %9462 = vmatpush.msra.mxu0 0.0
  %9463 = vmatpush.msra.mxu0 0.0
  %9464 = vmatpush.msra.mxu0 0.0
  %9465 = vmatpush.msra.mxu0 0.0
  %9466 = vmatpush.msra.mxu0 0.0
  %9467 = vmatpush.msra.mxu0 0.0
  %9468 = vmatpush.msra.mxu0 0.0
  %9469 = vmatpush.msra.mxu0 0.0
  %9470 = vmatpush.msra.mxu0 0.0
  %9471 = vmatpush.msra.mxu0 0.0
  %9472 = vmatpush.msra.mxu0 0.0
  %9473 = vmatpush.msra.mxu0 0.0
  %9474 = vmatpush.msra.mxu0 0.0
  %9475 = vmatpush.msra.mxu0 %v2255
  %9476 = vmatmul.f32.gmra.mxu0 %v9458
  %v9477 = vpop.f32.mrf.mxu0
  %v9478 = vadd.f32 0.0, %v9477
  %9479 = vdwg.mxu0
  %v9481 = vsel %vm1407, %v9360, 0
  %9483 = vmatpush.msra.mxu0 0.0
  %9484 = vmatpush.msra.mxu0 0.0
  %9485 = vmatpush.msra.mxu0 0.0
  %9486 = vmatpush.msra.mxu0 0.0
  %9487 = vmatpush.msra.mxu0 0.0
  %9488 = vmatpush.msra.mxu0 0.0
  %9489 = vmatpush.msra.mxu0 0.0
  %9490 = vmatpush.msra.mxu0 0.0
  %9491 = vmatpush.msra.mxu0 0.0
  %9492 = vmatpush.msra.mxu0 0.0
  %9493 = vmatpush.msra.mxu0 0.0
  %9494 = vmatpush.msra.mxu0 0.0
  %9495 = vmatpush.msra.mxu0 0.0
  %9496 = vmatpush.msra.mxu0 0.0
  %9497 = vmatpush.msra.mxu0 0.0
  %9498 = vmatpush.msra.mxu0 %v2281
  %9499 = vmatmul.f32.gmra.mxu0 %v9481
  %v9500 = vpop.f32.mrf.mxu0
  %v9501 = vadd.f32 0.0, %v9500
  %9502 = vdwg.mxu0
  %v9504 = vsel %vm1407, %v9361, 0
  %9506 = vmatpush.msra.mxu0 0.0
  %9507 = vmatpush.msra.mxu0 0.0
  %9508 = vmatpush.msra.mxu0 0.0
  %9509 = vmatpush.msra.mxu0 0.0
  %9510 = vmatpush.msra.mxu0 0.0
  %9511 = vmatpush.msra.mxu0 0.0
  %9512 = vmatpush.msra.mxu0 0.0
  %9513 = vmatpush.msra.mxu0 0.0
  %9514 = vmatpush.msra.mxu0 0.0
  %9515 = vmatpush.msra.mxu0 0.0
  %9516 = vmatpush.msra.mxu0 0.0
  %9517 = vmatpush.msra.mxu0 0.0
  %9518 = vmatpush.msra.mxu0 0.0
  %9519 = vmatpush.msra.mxu0 0.0
  %9520 = vmatpush.msra.mxu0 0.0
  %9521 = vmatpush.msra.mxu0 %v2307
  %9522 = vmatmul.f32.gmra.mxu0 %v9504
  %v9523 = vpop.f32.mrf.mxu0
  %v9524 = vadd.f32 0.0, %v9523
  %9525 = vdwg.mxu0
  %v9527 = vsel %vm1407, %v9362, 0
  %9529 = vmatpush.msra.mxu0 0.0
  %9530 = vmatpush.msra.mxu0 0.0
  %9531 = vmatpush.msra.mxu0 0.0
  %9532 = vmatpush.msra.mxu0 0.0
  %9533 = vmatpush.msra.mxu0 0.0
  %9534 = vmatpush.msra.mxu0 0.0
  %9535 = vmatpush.msra.mxu0 0.0
  %9536 = vmatpush.msra.mxu0 0.0
  %9537 = vmatpush.msra.mxu0 0.0
  %9538 = vmatpush.msra.mxu0 0.0
  %9539 = vmatpush.msra.mxu0 0.0
  %9540 = vmatpush.msra.mxu0 0.0
  %9541 = vmatpush.msra.mxu0 0.0
  %9542 = vmatpush.msra.mxu0 0.0
  %9543 = vmatpush.msra.mxu0 0.0
  %9544 = vmatpush.msra.mxu0 %v2333
  %9545 = vmatmul.f32.gmra.mxu0 %v9527
  %v9546 = vpop.f32.mrf.mxu0
  %v9547 = vadd.f32 0.0, %v9546
  %9548 = vdwg.mxu0
  %v9550 = vsel %vm1407, %v9363, 0
  %9552 = vmatpush.msra.mxu0 0.0
  %9553 = vmatpush.msra.mxu0 0.0
  %9554 = vmatpush.msra.mxu0 0.0
  %9555 = vmatpush.msra.mxu0 0.0
  %9556 = vmatpush.msra.mxu0 0.0
  %9557 = vmatpush.msra.mxu0 0.0
  %9558 = vmatpush.msra.mxu0 0.0
  %9559 = vmatpush.msra.mxu0 0.0
  %9560 = vmatpush.msra.mxu0 0.0
  %9561 = vmatpush.msra.mxu0 0.0
  %9562 = vmatpush.msra.mxu0 0.0
  %9563 = vmatpush.msra.mxu0 0.0
  %9564 = vmatpush.msra.mxu0 0.0
  %9565 = vmatpush.msra.mxu0 0.0
  %9566 = vmatpush.msra.mxu0 0.0
  %9567 = vmatpush.msra.mxu0 %v2359
  %9568 = vmatmul.f32.gmra.mxu0 %v9550
  %v9569 = vpop.f32.mrf.mxu0
  %v9570 = vadd.f32 0.0, %v9569
  %9571 = vdwg.mxu0
  %v9573 = vsel %vm1407, %v9364, 0
  %9575 = vmatpush.msra.mxu0 0.0
  %9576 = vmatpush.msra.mxu0 0.0
  %9577 = vmatpush.msra.mxu0 0.0
  %9578 = vmatpush.msra.mxu0 0.0
  %9579 = vmatpush.msra.mxu0 0.0
  %9580 = vmatpush.msra.mxu0 0.0
  %9581 = vmatpush.msra.mxu0 0.0
  %9582 = vmatpush.msra.mxu0 0.0
  %9583 = vmatpush.msra.mxu0 0.0
  %9584 = vmatpush.msra.mxu0 0.0
  %9585 = vmatpush.msra.mxu0 0.0
  %9586 = vmatpush.msra.mxu0 0.0
  %9587 = vmatpush.msra.mxu0 0.0
  %9588 = vmatpush.msra.mxu0 0.0
  %9589 = vmatpush.msra.mxu0 0.0
  %9590 = vmatpush.msra.mxu0 %v2385
  %9591 = vmatmul.f32.gmra.mxu0 %v9573
  %v9592 = vpop.f32.mrf.mxu0
  %v9593 = vadd.f32 0.0, %v9592
  %9594 = vdwg.mxu0
  %v9596 = vsel %vm1407, %v9365, 0
  %9598 = vmatpush.msra.mxu0 0.0
  %9599 = vmatpush.msra.mxu0 0.0
  %9600 = vmatpush.msra.mxu0 0.0
  %9601 = vmatpush.msra.mxu0 0.0
  %9602 = vmatpush.msra.mxu0 0.0
  %9603 = vmatpush.msra.mxu0 0.0
  %9604 = vmatpush.msra.mxu0 0.0
  %9605 = vmatpush.msra.mxu0 0.0
  %9606 = vmatpush.msra.mxu0 0.0
  %9607 = vmatpush.msra.mxu0 0.0
  %9608 = vmatpush.msra.mxu0 0.0
  %9609 = vmatpush.msra.mxu0 0.0
  %9610 = vmatpush.msra.mxu0 0.0
  %9611 = vmatpush.msra.mxu0 0.0
  %9612 = vmatpush.msra.mxu0 0.0
  %9613 = vmatpush.msra.mxu0 %v2411
  %9614 = vmatmul.f32.gmra.mxu0 %v9596
  %v9615 = vpop.f32.mrf.mxu0
  %v9616 = vadd.f32 0.0, %v9615
  %9617 = vdwg.mxu0
  %v9619 = vsel %vm1407, %v9366, 0
  %9621 = vmatpush.msra.mxu0 0.0
  %9622 = vmatpush.msra.mxu0 0.0
  %9623 = vmatpush.msra.mxu0 0.0
  %9624 = vmatpush.msra.mxu0 0.0
  %9625 = vmatpush.msra.mxu0 0.0
  %9626 = vmatpush.msra.mxu0 0.0
  %9627 = vmatpush.msra.mxu0 0.0
  %9628 = vmatpush.msra.mxu0 0.0
  %9629 = vmatpush.msra.mxu0 0.0
  %9630 = vmatpush.msra.mxu0 0.0
  %9631 = vmatpush.msra.mxu0 0.0
  %9632 = vmatpush.msra.mxu0 0.0
  %9633 = vmatpush.msra.mxu0 0.0
  %9634 = vmatpush.msra.mxu0 0.0
  %9635 = vmatpush.msra.mxu0 0.0
  %9636 = vmatpush.msra.mxu0 %v2437
  %9637 = vmatmul.f32.gmra.mxu0 %v9619
  %v9638 = vpop.f32.mrf.mxu0
  %v9639 = vadd.f32 0.0, %v9638
  %9640 = vdwg.mxu0
  %v9642 = vsel %vm1407, %v9367, 0
  %9644 = vmatpush.msra.mxu0 0.0
  %9645 = vmatpush.msra.mxu0 0.0
  %9646 = vmatpush.msra.mxu0 0.0
  %9647 = vmatpush.msra.mxu0 0.0
  %9648 = vmatpush.msra.mxu0 0.0
  %9649 = vmatpush.msra.mxu0 0.0
  %9650 = vmatpush.msra.mxu0 0.0
  %9651 = vmatpush.msra.mxu0 0.0
  %9652 = vmatpush.msra.mxu0 0.0
  %9653 = vmatpush.msra.mxu0 0.0
  %9654 = vmatpush.msra.mxu0 0.0
  %9655 = vmatpush.msra.mxu0 0.0
  %9656 = vmatpush.msra.mxu0 0.0
  %9657 = vmatpush.msra.mxu0 0.0
  %9658 = vmatpush.msra.mxu0 0.0
  %9659 = vmatpush.msra.mxu0 %v2463
  %9660 = vmatmul.f32.gmra.mxu0 %v9642
  %v9661 = vpop.f32.mrf.mxu0
  %v9662 = vadd.f32 0.0, %v9661
  %9663 = vdwg.mxu0
  %v9665 = vsel %vm1407, %v9368, 0
  %9667 = vmatpush.msra.mxu0 0.0
  %9668 = vmatpush.msra.mxu0 0.0
  %9669 = vmatpush.msra.mxu0 0.0
  %9670 = vmatpush.msra.mxu0 0.0
  %9671 = vmatpush.msra.mxu0 0.0
  %9672 = vmatpush.msra.mxu0 0.0
  %9673 = vmatpush.msra.mxu0 0.0
  %9674 = vmatpush.msra.mxu0 0.0
  %9675 = vmatpush.msra.mxu0 0.0
  %9676 = vmatpush.msra.mxu0 0.0
  %9677 = vmatpush.msra.mxu0 0.0
  %9678 = vmatpush.msra.mxu0 0.0
  %9679 = vmatpush.msra.mxu0 0.0
  %9680 = vmatpush.msra.mxu0 0.0
  %9681 = vmatpush.msra.mxu0 0.0
  %9682 = vmatpush.msra.mxu0 %v2489
  %9683 = vmatmul.f32.gmra.mxu0 %v9665
  %v9684 = vpop.f32.mrf.mxu0
  %v9685 = vadd.f32 0.0, %v9684
  %9686 = vdwg.mxu0
  %v9688 = vsel %vm1407, %v9369, 0
  %9690 = vmatpush.msra.mxu0 0.0
  %9691 = vmatpush.msra.mxu0 0.0
  %9692 = vmatpush.msra.mxu0 0.0
  %9693 = vmatpush.msra.mxu0 0.0
  %9694 = vmatpush.msra.mxu0 0.0
  %9695 = vmatpush.msra.mxu0 0.0
  %9696 = vmatpush.msra.mxu0 0.0
  %9697 = vmatpush.msra.mxu0 0.0
  %9698 = vmatpush.msra.mxu0 0.0
  %9699 = vmatpush.msra.mxu0 0.0
  %9700 = vmatpush.msra.mxu0 0.0
  %9701 = vmatpush.msra.mxu0 0.0
  %9702 = vmatpush.msra.mxu0 0.0
  %9703 = vmatpush.msra.mxu0 0.0
  %9704 = vmatpush.msra.mxu0 0.0
  %9705 = vmatpush.msra.mxu0 %v2515
  %9706 = vmatmul.f32.gmra.mxu0 %v9688
  %v9707 = vpop.f32.mrf.mxu0
  %v9708 = vadd.f32 0.0, %v9707
  %9709 = vdwg.mxu0
  %v9711 = vsel %vm1407, %v9370, 0
  %9713 = vmatpush.msra.mxu0 0.0
  %9714 = vmatpush.msra.mxu0 0.0
  %9715 = vmatpush.msra.mxu0 0.0
  %9716 = vmatpush.msra.mxu0 0.0
  %9717 = vmatpush.msra.mxu0 0.0
  %9718 = vmatpush.msra.mxu0 0.0
  %9719 = vmatpush.msra.mxu0 0.0
  %9720 = vmatpush.msra.mxu0 0.0
  %9721 = vmatpush.msra.mxu0 0.0
  %9722 = vmatpush.msra.mxu0 0.0
  %9723 = vmatpush.msra.mxu0 0.0
  %9724 = vmatpush.msra.mxu0 0.0
  %9725 = vmatpush.msra.mxu0 0.0
  %9726 = vmatpush.msra.mxu0 0.0
  %9727 = vmatpush.msra.mxu0 0.0
  %9728 = vmatpush.msra.mxu0 %v2541
  %9729 = vmatmul.f32.gmra.mxu0 %v9711
  %v9730 = vpop.f32.mrf.mxu0
  %v9731 = vadd.f32 0.0, %v9730
  %9732 = vdwg.mxu0
  %v9734 = vsel %vm1407, %v9371, 0
  %9736 = vmatpush.msra.mxu0 0.0
  %9737 = vmatpush.msra.mxu0 0.0
  %9738 = vmatpush.msra.mxu0 0.0
  %9739 = vmatpush.msra.mxu0 0.0
  %9740 = vmatpush.msra.mxu0 0.0
  %9741 = vmatpush.msra.mxu0 0.0
  %9742 = vmatpush.msra.mxu0 0.0
  %9743 = vmatpush.msra.mxu0 0.0
  %9744 = vmatpush.msra.mxu0 0.0
  %9745 = vmatpush.msra.mxu0 0.0
  %9746 = vmatpush.msra.mxu0 0.0
  %9747 = vmatpush.msra.mxu0 0.0
  %9748 = vmatpush.msra.mxu0 0.0
  %9749 = vmatpush.msra.mxu0 0.0
  %9750 = vmatpush.msra.mxu0 0.0
  %9751 = vmatpush.msra.mxu0 %v2567
  %9752 = vmatmul.f32.gmra.mxu0 %v9734
  %v9753 = vpop.f32.mrf.mxu0
  %v9754 = vadd.f32 0.0, %v9753
  %9755 = vdwg.mxu0
  %v9757 = vsel %vm1407, %v9372, 0
  %9759 = vmatpush.msra.mxu0 0.0
  %9760 = vmatpush.msra.mxu0 0.0
  %9761 = vmatpush.msra.mxu0 0.0
  %9762 = vmatpush.msra.mxu0 0.0
  %9763 = vmatpush.msra.mxu0 0.0
  %9764 = vmatpush.msra.mxu0 0.0
  %9765 = vmatpush.msra.mxu0 0.0
  %9766 = vmatpush.msra.mxu0 0.0
  %9767 = vmatpush.msra.mxu0 0.0
  %9768 = vmatpush.msra.mxu0 0.0
  %9769 = vmatpush.msra.mxu0 0.0
  %9770 = vmatpush.msra.mxu0 0.0
  %9771 = vmatpush.msra.mxu0 0.0
  %9772 = vmatpush.msra.mxu0 0.0
  %9773 = vmatpush.msra.mxu0 0.0
  %9774 = vmatpush.msra.mxu0 %v2593
  %9775 = vmatmul.f32.gmra.mxu0 %v9757
  %v9776 = vpop.f32.mrf.mxu0
  %v9777 = vadd.f32 0.0, %v9776
  %9778 = vdwg.mxu0
  %v9780 = vsel %vm1407, %v9373, 0
  %9782 = vmatpush.msra.mxu0 0.0
  %9783 = vmatpush.msra.mxu0 0.0
  %9784 = vmatpush.msra.mxu0 0.0
  %9785 = vmatpush.msra.mxu0 0.0
  %9786 = vmatpush.msra.mxu0 0.0
  %9787 = vmatpush.msra.mxu0 0.0
  %9788 = vmatpush.msra.mxu0 0.0
  %9789 = vmatpush.msra.mxu0 0.0
  %9790 = vmatpush.msra.mxu0 0.0
  %9791 = vmatpush.msra.mxu0 0.0
  %9792 = vmatpush.msra.mxu0 0.0
  %9793 = vmatpush.msra.mxu0 0.0
  %9794 = vmatpush.msra.mxu0 0.0
  %9795 = vmatpush.msra.mxu0 0.0
  %9796 = vmatpush.msra.mxu0 0.0
  %9797 = vmatpush.msra.mxu0 %v2619
  %9798 = vmatmul.f32.gmra.mxu0 %v9780
  %v9799 = vpop.f32.mrf.mxu0
  %v9800 = vadd.f32 0.0, %v9799
  %9801 = vdwg.mxu0
  %v9803 = vsel %vm1407, %v9374, 0
  %9805 = vmatpush.msra.mxu0 0.0
  %9806 = vmatpush.msra.mxu0 0.0
  %9807 = vmatpush.msra.mxu0 0.0
  %9808 = vmatpush.msra.mxu0 0.0
  %9809 = vmatpush.msra.mxu0 0.0
  %9810 = vmatpush.msra.mxu0 0.0
  %9811 = vmatpush.msra.mxu0 0.0
  %9812 = vmatpush.msra.mxu0 0.0
  %9813 = vmatpush.msra.mxu0 0.0
  %9814 = vmatpush.msra.mxu0 0.0
  %9815 = vmatpush.msra.mxu0 0.0
  %9816 = vmatpush.msra.mxu0 0.0
  %9817 = vmatpush.msra.mxu0 0.0
  %9818 = vmatpush.msra.mxu0 0.0
  %9819 = vmatpush.msra.mxu0 0.0
  %9820 = vmatpush.msra.mxu0 %v2645
  %9821 = vmatmul.f32.gmra.mxu0 %v9803
  %v9822 = vpop.f32.mrf.mxu0
  %v9823 = vadd.f32 0.0, %v9822
  %9824 = vdwg.mxu0
  %v9826 = vsel %vm1407, %v9375, 0
  %9828 = vmatpush.msra.mxu0 0.0
  %9829 = vmatpush.msra.mxu0 0.0
  %9830 = vmatpush.msra.mxu0 0.0
  %9831 = vmatpush.msra.mxu0 0.0
  %9832 = vmatpush.msra.mxu0 0.0
  %9833 = vmatpush.msra.mxu0 0.0
  %9834 = vmatpush.msra.mxu0 0.0
  %9835 = vmatpush.msra.mxu0 0.0
  %9836 = vmatpush.msra.mxu0 0.0
  %9837 = vmatpush.msra.mxu0 0.0
  %9838 = vmatpush.msra.mxu0 0.0
  %9839 = vmatpush.msra.mxu0 0.0
  %9840 = vmatpush.msra.mxu0 0.0
  %9841 = vmatpush.msra.mxu0 0.0
  %9842 = vmatpush.msra.mxu0 0.0
  %9843 = vmatpush.msra.mxu0 %v2671
  %9844 = vmatmul.f32.gmra.mxu0 %v9826
  %v9845 = vpop.f32.mrf.mxu0
  %v9846 = vadd.f32 0.0, %v9845
  %9847 = vdwg.mxu0
  %v9849 = vsel %vm1407, %v9376, 0
  %9851 = vmatpush.msra.mxu0 0.0
  %9852 = vmatpush.msra.mxu0 0.0
  %9853 = vmatpush.msra.mxu0 0.0
  %9854 = vmatpush.msra.mxu0 0.0
  %9855 = vmatpush.msra.mxu0 0.0
  %9856 = vmatpush.msra.mxu0 0.0
  %9857 = vmatpush.msra.mxu0 0.0
  %9858 = vmatpush.msra.mxu0 0.0
  %9859 = vmatpush.msra.mxu0 0.0
  %9860 = vmatpush.msra.mxu0 0.0
  %9861 = vmatpush.msra.mxu0 0.0
  %9862 = vmatpush.msra.mxu0 0.0
  %9863 = vmatpush.msra.mxu0 0.0
  %9864 = vmatpush.msra.mxu0 0.0
  %9865 = vmatpush.msra.mxu0 0.0
  %9866 = vmatpush.msra.mxu0 %v2697
  %9867 = vmatmul.f32.gmra.mxu0 %v9849
  %v9868 = vpop.f32.mrf.mxu0
  %v9869 = vadd.f32 0.0, %v9868
  %9870 = vdwg.mxu0
  %v9872 = vsel %vm1407, %v9377, 0
  %9874 = vmatpush.msra.mxu0 0.0
  %9875 = vmatpush.msra.mxu0 0.0
  %9876 = vmatpush.msra.mxu0 0.0
  %9877 = vmatpush.msra.mxu0 0.0
  %9878 = vmatpush.msra.mxu0 0.0
  %9879 = vmatpush.msra.mxu0 0.0
  %9880 = vmatpush.msra.mxu0 0.0
  %9881 = vmatpush.msra.mxu0 0.0
  %9882 = vmatpush.msra.mxu0 0.0
  %9883 = vmatpush.msra.mxu0 0.0
  %9884 = vmatpush.msra.mxu0 0.0
  %9885 = vmatpush.msra.mxu0 0.0
  %9886 = vmatpush.msra.mxu0 0.0
  %9887 = vmatpush.msra.mxu0 0.0
  %9888 = vmatpush.msra.mxu0 0.0
  %9889 = vmatpush.msra.mxu0 %v2723
  %9890 = vmatmul.f32.gmra.mxu0 %v9872
  %v9891 = vpop.f32.mrf.mxu0
  %v9892 = vadd.f32 0.0, %v9891
  %9893 = vdwg.mxu0
  %v9895 = vsel %vm1407, %v9378, 0
  %9897 = vmatpush.msra.mxu0 0.0
  %9898 = vmatpush.msra.mxu0 0.0
  %9899 = vmatpush.msra.mxu0 0.0
  %9900 = vmatpush.msra.mxu0 0.0
  %9901 = vmatpush.msra.mxu0 0.0
  %9902 = vmatpush.msra.mxu0 0.0
  %9903 = vmatpush.msra.mxu0 0.0
  %9904 = vmatpush.msra.mxu0 0.0
  %9905 = vmatpush.msra.mxu0 0.0
  %9906 = vmatpush.msra.mxu0 0.0
  %9907 = vmatpush.msra.mxu0 0.0
  %9908 = vmatpush.msra.mxu0 0.0
  %9909 = vmatpush.msra.mxu0 0.0
  %9910 = vmatpush.msra.mxu0 0.0
  %9911 = vmatpush.msra.mxu0 0.0
  %9912 = vmatpush.msra.mxu0 %v2749
  %9913 = vmatmul.f32.gmra.mxu0 %v9895
  %v9914 = vpop.f32.mrf.mxu0
  %v9915 = vadd.f32 0.0, %v9914
  %9916 = vdwg.mxu0
  %v9918 = vsel %vm1407, %v9379, 0
  %9920 = vmatpush.msra.mxu0 0.0
  %9921 = vmatpush.msra.mxu0 0.0
  %9922 = vmatpush.msra.mxu0 0.0
  %9923 = vmatpush.msra.mxu0 0.0
  %9924 = vmatpush.msra.mxu0 0.0
  %9925 = vmatpush.msra.mxu0 0.0
  %9926 = vmatpush.msra.mxu0 0.0
  %9927 = vmatpush.msra.mxu0 0.0
  %9928 = vmatpush.msra.mxu0 0.0
  %9929 = vmatpush.msra.mxu0 0.0
  %9930 = vmatpush.msra.mxu0 0.0
  %9931 = vmatpush.msra.mxu0 0.0
  %9932 = vmatpush.msra.mxu0 0.0
  %9933 = vmatpush.msra.mxu0 0.0
  %9934 = vmatpush.msra.mxu0 0.0
  %9935 = vmatpush.msra.mxu0 %v2775
  %9936 = vmatmul.f32.gmra.mxu0 %v9918
  %v9937 = vpop.f32.mrf.mxu0
  %v9938 = vadd.f32 0.0, %v9937
  %9939 = vdwg.mxu0
  %v9941 = vsel %vm1407, %v9380, 0
  %9943 = vmatpush.msra.mxu0 0.0
  %9944 = vmatpush.msra.mxu0 0.0
  %9945 = vmatpush.msra.mxu0 0.0
  %9946 = vmatpush.msra.mxu0 0.0
  %9947 = vmatpush.msra.mxu0 0.0
  %9948 = vmatpush.msra.mxu0 0.0
  %9949 = vmatpush.msra.mxu0 0.0
  %9950 = vmatpush.msra.mxu0 0.0
  %9951 = vmatpush.msra.mxu0 0.0
  %9952 = vmatpush.msra.mxu0 0.0
  %9953 = vmatpush.msra.mxu0 0.0
  %9954 = vmatpush.msra.mxu0 0.0
  %9955 = vmatpush.msra.mxu0 0.0
  %9956 = vmatpush.msra.mxu0 0.0
  %9957 = vmatpush.msra.mxu0 0.0
  %9958 = vmatpush.msra.mxu0 %v2801
  %9959 = vmatmul.f32.gmra.mxu0 %v9941
  %v9960 = vpop.f32.mrf.mxu0
  %v9961 = vadd.f32 0.0, %v9960
  %9962 = vdwg.mxu0
  %v9964 = vsel %vm1407, %v9381, 0
  %9966 = vmatpush.msra.mxu0 0.0
  %9967 = vmatpush.msra.mxu0 0.0
  %9968 = vmatpush.msra.mxu0 0.0
  %9969 = vmatpush.msra.mxu0 0.0
  %9970 = vmatpush.msra.mxu0 0.0
  %9971 = vmatpush.msra.mxu0 0.0
  %9972 = vmatpush.msra.mxu0 0.0
  %9973 = vmatpush.msra.mxu0 0.0
  %9974 = vmatpush.msra.mxu0 0.0
  %9975 = vmatpush.msra.mxu0 0.0
  %9976 = vmatpush.msra.mxu0 0.0
  %9977 = vmatpush.msra.mxu0 0.0
  %9978 = vmatpush.msra.mxu0 0.0
  %9979 = vmatpush.msra.mxu0 0.0
  %9980 = vmatpush.msra.mxu0 0.0
  %9981 = vmatpush.msra.mxu0 %v2827
  %9982 = vmatmul.f32.gmra.mxu0 %v9964
  %v9983 = vpop.f32.mrf.mxu0
  %v9984 = vadd.f32 0.0, %v9983
  %9985 = vdwg.mxu0
  %v9987 = vsel %vm1407, %v9382, 0
  %9989 = vmatpush.msra.mxu0 0.0
  %9990 = vmatpush.msra.mxu0 0.0
  %9991 = vmatpush.msra.mxu0 0.0
  %9992 = vmatpush.msra.mxu0 0.0
  %9993 = vmatpush.msra.mxu0 0.0
  %9994 = vmatpush.msra.mxu0 0.0
  %9995 = vmatpush.msra.mxu0 0.0
  %9996 = vmatpush.msra.mxu0 0.0
  %9997 = vmatpush.msra.mxu0 0.0
  %9998 = vmatpush.msra.mxu0 0.0
  %9999 = vmatpush.msra.mxu0 0.0
  %10000 = vmatpush.msra.mxu0 0.0
  %10001 = vmatpush.msra.mxu0 0.0
  %10002 = vmatpush.msra.mxu0 0.0
  %10003 = vmatpush.msra.mxu0 0.0
  %10004 = vmatpush.msra.mxu0 %v2853
  %10005 = vmatmul.f32.gmra.mxu0 %v9987
  %v10006 = vpop.f32.mrf.mxu0
  %v10007 = vadd.f32 0.0, %v10006
  %10008 = vdwg.mxu0
  %v10010 = vsel %vm1407, %v9383, 0
  %10012 = vmatpush.msra.mxu0 0.0
  %10013 = vmatpush.msra.mxu0 0.0
  %10014 = vmatpush.msra.mxu0 0.0
  %10015 = vmatpush.msra.mxu0 0.0
  %10016 = vmatpush.msra.mxu0 0.0
  %10017 = vmatpush.msra.mxu0 0.0
  %10018 = vmatpush.msra.mxu0 0.0
  %10019 = vmatpush.msra.mxu0 0.0
  %10020 = vmatpush.msra.mxu0 0.0
  %10021 = vmatpush.msra.mxu0 0.0
  %10022 = vmatpush.msra.mxu0 0.0
  %10023 = vmatpush.msra.mxu0 0.0
  %10024 = vmatpush.msra.mxu0 0.0
  %10025 = vmatpush.msra.mxu0 0.0
  %10026 = vmatpush.msra.mxu0 0.0
  %10027 = vmatpush.msra.mxu0 %v2879
  %10028 = vmatmul.f32.gmra.mxu0 %v10010
  %v10029 = vpop.f32.mrf.mxu0
  %v10030 = vadd.f32 0.0, %v10029
  %10031 = vdwg.mxu0
  %v10033 = vsel %vm1407, %v9384, 0
  %10035 = vmatpush.msra.mxu0 0.0
  %10036 = vmatpush.msra.mxu0 0.0
  %10037 = vmatpush.msra.mxu0 0.0
  %10038 = vmatpush.msra.mxu0 0.0
  %10039 = vmatpush.msra.mxu0 0.0
  %10040 = vmatpush.msra.mxu0 0.0
  %10041 = vmatpush.msra.mxu0 0.0
  %10042 = vmatpush.msra.mxu0 0.0
  %10043 = vmatpush.msra.mxu0 0.0
  %10044 = vmatpush.msra.mxu0 0.0
  %10045 = vmatpush.msra.mxu0 0.0
  %10046 = vmatpush.msra.mxu0 0.0
  %10047 = vmatpush.msra.mxu0 0.0
  %10048 = vmatpush.msra.mxu0 0.0
  %10049 = vmatpush.msra.mxu0 0.0
  %10050 = vmatpush.msra.mxu0 %v2905
  %10051 = vmatmul.f32.gmra.mxu0 %v10033
  %v10052 = vpop.f32.mrf.mxu0
  %v10053 = vadd.f32 0.0, %v10052
  %10054 = vdwg.mxu0
  %v10056 = vsel %vm1407, %v9385, 0
  %10058 = vmatpush.msra.mxu0 0.0
  %10059 = vmatpush.msra.mxu0 0.0
  %10060 = vmatpush.msra.mxu0 0.0
  %10061 = vmatpush.msra.mxu0 0.0
  %10062 = vmatpush.msra.mxu0 0.0
  %10063 = vmatpush.msra.mxu0 0.0
  %10064 = vmatpush.msra.mxu0 0.0
  %10065 = vmatpush.msra.mxu0 0.0
  %10066 = vmatpush.msra.mxu0 0.0
  %10067 = vmatpush.msra.mxu0 0.0
  %10068 = vmatpush.msra.mxu0 0.0
  %10069 = vmatpush.msra.mxu0 0.0
  %10070 = vmatpush.msra.mxu0 0.0
  %10071 = vmatpush.msra.mxu0 0.0
  %10072 = vmatpush.msra.mxu0 0.0
  %10073 = vmatpush.msra.mxu0 %v2931
  %10074 = vmatmul.f32.gmra.mxu0 %v10056
  %v10075 = vpop.f32.mrf.mxu0
  %v10076 = vadd.f32 0.0, %v10075
  %10077 = vdwg.mxu0
  %v10079 = vsel %vm1407, %v9386, 0
  %10081 = vmatpush.msra.mxu0 0.0
  %10082 = vmatpush.msra.mxu0 0.0
  %10083 = vmatpush.msra.mxu0 0.0
  %10084 = vmatpush.msra.mxu0 0.0
  %10085 = vmatpush.msra.mxu0 0.0
  %10086 = vmatpush.msra.mxu0 0.0
  %10087 = vmatpush.msra.mxu0 0.0
  %10088 = vmatpush.msra.mxu0 0.0
  %10089 = vmatpush.msra.mxu0 0.0
  %10090 = vmatpush.msra.mxu0 0.0
  %10091 = vmatpush.msra.mxu0 0.0
  %10092 = vmatpush.msra.mxu0 0.0
  %10093 = vmatpush.msra.mxu0 0.0
  %10094 = vmatpush.msra.mxu0 0.0
  %10095 = vmatpush.msra.mxu0 0.0
  %10096 = vmatpush.msra.mxu0 %v2957
  %10097 = vmatmul.f32.gmra.mxu0 %v10079
  %v10098 = vpop.f32.mrf.mxu0
  %v10099 = vadd.f32 0.0, %v10098
  %10100 = vdwg.mxu0
  %v10102 = vsel %vm1407, %v9387, 0
  %10104 = vmatpush.msra.mxu0 0.0
  %10105 = vmatpush.msra.mxu0 0.0
  %10106 = vmatpush.msra.mxu0 0.0
  %10107 = vmatpush.msra.mxu0 0.0
  %10108 = vmatpush.msra.mxu0 0.0
  %10109 = vmatpush.msra.mxu0 0.0
  %10110 = vmatpush.msra.mxu0 0.0
  %10111 = vmatpush.msra.mxu0 0.0
  %10112 = vmatpush.msra.mxu0 0.0
  %10113 = vmatpush.msra.mxu0 0.0
  %10114 = vmatpush.msra.mxu0 0.0
  %10115 = vmatpush.msra.mxu0 0.0
  %10116 = vmatpush.msra.mxu0 0.0
  %10117 = vmatpush.msra.mxu0 0.0
  %10118 = vmatpush.msra.mxu0 0.0
  %10119 = vmatpush.msra.mxu0 %v2983
  %10120 = vmatmul.f32.gmra.mxu0 %v10102
  %v10121 = vpop.f32.mrf.mxu0
  %v10122 = vadd.f32 0.0, %v10121
  %10123 = vdwg.mxu0
  %v10124 = vmul.f32 %v9409, %v7819
  %v10125 = vmul.f32 %v9432, %v7819
  %v10126 = vmul.f32 %v9455, %v7819
  %v10127 = vmul.f32 %v9478, %v7819
  %v10128 = vmul.f32 %v9501, %v7819
  %v10129 = vmul.f32 %v9524, %v7819
  %v10130 = vmul.f32 %v9547, %v7819
  %v10131 = vmul.f32 %v9570, %v7819
  %v10132 = vmul.f32 %v9593, %v7819
  %v10133 = vmul.f32 %v9616, %v7819
  %v10134 = vmul.f32 %v9639, %v7819
  %v10135 = vmul.f32 %v9662, %v7819
  %v10136 = vmul.f32 %v9685, %v7819
  %v10137 = vmul.f32 %v9708, %v7819
  %v10138 = vmul.f32 %v9731, %v7819
  %v10139 = vmul.f32 %v9754, %v7819
  %v10140 = vmul.f32 %v9777, %v7819
  %v10141 = vmul.f32 %v9800, %v7819
  %v10142 = vmul.f32 %v9823, %v7819
  %v10143 = vmul.f32 %v9846, %v7819
  %v10144 = vmul.f32 %v9869, %v7819
  %v10145 = vmul.f32 %v9892, %v7819
  %v10146 = vmul.f32 %v9915, %v7819
  %v10147 = vmul.f32 %v9938, %v7819
  %v10148 = vmul.f32 %v9961, %v7819
  %v10149 = vmul.f32 %v9984, %v7819
  %v10150 = vmul.f32 %v10007, %v7819
  %v10151 = vmul.f32 %v10030, %v7819
  %v10152 = vmul.f32 %v10053, %v7819
  %v10153 = vmul.f32 %v10076, %v7819
  %v10154 = vmul.f32 %v10099, %v7819
  %v10155 = vmul.f32 %v10122, %v7819
  %v10156 = vadd.f32 %v7784, %v10124
  %v10157 = vadd.f32 %v7785, %v10125
  %v10158 = vadd.f32 %v7786, %v10126
  %v10159 = vadd.f32 %v7787, %v10127
  %v10160 = vadd.f32 %v7788, %v10128
  %v10161 = vadd.f32 %v7789, %v10129
  %v10162 = vadd.f32 %v7790, %v10130
  %v10163 = vadd.f32 %v7791, %v10131
  %v10164 = vadd.f32 %v7792, %v10132
  %v10165 = vadd.f32 %v7793, %v10133
  %v10166 = vadd.f32 %v7794, %v10134
  %v10167 = vadd.f32 %v7795, %v10135
  %v10168 = vadd.f32 %v7796, %v10136
  %v10169 = vadd.f32 %v7797, %v10137
  %v10170 = vadd.f32 %v7798, %v10138
  %v10171 = vadd.f32 %v7799, %v10139
  %v10172 = vadd.f32 %v7800, %v10140
  %v10173 = vadd.f32 %v7801, %v10141
  %v10174 = vadd.f32 %v7802, %v10142
  %v10175 = vadd.f32 %v7803, %v10143
  %v10176 = vadd.f32 %v7804, %v10144
  %v10177 = vadd.f32 %v7805, %v10145
  %v10178 = vadd.f32 %v7806, %v10146
  %v10179 = vadd.f32 %v7807, %v10147
  %v10180 = vadd.f32 %v7808, %v10148
  %v10181 = vadd.f32 %v7809, %v10149
  %v10182 = vadd.f32 %v7810, %v10150
  %v10183 = vadd.f32 %v7811, %v10151
  %v10184 = vadd.f32 %v7812, %v10152
  %v10185 = vadd.f32 %v7813, %v10153
  %v10186 = vadd.f32 %v7814, %v10154
  %v10187 = vadd.f32 %v7815, %v10155
  %v10188 = vld [vmem:[%s3] sm:$0xff]
  %v10189 = vld [vmem:[%s3 + $0x8] sm:$0xff]
  %v10190 = vld [vmem:[%s3 + $0x10] sm:$0xff]
  %v10191 = vld [vmem:[%s3 + $0x18] sm:$0xff]
  %v10192 = vld [vmem:[%s4] sm:$0x1]
  %v10194 = vperm.slane %v10192, 0
  %v10197 = vsel %vm481, %v10156, 0
  %v10200 = vsel %vm481, %v10157, 0
  %v10203 = vsel %vm481, %v10158, 0
  %v10206 = vsel %vm481, %v10159, 0
  %v10209 = vsel %vm481, %v10160, 0
  %v10212 = vsel %vm481, %v10161, 0
  %v10215 = vsel %vm481, %v10162, 0
  %v10218 = vsel %vm481, %v10163, 0
  %v10221 = vsel %vm481, %v10164, 0
  %v10224 = vsel %vm481, %v10165, 0
  %v10227 = vsel %vm481, %v10166, 0
  %v10230 = vsel %vm481, %v10167, 0
  %v10233 = vsel %vm481, %v10168, 0
  %v10236 = vsel %vm481, %v10169, 0
  %v10239 = vsel %vm481, %v10170, 0
  %v10242 = vsel %vm481, %v10171, 0
  %v10245 = vsel %vm481, %v10172, 0
  %v10248 = vsel %vm481, %v10173, 0
  %v10251 = vsel %vm481, %v10174, 0
  %v10254 = vsel %vm481, %v10175, 0
  %v10257 = vsel %vm481, %v10176, 0
  %v10260 = vsel %vm481, %v10177, 0
  %v10263 = vsel %vm481, %v10178, 0
  %v10266 = vsel %vm481, %v10179, 0
  %v10269 = vsel %vm481, %v10180, 0
  %v10272 = vsel %vm481, %v10181, 0
  %v10275 = vsel %vm481, %v10182, 0
  %v10278 = vsel %vm481, %v10183, 0
  %v10281 = vsel %vm481, %v10184, 0
  %v10284 = vsel %vm481, %v10185, 0
  %v10287 = vsel %vm481, %v10186, 0
  %v10290 = vsel %vm481, %v10187, 0
  %10292 = vmatpush.msra.mxu0 0.0
  %10293 = vmatpush.msra.mxu0 0.0
  %10294 = vmatpush.msra.mxu0 0.0
  %10295 = vmatpush.msra.mxu0 0.0
  %10296 = vmatpush.msra.mxu0 0.0
  %10297 = vmatpush.msra.mxu0 0.0
  %10298 = vmatpush.msra.mxu0 0.0
  %10299 = vmatpush.msra.mxu0 0.0
  %10300 = vmatpush.msra.mxu0 0.0
  %10301 = vmatpush.msra.mxu0 0.0
  %10302 = vmatpush.msra.mxu0 0.0
  %10303 = vmatpush.msra.mxu0 0.0
  %10304 = vmatpush.msra.mxu0 %v10191
  %10305 = vmatpush.msra.mxu0 %v10190
  %10306 = vmatpush.msra.mxu0 %v10189
  %10307 = vmatpush.msra.mxu0 %v10188
  %10308 = vmatmul.f32.gmra.mxu0 %v10197
  %v10309 = vpop.f32.mrf.mxu0
  %v10310 = vadd.f32 %v10194, %v10309
  %10311 = vmatmul.f32.gmra.mxu0 %v10200
  %v10312 = vpop.f32.mrf.mxu0
  %v10313 = vadd.f32 %v10194, %v10312
  %10314 = vmatmul.f32.gmra.mxu0 %v10203
  %v10315 = vpop.f32.mrf.mxu0
  %v10316 = vadd.f32 %v10194, %v10315
  %10317 = vmatmul.f32.gmra.mxu0 %v10206
  %v10318 = vpop.f32.mrf.mxu0
  %v10319 = vadd.f32 %v10194, %v10318
  %10320 = vmatmul.f32.gmra.mxu0 %v10209
  %v10321 = vpop.f32.mrf.mxu0
  %v10322 = vadd.f32 %v10194, %v10321
  %10323 = vmatmul.f32.gmra.mxu0 %v10212
  %v10324 = vpop.f32.mrf.mxu0
  %v10325 = vadd.f32 %v10194, %v10324
  %10326 = vmatmul.f32.gmra.mxu0 %v10215
  %v10327 = vpop.f32.mrf.mxu0
  %v10328 = vadd.f32 %v10194, %v10327
  %10329 = vmatmul.f32.gmra.mxu0 %v10218
  %v10330 = vpop.f32.mrf.mxu0
  %v10331 = vadd.f32 %v10194, %v10330
  %10332 = vmatmul.f32.gmra.mxu0 %v10221
  %v10333 = vpop.f32.mrf.mxu0
  %v10334 = vadd.f32 %v10194, %v10333
  %10335 = vmatmul.f32.gmra.mxu0 %v10224
  %v10336 = vpop.f32.mrf.mxu0
  %v10337 = vadd.f32 %v10194, %v10336
  %10338 = vmatmul.f32.gmra.mxu0 %v10227
  %v10339 = vpop.f32.mrf.mxu0
  %v10340 = vadd.f32 %v10194, %v10339
  %10341 = vmatmul.f32.gmra.mxu0 %v10230
  %v10342 = vpop.f32.mrf.mxu0
  %v10343 = vadd.f32 %v10194, %v10342
  %10344 = vmatmul.f32.gmra.mxu0 %v10233
  %v10345 = vpop.f32.mrf.mxu0
  %v10346 = vadd.f32 %v10194, %v10345
  %10347 = vmatmul.f32.gmra.mxu0 %v10236
  %v10348 = vpop.f32.mrf.mxu0
  %v10349 = vadd.f32 %v10194, %v10348
  %10350 = vmatmul.f32.gmra.mxu0 %v10239
  %v10351 = vpop.f32.mrf.mxu0
  %v10352 = vadd.f32 %v10194, %v10351
  %10353 = vmatmul.f32.gmra.mxu0 %v10242
  %v10354 = vpop.f32.mrf.mxu0
  %v10355 = vadd.f32 %v10194, %v10354
  %10356 = vmatmul.f32.gmra.mxu0 %v10245
  %v10357 = vpop.f32.mrf.mxu0
  %v10358 = vadd.f32 %v10194, %v10357
  %10359 = vmatmul.f32.gmra.mxu0 %v10248
  %v10360 = vpop.f32.mrf.mxu0
  %v10361 = vadd.f32 %v10194, %v10360
  %10362 = vmatmul.f32.gmra.mxu0 %v10251
  %v10363 = vpop.f32.mrf.mxu0
  %v10364 = vadd.f32 %v10194, %v10363
  %10365 = vmatmul.f32.gmra.mxu0 %v10254
  %v10366 = vpop.f32.mrf.mxu0
  %v10367 = vadd.f32 %v10194, %v10366
  %10368 = vmatmul.f32.gmra.mxu0 %v10257
  %v10369 = vpop.f32.mrf.mxu0
  %v10370 = vadd.f32 %v10194, %v10369
  %10371 = vmatmul.f32.gmra.mxu0 %v10260
  %v10372 = vpop.f32.mrf.mxu0
  %v10373 = vadd.f32 %v10194, %v10372
  %10374 = vmatmul.f32.gmra.mxu0 %v10263
  %v10375 = vpop.f32.mrf.mxu0
  %v10376 = vadd.f32 %v10194, %v10375
  %10377 = vmatmul.f32.gmra.mxu0 %v10266
  %v10378 = vpop.f32.mrf.mxu0
  %v10379 = vadd.f32 %v10194, %v10378
  %10380 = vmatmul.f32.gmra.mxu0 %v10269
  %v10381 = vpop.f32.mrf.mxu0
  %v10382 = vadd.f32 %v10194, %v10381
  %10383 = vmatmul.f32.gmra.mxu0 %v10272
  %v10384 = vpop.f32.mrf.mxu0
  %v10385 = vadd.f32 %v10194, %v10384
  %10386 = vmatmul.f32.gmra.mxu0 %v10275
  %v10387 = vpop.f32.mrf.mxu0
  %v10388 = vadd.f32 %v10194, %v10387
  %10389 = vmatmul.f32.gmra.mxu0 %v10278
  %v10390 = vpop.f32.mrf.mxu0
  %v10391 = vadd.f32 %v10194, %v10390
  %10392 = vmatmul.f32.gmra.mxu0 %v10281
  %v10393 = vpop.f32.mrf.mxu0
  %v10394 = vadd.f32 %v10194, %v10393
  %10395 = vmatmul.f32.gmra.mxu0 %v10284
  %v10396 = vpop.f32.mrf.mxu0
  %v10397 = vadd.f32 %v10194, %v10396
  %10398 = vmatmul.f32.gmra.mxu0 %v10287
  %v10399 = vpop.f32.mrf.mxu0
  %v10400 = vadd.f32 %v10194, %v10399
  %10401 = vmatmul.f32.gmra.mxu0 %v10290
  %v10402 = vpop.f32.mrf.mxu0
  %v10403 = vadd.f32 %v10194, %v10402
  %10404 = vdwg.mxu0
  %v10405 = vtanh.pop %v10310
  %v10406 = vtanh.pop %v10313
  %v10407 = vtanh.pop %v10316
  %v10408 = vtanh.pop %v10319
  %v10409 = vtanh.pop %v10322
  %v10410 = vtanh.pop %v10325
  %v10411 = vtanh.pop %v10328
  %v10412 = vtanh.pop %v10331
  %v10413 = vtanh.pop %v10334
  %v10414 = vtanh.pop %v10337
  %v10415 = vtanh.pop %v10340
  %v10416 = vtanh.pop %v10343
  %v10417 = vtanh.pop %v10346
  %v10418 = vtanh.pop %v10349
  %v10419 = vtanh.pop %v10352
  %v10420 = vtanh.pop %v10355
  %v10421 = vtanh.pop %v10358
  %v10422 = vtanh.pop %v10361
  %v10423 = vtanh.pop %v10364
  %v10424 = vtanh.pop %v10367
  %v10425 = vtanh.pop %v10370
  %v10426 = vtanh.pop %v10373
  %v10427 = vtanh.pop %v10376
  %v10428 = vtanh.pop %v10379
  %v10429 = vtanh.pop %v10382
  %v10430 = vtanh.pop %v10385
  %v10431 = vtanh.pop %v10388
  %v10432 = vtanh.pop %v10391
  %v10433 = vtanh.pop %v10394
  %v10434 = vtanh.pop %v10397
  %v10435 = vtanh.pop %v10400
  %v10436 = vtanh.pop %v10403
  %v10437 = vld [vmem:[%s5] sm:$0x1]
  %v10439 = vperm.slane %v10437, 0
  %v10441 = vmul.f32 %v10405, %v10439
  %v10442 = vmul.f32 %v10406, %v10439
  %v10443 = vmul.f32 %v10407, %v10439
  %v10444 = vmul.f32 %v10408, %v10439
  %v10445 = vmul.f32 %v10409, %v10439
  %v10446 = vmul.f32 %v10410, %v10439
  %v10447 = vmul.f32 %v10411, %v10439
  %v10448 = vmul.f32 %v10412, %v10439
  %v10449 = vmul.f32 %v10413, %v10439
  %v10450 = vmul.f32 %v10414, %v10439
  %v10451 = vmul.f32 %v10415, %v10439
  %v10452 = vmul.f32 %v10416, %v10439
  %v10453 = vmul.f32 %v10417, %v10439
  %v10454 = vmul.f32 %v10418, %v10439
  %v10455 = vmul.f32 %v10419, %v10439
  %v10456 = vmul.f32 %v10420, %v10439
  %v10457 = vmul.f32 %v10421, %v10439
  %v10458 = vmul.f32 %v10422, %v10439
  %v10459 = vmul.f32 %v10423, %v10439
  %v10460 = vmul.f32 %v10424, %v10439
  %v10461 = vmul.f32 %v10425, %v10439
  %v10462 = vmul.f32 %v10426, %v10439
  %v10463 = vmul.f32 %v10427, %v10439
  %v10464 = vmul.f32 %v10428, %v10439
  %v10465 = vmul.f32 %v10429, %v10439
  %v10466 = vmul.f32 %v10430, %v10439
  %v10467 = vmul.f32 %v10431, %v10439
  %v10468 = vmul.f32 %v10432, %v10439
  %v10469 = vmul.f32 %v10433, %v10439
  %v10470 = vmul.f32 %v10434, %v10439
  %v10471 = vmul.f32 %v10435, %v10439
  %v10472 = vmul.f32 %v10436, %v10439
  %v10473 = vsel %vm481, %v10441, 0.0
  %10474 = vadd.xlane.f32.xlu0 %v10473
  %v10475 = vpop.xlane.xlu0 %10474
  %v10476 = vsel %vm481, %v10442, 0.0
  %10477 = vadd.xlane.f32.xlu0 %v10476
  %v10478 = vpop.xlane.xlu0 %10477
  %v10479 = vsel %vm481, %v10443, 0.0
  %10480 = vadd.xlane.f32.xlu0 %v10479
  %v10481 = vpop.xlane.xlu0 %10480
  %v10482 = vsel %vm481, %v10444, 0.0
  %10483 = vadd.xlane.f32.xlu0 %v10482
  %v10484 = vpop.xlane.xlu0 %10483
  %v10485 = vsel %vm481, %v10445, 0.0
  %10486 = vadd.xlane.f32.xlu0 %v10485
  %v10487 = vpop.xlane.xlu0 %10486
  %v10488 = vsel %vm481, %v10446, 0.0
  %10489 = vadd.xlane.f32.xlu0 %v10488
  %v10490 = vpop.xlane.xlu0 %10489
  %v10491 = vsel %vm481, %v10447, 0.0
  %10492 = vadd.xlane.f32.xlu0 %v10491
  %v10493 = vpop.xlane.xlu0 %10492
  %v10494 = vsel %vm481, %v10448, 0.0
  %10495 = vadd.xlane.f32.xlu0 %v10494
  %v10496 = vpop.xlane.xlu0 %10495
  %v10497 = vsel %vm481, %v10449, 0.0
  %10498 = vadd.xlane.f32.xlu0 %v10497
  %v10499 = vpop.xlane.xlu0 %10498
  %v10500 = vsel %vm481, %v10450, 0.0
  %10501 = vadd.xlane.f32.xlu0 %v10500
  %v10502 = vpop.xlane.xlu0 %10501
  %v10503 = vsel %vm481, %v10451, 0.0
  %10504 = vadd.xlane.f32.xlu0 %v10503
  %v10505 = vpop.xlane.xlu0 %10504
  %v10506 = vsel %vm481, %v10452, 0.0
  %10507 = vadd.xlane.f32.xlu0 %v10506
  %v10508 = vpop.xlane.xlu0 %10507
  %v10509 = vsel %vm481, %v10453, 0.0
  %10510 = vadd.xlane.f32.xlu0 %v10509
  %v10511 = vpop.xlane.xlu0 %10510
  %v10512 = vsel %vm481, %v10454, 0.0
  %10513 = vadd.xlane.f32.xlu0 %v10512
  %v10514 = vpop.xlane.xlu0 %10513
  %v10515 = vsel %vm481, %v10455, 0.0
  %10516 = vadd.xlane.f32.xlu0 %v10515
  %v10517 = vpop.xlane.xlu0 %10516
  %v10518 = vsel %vm481, %v10456, 0.0
  %10519 = vadd.xlane.f32.xlu0 %v10518
  %v10520 = vpop.xlane.xlu0 %10519
  %v10521 = vsel %vm481, %v10457, 0.0
  %10522 = vadd.xlane.f32.xlu0 %v10521
  %v10523 = vpop.xlane.xlu0 %10522
  %v10524 = vsel %vm481, %v10458, 0.0
  %10525 = vadd.xlane.f32.xlu0 %v10524
  %v10526 = vpop.xlane.xlu0 %10525
  %v10527 = vsel %vm481, %v10459, 0.0
  %10528 = vadd.xlane.f32.xlu0 %v10527
  %v10529 = vpop.xlane.xlu0 %10528
  %v10530 = vsel %vm481, %v10460, 0.0
  %10531 = vadd.xlane.f32.xlu0 %v10530
  %v10532 = vpop.xlane.xlu0 %10531
  %v10533 = vsel %vm481, %v10461, 0.0
  %10534 = vadd.xlane.f32.xlu0 %v10533
  %v10535 = vpop.xlane.xlu0 %10534
  %v10536 = vsel %vm481, %v10462, 0.0
  %10537 = vadd.xlane.f32.xlu0 %v10536
  %v10538 = vpop.xlane.xlu0 %10537
  %v10539 = vsel %vm481, %v10463, 0.0
  %10540 = vadd.xlane.f32.xlu0 %v10539
  %v10541 = vpop.xlane.xlu0 %10540
  %v10542 = vsel %vm481, %v10464, 0.0
  %10543 = vadd.xlane.f32.xlu0 %v10542
  %v10544 = vpop.xlane.xlu0 %10543
  %v10545 = vsel %vm481, %v10465, 0.0
  %10546 = vadd.xlane.f32.xlu0 %v10545
  %v10547 = vpop.xlane.xlu0 %10546
  %v10548 = vsel %vm481, %v10466, 0.0
  %10549 = vadd.xlane.f32.xlu0 %v10548
  %v10550 = vpop.xlane.xlu0 %10549
  %v10551 = vsel %vm481, %v10467, 0.0
  %10552 = vadd.xlane.f32.xlu0 %v10551
  %v10553 = vpop.xlane.xlu0 %10552
  %v10554 = vsel %vm481, %v10468, 0.0
  %10555 = vadd.xlane.f32.xlu0 %v10554
  %v10556 = vpop.xlane.xlu0 %10555
  %v10557 = vsel %vm481, %v10469, 0.0
  %10558 = vadd.xlane.f32.xlu0 %v10557
  %v10559 = vpop.xlane.xlu0 %10558
  %v10560 = vsel %vm481, %v10470, 0.0
  %10561 = vadd.xlane.f32.xlu0 %v10560
  %v10562 = vpop.xlane.xlu0 %10561
  %v10563 = vsel %vm481, %v10471, 0.0
  %10564 = vadd.xlane.f32.xlu0 %v10563
  %v10565 = vpop.xlane.xlu0 %10564
  %v10566 = vsel %vm481, %v10472, 0.0
  %10567 = vadd.xlane.f32.xlu0 %v10566
  %v10568 = vpop.xlane.xlu0 %10567
  %v10569 = vrot.slane %v10475, 4
  %v10570 = vmax.f32 %v10475, %v10569
  %v10571 = vrot.slane %v10570, 2
  %v10572 = vmax.f32 %v10570, %v10571
  %v10573 = vrot.slane %v10572, 1
  %v10574 = vmax.f32 %v10572, %v10573
  %v10575 = vrot.slane %v10478, 4
  %v10576 = vmax.f32 %v10478, %v10575
  %v10577 = vrot.slane %v10576, 2
  %v10578 = vmax.f32 %v10576, %v10577
  %v10579 = vrot.slane %v10578, 1
  %v10580 = vmax.f32 %v10578, %v10579
  %v10581 = vrot.slane %v10481, 4
  %v10582 = vmax.f32 %v10481, %v10581
  %v10583 = vrot.slane %v10582, 2
  %v10584 = vmax.f32 %v10582, %v10583
  %v10585 = vrot.slane %v10584, 1
  %v10586 = vmax.f32 %v10584, %v10585
  %v10587 = vrot.slane %v10484, 4
  %v10588 = vmax.f32 %v10484, %v10587
  %v10589 = vrot.slane %v10588, 2
  %v10590 = vmax.f32 %v10588, %v10589
  %v10591 = vrot.slane %v10590, 1
  %v10592 = vmax.f32 %v10590, %v10591
  %v10593 = vrot.slane %v10487, 4
  %v10594 = vmax.f32 %v10487, %v10593
  %v10595 = vrot.slane %v10594, 2
  %v10596 = vmax.f32 %v10594, %v10595
  %v10597 = vrot.slane %v10596, 1
  %v10598 = vmax.f32 %v10596, %v10597
  %v10599 = vrot.slane %v10490, 4
  %v10600 = vmax.f32 %v10490, %v10599
  %v10601 = vrot.slane %v10600, 2
  %v10602 = vmax.f32 %v10600, %v10601
  %v10603 = vrot.slane %v10602, 1
  %v10604 = vmax.f32 %v10602, %v10603
  %v10605 = vrot.slane %v10493, 4
  %v10606 = vmax.f32 %v10493, %v10605
  %v10607 = vrot.slane %v10606, 2
  %v10608 = vmax.f32 %v10606, %v10607
  %v10609 = vrot.slane %v10608, 1
  %v10610 = vmax.f32 %v10608, %v10609
  %v10611 = vrot.slane %v10496, 4
  %v10612 = vmax.f32 %v10496, %v10611
  %v10613 = vrot.slane %v10612, 2
  %v10614 = vmax.f32 %v10612, %v10613
  %v10615 = vrot.slane %v10614, 1
  %v10616 = vmax.f32 %v10614, %v10615
  %v10617 = vrot.slane %v10499, 4
  %v10618 = vmax.f32 %v10499, %v10617
  %v10619 = vrot.slane %v10618, 2
  %v10620 = vmax.f32 %v10618, %v10619
  %v10621 = vrot.slane %v10620, 1
  %v10622 = vmax.f32 %v10620, %v10621
  %v10623 = vrot.slane %v10502, 4
  %v10624 = vmax.f32 %v10502, %v10623
  %v10625 = vrot.slane %v10624, 2
  %v10626 = vmax.f32 %v10624, %v10625
  %v10627 = vrot.slane %v10626, 1
  %v10628 = vmax.f32 %v10626, %v10627
  %v10629 = vrot.slane %v10505, 4
  %v10630 = vmax.f32 %v10505, %v10629
  %v10631 = vrot.slane %v10630, 2
  %v10632 = vmax.f32 %v10630, %v10631
  %v10633 = vrot.slane %v10632, 1
  %v10634 = vmax.f32 %v10632, %v10633
  %v10635 = vrot.slane %v10508, 4
  %v10636 = vmax.f32 %v10508, %v10635
  %v10637 = vrot.slane %v10636, 2
  %v10638 = vmax.f32 %v10636, %v10637
  %v10639 = vrot.slane %v10638, 1
  %v10640 = vmax.f32 %v10638, %v10639
  %v10641 = vrot.slane %v10511, 4
  %v10642 = vmax.f32 %v10511, %v10641
  %v10643 = vrot.slane %v10642, 2
  %v10644 = vmax.f32 %v10642, %v10643
  %v10645 = vrot.slane %v10644, 1
  %v10646 = vmax.f32 %v10644, %v10645
  %v10647 = vrot.slane %v10514, 4
  %v10648 = vmax.f32 %v10514, %v10647
  %v10649 = vrot.slane %v10648, 2
  %v10650 = vmax.f32 %v10648, %v10649
  %v10651 = vrot.slane %v10650, 1
  %v10652 = vmax.f32 %v10650, %v10651
  %v10653 = vrot.slane %v10517, 4
  %v10654 = vmax.f32 %v10517, %v10653
  %v10655 = vrot.slane %v10654, 2
  %v10656 = vmax.f32 %v10654, %v10655
  %v10657 = vrot.slane %v10656, 1
  %v10658 = vmax.f32 %v10656, %v10657
  %v10659 = vrot.slane %v10520, 4
  %v10660 = vmax.f32 %v10520, %v10659
  %v10661 = vrot.slane %v10660, 2
  %v10662 = vmax.f32 %v10660, %v10661
  %v10663 = vrot.slane %v10662, 1
  %v10664 = vmax.f32 %v10662, %v10663
  %v10665 = vrot.slane %v10523, 4
  %v10666 = vmax.f32 %v10523, %v10665
  %v10667 = vrot.slane %v10666, 2
  %v10668 = vmax.f32 %v10666, %v10667
  %v10669 = vrot.slane %v10668, 1
  %v10670 = vmax.f32 %v10668, %v10669
  %v10671 = vrot.slane %v10526, 4
  %v10672 = vmax.f32 %v10526, %v10671
  %v10673 = vrot.slane %v10672, 2
  %v10674 = vmax.f32 %v10672, %v10673
  %v10675 = vrot.slane %v10674, 1
  %v10676 = vmax.f32 %v10674, %v10675
  %v10677 = vrot.slane %v10529, 4
  %v10678 = vmax.f32 %v10529, %v10677
  %v10679 = vrot.slane %v10678, 2
  %v10680 = vmax.f32 %v10678, %v10679
  %v10681 = vrot.slane %v10680, 1
  %v10682 = vmax.f32 %v10680, %v10681
  %v10683 = vrot.slane %v10532, 4
  %v10684 = vmax.f32 %v10532, %v10683
  %v10685 = vrot.slane %v10684, 2
  %v10686 = vmax.f32 %v10684, %v10685
  %v10687 = vrot.slane %v10686, 1
  %v10688 = vmax.f32 %v10686, %v10687
  %v10689 = vrot.slane %v10535, 4
  %v10690 = vmax.f32 %v10535, %v10689
  %v10691 = vrot.slane %v10690, 2
  %v10692 = vmax.f32 %v10690, %v10691
  %v10693 = vrot.slane %v10692, 1
  %v10694 = vmax.f32 %v10692, %v10693
  %v10695 = vrot.slane %v10538, 4
  %v10696 = vmax.f32 %v10538, %v10695
  %v10697 = vrot.slane %v10696, 2
  %v10698 = vmax.f32 %v10696, %v10697
  %v10699 = vrot.slane %v10698, 1
  %v10700 = vmax.f32 %v10698, %v10699
  %v10701 = vrot.slane %v10541, 4
  %v10702 = vmax.f32 %v10541, %v10701
  %v10703 = vrot.slane %v10702, 2
  %v10704 = vmax.f32 %v10702, %v10703
  %v10705 = vrot.slane %v10704, 1
  %v10706 = vmax.f32 %v10704, %v10705
  %v10707 = vrot.slane %v10544, 4
  %v10708 = vmax.f32 %v10544, %v10707
  %v10709 = vrot.slane %v10708, 2
  %v10710 = vmax.f32 %v10708, %v10709
  %v10711 = vrot.slane %v10710, 1
  %v10712 = vmax.f32 %v10710, %v10711
  %v10713 = vrot.slane %v10547, 4
  %v10714 = vmax.f32 %v10547, %v10713
  %v10715 = vrot.slane %v10714, 2
  %v10716 = vmax.f32 %v10714, %v10715
  %v10717 = vrot.slane %v10716, 1
  %v10718 = vmax.f32 %v10716, %v10717
  %v10719 = vrot.slane %v10550, 4
  %v10720 = vmax.f32 %v10550, %v10719
  %v10721 = vrot.slane %v10720, 2
  %v10722 = vmax.f32 %v10720, %v10721
  %v10723 = vrot.slane %v10722, 1
  %v10724 = vmax.f32 %v10722, %v10723
  %v10725 = vrot.slane %v10553, 4
  %v10726 = vmax.f32 %v10553, %v10725
  %v10727 = vrot.slane %v10726, 2
  %v10728 = vmax.f32 %v10726, %v10727
  %v10729 = vrot.slane %v10728, 1
  %v10730 = vmax.f32 %v10728, %v10729
  %v10731 = vrot.slane %v10556, 4
  %v10732 = vmax.f32 %v10556, %v10731
  %v10733 = vrot.slane %v10732, 2
  %v10734 = vmax.f32 %v10732, %v10733
  %v10735 = vrot.slane %v10734, 1
  %v10736 = vmax.f32 %v10734, %v10735
  %v10737 = vrot.slane %v10559, 4
  %v10738 = vmax.f32 %v10559, %v10737
  %v10739 = vrot.slane %v10738, 2
  %v10740 = vmax.f32 %v10738, %v10739
  %v10741 = vrot.slane %v10740, 1
  %v10742 = vmax.f32 %v10740, %v10741
  %v10743 = vrot.slane %v10562, 4
  %v10744 = vmax.f32 %v10562, %v10743
  %v10745 = vrot.slane %v10744, 2
  %v10746 = vmax.f32 %v10744, %v10745
  %v10747 = vrot.slane %v10746, 1
  %v10748 = vmax.f32 %v10746, %v10747
  %v10749 = vrot.slane %v10565, 4
  %v10750 = vmax.f32 %v10565, %v10749
  %v10751 = vrot.slane %v10750, 2
  %v10752 = vmax.f32 %v10750, %v10751
  %v10753 = vrot.slane %v10752, 1
  %v10754 = vmax.f32 %v10752, %v10753
  %v10755 = vrot.slane %v10568, 4
  %v10756 = vmax.f32 %v10568, %v10755
  %v10757 = vrot.slane %v10756, 2
  %v10758 = vmax.f32 %v10756, %v10757
  %v10759 = vrot.slane %v10758, 1
  %v10760 = vmax.f32 %v10758, %v10759
  %v10761 = vsub.f32 %v10475, %v10574
  %v10762 = vsub.f32 %v10478, %v10580
  %v10763 = vsub.f32 %v10481, %v10586
  %v10764 = vsub.f32 %v10484, %v10592
  %v10765 = vsub.f32 %v10487, %v10598
  %v10766 = vsub.f32 %v10490, %v10604
  %v10767 = vsub.f32 %v10493, %v10610
  %v10768 = vsub.f32 %v10496, %v10616
  %v10769 = vsub.f32 %v10499, %v10622
  %v10770 = vsub.f32 %v10502, %v10628
  %v10771 = vsub.f32 %v10505, %v10634
  %v10772 = vsub.f32 %v10508, %v10640
  %v10773 = vsub.f32 %v10511, %v10646
  %v10774 = vsub.f32 %v10514, %v10652
  %v10775 = vsub.f32 %v10517, %v10658
  %v10776 = vsub.f32 %v10520, %v10664
  %v10777 = vsub.f32 %v10523, %v10670
  %v10778 = vsub.f32 %v10526, %v10676
  %v10779 = vsub.f32 %v10529, %v10682
  %v10780 = vsub.f32 %v10532, %v10688
  %v10781 = vsub.f32 %v10535, %v10694
  %v10782 = vsub.f32 %v10538, %v10700
  %v10783 = vsub.f32 %v10541, %v10706
  %v10784 = vsub.f32 %v10544, %v10712
  %v10785 = vsub.f32 %v10547, %v10718
  %v10786 = vsub.f32 %v10550, %v10724
  %v10787 = vsub.f32 %v10553, %v10730
  %v10788 = vsub.f32 %v10556, %v10736
  %v10789 = vsub.f32 %v10559, %v10742
  %v10790 = vsub.f32 %v10562, %v10748
  %v10791 = vsub.f32 %v10565, %v10754
  %v10792 = vsub.f32 %v10568, %v10760
  %v10793 = vmul.f32 %v10761, 1.442695
  %v10794 = vpow.pop %v10793
  %v10795 = vmul.f32 %v10762, 1.442695
  %v10796 = vpow.pop %v10795
  %v10797 = vmul.f32 %v10763, 1.442695
  %v10798 = vpow.pop %v10797
  %v10799 = vmul.f32 %v10764, 1.442695
  %v10800 = vpow.pop %v10799
  %v10801 = vmul.f32 %v10765, 1.442695
  %v10802 = vpow.pop %v10801
  %v10803 = vmul.f32 %v10766, 1.442695
  %v10804 = vpow.pop %v10803
  %v10805 = vmul.f32 %v10767, 1.442695
  %v10806 = vpow.pop %v10805
  %v10807 = vmul.f32 %v10768, 1.442695
  %v10808 = vpow.pop %v10807
  %v10809 = vmul.f32 %v10769, 1.442695
  %v10810 = vpow.pop %v10809
  %v10811 = vmul.f32 %v10770, 1.442695
  %v10812 = vpow.pop %v10811
  %v10813 = vmul.f32 %v10771, 1.442695
  %v10814 = vpow.pop %v10813
  %v10815 = vmul.f32 %v10772, 1.442695
  %v10816 = vpow.pop %v10815
  %v10817 = vmul.f32 %v10773, 1.442695
  %v10818 = vpow.pop %v10817
  %v10819 = vmul.f32 %v10774, 1.442695
  %v10820 = vpow.pop %v10819
  %v10821 = vmul.f32 %v10775, 1.442695
  %v10822 = vpow.pop %v10821
  %v10823 = vmul.f32 %v10776, 1.442695
  %v10824 = vpow.pop %v10823
  %v10825 = vmul.f32 %v10777, 1.442695
  %v10826 = vpow.pop %v10825
  %v10827 = vmul.f32 %v10778, 1.442695
  %v10828 = vpow.pop %v10827
  %v10829 = vmul.f32 %v10779, 1.442695
  %v10830 = vpow.pop %v10829
  %v10831 = vmul.f32 %v10780, 1.442695
  %v10832 = vpow.pop %v10831
  %v10833 = vmul.f32 %v10781, 1.442695
  %v10834 = vpow.pop %v10833
  %v10835 = vmul.f32 %v10782, 1.442695
  %v10836 = vpow.pop %v10835
  %v10837 = vmul.f32 %v10783, 1.442695
  %v10838 = vpow.pop %v10837
  %v10839 = vmul.f32 %v10784, 1.442695
  %v10840 = vpow.pop %v10839
  %v10841 = vmul.f32 %v10785, 1.442695
  %v10842 = vpow.pop %v10841
  %v10843 = vmul.f32 %v10786, 1.442695
  %v10844 = vpow.pop %v10843
  %v10845 = vmul.f32 %v10787, 1.442695
  %v10846 = vpow.pop %v10845
  %v10847 = vmul.f32 %v10788, 1.442695
  %v10848 = vpow.pop %v10847
  %v10849 = vmul.f32 %v10789, 1.442695
  %v10850 = vpow.pop %v10849
  %v10851 = vmul.f32 %v10790, 1.442695
  %v10852 = vpow.pop %v10851
  %v10853 = vmul.f32 %v10791, 1.442695
  %v10854 = vpow.pop %v10853
  %v10855 = vmul.f32 %v10792, 1.442695
  %v10856 = vpow.pop %v10855
  %v10857 = vrot.slane %v10794, 4
  %v10858 = vadd.f32 %v10794, %v10857
  %v10859 = vrot.slane %v10858, 2
  %v10860 = vadd.f32 %v10858, %v10859
  %v10861 = vrot.slane %v10860, 1
  %v10862 = vadd.f32 %v10860, %v10861
  %v10863 = vrot.slane %v10796, 4
  %v10864 = vadd.f32 %v10796, %v10863
  %v10865 = vrot.slane %v10864, 2
  %v10866 = vadd.f32 %v10864, %v10865
  %v10867 = vrot.slane %v10866, 1
  %v10868 = vadd.f32 %v10866, %v10867
  %v10869 = vrot.slane %v10798, 4
  %v10870 = vadd.f32 %v10798, %v10869
  %v10871 = vrot.slane %v10870, 2
  %v10872 = vadd.f32 %v10870, %v10871
  %v10873 = vrot.slane %v10872, 1
  %v10874 = vadd.f32 %v10872, %v10873
  %v10875 = vrot.slane %v10800, 4
  %v10876 = vadd.f32 %v10800, %v10875
  %v10877 = vrot.slane %v10876, 2
  %v10878 = vadd.f32 %v10876, %v10877
  %v10879 = vrot.slane %v10878, 1
  %v10880 = vadd.f32 %v10878, %v10879
  %v10881 = vrot.slane %v10802, 4
  %v10882 = vadd.f32 %v10802, %v10881
  %v10883 = vrot.slane %v10882, 2
  %v10884 = vadd.f32 %v10882, %v10883
  %v10885 = vrot.slane %v10884, 1
  %v10886 = vadd.f32 %v10884, %v10885
  %v10887 = vrot.slane %v10804, 4
  %v10888 = vadd.f32 %v10804, %v10887
  %v10889 = vrot.slane %v10888, 2
  %v10890 = vadd.f32 %v10888, %v10889
  %v10891 = vrot.slane %v10890, 1
  %v10892 = vadd.f32 %v10890, %v10891
  %v10893 = vrot.slane %v10806, 4
  %v10894 = vadd.f32 %v10806, %v10893
  %v10895 = vrot.slane %v10894, 2
  %v10896 = vadd.f32 %v10894, %v10895
  %v10897 = vrot.slane %v10896, 1
  %v10898 = vadd.f32 %v10896, %v10897
  %v10899 = vrot.slane %v10808, 4
  %v10900 = vadd.f32 %v10808, %v10899
  %v10901 = vrot.slane %v10900, 2
  %v10902 = vadd.f32 %v10900, %v10901
  %v10903 = vrot.slane %v10902, 1
  %v10904 = vadd.f32 %v10902, %v10903
  %v10905 = vrot.slane %v10810, 4
  %v10906 = vadd.f32 %v10810, %v10905
  %v10907 = vrot.slane %v10906, 2
  %v10908 = vadd.f32 %v10906, %v10907
  %v10909 = vrot.slane %v10908, 1
  %v10910 = vadd.f32 %v10908, %v10909
  %v10911 = vrot.slane %v10812, 4
  %v10912 = vadd.f32 %v10812, %v10911
  %v10913 = vrot.slane %v10912, 2
  %v10914 = vadd.f32 %v10912, %v10913
  %v10915 = vrot.slane %v10914, 1
  %v10916 = vadd.f32 %v10914, %v10915
  %v10917 = vrot.slane %v10814, 4
  %v10918 = vadd.f32 %v10814, %v10917
  %v10919 = vrot.slane %v10918, 2
  %v10920 = vadd.f32 %v10918, %v10919
  %v10921 = vrot.slane %v10920, 1
  %v10922 = vadd.f32 %v10920, %v10921
  %v10923 = vrot.slane %v10816, 4
  %v10924 = vadd.f32 %v10816, %v10923
  %v10925 = vrot.slane %v10924, 2
  %v10926 = vadd.f32 %v10924, %v10925
  %v10927 = vrot.slane %v10926, 1
  %v10928 = vadd.f32 %v10926, %v10927
  %v10929 = vrot.slane %v10818, 4
  %v10930 = vadd.f32 %v10818, %v10929
  %v10931 = vrot.slane %v10930, 2
  %v10932 = vadd.f32 %v10930, %v10931
  %v10933 = vrot.slane %v10932, 1
  %v10934 = vadd.f32 %v10932, %v10933
  %v10935 = vrot.slane %v10820, 4
  %v10936 = vadd.f32 %v10820, %v10935
  %v10937 = vrot.slane %v10936, 2
  %v10938 = vadd.f32 %v10936, %v10937
  %v10939 = vrot.slane %v10938, 1
  %v10940 = vadd.f32 %v10938, %v10939
  %v10941 = vrot.slane %v10822, 4
  %v10942 = vadd.f32 %v10822, %v10941
  %v10943 = vrot.slane %v10942, 2
  %v10944 = vadd.f32 %v10942, %v10943
  %v10945 = vrot.slane %v10944, 1
  %v10946 = vadd.f32 %v10944, %v10945
  %v10947 = vrot.slane %v10824, 4
  %v10948 = vadd.f32 %v10824, %v10947
  %v10949 = vrot.slane %v10948, 2
  %v10950 = vadd.f32 %v10948, %v10949
  %v10951 = vrot.slane %v10950, 1
  %v10952 = vadd.f32 %v10950, %v10951
  %v10953 = vrot.slane %v10826, 4
  %v10954 = vadd.f32 %v10826, %v10953
  %v10955 = vrot.slane %v10954, 2
  %v10956 = vadd.f32 %v10954, %v10955
  %v10957 = vrot.slane %v10956, 1
  %v10958 = vadd.f32 %v10956, %v10957
  %v10959 = vrot.slane %v10828, 4
  %v10960 = vadd.f32 %v10828, %v10959
  %v10961 = vrot.slane %v10960, 2
  %v10962 = vadd.f32 %v10960, %v10961
  %v10963 = vrot.slane %v10962, 1
  %v10964 = vadd.f32 %v10962, %v10963
  %v10965 = vrot.slane %v10830, 4
  %v10966 = vadd.f32 %v10830, %v10965
  %v10967 = vrot.slane %v10966, 2
  %v10968 = vadd.f32 %v10966, %v10967
  %v10969 = vrot.slane %v10968, 1
  %v10970 = vadd.f32 %v10968, %v10969
  %v10971 = vrot.slane %v10832, 4
  %v10972 = vadd.f32 %v10832, %v10971
  %v10973 = vrot.slane %v10972, 2
  %v10974 = vadd.f32 %v10972, %v10973
  %v10975 = vrot.slane %v10974, 1
  %v10976 = vadd.f32 %v10974, %v10975
  %v10977 = vrot.slane %v10834, 4
  %v10978 = vadd.f32 %v10834, %v10977
  %v10979 = vrot.slane %v10978, 2
  %v10980 = vadd.f32 %v10978, %v10979
  %v10981 = vrot.slane %v10980, 1
  %v10982 = vadd.f32 %v10980, %v10981
  %v10983 = vrot.slane %v10836, 4
  %v10984 = vadd.f32 %v10836, %v10983
  %v10985 = vrot.slane %v10984, 2
  %v10986 = vadd.f32 %v10984, %v10985
  %v10987 = vrot.slane %v10986, 1
  %v10988 = vadd.f32 %v10986, %v10987
  %v10989 = vrot.slane %v10838, 4
  %v10990 = vadd.f32 %v10838, %v10989
  %v10991 = vrot.slane %v10990, 2
  %v10992 = vadd.f32 %v10990, %v10991
  %v10993 = vrot.slane %v10992, 1
  %v10994 = vadd.f32 %v10992, %v10993
  %v10995 = vrot.slane %v10840, 4
  %v10996 = vadd.f32 %v10840, %v10995
  %v10997 = vrot.slane %v10996, 2
  %v10998 = vadd.f32 %v10996, %v10997
  %v10999 = vrot.slane %v10998, 1
  %v11000 = vadd.f32 %v10998, %v10999
  %v11001 = vrot.slane %v10842, 4
  %v11002 = vadd.f32 %v10842, %v11001
  %v11003 = vrot.slane %v11002, 2
  %v11004 = vadd.f32 %v11002, %v11003
  %v11005 = vrot.slane %v11004, 1
  %v11006 = vadd.f32 %v11004, %v11005
  %v11007 = vrot.slane %v10844, 4
  %v11008 = vadd.f32 %v10844, %v11007
  %v11009 = vrot.slane %v11008, 2
  %v11010 = vadd.f32 %v11008, %v11009
  %v11011 = vrot.slane %v11010, 1
  %v11012 = vadd.f32 %v11010, %v11011
  %v11013 = vrot.slane %v10846, 4
  %v11014 = vadd.f32 %v10846, %v11013
  %v11015 = vrot.slane %v11014, 2
  %v11016 = vadd.f32 %v11014, %v11015
  %v11017 = vrot.slane %v11016, 1
  %v11018 = vadd.f32 %v11016, %v11017
  %v11019 = vrot.slane %v10848, 4
  %v11020 = vadd.f32 %v10848, %v11019
  %v11021 = vrot.slane %v11020, 2
  %v11022 = vadd.f32 %v11020, %v11021
  %v11023 = vrot.slane %v11022, 1
  %v11024 = vadd.f32 %v11022, %v11023
  %v11025 = vrot.slane %v10850, 4
  %v11026 = vadd.f32 %v10850, %v11025
  %v11027 = vrot.slane %v11026, 2
  %v11028 = vadd.f32 %v11026, %v11027
  %v11029 = vrot.slane %v11028, 1
  %v11030 = vadd.f32 %v11028, %v11029
  %v11031 = vrot.slane %v10852, 4
  %v11032 = vadd.f32 %v10852, %v11031
  %v11033 = vrot.slane %v11032, 2
  %v11034 = vadd.f32 %v11032, %v11033
  %v11035 = vrot.slane %v11034, 1
  %v11036 = vadd.f32 %v11034, %v11035
  %v11037 = vrot.slane %v10854, 4
  %v11038 = vadd.f32 %v10854, %v11037
  %v11039 = vrot.slane %v11038, 2
  %v11040 = vadd.f32 %v11038, %v11039
  %v11041 = vrot.slane %v11040, 1
  %v11042 = vadd.f32 %v11040, %v11041
  %v11043 = vrot.slane %v10856, 4
  %v11044 = vadd.f32 %v10856, %v11043
  %v11045 = vrot.slane %v11044, 2
  %v11046 = vadd.f32 %v11044, %v11045
  %v11047 = vrot.slane %v11046, 1
  %v11048 = vadd.f32 %v11046, %v11047
  %v11049 = vrcp.pop %v10862
  %v11050 = vmul.f32 %v10862, %v11049
  %v11051 = vsub.f32 1.0, %v11050
  %v11052 = vmul.f32 %v11049, %v11051
  %v11053 = vadd.f32 %v11049, %v11052
  %vm11054 = vweird.f32 %v10862
  %vm11055 = vweird.f32 %v11049
  %vm11056 = vmor %vm11054, %vm11055
  %v11057 = vsel %vm11056, %v11049, %v11053
  %v11058 = vand.u32 2147483647, %v10862
  %vm11059 = vcmp.eq.f32.partialorder %v11058, 8.507059e+37
  %v11060 = vand.u32 %v10862, 2147483648
  %v11061 = vor.u32 1.1754944e-38, %v11060
  %v11062 = vsel %vm11059, %v11061, %v11057
  %v11063 = vrcp.pop %v10868
  %v11064 = vmul.f32 %v10868, %v11063
  %v11065 = vsub.f32 1.0, %v11064
  %v11066 = vmul.f32 %v11063, %v11065
  %v11067 = vadd.f32 %v11063, %v11066
  %vm11068 = vweird.f32 %v10868
  %vm11069 = vweird.f32 %v11063
  %vm11070 = vmor %vm11068, %vm11069
  %v11071 = vsel %vm11070, %v11063, %v11067
  %v11072 = vand.u32 2147483647, %v10868
  %vm11073 = vcmp.eq.f32.partialorder %v11072, 8.507059e+37
  %v11074 = vand.u32 %v10868, 2147483648
  %v11075 = vor.u32 1.1754944e-38, %v11074
  %v11076 = vsel %vm11073, %v11075, %v11071
  %v11077 = vrcp.pop %v10874
  %v11078 = vmul.f32 %v10874, %v11077
  %v11079 = vsub.f32 1.0, %v11078
  %v11080 = vmul.f32 %v11077, %v11079
  %v11081 = vadd.f32 %v11077, %v11080
  %vm11082 = vweird.f32 %v10874
  %vm11083 = vweird.f32 %v11077
  %vm11084 = vmor %vm11082, %vm11083
  %v11085 = vsel %vm11084, %v11077, %v11081
  %v11086 = vand.u32 2147483647, %v10874
  %vm11087 = vcmp.eq.f32.partialorder %v11086, 8.507059e+37
  %v11088 = vand.u32 %v10874, 2147483648
  %v11089 = vor.u32 1.1754944e-38, %v11088
  %v11090 = vsel %vm11087, %v11089, %v11085
  %v11091 = vrcp.pop %v10880
  %v11092 = vmul.f32 %v10880, %v11091
  %v11093 = vsub.f32 1.0, %v11092
  %v11094 = vmul.f32 %v11091, %v11093
  %v11095 = vadd.f32 %v11091, %v11094
  %vm11096 = vweird.f32 %v10880
  %vm11097 = vweird.f32 %v11091
  %vm11098 = vmor %vm11096, %vm11097
  %v11099 = vsel %vm11098, %v11091, %v11095
  %v11100 = vand.u32 2147483647, %v10880
  %vm11101 = vcmp.eq.f32.partialorder %v11100, 8.507059e+37
  %v11102 = vand.u32 %v10880, 2147483648
  %v11103 = vor.u32 1.1754944e-38, %v11102
  %v11104 = vsel %vm11101, %v11103, %v11099
  %v11105 = vrcp.pop %v10886
  %v11106 = vmul.f32 %v10886, %v11105
  %v11107 = vsub.f32 1.0, %v11106
  %v11108 = vmul.f32 %v11105, %v11107
  %v11109 = vadd.f32 %v11105, %v11108
  %vm11110 = vweird.f32 %v10886
  %vm11111 = vweird.f32 %v11105
  %vm11112 = vmor %vm11110, %vm11111
  %v11113 = vsel %vm11112, %v11105, %v11109
  %v11114 = vand.u32 2147483647, %v10886
  %vm11115 = vcmp.eq.f32.partialorder %v11114, 8.507059e+37
  %v11116 = vand.u32 %v10886, 2147483648
  %v11117 = vor.u32 1.1754944e-38, %v11116
  %v11118 = vsel %vm11115, %v11117, %v11113
  %v11119 = vrcp.pop %v10892
  %v11120 = vmul.f32 %v10892, %v11119
  %v11121 = vsub.f32 1.0, %v11120
  %v11122 = vmul.f32 %v11119, %v11121
  %v11123 = vadd.f32 %v11119, %v11122
  %vm11124 = vweird.f32 %v10892
  %vm11125 = vweird.f32 %v11119
  %vm11126 = vmor %vm11124, %vm11125
  %v11127 = vsel %vm11126, %v11119, %v11123
  %v11128 = vand.u32 2147483647, %v10892
  %vm11129 = vcmp.eq.f32.partialorder %v11128, 8.507059e+37
  %v11130 = vand.u32 %v10892, 2147483648
  %v11131 = vor.u32 1.1754944e-38, %v11130
  %v11132 = vsel %vm11129, %v11131, %v11127
  %v11133 = vrcp.pop %v10898
  %v11134 = vmul.f32 %v10898, %v11133
  %v11135 = vsub.f32 1.0, %v11134
  %v11136 = vmul.f32 %v11133, %v11135
  %v11137 = vadd.f32 %v11133, %v11136
  %vm11138 = vweird.f32 %v10898
  %vm11139 = vweird.f32 %v11133
  %vm11140 = vmor %vm11138, %vm11139
  %v11141 = vsel %vm11140, %v11133, %v11137
  %v11142 = vand.u32 2147483647, %v10898
  %vm11143 = vcmp.eq.f32.partialorder %v11142, 8.507059e+37
  %v11144 = vand.u32 %v10898, 2147483648
  %v11145 = vor.u32 1.1754944e-38, %v11144
  %v11146 = vsel %vm11143, %v11145, %v11141
  %v11147 = vrcp.pop %v10904
  %v11148 = vmul.f32 %v10904, %v11147
  %v11149 = vsub.f32 1.0, %v11148
  %v11150 = vmul.f32 %v11147, %v11149
  %v11151 = vadd.f32 %v11147, %v11150
  %vm11152 = vweird.f32 %v10904
  %vm11153 = vweird.f32 %v11147
  %vm11154 = vmor %vm11152, %vm11153
  %v11155 = vsel %vm11154, %v11147, %v11151
  %v11156 = vand.u32 2147483647, %v10904
  %vm11157 = vcmp.eq.f32.partialorder %v11156, 8.507059e+37
  %v11158 = vand.u32 %v10904, 2147483648
  %v11159 = vor.u32 1.1754944e-38, %v11158
  %v11160 = vsel %vm11157, %v11159, %v11155
  %v11161 = vrcp.pop %v10910
  %v11162 = vmul.f32 %v10910, %v11161
  %v11163 = vsub.f32 1.0, %v11162
  %v11164 = vmul.f32 %v11161, %v11163
  %v11165 = vadd.f32 %v11161, %v11164
  %vm11166 = vweird.f32 %v10910
  %vm11167 = vweird.f32 %v11161
  %vm11168 = vmor %vm11166, %vm11167
  %v11169 = vsel %vm11168, %v11161, %v11165
  %v11170 = vand.u32 2147483647, %v10910
  %vm11171 = vcmp.eq.f32.partialorder %v11170, 8.507059e+37
  %v11172 = vand.u32 %v10910, 2147483648
  %v11173 = vor.u32 1.1754944e-38, %v11172
  %v11174 = vsel %vm11171, %v11173, %v11169
  %v11175 = vrcp.pop %v10916
  %v11176 = vmul.f32 %v10916, %v11175
  %v11177 = vsub.f32 1.0, %v11176
  %v11178 = vmul.f32 %v11175, %v11177
  %v11179 = vadd.f32 %v11175, %v11178
  %vm11180 = vweird.f32 %v10916
  %vm11181 = vweird.f32 %v11175
  %vm11182 = vmor %vm11180, %vm11181
  %v11183 = vsel %vm11182, %v11175, %v11179
  %v11184 = vand.u32 2147483647, %v10916
  %vm11185 = vcmp.eq.f32.partialorder %v11184, 8.507059e+37
  %v11186 = vand.u32 %v10916, 2147483648
  %v11187 = vor.u32 1.1754944e-38, %v11186
  %v11188 = vsel %vm11185, %v11187, %v11183
  %v11189 = vrcp.pop %v10922
  %v11190 = vmul.f32 %v10922, %v11189
  %v11191 = vsub.f32 1.0, %v11190
  %v11192 = vmul.f32 %v11189, %v11191
  %v11193 = vadd.f32 %v11189, %v11192
  %vm11194 = vweird.f32 %v10922
  %vm11195 = vweird.f32 %v11189
  %vm11196 = vmor %vm11194, %vm11195
  %v11197 = vsel %vm11196, %v11189, %v11193
  %v11198 = vand.u32 2147483647, %v10922
  %vm11199 = vcmp.eq.f32.partialorder %v11198, 8.507059e+37
  %v11200 = vand.u32 %v10922, 2147483648
  %v11201 = vor.u32 1.1754944e-38, %v11200
  %v11202 = vsel %vm11199, %v11201, %v11197
  %v11203 = vrcp.pop %v10928
  %v11204 = vmul.f32 %v10928, %v11203
  %v11205 = vsub.f32 1.0, %v11204
  %v11206 = vmul.f32 %v11203, %v11205
  %v11207 = vadd.f32 %v11203, %v11206
  %vm11208 = vweird.f32 %v10928
  %vm11209 = vweird.f32 %v11203
  %vm11210 = vmor %vm11208, %vm11209
  %v11211 = vsel %vm11210, %v11203, %v11207
  %v11212 = vand.u32 2147483647, %v10928
  %vm11213 = vcmp.eq.f32.partialorder %v11212, 8.507059e+37
  %v11214 = vand.u32 %v10928, 2147483648
  %v11215 = vor.u32 1.1754944e-38, %v11214
  %v11216 = vsel %vm11213, %v11215, %v11211
  %v11217 = vrcp.pop %v10934
  %v11218 = vmul.f32 %v10934, %v11217
  %v11219 = vsub.f32 1.0, %v11218
  %v11220 = vmul.f32 %v11217, %v11219
  %v11221 = vadd.f32 %v11217, %v11220
  %vm11222 = vweird.f32 %v10934
  %vm11223 = vweird.f32 %v11217
  %vm11224 = vmor %vm11222, %vm11223
  %v11225 = vsel %vm11224, %v11217, %v11221
  %v11226 = vand.u32 2147483647, %v10934
  %vm11227 = vcmp.eq.f32.partialorder %v11226, 8.507059e+37
  %v11228 = vand.u32 %v10934, 2147483648
  %v11229 = vor.u32 1.1754944e-38, %v11228
  %v11230 = vsel %vm11227, %v11229, %v11225
  %v11231 = vrcp.pop %v10940
  %v11232 = vmul.f32 %v10940, %v11231
  %v11233 = vsub.f32 1.0, %v11232
  %v11234 = vmul.f32 %v11231, %v11233
  %v11235 = vadd.f32 %v11231, %v11234
  %vm11236 = vweird.f32 %v10940
  %vm11237 = vweird.f32 %v11231
  %vm11238 = vmor %vm11236, %vm11237
  %v11239 = vsel %vm11238, %v11231, %v11235
  %v11240 = vand.u32 2147483647, %v10940
  %vm11241 = vcmp.eq.f32.partialorder %v11240, 8.507059e+37
  %v11242 = vand.u32 %v10940, 2147483648
  %v11243 = vor.u32 1.1754944e-38, %v11242
  %v11244 = vsel %vm11241, %v11243, %v11239
  %v11245 = vrcp.pop %v10946
  %v11246 = vmul.f32 %v10946, %v11245
  %v11247 = vsub.f32 1.0, %v11246
  %v11248 = vmul.f32 %v11245, %v11247
  %v11249 = vadd.f32 %v11245, %v11248
  %vm11250 = vweird.f32 %v10946
  %vm11251 = vweird.f32 %v11245
  %vm11252 = vmor %vm11250, %vm11251
  %v11253 = vsel %vm11252, %v11245, %v11249
  %v11254 = vand.u32 2147483647, %v10946
  %vm11255 = vcmp.eq.f32.partialorder %v11254, 8.507059e+37
  %v11256 = vand.u32 %v10946, 2147483648
  %v11257 = vor.u32 1.1754944e-38, %v11256
  %v11258 = vsel %vm11255, %v11257, %v11253
  %v11259 = vrcp.pop %v10952
  %v11260 = vmul.f32 %v10952, %v11259
  %v11261 = vsub.f32 1.0, %v11260
  %v11262 = vmul.f32 %v11259, %v11261
  %v11263 = vadd.f32 %v11259, %v11262
  %vm11264 = vweird.f32 %v10952
  %vm11265 = vweird.f32 %v11259
  %vm11266 = vmor %vm11264, %vm11265
  %v11267 = vsel %vm11266, %v11259, %v11263
  %v11268 = vand.u32 2147483647, %v10952
  %vm11269 = vcmp.eq.f32.partialorder %v11268, 8.507059e+37
  %v11270 = vand.u32 %v10952, 2147483648
  %v11271 = vor.u32 1.1754944e-38, %v11270
  %v11272 = vsel %vm11269, %v11271, %v11267
  %v11273 = vrcp.pop %v10958
  %v11274 = vmul.f32 %v10958, %v11273
  %v11275 = vsub.f32 1.0, %v11274
  %v11276 = vmul.f32 %v11273, %v11275
  %v11277 = vadd.f32 %v11273, %v11276
  %vm11278 = vweird.f32 %v10958
  %vm11279 = vweird.f32 %v11273
  %vm11280 = vmor %vm11278, %vm11279
  %v11281 = vsel %vm11280, %v11273, %v11277
  %v11282 = vand.u32 2147483647, %v10958
  %vm11283 = vcmp.eq.f32.partialorder %v11282, 8.507059e+37
  %v11284 = vand.u32 %v10958, 2147483648
  %v11285 = vor.u32 1.1754944e-38, %v11284
  %v11286 = vsel %vm11283, %v11285, %v11281
  %v11287 = vrcp.pop %v10964
  %v11288 = vmul.f32 %v10964, %v11287
  %v11289 = vsub.f32 1.0, %v11288
  %v11290 = vmul.f32 %v11287, %v11289
  %v11291 = vadd.f32 %v11287, %v11290
  %vm11292 = vweird.f32 %v10964
  %vm11293 = vweird.f32 %v11287
  %vm11294 = vmor %vm11292, %vm11293
  %v11295 = vsel %vm11294, %v11287, %v11291
  %v11296 = vand.u32 2147483647, %v10964
  %vm11297 = vcmp.eq.f32.partialorder %v11296, 8.507059e+37
  %v11298 = vand.u32 %v10964, 2147483648
  %v11299 = vor.u32 1.1754944e-38, %v11298
  %v11300 = vsel %vm11297, %v11299, %v11295
  %v11301 = vrcp.pop %v10970
  %v11302 = vmul.f32 %v10970, %v11301
  %v11303 = vsub.f32 1.0, %v11302
  %v11304 = vmul.f32 %v11301, %v11303
  %v11305 = vadd.f32 %v11301, %v11304
  %vm11306 = vweird.f32 %v10970
  %vm11307 = vweird.f32 %v11301
  %vm11308 = vmor %vm11306, %vm11307
  %v11309 = vsel %vm11308, %v11301, %v11305
  %v11310 = vand.u32 2147483647, %v10970
  %vm11311 = vcmp.eq.f32.partialorder %v11310, 8.507059e+37
  %v11312 = vand.u32 %v10970, 2147483648
  %v11313 = vor.u32 1.1754944e-38, %v11312
  %v11314 = vsel %vm11311, %v11313, %v11309
  %v11315 = vrcp.pop %v10976
  %v11316 = vmul.f32 %v10976, %v11315
  %v11317 = vsub.f32 1.0, %v11316
  %v11318 = vmul.f32 %v11315, %v11317
  %v11319 = vadd.f32 %v11315, %v11318
  %vm11320 = vweird.f32 %v10976
  %vm11321 = vweird.f32 %v11315
  %vm11322 = vmor %vm11320, %vm11321
  %v11323 = vsel %vm11322, %v11315, %v11319
  %v11324 = vand.u32 2147483647, %v10976
  %vm11325 = vcmp.eq.f32.partialorder %v11324, 8.507059e+37
  %v11326 = vand.u32 %v10976, 2147483648
  %v11327 = vor.u32 1.1754944e-38, %v11326
  %v11328 = vsel %vm11325, %v11327, %v11323
  %v11329 = vrcp.pop %v10982
  %v11330 = vmul.f32 %v10982, %v11329
  %v11331 = vsub.f32 1.0, %v11330
  %v11332 = vmul.f32 %v11329, %v11331
  %v11333 = vadd.f32 %v11329, %v11332
  %vm11334 = vweird.f32 %v10982
  %vm11335 = vweird.f32 %v11329
  %vm11336 = vmor %vm11334, %vm11335
  %v11337 = vsel %vm11336, %v11329, %v11333
  %v11338 = vand.u32 2147483647, %v10982
  %vm11339 = vcmp.eq.f32.partialorder %v11338, 8.507059e+37
  %v11340 = vand.u32 %v10982, 2147483648
  %v11341 = vor.u32 1.1754944e-38, %v11340
  %v11342 = vsel %vm11339, %v11341, %v11337
  %v11343 = vrcp.pop %v10988
  %v11344 = vmul.f32 %v10988, %v11343
  %v11345 = vsub.f32 1.0, %v11344
  %v11346 = vmul.f32 %v11343, %v11345
  %v11347 = vadd.f32 %v11343, %v11346
  %vm11348 = vweird.f32 %v10988
  %vm11349 = vweird.f32 %v11343
  %vm11350 = vmor %vm11348, %vm11349
  %v11351 = vsel %vm11350, %v11343, %v11347
  %v11352 = vand.u32 2147483647, %v10988
  %vm11353 = vcmp.eq.f32.partialorder %v11352, 8.507059e+37
  %v11354 = vand.u32 %v10988, 2147483648
  %v11355 = vor.u32 1.1754944e-38, %v11354
  %v11356 = vsel %vm11353, %v11355, %v11351
  %v11357 = vrcp.pop %v10994
  %v11358 = vmul.f32 %v10994, %v11357
  %v11359 = vsub.f32 1.0, %v11358
  %v11360 = vmul.f32 %v11357, %v11359
  %v11361 = vadd.f32 %v11357, %v11360
  %vm11362 = vweird.f32 %v10994
  %vm11363 = vweird.f32 %v11357
  %vm11364 = vmor %vm11362, %vm11363
  %v11365 = vsel %vm11364, %v11357, %v11361
  %v11366 = vand.u32 2147483647, %v10994
  %vm11367 = vcmp.eq.f32.partialorder %v11366, 8.507059e+37
  %v11368 = vand.u32 %v10994, 2147483648
  %v11369 = vor.u32 1.1754944e-38, %v11368
  %v11370 = vsel %vm11367, %v11369, %v11365
  %v11371 = vrcp.pop %v11000
  %v11372 = vmul.f32 %v11000, %v11371
  %v11373 = vsub.f32 1.0, %v11372
  %v11374 = vmul.f32 %v11371, %v11373
  %v11375 = vadd.f32 %v11371, %v11374
  %vm11376 = vweird.f32 %v11000
  %vm11377 = vweird.f32 %v11371
  %vm11378 = vmor %vm11376, %vm11377
  %v11379 = vsel %vm11378, %v11371, %v11375
  %v11380 = vand.u32 2147483647, %v11000
  %vm11381 = vcmp.eq.f32.partialorder %v11380, 8.507059e+37
  %v11382 = vand.u32 %v11000, 2147483648
  %v11383 = vor.u32 1.1754944e-38, %v11382
  %v11384 = vsel %vm11381, %v11383, %v11379
  %v11385 = vrcp.pop %v11006
  %v11386 = vmul.f32 %v11006, %v11385
  %v11387 = vsub.f32 1.0, %v11386
  %v11388 = vmul.f32 %v11385, %v11387
  %v11389 = vadd.f32 %v11385, %v11388
  %vm11390 = vweird.f32 %v11006
  %vm11391 = vweird.f32 %v11385
  %vm11392 = vmor %vm11390, %vm11391
  %v11393 = vsel %vm11392, %v11385, %v11389
  %v11394 = vand.u32 2147483647, %v11006
  %vm11395 = vcmp.eq.f32.partialorder %v11394, 8.507059e+37
  %v11396 = vand.u32 %v11006, 2147483648
  %v11397 = vor.u32 1.1754944e-38, %v11396
  %v11398 = vsel %vm11395, %v11397, %v11393
  %v11399 = vrcp.pop %v11012
  %v11400 = vmul.f32 %v11012, %v11399
  %v11401 = vsub.f32 1.0, %v11400
  %v11402 = vmul.f32 %v11399, %v11401
  %v11403 = vadd.f32 %v11399, %v11402
  %vm11404 = vweird.f32 %v11012
  %vm11405 = vweird.f32 %v11399
  %vm11406 = vmor %vm11404, %vm11405
  %v11407 = vsel %vm11406, %v11399, %v11403
  %v11408 = vand.u32 2147483647, %v11012
  %vm11409 = vcmp.eq.f32.partialorder %v11408, 8.507059e+37
  %v11410 = vand.u32 %v11012, 2147483648
  %v11411 = vor.u32 1.1754944e-38, %v11410
  %v11412 = vsel %vm11409, %v11411, %v11407
  %v11413 = vrcp.pop %v11018
  %v11414 = vmul.f32 %v11018, %v11413
  %v11415 = vsub.f32 1.0, %v11414
  %v11416 = vmul.f32 %v11413, %v11415
  %v11417 = vadd.f32 %v11413, %v11416
  %vm11418 = vweird.f32 %v11018
  %vm11419 = vweird.f32 %v11413
  %vm11420 = vmor %vm11418, %vm11419
  %v11421 = vsel %vm11420, %v11413, %v11417
  %v11422 = vand.u32 2147483647, %v11018
  %vm11423 = vcmp.eq.f32.partialorder %v11422, 8.507059e+37
  %v11424 = vand.u32 %v11018, 2147483648
  %v11425 = vor.u32 1.1754944e-38, %v11424
  %v11426 = vsel %vm11423, %v11425, %v11421
  %v11427 = vrcp.pop %v11024
  %v11428 = vmul.f32 %v11024, %v11427
  %v11429 = vsub.f32 1.0, %v11428
  %v11430 = vmul.f32 %v11427, %v11429
  %v11431 = vadd.f32 %v11427, %v11430
  %vm11432 = vweird.f32 %v11024
  %vm11433 = vweird.f32 %v11427
  %vm11434 = vmor %vm11432, %vm11433
  %v11435 = vsel %vm11434, %v11427, %v11431
  %v11436 = vand.u32 2147483647, %v11024
  %vm11437 = vcmp.eq.f32.partialorder %v11436, 8.507059e+37
  %v11438 = vand.u32 %v11024, 2147483648
  %v11439 = vor.u32 1.1754944e-38, %v11438
  %v11440 = vsel %vm11437, %v11439, %v11435
  %v11441 = vrcp.pop %v11030
  %v11442 = vmul.f32 %v11030, %v11441
  %v11443 = vsub.f32 1.0, %v11442
  %v11444 = vmul.f32 %v11441, %v11443
  %v11445 = vadd.f32 %v11441, %v11444
  %vm11446 = vweird.f32 %v11030
  %vm11447 = vweird.f32 %v11441
  %vm11448 = vmor %vm11446, %vm11447
  %v11449 = vsel %vm11448, %v11441, %v11445
  %v11450 = vand.u32 2147483647, %v11030
  %vm11451 = vcmp.eq.f32.partialorder %v11450, 8.507059e+37
  %v11452 = vand.u32 %v11030, 2147483648
  %v11453 = vor.u32 1.1754944e-38, %v11452
  %v11454 = vsel %vm11451, %v11453, %v11449
  %v11455 = vrcp.pop %v11036
  %v11456 = vmul.f32 %v11036, %v11455
  %v11457 = vsub.f32 1.0, %v11456
  %v11458 = vmul.f32 %v11455, %v11457
  %v11459 = vadd.f32 %v11455, %v11458
  %vm11460 = vweird.f32 %v11036
  %vm11461 = vweird.f32 %v11455
  %vm11462 = vmor %vm11460, %vm11461
  %v11463 = vsel %vm11462, %v11455, %v11459
  %v11464 = vand.u32 2147483647, %v11036
  %vm11465 = vcmp.eq.f32.partialorder %v11464, 8.507059e+37
  %v11466 = vand.u32 %v11036, 2147483648
  %v11467 = vor.u32 1.1754944e-38, %v11466
  %v11468 = vsel %vm11465, %v11467, %v11463
  %v11469 = vrcp.pop %v11042
  %v11470 = vmul.f32 %v11042, %v11469
  %v11471 = vsub.f32 1.0, %v11470
  %v11472 = vmul.f32 %v11469, %v11471
  %v11473 = vadd.f32 %v11469, %v11472
  %vm11474 = vweird.f32 %v11042
  %vm11475 = vweird.f32 %v11469
  %vm11476 = vmor %vm11474, %vm11475
  %v11477 = vsel %vm11476, %v11469, %v11473
  %v11478 = vand.u32 2147483647, %v11042
  %vm11479 = vcmp.eq.f32.partialorder %v11478, 8.507059e+37
  %v11480 = vand.u32 %v11042, 2147483648
  %v11481 = vor.u32 1.1754944e-38, %v11480
  %v11482 = vsel %vm11479, %v11481, %v11477
  %v11483 = vrcp.pop %v11048
  %v11484 = vmul.f32 %v11048, %v11483
  %v11485 = vsub.f32 1.0, %v11484
  %v11486 = vmul.f32 %v11483, %v11485
  %v11487 = vadd.f32 %v11483, %v11486
  %vm11488 = vweird.f32 %v11048
  %vm11489 = vweird.f32 %v11483
  %vm11490 = vmor %vm11488, %vm11489
  %v11491 = vsel %vm11490, %v11483, %v11487
  %v11492 = vand.u32 2147483647, %v11048
  %vm11493 = vcmp.eq.f32.partialorder %v11492, 8.507059e+37
  %v11494 = vand.u32 %v11048, 2147483648
  %v11495 = vor.u32 1.1754944e-38, %v11494
  %v11496 = vsel %vm11493, %v11495, %v11491
  %v11497 = vmul.f32 %v10794, %v11062
  %v11498 = vmul.f32 %v10796, %v11076
  %v11499 = vmul.f32 %v10798, %v11090
  %v11500 = vmul.f32 %v10800, %v11104
  %v11501 = vmul.f32 %v10802, %v11118
  %v11502 = vmul.f32 %v10804, %v11132
  %v11503 = vmul.f32 %v10806, %v11146
  %v11504 = vmul.f32 %v10808, %v11160
  %v11505 = vmul.f32 %v10810, %v11174
  %v11506 = vmul.f32 %v10812, %v11188
  %v11507 = vmul.f32 %v10814, %v11202
  %v11508 = vmul.f32 %v10816, %v11216
  %v11509 = vmul.f32 %v10818, %v11230
  %v11510 = vmul.f32 %v10820, %v11244
  %v11511 = vmul.f32 %v10822, %v11258
  %v11512 = vmul.f32 %v10824, %v11272
  %v11513 = vmul.f32 %v10826, %v11286
  %v11514 = vmul.f32 %v10828, %v11300
  %v11515 = vmul.f32 %v10830, %v11314
  %v11516 = vmul.f32 %v10832, %v11328
  %v11517 = vmul.f32 %v10834, %v11342
  %v11518 = vmul.f32 %v10836, %v11356
  %v11519 = vmul.f32 %v10838, %v11370
  %v11520 = vmul.f32 %v10840, %v11384
  %v11521 = vmul.f32 %v10842, %v11398
  %v11522 = vmul.f32 %v10844, %v11412
  %v11523 = vmul.f32 %v10846, %v11426
  %v11524 = vmul.f32 %v10848, %v11440
  %v11525 = vmul.f32 %v10850, %v11454
  %v11526 = vmul.f32 %v10852, %v11468
  %v11527 = vmul.f32 %v10854, %v11482
  %v11528 = vmul.f32 %v10856, %v11496
  %v11529 = vmul.f32 %v11497, %v10156
  %v11530 = vmul.f32 %v11498, %v10157
  %v11531 = vmul.f32 %v11499, %v10158
  %v11532 = vmul.f32 %v11500, %v10159
  %v11533 = vmul.f32 %v11501, %v10160
  %v11534 = vmul.f32 %v11502, %v10161
  %v11535 = vmul.f32 %v11503, %v10162
  %v11536 = vmul.f32 %v11504, %v10163
  %v11537 = vmul.f32 %v11505, %v10164
  %v11538 = vmul.f32 %v11506, %v10165
  %v11539 = vmul.f32 %v11507, %v10166
  %v11540 = vmul.f32 %v11508, %v10167
  %v11541 = vmul.f32 %v11509, %v10168
  %v11542 = vmul.f32 %v11510, %v10169
  %v11543 = vmul.f32 %v11511, %v10170
  %v11544 = vmul.f32 %v11512, %v10171
  %v11545 = vmul.f32 %v11513, %v10172
  %v11546 = vmul.f32 %v11514, %v10173
  %v11547 = vmul.f32 %v11515, %v10174
  %v11548 = vmul.f32 %v11516, %v10175
  %v11549 = vmul.f32 %v11517, %v10176
  %v11550 = vmul.f32 %v11518, %v10177
  %v11551 = vmul.f32 %v11519, %v10178
  %v11552 = vmul.f32 %v11520, %v10179
  %v11553 = vmul.f32 %v11521, %v10180
  %v11554 = vmul.f32 %v11522, %v10181
  %v11555 = vmul.f32 %v11523, %v10182
  %v11556 = vmul.f32 %v11524, %v10183
  %v11557 = vmul.f32 %v11525, %v10184
  %v11558 = vmul.f32 %v11526, %v10185
  %v11559 = vmul.f32 %v11527, %v10186
  %v11560 = vmul.f32 %v11528, %v10187
  %v11561 = vsel %vm481, %v11529, 0.0
  %v11562 = vrot.slane %v11561, 4
  %v11563 = vadd.f32 %v11561, %v11562
  %v11564 = vrot.slane %v11563, 2
  %v11565 = vadd.f32 %v11563, %v11564
  %v11566 = vrot.slane %v11565, 1
  %v11567 = vadd.f32 %v11565, %v11566
  %v11568 = vsel %vm481, %v11530, 0.0
  %v11569 = vrot.slane %v11568, 4
  %v11570 = vadd.f32 %v11568, %v11569
  %v11571 = vrot.slane %v11570, 2
  %v11572 = vadd.f32 %v11570, %v11571
  %v11573 = vrot.slane %v11572, 1
  %v11574 = vadd.f32 %v11572, %v11573
  %v11575 = vsel %vm481, %v11531, 0.0
  %v11576 = vrot.slane %v11575, 4
  %v11577 = vadd.f32 %v11575, %v11576
  %v11578 = vrot.slane %v11577, 2
  %v11579 = vadd.f32 %v11577, %v11578
  %v11580 = vrot.slane %v11579, 1
  %v11581 = vadd.f32 %v11579, %v11580
  %v11582 = vsel %vm481, %v11532, 0.0
  %v11583 = vrot.slane %v11582, 4
  %v11584 = vadd.f32 %v11582, %v11583
  %v11585 = vrot.slane %v11584, 2
  %v11586 = vadd.f32 %v11584, %v11585
  %v11587 = vrot.slane %v11586, 1
  %v11588 = vadd.f32 %v11586, %v11587
  %v11589 = vsel %vm481, %v11533, 0.0
  %v11590 = vrot.slane %v11589, 4
  %v11591 = vadd.f32 %v11589, %v11590
  %v11592 = vrot.slane %v11591, 2
  %v11593 = vadd.f32 %v11591, %v11592
  %v11594 = vrot.slane %v11593, 1
  %v11595 = vadd.f32 %v11593, %v11594
  %v11596 = vsel %vm481, %v11534, 0.0
  %v11597 = vrot.slane %v11596, 4
  %v11598 = vadd.f32 %v11596, %v11597
  %v11599 = vrot.slane %v11598, 2
  %v11600 = vadd.f32 %v11598, %v11599
  %v11601 = vrot.slane %v11600, 1
  %v11602 = vadd.f32 %v11600, %v11601
  %v11603 = vsel %vm481, %v11535, 0.0
  %v11604 = vrot.slane %v11603, 4
  %v11605 = vadd.f32 %v11603, %v11604
  %v11606 = vrot.slane %v11605, 2
  %v11607 = vadd.f32 %v11605, %v11606
  %v11608 = vrot.slane %v11607, 1
  %v11609 = vadd.f32 %v11607, %v11608
  %v11610 = vsel %vm481, %v11536, 0.0
  %v11611 = vrot.slane %v11610, 4
  %v11612 = vadd.f32 %v11610, %v11611
  %v11613 = vrot.slane %v11612, 2
  %v11614 = vadd.f32 %v11612, %v11613
  %v11615 = vrot.slane %v11614, 1
  %v11616 = vadd.f32 %v11614, %v11615
  %v11617 = vsel %vm481, %v11537, 0.0
  %v11618 = vrot.slane %v11617, 4
  %v11619 = vadd.f32 %v11617, %v11618
  %v11620 = vrot.slane %v11619, 2
  %v11621 = vadd.f32 %v11619, %v11620
  %v11622 = vrot.slane %v11621, 1
  %v11623 = vadd.f32 %v11621, %v11622
  %v11624 = vsel %vm481, %v11538, 0.0
  %v11625 = vrot.slane %v11624, 4
  %v11626 = vadd.f32 %v11624, %v11625
  %v11627 = vrot.slane %v11626, 2
  %v11628 = vadd.f32 %v11626, %v11627
  %v11629 = vrot.slane %v11628, 1
  %v11630 = vadd.f32 %v11628, %v11629
  %v11631 = vsel %vm481, %v11539, 0.0
  %v11632 = vrot.slane %v11631, 4
  %v11633 = vadd.f32 %v11631, %v11632
  %v11634 = vrot.slane %v11633, 2
  %v11635 = vadd.f32 %v11633, %v11634
  %v11636 = vrot.slane %v11635, 1
  %v11637 = vadd.f32 %v11635, %v11636
  %v11638 = vsel %vm481, %v11540, 0.0
  %v11639 = vrot.slane %v11638, 4
  %v11640 = vadd.f32 %v11638, %v11639
  %v11641 = vrot.slane %v11640, 2
  %v11642 = vadd.f32 %v11640, %v11641
  %v11643 = vrot.slane %v11642, 1
  %v11644 = vadd.f32 %v11642, %v11643
  %v11645 = vsel %vm481, %v11541, 0.0
  %v11646 = vrot.slane %v11645, 4
  %v11647 = vadd.f32 %v11645, %v11646
  %v11648 = vrot.slane %v11647, 2
  %v11649 = vadd.f32 %v11647, %v11648
  %v11650 = vrot.slane %v11649, 1
  %v11651 = vadd.f32 %v11649, %v11650
  %v11652 = vsel %vm481, %v11542, 0.0
  %v11653 = vrot.slane %v11652, 4
  %v11654 = vadd.f32 %v11652, %v11653
  %v11655 = vrot.slane %v11654, 2
  %v11656 = vadd.f32 %v11654, %v11655
  %v11657 = vrot.slane %v11656, 1
  %v11658 = vadd.f32 %v11656, %v11657
  %v11659 = vsel %vm481, %v11543, 0.0
  %v11660 = vrot.slane %v11659, 4
  %v11661 = vadd.f32 %v11659, %v11660
  %v11662 = vrot.slane %v11661, 2
  %v11663 = vadd.f32 %v11661, %v11662
  %v11664 = vrot.slane %v11663, 1
  %v11665 = vadd.f32 %v11663, %v11664
  %v11666 = vsel %vm481, %v11544, 0.0
  %v11667 = vrot.slane %v11666, 4
  %v11668 = vadd.f32 %v11666, %v11667
  %v11669 = vrot.slane %v11668, 2
  %v11670 = vadd.f32 %v11668, %v11669
  %v11671 = vrot.slane %v11670, 1
  %v11672 = vadd.f32 %v11670, %v11671
  %v11673 = vsel %vm481, %v11545, 0.0
  %v11674 = vrot.slane %v11673, 4
  %v11675 = vadd.f32 %v11673, %v11674
  %v11676 = vrot.slane %v11675, 2
  %v11677 = vadd.f32 %v11675, %v11676
  %v11678 = vrot.slane %v11677, 1
  %v11679 = vadd.f32 %v11677, %v11678
  %v11680 = vsel %vm481, %v11546, 0.0
  %v11681 = vrot.slane %v11680, 4
  %v11682 = vadd.f32 %v11680, %v11681
  %v11683 = vrot.slane %v11682, 2
  %v11684 = vadd.f32 %v11682, %v11683
  %v11685 = vrot.slane %v11684, 1
  %v11686 = vadd.f32 %v11684, %v11685
  %v11687 = vsel %vm481, %v11547, 0.0
  %v11688 = vrot.slane %v11687, 4
  %v11689 = vadd.f32 %v11687, %v11688
  %v11690 = vrot.slane %v11689, 2
  %v11691 = vadd.f32 %v11689, %v11690
  %v11692 = vrot.slane %v11691, 1
  %v11693 = vadd.f32 %v11691, %v11692
  %v11694 = vsel %vm481, %v11548, 0.0
  %v11695 = vrot.slane %v11694, 4
  %v11696 = vadd.f32 %v11694, %v11695
  %v11697 = vrot.slane %v11696, 2
  %v11698 = vadd.f32 %v11696, %v11697
  %v11699 = vrot.slane %v11698, 1
  %v11700 = vadd.f32 %v11698, %v11699
  %v11701 = vsel %vm481, %v11549, 0.0
  %v11702 = vrot.slane %v11701, 4
  %v11703 = vadd.f32 %v11701, %v11702
  %v11704 = vrot.slane %v11703, 2
  %v11705 = vadd.f32 %v11703, %v11704
  %v11706 = vrot.slane %v11705, 1
  %v11707 = vadd.f32 %v11705, %v11706
  %v11708 = vsel %vm481, %v11550, 0.0
  %v11709 = vrot.slane %v11708, 4
  %v11710 = vadd.f32 %v11708, %v11709
  %v11711 = vrot.slane %v11710, 2
  %v11712 = vadd.f32 %v11710, %v11711
  %v11713 = vrot.slane %v11712, 1
  %v11714 = vadd.f32 %v11712, %v11713
  %v11715 = vsel %vm481, %v11551, 0.0
  %v11716 = vrot.slane %v11715, 4
  %v11717 = vadd.f32 %v11715, %v11716
  %v11718 = vrot.slane %v11717, 2
  %v11719 = vadd.f32 %v11717, %v11718
  %v11720 = vrot.slane %v11719, 1
  %v11721 = vadd.f32 %v11719, %v11720
  %v11722 = vsel %vm481, %v11552, 0.0
  %v11723 = vrot.slane %v11722, 4
  %v11724 = vadd.f32 %v11722, %v11723
  %v11725 = vrot.slane %v11724, 2
  %v11726 = vadd.f32 %v11724, %v11725
  %v11727 = vrot.slane %v11726, 1
  %v11728 = vadd.f32 %v11726, %v11727
  %v11729 = vsel %vm481, %v11553, 0.0
  %v11730 = vrot.slane %v11729, 4
  %v11731 = vadd.f32 %v11729, %v11730
  %v11732 = vrot.slane %v11731, 2
  %v11733 = vadd.f32 %v11731, %v11732
  %v11734 = vrot.slane %v11733, 1
  %v11735 = vadd.f32 %v11733, %v11734
  %v11736 = vsel %vm481, %v11554, 0.0
  %v11737 = vrot.slane %v11736, 4
  %v11738 = vadd.f32 %v11736, %v11737
  %v11739 = vrot.slane %v11738, 2
  %v11740 = vadd.f32 %v11738, %v11739
  %v11741 = vrot.slane %v11740, 1
  %v11742 = vadd.f32 %v11740, %v11741
  %v11743 = vsel %vm481, %v11555, 0.0
  %v11744 = vrot.slane %v11743, 4
  %v11745 = vadd.f32 %v11743, %v11744
  %v11746 = vrot.slane %v11745, 2
  %v11747 = vadd.f32 %v11745, %v11746
  %v11748 = vrot.slane %v11747, 1
  %v11749 = vadd.f32 %v11747, %v11748
  %v11750 = vsel %vm481, %v11556, 0.0
  %v11751 = vrot.slane %v11750, 4
  %v11752 = vadd.f32 %v11750, %v11751
  %v11753 = vrot.slane %v11752, 2
  %v11754 = vadd.f32 %v11752, %v11753
  %v11755 = vrot.slane %v11754, 1
  %v11756 = vadd.f32 %v11754, %v11755
  %v11757 = vsel %vm481, %v11557, 0.0
  %v11758 = vrot.slane %v11757, 4
  %v11759 = vadd.f32 %v11757, %v11758
  %v11760 = vrot.slane %v11759, 2
  %v11761 = vadd.f32 %v11759, %v11760
  %v11762 = vrot.slane %v11761, 1
  %v11763 = vadd.f32 %v11761, %v11762
  %v11764 = vsel %vm481, %v11558, 0.0
  %v11765 = vrot.slane %v11764, 4
  %v11766 = vadd.f32 %v11764, %v11765
  %v11767 = vrot.slane %v11766, 2
  %v11768 = vadd.f32 %v11766, %v11767
  %v11769 = vrot.slane %v11768, 1
  %v11770 = vadd.f32 %v11768, %v11769
  %v11771 = vsel %vm481, %v11559, 0.0
  %v11772 = vrot.slane %v11771, 4
  %v11773 = vadd.f32 %v11771, %v11772
  %v11774 = vrot.slane %v11773, 2
  %v11775 = vadd.f32 %v11773, %v11774
  %v11776 = vrot.slane %v11775, 1
  %v11777 = vadd.f32 %v11775, %v11776
  %v11778 = vsel %vm481, %v11560, 0.0
  %v11779 = vrot.slane %v11778, 4
  %v11780 = vadd.f32 %v11778, %v11779
  %v11781 = vrot.slane %v11780, 2
  %v11782 = vadd.f32 %v11780, %v11781
  %v11783 = vrot.slane %v11782, 1
  %v11784 = vadd.f32 %v11782, %v11783
  %v11785 = vlaneseq
  %v11786 = vshrl.u32 %v11785, 7
  %v11787 = vmul.u32 %v11786, 4
  %vm11788 = vcmp.eq.s32.totalorder %v56, %v11787
  %v11789 = vsel %vm11788, 1.0, 0.0
  %vm11822 = vcmask 1041409
  %v11823 = vsel %vm11822, %v11574, %v11567
  %vm11824 = vcmask 1042434
  %v11825 = vsel %vm11824, %v11581, %v11823
  %vm11826 = vcmask 1043459
  %v11827 = vsel %vm11826, %v11588, %v11825
  %vm11828 = vcmask 1044484
  %v11829 = vsel %vm11828, %v11595, %v11827
  %vm11830 = vcmask 1045509
  %v11831 = vsel %vm11830, %v11602, %v11829
  %vm11832 = vcmask 1046534
  %v11833 = vsel %vm11832, %v11609, %v11831
  %vm11834 = vcmask 1047559
  %v11835 = vsel %vm11834, %v11616, %v11833
  %v11836 = vsel %vm11822, %v11630, %v11623
  %v11837 = vsel %vm11824, %v11637, %v11836
  %v11838 = vsel %vm11826, %v11644, %v11837
  %v11839 = vsel %vm11828, %v11651, %v11838
  %v11840 = vsel %vm11830, %v11658, %v11839
  %v11841 = vsel %vm11832, %v11665, %v11840
  %v11842 = vsel %vm11834, %v11672, %v11841
  %v11843 = vsel %vm11822, %v11686, %v11679
  %v11844 = vsel %vm11824, %v11693, %v11843
  %v11845 = vsel %vm11826, %v11700, %v11844
  %v11846 = vsel %vm11828, %v11707, %v11845
  %v11847 = vsel %vm11830, %v11714, %v11846
  %v11848 = vsel %vm11832, %v11721, %v11847
  %v11849 = vsel %vm11834, %v11728, %v11848
  %v11850 = vsel %vm11822, %v11742, %v11735
  %v11851 = vsel %vm11824, %v11749, %v11850
  %v11852 = vsel %vm11826, %v11756, %v11851
  %v11853 = vsel %vm11828, %v11763, %v11852
  %v11854 = vsel %vm11830, %v11770, %v11853
  %v11855 = vsel %vm11832, %v11777, %v11854
  %v11856 = vsel %vm11834, %v11784, %v11855
  %v11862 = vsel %vm481, %v11789, 0
  %11864 = vmatpush.msra.mxu0 0.0
  %11865 = vmatpush.msra.mxu0 0.0
  %11866 = vmatpush.msra.mxu0 0.0
  %11867 = vmatpush.msra.mxu0 0.0
  %11868 = vmatpush.msra.mxu0 0.0
  %11869 = vmatpush.msra.mxu0 0.0
  %11870 = vmatpush.msra.mxu0 0.0
  %11871 = vmatpush.msra.mxu0 0.0
  %11872 = vmatpush.msra.mxu0 0.0
  %11873 = vmatpush.msra.mxu0 0.0
  %11874 = vmatpush.msra.mxu0 0.0
  %11875 = vmatpush.msra.mxu0 0.0
  %11876 = vmatpush.msra.mxu0 %v11856
  %11877 = vmatpush.msra.mxu0 %v11849
  %11878 = vmatpush.msra.mxu0 %v11842
  %11879 = vmatpush.msra.mxu0 %v11835
  %11880 = vmatmul.f32.gmra.mxu0 %v11862
  %v11881 = vpop.f32.mrf.mxu0
  %v11882 = vadd.f32 0.0, %v11881
  %11883 = vdwg.mxu0
  %v11884 = vadd.s32 %v11787, 1
  %vm11885 = vcmp.eq.s32.totalorder %v56, %v11884
  %v11886 = vsel %vm11885, 1.0, 0.0
  %v11888 = vsel %vm481, %v11886, 0
  %11890 = vmatpush.msra.mxu0 0.0
  %11891 = vmatpush.msra.mxu0 0.0
  %11892 = vmatpush.msra.mxu0 0.0
  %11893 = vmatpush.msra.mxu0 0.0
  %11894 = vmatpush.msra.mxu0 0.0
  %11895 = vmatpush.msra.mxu0 0.0
  %11896 = vmatpush.msra.mxu0 0.0
  %11897 = vmatpush.msra.mxu0 0.0
  %11898 = vmatpush.msra.mxu0 0.0
  %11899 = vmatpush.msra.mxu0 0.0
  %11900 = vmatpush.msra.mxu0 0.0
  %11901 = vmatpush.msra.mxu0 0.0
  %11902 = vmatpush.msra.mxu0 %v11856
  %11903 = vmatpush.msra.mxu0 %v11849
  %11904 = vmatpush.msra.mxu0 %v11842
  %11905 = vmatpush.msra.mxu0 %v11835
  %11906 = vmatmul.f32.gmra.mxu0 %v11888
  %v11907 = vpop.f32.mrf.mxu0
  %v11908 = vadd.f32 0.0, %v11907
  %11909 = vdwg.mxu0
  %v11910 = vadd.s32 %v11787, 2
  %vm11911 = vcmp.eq.s32.totalorder %v56, %v11910
  %v11912 = vsel %vm11911, 1.0, 0.0
  %v11914 = vsel %vm481, %v11912, 0
  %11916 = vmatpush.msra.mxu0 0.0
  %11917 = vmatpush.msra.mxu0 0.0
  %11918 = vmatpush.msra.mxu0 0.0
  %11919 = vmatpush.msra.mxu0 0.0
  %11920 = vmatpush.msra.mxu0 0.0
  %11921 = vmatpush.msra.mxu0 0.0
  %11922 = vmatpush.msra.mxu0 0.0
  %11923 = vmatpush.msra.mxu0 0.0
  %11924 = vmatpush.msra.mxu0 0.0
  %11925 = vmatpush.msra.mxu0 0.0
  %11926 = vmatpush.msra.mxu0 0.0
  %11927 = vmatpush.msra.mxu0 0.0
  %11928 = vmatpush.msra.mxu0 %v11856
  %11929 = vmatpush.msra.mxu0 %v11849
  %11930 = vmatpush.msra.mxu0 %v11842
  %11931 = vmatpush.msra.mxu0 %v11835
  %11932 = vmatmul.f32.gmra.mxu0 %v11914
  %v11933 = vpop.f32.mrf.mxu0
  %v11934 = vadd.f32 0.0, %v11933
  %11935 = vdwg.mxu0
  %v11936 = vadd.s32 %v11787, 3
  %vm11937 = vcmp.eq.s32.totalorder %v56, %v11936
  %v11938 = vsel %vm11937, 1.0, 0.0
  %v11940 = vsel %vm481, %v11938, 0
  %11942 = vmatpush.msra.mxu0 0.0
  %11943 = vmatpush.msra.mxu0 0.0
  %11944 = vmatpush.msra.mxu0 0.0
  %11945 = vmatpush.msra.mxu0 0.0
  %11946 = vmatpush.msra.mxu0 0.0
  %11947 = vmatpush.msra.mxu0 0.0
  %11948 = vmatpush.msra.mxu0 0.0
  %11949 = vmatpush.msra.mxu0 0.0
  %11950 = vmatpush.msra.mxu0 0.0
  %11951 = vmatpush.msra.mxu0 0.0
  %11952 = vmatpush.msra.mxu0 0.0
  %11953 = vmatpush.msra.mxu0 0.0
  %11954 = vmatpush.msra.mxu0 %v11856
  %11955 = vmatpush.msra.mxu0 %v11849
  %11956 = vmatpush.msra.mxu0 %v11842
  %11957 = vmatpush.msra.mxu0 %v11835
  %11958 = vmatmul.f32.gmra.mxu0 %v11940
  %v11959 = vpop.f32.mrf.mxu0
  %v11960 = vadd.f32 0.0, %v11959
  %11961 = vdwg.mxu0
  %11963 = vrot.lane.b32.xlu0 %v11908, 32
  %v11964 = vpop.permute.xlu0 %11963
  %11967 = vrot.lane.b32.xlu0 %v11934, 64
  %v11968 = vpop.permute.xlu0 %11967
  %11971 = vrot.lane.b32.xlu0 %v11960, 96
  %v11972 = vpop.permute.xlu0 %11971
  %v11974 = vsel %vm481, %v11882, %v11964
  %vm11975 = vcmask 523264
  %v11976 = vsel %vm11975, %v11974, %v11968
  %vm11977 = vcmask 785408
  %v11978 = vsel %vm11977, %v11976, %v11972
  %11979 = vst [vmem:[%s6] sm:$0xff] %v11978
  // Predicated region
  $region26: #{title_encoder_forward.1} parent=0 // pred_check
    _
  $region27: #{title_encoder_forward.1} parent=0 // pred_check_branch
    %11981 = sbr.rel (0) target = $region29
  $region28: #{title_encoder_forward.1} parent=0 // pred_region
    _
  $region29: #{title_encoder_forward.1} parent=0 // pred_fallthru
    _
  // Predicated region
  $region30: #{title_encoder_forward.1} parent=0 // pred_check
    _
  $region31: #{title_encoder_forward.1} parent=0 // pred_check_branch
    %11983 = sbr.rel (0) target = $region33
  $region32: #{title_encoder_forward.1} parent=0 // pred_region
    _
  $region33: #{title_encoder_forward.1} parent=0 // pred_fallthru
    _

</llo_original>
